<compile_context>
chip_gen: v7x
topology: tpu7x:2x2x1
jax: 0.10.0
libtpu: 0.0.40
codegen_flags: <defaults>
</compile_context>

<pallas_src>
import jax
import jax.numpy as jnp
from jax import lax
from jax.experimental import pallas as pl
from jax.experimental.pallas import tpu as pltpu

# synthetic model hyper-parameters (reference layer definitions not provided)
EMB_DIM = 32            # cfg.emb_dim
LATENT_DIM = 32         # cfg.latent_dim == language embedding dim (use_language path)
D_TF = EMB_DIM + LATENT_DIM     # transformer / MLPKernel feature dim (concat, as in reference)
FF_DIM = 2 * D_TF
ENC_HIDDEN = 64
KER_HIDDEN = 64
N_BLOCKS = 2
TI = 8                  # rows of Phi_A per dro chunk


# --------------------------------------------------------------------------
# in-kernel helpers (traced inside the fused Pallas kernel)
# --------------------------------------------------------------------------
def _encode(pc, w1, b1, w2, b2, w3, b3):
    # TODO(synk): reference create_encoder_network is a DGCNN edge-conv; definition not
    # provided, so a shared per-point MLP (3 -> 64 -> 64 -> emb_dim, ReLU) is used.
    # First layer via three rank-1 broadcasts (K=3 is MXU-unfriendly; VPU is idle here).
    h = (pc[:, 0:1] * w1[0:1, :] + pc[:, 1:2] * w1[1:2, :] + pc[:, 2:3] * w1[2:3, :]) + b1
    h = jnp.maximum(h, 0.0)
    h = jnp.maximum(jnp.dot(h, w2, preferred_element_type=jnp.float32) + b2, 0.0)
    return jnp.dot(h, w3, preferred_element_type=jnp.float32) + b3


def _xattn(src, tgt, wq, wkv, wo, wf1, bf1, wf2, bf2):
    # TODO(synk): reference DCP Transformer (multi-head + LayerNorm) not provided; this is a
    # single-head cross-attention + FFN block with residuals.
    d = src.shape[-1]
    q = jnp.dot(src, wq, preferred_element_type=jnp.float32)
    kv = jnp.dot(tgt, wkv, preferred_element_type=jnp.float32)     # fused K|V projection
    k = kv[:, :d]
    v = kv[:, d:]
    s = lax.dot_general(q, k, (((1,), (1,)), ((), ())),
                        preferred_element_type=jnp.float32) * (float(d) ** -0.5)
    m = jnp.max(s, axis=-1, keepdims=True)
    e = jnp.exp(s - m)
    p = e * pl.reciprocal(jnp.sum(e, axis=-1, keepdims=True), approx=True)
    ctx = jnp.dot(p, v, preferred_element_type=jnp.float32)
    x = src + jnp.dot(ctx, wo, preferred_element_type=jnp.float32)
    ff = jnp.maximum(jnp.dot(x, wf1, preferred_element_type=jnp.float32) + bf1, 0.0)
    return x + jnp.dot(ff, wf2, preferred_element_type=jnp.float32) + bf2


# --------------------------------------------------------------------------
# fused forward kernel: one batch element per grid step
# --------------------------------------------------------------------------
def fused_forward_kernel(robot_ref, object_ref, lang_ref, *rest):
    *wrefs, out_ref, apart_scr = rest

    it = iter(wrefs)
    take = lambda k: [next(it) for _ in range(k)]
    enc_r, enc_o = take(6), take(6)
    tf_r = [take(7) for _ in range(N_BLOCKS)]
    tf_o = [take(7) for _ in range(N_BLOCKS)]
    ker = take(7)

    n = robot_ref.shape[1]

    rpc = robot_ref[0]                    # (N, 3)
    opc = object_ref[0]                   # (N, 3)
    z = lang_ref[0]                       # (1, LATENT_DIM)

    # center_pc (robot only, as in the reference)
    rpc = rpc - jnp.mean(rpc, axis=0, keepdims=True)

    remb = _encode(rpc, *[r[...] for r in enc_r])     # (N, EMB_DIM)
    oemb = _encode(opc, *[r[...] for r in enc_o])     # (N, EMB_DIM)
    # .detach() on the embeddings: no-op for forward math

    z_rep = jnp.broadcast_to(z, (n, z.shape[-1]))
    rz = jnp.concatenate([remb, z_rep], axis=-1)      # (N, D_TF)
    oz = jnp.concatenate([oemb, z_rep], axis=-1)      # (N, D_TF)

    src = rz
    for blk in tf_r:
        src = _xattn(src, oz, *[r[...] for r in blk])
    phi_a = rz + src

    src = oz
    for blk in tf_o:
        src = _xattn(src, rz, *[r[...] for r in blk])
    phi_b = oz + src

    # ---- pairwise MLPKernel -> dro, i-axis tiled ----
    # TODO(synk): exact MLPKernel widths/activation unknown; using 2*D_TF -> H -> H -> 1 (ReLU).
    kw1a, kw1b, kb1, kw2, kb2, kw3, kb3 = (r[...] for r in ker)

    apart_scr[...] = jnp.dot(phi_a, kw1a, preferred_element_type=jnp.float32)          # (N, H)
    bpart = (jnp.dot(phi_b, kw1b, preferred_element_type=jnp.float32) + kb1)[None, :, :]  # (1,N,H), hoisted
    w2_bf = kw2.astype(jnp.bfloat16)

    chunk = TI * n

    def dro_chunk(i, carry):
        row0 = pl.multiple_of(i * TI, TI)
        a_chunk = apart_scr[pl.ds(row0, TI), :]                        # (TI, H)
        h1 = jnp.maximum(a_chunk[:, None, :] + bpart, 0.0)             # (TI, N, H)
        h1f = h1.reshape(chunk, KER_HIDDEN).astype(jnp.bfloat16)
        h2 = jnp.maximum(
            jnp.dot(h1f, w2_bf, preferred_element_type=jnp.float32) + kb2, 0.0)   # (TI*N, H)
        # final H -> 1 layer on the MXU, producing a lane-dense (1, TI*N) row slab
        outc = lax.dot_general(kw3, h2, (((1,), (1,)), ((), ())),
                               preferred_element_type=jnp.float32) + kb3           # (1, TI*N)
        col0 = pl.multiple_of(i * chunk, chunk)
        out_ref[0, :, pl.ds(col0, chunk)] = outc
        return carry

    lax.fori_loop(0, n // TI, dro_chunk, 0)


# --------------------------------------------------------------------------
# pallas_call wrapper
# --------------------------------------------------------------------------
def _weight_list(params):
    ws = []
    for enc in (params["enc_robot"], params["enc_object"]):
        ws += [enc["w1"], enc["b1"], enc["w2"], enc["b2"], enc["w3"], enc["b3"]]
    for blocks in (params["tf_robot"], params["tf_object"]):
        for blk in blocks:
            ws += [blk["wq"], blk["wkv"], blk["wo"],
                   blk["wf1"], blk["bf1"], blk["wf2"], blk["bf2"]]
    k = params["kernel"]
    ws += [k["w1a"], k["w1b"], k["b1"], k["w2"], k["b2"], k["w3"], k["b3"]]
    return ws


def _rep_spec(arr):
    nd = arr.ndim
    return pl.BlockSpec(arr.shape, lambda b, _nd=nd: (0,) * _nd)


@jax.jit
def forward(params, robot_pc, object_pc, language_emb):
    B, N, _ = robot_pc.shape
    assert N % TI == 0
    L = language_emb.shape[-1]
    ws = _weight_list(params)

    dro_flat = pl.pallas_call(
        fused_forward_kernel,
        out_shape=jax.ShapeDtypeStruct((B, 1, N * N), jnp.float32),
        grid=(B,),
        in_specs=[pl.BlockSpec((1, N, 3), lambda b: (b, 0, 0)),
                  pl.BlockSpec((1, N, 3), lambda b: (b, 0, 0)),
                  pl.BlockSpec((1, 1, L), lambda b: (b, 0, 0))]
                 + [_rep_spec(w) for w in ws],
        out_specs=pl.BlockSpec((1, 1, N * N), lambda b: (b, 0, 0)),
        scratch_shapes=[pltpu.VMEM((N, KER_HIDDEN), jnp.float32)],
        compiler_params=pltpu.CompilerParams(dimension_semantics=("parallel",)),
    )(robot_pc, object_pc, language_emb.reshape(B, 1, L), *ws)

    return {"dro": dro_flat.reshape(B, N, N), "mu": None, "logvar": None}


# --------------------------------------------------------------------------
# Parameter init (deterministic, synthetic)
# --------------------------------------------------------------------------
def _dense(key, fan_in, fan_out):
    return jax.random.normal(key, (fan_in, fan_out), jnp.float32) / jnp.sqrt(float(fan_in))


def _bias(shape):
    return jnp.zeros(shape, jnp.float32)


def init_encoder(key, emb_dim, hidden=ENC_HIDDEN, in_c=3):
    k1, k2, k3 = jax.random.split(key, 3)
    return {"w1": _dense(k1, in_c, hidden), "b1": _bias((1, hidden)),
            "w2": _dense(k2, hidden, hidden), "b2": _bias((1, hidden)),
            "w3": _dense(k3, hidden, emb_dim), "b3": _bias((1, emb_dim))}


def init_tf_block(key, d, ff):
    ks = jax.random.split(key, 6)
    wk, wv = _dense(ks[1], d, d), _dense(ks[2], d, d)
    return {"wq": _dense(ks[0], d, d),
            "wkv": jnp.concatenate([wk, wv], axis=1),    # fused K|V projection weight
            "wo": _dense(ks[3], d, d),
            "wf1": _dense(ks[4], d, ff), "bf1": _bias((1, ff)),
            "wf2": _dense(ks[5], ff, d), "bf2": _bias((1, d))}


def init_mlp_kernel(key, d, hidden=KER_HIDDEN):
    ks = jax.random.split(key, 4)
    return {"w1a": _dense(ks[0], d, hidden), "w1b": _dense(ks[1], d, hidden),
            "b1": _bias((1, hidden)),
            "w2": _dense(ks[2], hidden, hidden), "b2": _bias((1, hidden)),
            "w3": jax.random.normal(ks[3], (1, hidden), jnp.float32) / jnp.sqrt(float(hidden)),
            "b3": _bias((1, 1))}


def init_params(key):
    ks = jax.random.split(key, 5)
    return {
        "enc_robot": init_encoder(ks[0], EMB_DIM),
        "enc_object": init_encoder(ks[1], EMB_DIM),
        "tf_robot": [init_tf_block(k, D_TF, FF_DIM) for k in jax.random.split(ks[2], N_BLOCKS)],
        "tf_object": [init_tf_block(k, D_TF, FF_DIM) for k in jax.random.split(ks[3], N_BLOCKS)],
        "kernel": init_mlp_kernel(ks[4], D_TF),
    }


# --------------------------------------------------------------------------
if __name__ == "__main__":
    B, N = 2, 64
    key = jax.random.PRNGKey(0)
    k1, k2, k3, kp = jax.random.split(key, 4)

    robot_pc = jax.random.normal(k1, (B, N, 3), jnp.float32)
    object_pc = jax.random.normal(k2, (B, N, 3), jnp.float32)
    language_emb = jax.random.normal(k3, (B, LATENT_DIM), jnp.float32)

    params = init_params(kp)

    out = forward(params, robot_pc, object_pc, language_emb)
    jax.block_until_ready(out["dro"])

    assert out["dro"].shape == (B, N, N)
    assert out["dro"].dtype == jnp.float32
    assert bool(jnp.all(jnp.isfinite(out["dro"])))
    print("KERNEL_OK")
</pallas_src>

<mosaic_0001>
module attributes {stable_mosaic.version = 11 : i64} {
  func.func @fused_forward_kernel(%arg0: i32, %arg1: memref<1x64x3xf32, #tpu.memory_space<vmem>>, %arg2: memref<1x64x3xf32, #tpu.memory_space<vmem>>, %arg3: memref<1x1x32xf32, #tpu.memory_space<vmem>>, %arg4: memref<3x64xf32, #tpu.memory_space<vmem>>, %arg5: memref<1x64xf32, #tpu.memory_space<vmem>>, %arg6: memref<64x64xf32, #tpu.memory_space<vmem>>, %arg7: memref<1x64xf32, #tpu.memory_space<vmem>>, %arg8: memref<64x32xf32, #tpu.memory_space<vmem>>, %arg9: memref<1x32xf32, #tpu.memory_space<vmem>>, %arg10: memref<3x64xf32, #tpu.memory_space<vmem>>, %arg11: memref<1x64xf32, #tpu.memory_space<vmem>>, %arg12: memref<64x64xf32, #tpu.memory_space<vmem>>, %arg13: memref<1x64xf32, #tpu.memory_space<vmem>>, %arg14: memref<64x32xf32, #tpu.memory_space<vmem>>, %arg15: memref<1x32xf32, #tpu.memory_space<vmem>>, %arg16: memref<64x64xf32, #tpu.memory_space<vmem>>, %arg17: memref<64x128xf32, #tpu.memory_space<vmem>>, %arg18: memref<64x64xf32, #tpu.memory_space<vmem>>, %arg19: memref<64x128xf32, #tpu.memory_space<vmem>>, %arg20: memref<1x128xf32, #tpu.memory_space<vmem>>, %arg21: memref<128x64xf32, #tpu.memory_space<vmem>>, %arg22: memref<1x64xf32, #tpu.memory_space<vmem>>, %arg23: memref<64x64xf32, #tpu.memory_space<vmem>>, %arg24: memref<64x128xf32, #tpu.memory_space<vmem>>, %arg25: memref<64x64xf32, #tpu.memory_space<vmem>>, %arg26: memref<64x128xf32, #tpu.memory_space<vmem>>, %arg27: memref<1x128xf32, #tpu.memory_space<vmem>>, %arg28: memref<128x64xf32, #tpu.memory_space<vmem>>, %arg29: memref<1x64xf32, #tpu.memory_space<vmem>>, %arg30: memref<64x64xf32, #tpu.memory_space<vmem>>, %arg31: memref<64x128xf32, #tpu.memory_space<vmem>>, %arg32: memref<64x64xf32, #tpu.memory_space<vmem>>, %arg33: memref<64x128xf32, #tpu.memory_space<vmem>>, %arg34: memref<1x128xf32, #tpu.memory_space<vmem>>, %arg35: memref<128x64xf32, #tpu.memory_space<vmem>>, %arg36: memref<1x64xf32, #tpu.memory_space<vmem>>, %arg37: memref<64x64xf32, #tpu.memory_space<vmem>>, %arg38: memref<64x128xf32, #tpu.memory_space<vmem>>, %arg39: memref<64x64xf32, #tpu.memory_space<vmem>>, %arg40: memref<64x128xf32, #tpu.memory_space<vmem>>, %arg41: memref<1x128xf32, #tpu.memory_space<vmem>>, %arg42: memref<128x64xf32, #tpu.memory_space<vmem>>, %arg43: memref<1x64xf32, #tpu.memory_space<vmem>>, %arg44: memref<64x64xf32, #tpu.memory_space<vmem>>, %arg45: memref<64x64xf32, #tpu.memory_space<vmem>>, %arg46: memref<1x64xf32, #tpu.memory_space<vmem>>, %arg47: memref<64x64xf32, #tpu.memory_space<vmem>>, %arg48: memref<1x64xf32, #tpu.memory_space<vmem>>, %arg49: memref<1x64xf32, #tpu.memory_space<vmem>>, %arg50: memref<1x1xf32, #tpu.memory_space<vmem>>, %arg51: memref<1x1x4096xf32, #tpu.memory_space<vmem>>, %arg52: memref<64x64xf32, #tpu.memory_space<vmem>>) attributes {dimension_semantics = [#tpu.dimension_semantics<parallel>], iteration_bounds = array<i64: 2>, scalar_prefetch = 0 : i64, scratch_operands = 1 : i64, tpu.core_type = #tpu.core_type<tc>, window_params = [{transform_indices = @transform_0, window_bounds = array<i64: 1, 64, 3>}, {transform_indices = @transform_1, window_bounds = array<i64: 1, 64, 3>}, {transform_indices = @transform_2, window_bounds = array<i64: 1, 1, 32>}, {pipeline_mode = #tpu.pipeline_mode<synchronous>, transform_indices = @transform_3, window_bounds = array<i64: 3, 64>}, {pipeline_mode = #tpu.pipeline_mode<synchronous>, transform_indices = @transform_4, window_bounds = array<i64: 1, 64>}, {pipeline_mode = #tpu.pipeline_mode<synchronous>, transform_indices = @transform_5, window_bounds = array<i64: 64, 64>}, {pipeline_mode = #tpu.pipeline_mode<synchronous>, transform_indices = @transform_6, window_bounds = array<i64: 1, 64>}, {pipeline_mode = #tpu.pipeline_mode<synchronous>, transform_indices = @transform_7, window_bounds = array<i64: 64, 32>}, {pipeline_mode = #tpu.pipeline_mode<synchronous>, transform_indices = @transform_8, window_bounds = array<i64: 1, 32>}, {pipeline_mode = #tpu.pipeline_mode<synchronous>, transform_indices = @transform_9, window_bounds = array<i64: 3, 64>}, {pipeline_mode = #tpu.pipeline_mode<synchronous>, transform_indices = @transform_10, window_bounds = array<i64: 1, 64>}, {pipeline_mode = #tpu.pipeline_mode<synchronous>, transform_indices = @transform_11, window_bounds = array<i64: 64, 64>}, {pipeline_mode = #tpu.pipeline_mode<synchronous>, transform_indices = @transform_12, window_bounds = array<i64: 1, 64>}, {pipeline_mode = #tpu.pipeline_mode<synchronous>, transform_indices = @transform_13, window_bounds = array<i64: 64, 32>}, {pipeline_mode = #tpu.pipeline_mode<synchronous>, transform_indices = @transform_14, window_bounds = array<i64: 1, 32>}, {pipeline_mode = #tpu.pipeline_mode<synchronous>, transform_indices = @transform_15, window_bounds = array<i64: 64, 64>}, {pipeline_mode = #tpu.pipeline_mode<synchronous>, transform_indices = @transform_16, window_bounds = array<i64: 64, 128>}, {pipeline_mode = #tpu.pipeline_mode<synchronous>, transform_indices = @transform_17, window_bounds = array<i64: 64, 64>}, {pipeline_mode = #tpu.pipeline_mode<synchronous>, transform_indices = @transform_18, window_bounds = array<i64: 64, 128>}, {pipeline_mode = #tpu.pipeline_mode<synchronous>, transform_indices = @transform_19, window_bounds = array<i64: 1, 128>}, {pipeline_mode = #tpu.pipeline_mode<synchronous>, transform_indices = @transform_20, window_bounds = array<i64: 128, 64>}, {pipeline_mode = #tpu.pipeline_mode<synchronous>, transform_indices = @transform_21, window_bounds = array<i64: 1, 64>}, {pipeline_mode = #tpu.pipeline_mode<synchronous>, transform_indices = @transform_22, window_bounds = array<i64: 64, 64>}, {pipeline_mode = #tpu.pipeline_mode<synchronous>, transform_indices = @transform_23, window_bounds = array<i64: 64, 128>}, {pipeline_mode = #tpu.pipeline_mode<synchronous>, transform_indices = @transform_24, window_bounds = array<i64: 64, 64>}, {pipeline_mode = #tpu.pipeline_mode<synchronous>, transform_indices = @transform_25, window_bounds = array<i64: 64, 128>}, {pipeline_mode = #tpu.pipeline_mode<synchronous>, transform_indices = @transform_26, window_bounds = array<i64: 1, 128>}, {pipeline_mode = #tpu.pipeline_mode<synchronous>, transform_indices = @transform_27, window_bounds = array<i64: 128, 64>}, {pipeline_mode = #tpu.pipeline_mode<synchronous>, transform_indices = @transform_28, window_bounds = array<i64: 1, 64>}, {pipeline_mode = #tpu.pipeline_mode<synchronous>, transform_indices = @transform_29, window_bounds = array<i64: 64, 64>}, {pipeline_mode = #tpu.pipeline_mode<synchronous>, transform_indices = @transform_30, window_bounds = array<i64: 64, 128>}, {pipeline_mode = #tpu.pipeline_mode<synchronous>, transform_indices = @transform_31, window_bounds = array<i64: 64, 64>}, {pipeline_mode = #tpu.pipeline_mode<synchronous>, transform_indices = @transform_32, window_bounds = array<i64: 64, 128>}, {pipeline_mode = #tpu.pipeline_mode<synchronous>, transform_indices = @transform_33, window_bounds = array<i64: 1, 128>}, {pipeline_mode = #tpu.pipeline_mode<synchronous>, transform_indices = @transform_34, window_bounds = array<i64: 128, 64>}, {pipeline_mode = #tpu.pipeline_mode<synchronous>, transform_indices = @transform_35, window_bounds = array<i64: 1, 64>}, {pipeline_mode = #tpu.pipeline_mode<synchronous>, transform_indices = @transform_36, window_bounds = array<i64: 64, 64>}, {pipeline_mode = #tpu.pipeline_mode<synchronous>, transform_indices = @transform_37, window_bounds = array<i64: 64, 128>}, {pipeline_mode = #tpu.pipeline_mode<synchronous>, transform_indices = @transform_38, window_bounds = array<i64: 64, 64>}, {pipeline_mode = #tpu.pipeline_mode<synchronous>, transform_indices = @transform_39, window_bounds = array<i64: 64, 128>}, {pipeline_mode = #tpu.pipeline_mode<synchronous>, transform_indices = @transform_40, window_bounds = array<i64: 1, 128>}, {pipeline_mode = #tpu.pipeline_mode<synchronous>, transform_indices = @transform_41, window_bounds = array<i64: 128, 64>}, {pipeline_mode = #tpu.pipeline_mode<synchronous>, transform_indices = @transform_42, window_bounds = array<i64: 1, 64>}, {pipeline_mode = #tpu.pipeline_mode<synchronous>, transform_indices = @transform_43, window_bounds = array<i64: 64, 64>}, {pipeline_mode = #tpu.pipeline_mode<synchronous>, transform_indices = @transform_44, window_bounds = array<i64: 64, 64>}, {pipeline_mode = #tpu.pipeline_mode<synchronous>, transform_indices = @transform_45, window_bounds = array<i64: 1, 64>}, {pipeline_mode = #tpu.pipeline_mode<synchronous>, transform_indices = @transform_46, window_bounds = array<i64: 64, 64>}, {pipeline_mode = #tpu.pipeline_mode<synchronous>, transform_indices = @transform_47, window_bounds = array<i64: 1, 64>}, {pipeline_mode = #tpu.pipeline_mode<synchronous>, transform_indices = @transform_48, window_bounds = array<i64: 1, 64>}, {pipeline_mode = #tpu.pipeline_mode<synchronous>, transform_indices = @transform_49, window_bounds = array<i64: 1, 1>}, {transform_indices = @transform_50, window_bounds = array<i64: 1, 1, 4096>}]} {
    %c0 = arith.constant 0 : index
    %c0_0 = arith.constant 0 : index
    %c0_1 = arith.constant 0 : index
    %0 = vector.load %arg1[%c0, %c0_0, %c0_1] : memref<1x64x3xf32, #tpu.memory_space<vmem>>, vector<1x64x3xf32>
    %1 = vector.shape_cast %0 : vector<1x64x3xf32> to vector<64x3xf32>
    %c0_2 = arith.constant 0 : index
    %c0_3 = arith.constant 0 : index
    %c0_4 = arith.constant 0 : index
    %2 = vector.load %arg2[%c0_2, %c0_3, %c0_4] : memref<1x64x3xf32, #tpu.memory_space<vmem>>, vector<1x64x3xf32>
    %3 = vector.shape_cast %2 : vector<1x64x3xf32> to vector<64x3xf32>
    %c0_5 = arith.constant 0 : index
    %c0_6 = arith.constant 0 : index
    %c0_7 = arith.constant 0 : index
    %4 = vector.load %arg3[%c0_5, %c0_6, %c0_7] : memref<1x1x32xf32, #tpu.memory_space<vmem>>, vector<1x1x32xf32>
    %5 = vector.shape_cast %4 : vector<1x1x32xf32> to vector<1x32xf32>
    %cst = arith.constant dense<0.000000e+00> : vector<3xf32>
    %6 = vector.multi_reduction <add>, %1, %cst [0] : vector<64x3xf32> to vector<3xf32>
    %7 = vector.shape_cast %6 : vector<3xf32> to vector<1x3xf32>
    %cst_8 = arith.constant 6.400000e+01 : f32
    %8 = vector.broadcast %cst_8 : f32 to vector<1x3xf32>
    %9 = arith.divf %7, %8 : vector<1x3xf32>
    %10 = vector.broadcast %9 : vector<1x3xf32> to vector<64x3xf32>
    %11 = arith.subf %1, %10 : vector<64x3xf32>
    %c0_9 = arith.constant 0 : index
    %c0_10 = arith.constant 0 : index
    %12 = vector.load %arg4[%c0_9, %c0_10] : memref<3x64xf32, #tpu.memory_space<vmem>>, vector<3x64xf32>
    %c0_11 = arith.constant 0 : index
    %c0_12 = arith.constant 0 : index
    %13 = vector.load %arg5[%c0_11, %c0_12] : memref<1x64xf32, #tpu.memory_space<vmem>>, vector<1x64xf32>
    %c0_13 = arith.constant 0 : index
    %c0_14 = arith.constant 0 : index
    %14 = vector.load %arg6[%c0_13, %c0_14] : memref<64x64xf32, #tpu.memory_space<vmem>>, vector<64x64xf32>
    %c0_15 = arith.constant 0 : index
    %c0_16 = arith.constant 0 : index
    %15 = vector.load %arg7[%c0_15, %c0_16] : memref<1x64xf32, #tpu.memory_space<vmem>>, vector<1x64xf32>
    %c0_17 = arith.constant 0 : index
    %c0_18 = arith.constant 0 : index
    %16 = vector.load %arg8[%c0_17, %c0_18] : memref<64x32xf32, #tpu.memory_space<vmem>>, vector<64x32xf32>
    %c0_19 = arith.constant 0 : index
    %c0_20 = arith.constant 0 : index
    %17 = vector.load %arg9[%c0_19, %c0_20] : memref<1x32xf32, #tpu.memory_space<vmem>>, vector<1x32xf32>
    %18 = vector.extract_strided_slice %11 {offsets = [0, 0], sizes = [64, 1], strides = [1, 1]} : vector<64x3xf32> to vector<64x1xf32>
    %19 = vector.extract_strided_slice %12 {offsets = [0, 0], sizes = [1, 64], strides = [1, 1]} : vector<3x64xf32> to vector<1x64xf32>
    %20 = vector.broadcast %18 : vector<64x1xf32> to vector<64x64xf32>
    %21 = vector.broadcast %19 : vector<1x64xf32> to vector<64x64xf32>
    %22 = arith.mulf %20, %21 : vector<64x64xf32>
    %23 = vector.extract_strided_slice %11 {offsets = [0, 1], sizes = [64, 1], strides = [1, 1]} : vector<64x3xf32> to vector<64x1xf32>
    %24 = vector.extract_strided_slice %12 {offsets = [1, 0], sizes = [1, 64], strides = [1, 1]} : vector<3x64xf32> to vector<1x64xf32>
    %25 = vector.broadcast %23 : vector<64x1xf32> to vector<64x64xf32>
    %26 = vector.broadcast %24 : vector<1x64xf32> to vector<64x64xf32>
    %27 = arith.mulf %25, %26 : vector<64x64xf32>
    %28 = arith.addf %22, %27 : vector<64x64xf32>
    %29 = vector.extract_strided_slice %11 {offsets = [0, 2], sizes = [64, 1], strides = [1, 1]} : vector<64x3xf32> to vector<64x1xf32>
    %30 = vector.extract_strided_slice %12 {offsets = [2, 0], sizes = [1, 64], strides = [1, 1]} : vector<3x64xf32> to vector<1x64xf32>
    %31 = vector.broadcast %29 : vector<64x1xf32> to vector<64x64xf32>
    %32 = vector.broadcast %30 : vector<1x64xf32> to vector<64x64xf32>
    %33 = arith.mulf %31, %32 : vector<64x64xf32>
    %34 = arith.addf %28, %33 : vector<64x64xf32>
    %35 = vector.broadcast %13 : vector<1x64xf32> to vector<64x64xf32>
    %36 = arith.addf %34, %35 : vector<64x64xf32>
    %cst_21 = arith.constant 0.000000e+00 : f32
    %37 = vector.broadcast %cst_21 : f32 to vector<64x64xf32>
    %38 = arith.maximumf %36, %37 : vector<64x64xf32>
    %cst_22 = arith.constant dense<0.000000e+00> : vector<64x64xf32>
    %39 = tpu.matmul %38, %14, %cst_22 {dimension_numbers = #tpu.dot_dimension_numbers<[1], [0], [0], [1], [0, 0, 1, 1], [], []>} : vector<64x64xf32>, vector<64x64xf32>, vector<64x64xf32> -> vector<64x64xf32>
    %40 = vector.broadcast %15 : vector<1x64xf32> to vector<64x64xf32>
    %41 = arith.addf %39, %40 : vector<64x64xf32>
    %cst_23 = arith.constant 0.000000e+00 : f32
    %42 = vector.broadcast %cst_23 : f32 to vector<64x64xf32>
    %43 = arith.maximumf %41, %42 : vector<64x64xf32>
    %cst_24 = arith.constant dense<0.000000e+00> : vector<64x32xf32>
    %44 = tpu.matmul %43, %16, %cst_24 {dimension_numbers = #tpu.dot_dimension_numbers<[1], [0], [0], [1], [0, 0, 1, 1], [], []>} : vector<64x64xf32>, vector<64x32xf32>, vector<64x32xf32> -> vector<64x32xf32>
    %45 = vector.broadcast %17 : vector<1x32xf32> to vector<64x32xf32>
    %46 = arith.addf %44, %45 : vector<64x32xf32>
    %c0_25 = arith.constant 0 : index
    %c0_26 = arith.constant 0 : index
    %47 = vector.load %arg10[%c0_25, %c0_26] : memref<3x64xf32, #tpu.memory_space<vmem>>, vector<3x64xf32>
    %c0_27 = arith.constant 0 : index
    %c0_28 = arith.constant 0 : index
    %48 = vector.load %arg11[%c0_27, %c0_28] : memref<1x64xf32, #tpu.memory_space<vmem>>, vector<1x64xf32>
    %c0_29 = arith.constant 0 : index
    %c0_30 = arith.constant 0 : index
    %49 = vector.load %arg12[%c0_29, %c0_30] : memref<64x64xf32, #tpu.memory_space<vmem>>, vector<64x64xf32>
    %c0_31 = arith.constant 0 : index
    %c0_32 = arith.constant 0 : index
    %50 = vector.load %arg13[%c0_31, %c0_32] : memref<1x64xf32, #tpu.memory_space<vmem>>, vector<1x64xf32>
    %c0_33 = arith.constant 0 : index
    %c0_34 = arith.constant 0 : index
    %51 = vector.load %arg14[%c0_33, %c0_34] : memref<64x32xf32, #tpu.memory_space<vmem>>, vector<64x32xf32>
    %c0_35 = arith.constant 0 : index
    %c0_36 = arith.constant 0 : index
    %52 = vector.load %arg15[%c0_35, %c0_36] : memref<1x32xf32, #tpu.memory_space<vmem>>, vector<1x32xf32>
    %53 = vector.extract_strided_slice %3 {offsets = [0, 0], sizes = [64, 1], strides = [1, 1]} : vector<64x3xf32> to vector<64x1xf32>
    %54 = vector.extract_strided_slice %47 {offsets = [0, 0], sizes = [1, 64], strides = [1, 1]} : vector<3x64xf32> to vector<1x64xf32>
    %55 = vector.broadcast %53 : vector<64x1xf32> to vector<64x64xf32>
    %56 = vector.broadcast %54 : vector<1x64xf32> to vector<64x64xf32>
    %57 = arith.mulf %55, %56 : vector<64x64xf32>
    %58 = vector.extract_strided_slice %3 {offsets = [0, 1], sizes = [64, 1], strides = [1, 1]} : vector<64x3xf32> to vector<64x1xf32>
    %59 = vector.extract_strided_slice %47 {offsets = [1, 0], sizes = [1, 64], strides = [1, 1]} : vector<3x64xf32> to vector<1x64xf32>
    %60 = vector.broadcast %58 : vector<64x1xf32> to vector<64x64xf32>
    %61 = vector.broadcast %59 : vector<1x64xf32> to vector<64x64xf32>
    %62 = arith.mulf %60, %61 : vector<64x64xf32>
    %63 = arith.addf %57, %62 : vector<64x64xf32>
    %64 = vector.extract_strided_slice %3 {offsets = [0, 2], sizes = [64, 1], strides = [1, 1]} : vector<64x3xf32> to vector<64x1xf32>
    %65 = vector.extract_strided_slice %47 {offsets = [2, 0], sizes = [1, 64], strides = [1, 1]} : vector<3x64xf32> to vector<1x64xf32>
    %66 = vector.broadcast %64 : vector<64x1xf32> to vector<64x64xf32>
    %67 = vector.broadcast %65 : vector<1x64xf32> to vector<64x64xf32>
    %68 = arith.mulf %66, %67 : vector<64x64xf32>
    %69 = arith.addf %63, %68 : vector<64x64xf32>
    %70 = vector.broadcast %48 : vector<1x64xf32> to vector<64x64xf32>
    %71 = arith.addf %69, %70 : vector<64x64xf32>
    %cst_37 = arith.constant 0.000000e+00 : f32
    %72 = vector.broadcast %cst_37 : f32 to vector<64x64xf32>
    %73 = arith.maximumf %71, %72 : vector<64x64xf32>
    %cst_38 = arith.constant dense<0.000000e+00> : vector<64x64xf32>
    %74 = tpu.matmul %73, %49, %cst_38 {dimension_numbers = #tpu.dot_dimension_numbers<[1], [0], [0], [1], [0, 0, 1, 1], [], []>} : vector<64x64xf32>, vector<64x64xf32>, vector<64x64xf32> -> vector<64x64xf32>
    %75 = vector.broadcast %50 : vector<1x64xf32> to vector<64x64xf32>
    %76 = arith.addf %74, %75 : vector<64x64xf32>
    %cst_39 = arith.constant 0.000000e+00 : f32
    %77 = vector.broadcast %cst_39 : f32 to vector<64x64xf32>
    %78 = arith.maximumf %76, %77 : vector<64x64xf32>
    %cst_40 = arith.constant dense<0.000000e+00> : vector<64x32xf32>
    %79 = tpu.matmul %78, %51, %cst_40 {dimension_numbers = #tpu.dot_dimension_numbers<[1], [0], [0], [1], [0, 0, 1, 1], [], []>} : vector<64x64xf32>, vector<64x32xf32>, vector<64x32xf32> -> vector<64x32xf32>
    %80 = vector.broadcast %52 : vector<1x32xf32> to vector<64x32xf32>
    %81 = arith.addf %79, %80 : vector<64x32xf32>
    %82 = vector.shape_cast %5 : vector<1x32xf32> to vector<1x32xf32>
    %83 = vector.broadcast %82 : vector<1x32xf32> to vector<64x32xf32>
    %84 = tpu.concatenate %46, %83 in 1 : vector<64x32xf32>, vector<64x32xf32> -> vector<64x64xf32>
    %85 = tpu.concatenate %81, %83 in 1 : vector<64x32xf32>, vector<64x32xf32> -> vector<64x64xf32>
    %c0_41 = arith.constant 0 : index
    %c0_42 = arith.constant 0 : index
    %86 = vector.load %arg16[%c0_41, %c0_42] : memref<64x64xf32, #tpu.memory_space<vmem>>, vector<64x64xf32>
    %c0_43 = arith.constant 0 : index
    %c0_44 = arith.constant 0 : index
    %87 = vector.load %arg17[%c0_43, %c0_44] : memref<64x128xf32, #tpu.memory_space<vmem>>, vector<64x128xf32>
    %c0_45 = arith.constant 0 : index
    %c0_46 = arith.constant 0 : index
    %88 = vector.load %arg18[%c0_45, %c0_46] : memref<64x64xf32, #tpu.memory_space<vmem>>, vector<64x64xf32>
    %c0_47 = arith.constant 0 : index
    %c0_48 = arith.constant 0 : index
    %89 = vector.load %arg19[%c0_47, %c0_48] : memref<64x128xf32, #tpu.memory_space<vmem>>, vector<64x128xf32>
    %c0_49 = arith.constant 0 : index
    %c0_50 = arith.constant 0 : index
    %90 = vector.load %arg20[%c0_49, %c0_50] : memref<1x128xf32, #tpu.memory_space<vmem>>, vector<1x128xf32>
    %c0_51 = arith.constant 0 : index
    %c0_52 = arith.constant 0 : index
    %91 = vector.load %arg21[%c0_51, %c0_52] : memref<128x64xf32, #tpu.memory_space<vmem>>, vector<128x64xf32>
    %c0_53 = arith.constant 0 : index
    %c0_54 = arith.constant 0 : index
    %92 = vector.load %arg22[%c0_53, %c0_54] : memref<1x64xf32, #tpu.memory_space<vmem>>, vector<1x64xf32>
    %cst_55 = arith.constant dense<0.000000e+00> : vector<64x64xf32>
    %93 = tpu.matmul %84, %86, %cst_55 {dimension_numbers = #tpu.dot_dimension_numbers<[1], [0], [0], [1], [0, 0, 1, 1], [], []>} : vector<64x64xf32>, vector<64x64xf32>, vector<64x64xf32> -> vector<64x64xf32>
    %cst_56 = arith.constant dense<0.000000e+00> : vector<64x128xf32>
    %94 = tpu.matmul %85, %87, %cst_56 {dimension_numbers = #tpu.dot_dimension_numbers<[1], [0], [0], [1], [0, 0, 1, 1], [], []>} : vector<64x64xf32>, vector<64x128xf32>, vector<64x128xf32> -> vector<64x128xf32>
    %95 = vector.extract_strided_slice %94 {offsets = [0, 0], sizes = [64, 64], strides = [1, 1]} : vector<64x128xf32> to vector<64x64xf32>
    %96 = vector.extract_strided_slice %94 {offsets = [0, 64], sizes = [64, 64], strides = [1, 1]} : vector<64x128xf32> to vector<64x64xf32>
    %cst_57 = arith.constant dense<0.000000e+00> : vector<64x64xf32>
    %97 = tpu.matmul %93, %95, %cst_57 {dimension_numbers = #tpu.dot_dimension_numbers<[1], [1], [0], [0], [0, 0, 1, 0], [], []>} : vector<64x64xf32>, vector<64x64xf32>, vector<64x64xf32> -> vector<64x64xf32>
    %cst_58 = arith.constant 1.250000e-01 : f32
    %98 = vector.broadcast %cst_58 : f32 to vector<64x64xf32>
    %99 = arith.mulf %97, %98 : vector<64x64xf32>
    %cst_59 = arith.constant dense<0xFF800000> : vector<64xf32>
    %100 = vector.multi_reduction <maximumf>, %99, %cst_59 [1] : vector<64x64xf32> to vector<64xf32>
    %101 = vector.shape_cast %100 : vector<64xf32> to vector<64x1xf32>
    %102 = vector.broadcast %101 : vector<64x1xf32> to vector<64x64xf32>
    %103 = arith.subf %99, %102 : vector<64x64xf32>
    %104 = math.exp %103 : vector<64x64xf32>
    %cst_60 = arith.constant dense<0.000000e+00> : vector<64xf32>
    %105 = vector.multi_reduction <add>, %104, %cst_60 [1] : vector<64x64xf32> to vector<64xf32>
    %106 = vector.shape_cast %105 : vector<64xf32> to vector<64x1xf32>
    %107 = tpu.reciprocal %106 {approx = true} : vector<64x1xf32> -> vector<64x1xf32>
    %108 = vector.broadcast %107 : vector<64x1xf32> to vector<64x64xf32>
    %109 = arith.mulf %104, %108 : vector<64x64xf32>
    %cst_61 = arith.constant dense<0.000000e+00> : vector<64x64xf32>
    %110 = tpu.matmul %109, %96, %cst_61 {dimension_numbers = #tpu.dot_dimension_numbers<[1], [0], [0], [1], [0, 0, 1, 1], [], []>} : vector<64x64xf32>, vector<64x64xf32>, vector<64x64xf32> -> vector<64x64xf32>
    %cst_62 = arith.constant dense<0.000000e+00> : vector<64x64xf32>
    %111 = tpu.matmul %110, %88, %cst_62 {dimension_numbers = #tpu.dot_dimension_numbers<[1], [0], [0], [1], [0, 0, 1, 1], [], []>} : vector<64x64xf32>, vector<64x64xf32>, vector<64x64xf32> -> vector<64x64xf32>
    %112 = arith.addf %84, %111 : vector<64x64xf32>
    %cst_63 = arith.constant dense<0.000000e+00> : vector<64x128xf32>
    %113 = tpu.matmul %112, %89, %cst_63 {dimension_numbers = #tpu.dot_dimension_numbers<[1], [0], [0], [1], [0, 0, 1, 1], [], []>} : vector<64x64xf32>, vector<64x128xf32>, vector<64x128xf32> -> vector<64x128xf32>
    %114 = vector.broadcast %90 : vector<1x128xf32> to vector<64x128xf32>
    %115 = arith.addf %113, %114 : vector<64x128xf32>
    %cst_64 = arith.constant 0.000000e+00 : f32
    %116 = vector.broadcast %cst_64 : f32 to vector<64x128xf32>
    %117 = arith.maximumf %115, %116 : vector<64x128xf32>
    %cst_65 = arith.constant dense<0.000000e+00> : vector<64x64xf32>
    %118 = tpu.matmul %117, %91, %cst_65 {dimension_numbers = #tpu.dot_dimension_numbers<[1], [0], [0], [1], [0, 0, 1, 1], [], []>} : vector<64x128xf32>, vector<128x64xf32>, vector<64x64xf32> -> vector<64x64xf32>
    %119 = arith.addf %112, %118 : vector<64x64xf32>
    %120 = vector.broadcast %92 : vector<1x64xf32> to vector<64x64xf32>
    %121 = arith.addf %119, %120 : vector<64x64xf32>
    %c0_66 = arith.constant 0 : index
    %c0_67 = arith.constant 0 : index
    %122 = vector.load %arg23[%c0_66, %c0_67] : memref<64x64xf32, #tpu.memory_space<vmem>>, vector<64x64xf32>
    %c0_68 = arith.constant 0 : index
    %c0_69 = arith.constant 0 : index
    %123 = vector.load %arg24[%c0_68, %c0_69] : memref<64x128xf32, #tpu.memory_space<vmem>>, vector<64x128xf32>
    %c0_70 = arith.constant 0 : index
    %c0_71 = arith.constant 0 : index
    %124 = vector.load %arg25[%c0_70, %c0_71] : memref<64x64xf32, #tpu.memory_space<vmem>>, vector<64x64xf32>
    %c0_72 = arith.constant 0 : index
    %c0_73 = arith.constant 0 : index
    %125 = vector.load %arg26[%c0_72, %c0_73] : memref<64x128xf32, #tpu.memory_space<vmem>>, vector<64x128xf32>
    %c0_74 = arith.constant 0 : index
    %c0_75 = arith.constant 0 : index
    %126 = vector.load %arg27[%c0_74, %c0_75] : memref<1x128xf32, #tpu.memory_space<vmem>>, vector<1x128xf32>
    %c0_76 = arith.constant 0 : index
    %c0_77 = arith.constant 0 : index
    %127 = vector.load %arg28[%c0_76, %c0_77] : memref<128x64xf32, #tpu.memory_space<vmem>>, vector<128x64xf32>
    %c0_78 = arith.constant 0 : index
    %c0_79 = arith.constant 0 : index
    %128 = vector.load %arg29[%c0_78, %c0_79] : memref<1x64xf32, #tpu.memory_space<vmem>>, vector<1x64xf32>
    %cst_80 = arith.constant dense<0.000000e+00> : vector<64x64xf32>
    %129 = tpu.matmul %121, %122, %cst_80 {dimension_numbers = #tpu.dot_dimension_numbers<[1], [0], [0], [1], [0, 0, 1, 1], [], []>} : vector<64x64xf32>, vector<64x64xf32>, vector<64x64xf32> -> vector<64x64xf32>
    %cst_81 = arith.constant dense<0.000000e+00> : vector<64x128xf32>
    %130 = tpu.matmul %85, %123, %cst_81 {dimension_numbers = #tpu.dot_dimension_numbers<[1], [0], [0], [1], [0, 0, 1, 1], [], []>} : vector<64x64xf32>, vector<64x128xf32>, vector<64x128xf32> -> vector<64x128xf32>
    %131 = vector.extract_strided_slice %130 {offsets = [0, 0], sizes = [64, 64], strides = [1, 1]} : vector<64x128xf32> to vector<64x64xf32>
    %132 = vector.extract_strided_slice %130 {offsets = [0, 64], sizes = [64, 64], strides = [1, 1]} : vector<64x128xf32> to vector<64x64xf32>
    %cst_82 = arith.constant dense<0.000000e+00> : vector<64x64xf32>
    %133 = tpu.matmul %129, %131, %cst_82 {dimension_numbers = #tpu.dot_dimension_numbers<[1], [1], [0], [0], [0, 0, 1, 0], [], []>} : vector<64x64xf32>, vector<64x64xf32>, vector<64x64xf32> -> vector<64x64xf32>
    %cst_83 = arith.constant 1.250000e-01 : f32
    %134 = vector.broadcast %cst_83 : f32 to vector<64x64xf32>
    %135 = arith.mulf %133, %134 : vector<64x64xf32>
    %cst_84 = arith.constant dense<0xFF800000> : vector<64xf32>
    %136 = vector.multi_reduction <maximumf>, %135, %cst_84 [1] : vector<64x64xf32> to vector<64xf32>
    %137 = vector.shape_cast %136 : vector<64xf32> to vector<64x1xf32>
    %138 = vector.broadcast %137 : vector<64x1xf32> to vector<64x64xf32>
    %139 = arith.subf %135, %138 : vector<64x64xf32>
    %140 = math.exp %139 : vector<64x64xf32>
    %cst_85 = arith.constant dense<0.000000e+00> : vector<64xf32>
    %141 = vector.multi_reduction <add>, %140, %cst_85 [1] : vector<64x64xf32> to vector<64xf32>
    %142 = vector.shape_cast %141 : vector<64xf32> to vector<64x1xf32>
    %143 = tpu.reciprocal %142 {approx = true} : vector<64x1xf32> -> vector<64x1xf32>
    %144 = vector.broadcast %143 : vector<64x1xf32> to vector<64x64xf32>
    %145 = arith.mulf %140, %144 : vector<64x64xf32>
    %cst_86 = arith.constant dense<0.000000e+00> : vector<64x64xf32>
    %146 = tpu.matmul %145, %132, %cst_86 {dimension_numbers = #tpu.dot_dimension_numbers<[1], [0], [0], [1], [0, 0, 1, 1], [], []>} : vector<64x64xf32>, vector<64x64xf32>, vector<64x64xf32> -> vector<64x64xf32>
    %cst_87 = arith.constant dense<0.000000e+00> : vector<64x64xf32>
    %147 = tpu.matmul %146, %124, %cst_87 {dimension_numbers = #tpu.dot_dimension_numbers<[1], [0], [0], [1], [0, 0, 1, 1], [], []>} : vector<64x64xf32>, vector<64x64xf32>, vector<64x64xf32> -> vector<64x64xf32>
    %148 = arith.addf %121, %147 : vector<64x64xf32>
    %cst_88 = arith.constant dense<0.000000e+00> : vector<64x128xf32>
    %149 = tpu.matmul %148, %125, %cst_88 {dimension_numbers = #tpu.dot_dimension_numbers<[1], [0], [0], [1], [0, 0, 1, 1], [], []>} : vector<64x64xf32>, vector<64x128xf32>, vector<64x128xf32> -> vector<64x128xf32>
    %150 = vector.broadcast %126 : vector<1x128xf32> to vector<64x128xf32>
    %151 = arith.addf %149, %150 : vector<64x128xf32>
    %cst_89 = arith.constant 0.000000e+00 : f32
    %152 = vector.broadcast %cst_89 : f32 to vector<64x128xf32>
    %153 = arith.maximumf %151, %152 : vector<64x128xf32>
    %cst_90 = arith.constant dense<0.000000e+00> : vector<64x64xf32>
    %154 = tpu.matmul %153, %127, %cst_90 {dimension_numbers = #tpu.dot_dimension_numbers<[1], [0], [0], [1], [0, 0, 1, 1], [], []>} : vector<64x128xf32>, vector<128x64xf32>, vector<64x64xf32> -> vector<64x64xf32>
    %155 = arith.addf %148, %154 : vector<64x64xf32>
    %156 = vector.broadcast %128 : vector<1x64xf32> to vector<64x64xf32>
    %157 = arith.addf %155, %156 : vector<64x64xf32>
    %158 = arith.addf %84, %157 : vector<64x64xf32>
    %c0_91 = arith.constant 0 : index
    %c0_92 = arith.constant 0 : index
    %159 = vector.load %arg30[%c0_91, %c0_92] : memref<64x64xf32, #tpu.memory_space<vmem>>, vector<64x64xf32>
    %c0_93 = arith.constant 0 : index
    %c0_94 = arith.constant 0 : index
    %160 = vector.load %arg31[%c0_93, %c0_94] : memref<64x128xf32, #tpu.memory_space<vmem>>, vector<64x128xf32>
    %c0_95 = arith.constant 0 : index
    %c0_96 = arith.constant 0 : index
    %161 = vector.load %arg32[%c0_95, %c0_96] : memref<64x64xf32, #tpu.memory_space<vmem>>, vector<64x64xf32>
    %c0_97 = arith.constant 0 : index
    %c0_98 = arith.constant 0 : index
    %162 = vector.load %arg33[%c0_97, %c0_98] : memref<64x128xf32, #tpu.memory_space<vmem>>, vector<64x128xf32>
    %c0_99 = arith.constant 0 : index
    %c0_100 = arith.constant 0 : index
    %163 = vector.load %arg34[%c0_99, %c0_100] : memref<1x128xf32, #tpu.memory_space<vmem>>, vector<1x128xf32>
    %c0_101 = arith.constant 0 : index
    %c0_102 = arith.constant 0 : index
    %164 = vector.load %arg35[%c0_101, %c0_102] : memref<128x64xf32, #tpu.memory_space<vmem>>, vector<128x64xf32>
    %c0_103 = arith.constant 0 : index
    %c0_104 = arith.constant 0 : index
    %165 = vector.load %arg36[%c0_103, %c0_104] : memref<1x64xf32, #tpu.memory_space<vmem>>, vector<1x64xf32>
    %cst_105 = arith.constant dense<0.000000e+00> : vector<64x64xf32>
    %166 = tpu.matmul %85, %159, %cst_105 {dimension_numbers = #tpu.dot_dimension_numbers<[1], [0], [0], [1], [0, 0, 1, 1], [], []>} : vector<64x64xf32>, vector<64x64xf32>, vector<64x64xf32> -> vector<64x64xf32>
    %cst_106 = arith.constant dense<0.000000e+00> : vector<64x128xf32>
    %167 = tpu.matmul %84, %160, %cst_106 {dimension_numbers = #tpu.dot_dimension_numbers<[1], [0], [0], [1], [0, 0, 1, 1], [], []>} : vector<64x64xf32>, vector<64x128xf32>, vector<64x128xf32> -> vector<64x128xf32>
    %168 = vector.extract_strided_slice %167 {offsets = [0, 0], sizes = [64, 64], strides = [1, 1]} : vector<64x128xf32> to vector<64x64xf32>
    %169 = vector.extract_strided_slice %167 {offsets = [0, 64], sizes = [64, 64], strides = [1, 1]} : vector<64x128xf32> to vector<64x64xf32>
    %cst_107 = arith.constant dense<0.000000e+00> : vector<64x64xf32>
    %170 = tpu.matmul %166, %168, %cst_107 {dimension_numbers = #tpu.dot_dimension_numbers<[1], [1], [0], [0], [0, 0, 1, 0], [], []>} : vector<64x64xf32>, vector<64x64xf32>, vector<64x64xf32> -> vector<64x64xf32>
    %cst_108 = arith.constant 1.250000e-01 : f32
    %171 = vector.broadcast %cst_108 : f32 to vector<64x64xf32>
    %172 = arith.mulf %170, %171 : vector<64x64xf32>
    %cst_109 = arith.constant dense<0xFF800000> : vector<64xf32>
    %173 = vector.multi_reduction <maximumf>, %172, %cst_109 [1] : vector<64x64xf32> to vector<64xf32>
    %174 = vector.shape_cast %173 : vector<64xf32> to vector<64x1xf32>
    %175 = vector.broadcast %174 : vector<64x1xf32> to vector<64x64xf32>
    %176 = arith.subf %172, %175 : vector<64x64xf32>
    %177 = math.exp %176 : vector<64x64xf32>
    %cst_110 = arith.constant dense<0.000000e+00> : vector<64xf32>
    %178 = vector.multi_reduction <add>, %177, %cst_110 [1] : vector<64x64xf32> to vector<64xf32>
    %179 = vector.shape_cast %178 : vector<64xf32> to vector<64x1xf32>
    %180 = tpu.reciprocal %179 {approx = true} : vector<64x1xf32> -> vector<64x1xf32>
    %181 = vector.broadcast %180 : vector<64x1xf32> to vector<64x64xf32>
    %182 = arith.mulf %177, %181 : vector<64x64xf32>
    %cst_111 = arith.constant dense<0.000000e+00> : vector<64x64xf32>
    %183 = tpu.matmul %182, %169, %cst_111 {dimension_numbers = #tpu.dot_dimension_numbers<[1], [0], [0], [1], [0, 0, 1, 1], [], []>} : vector<64x64xf32>, vector<64x64xf32>, vector<64x64xf32> -> vector<64x64xf32>
    %cst_112 = arith.constant dense<0.000000e+00> : vector<64x64xf32>
    %184 = tpu.matmul %183, %161, %cst_112 {dimension_numbers = #tpu.dot_dimension_numbers<[1], [0], [0], [1], [0, 0, 1, 1], [], []>} : vector<64x64xf32>, vector<64x64xf32>, vector<64x64xf32> -> vector<64x64xf32>
    %185 = arith.addf %85, %184 : vector<64x64xf32>
    %cst_113 = arith.constant dense<0.000000e+00> : vector<64x128xf32>
    %186 = tpu.matmul %185, %162, %cst_113 {dimension_numbers = #tpu.dot_dimension_numbers<[1], [0], [0], [1], [0, 0, 1, 1], [], []>} : vector<64x64xf32>, vector<64x128xf32>, vector<64x128xf32> -> vector<64x128xf32>
    %187 = vector.broadcast %163 : vector<1x128xf32> to vector<64x128xf32>
    %188 = arith.addf %186, %187 : vector<64x128xf32>
    %cst_114 = arith.constant 0.000000e+00 : f32
    %189 = vector.broadcast %cst_114 : f32 to vector<64x128xf32>
    %190 = arith.maximumf %188, %189 : vector<64x128xf32>
    %cst_115 = arith.constant dense<0.000000e+00> : vector<64x64xf32>
    %191 = tpu.matmul %190, %164, %cst_115 {dimension_numbers = #tpu.dot_dimension_numbers<[1], [0], [0], [1], [0, 0, 1, 1], [], []>} : vector<64x128xf32>, vector<128x64xf32>, vector<64x64xf32> -> vector<64x64xf32>
    %192 = arith.addf %185, %191 : vector<64x64xf32>
    %193 = vector.broadcast %165 : vector<1x64xf32> to vector<64x64xf32>
    %194 = arith.addf %192, %193 : vector<64x64xf32>
    %c0_116 = arith.constant 0 : index
    %c0_117 = arith.constant 0 : index
    %195 = vector.load %arg37[%c0_116, %c0_117] : memref<64x64xf32, #tpu.memory_space<vmem>>, vector<64x64xf32>
    %c0_118 = arith.constant 0 : index
    %c0_119 = arith.constant 0 : index
    %196 = vector.load %arg38[%c0_118, %c0_119] : memref<64x128xf32, #tpu.memory_space<vmem>>, vector<64x128xf32>
    %c0_120 = arith.constant 0 : index
    %c0_121 = arith.constant 0 : index
    %197 = vector.load %arg39[%c0_120, %c0_121] : memref<64x64xf32, #tpu.memory_space<vmem>>, vector<64x64xf32>
    %c0_122 = arith.constant 0 : index
    %c0_123 = arith.constant 0 : index
    %198 = vector.load %arg40[%c0_122, %c0_123] : memref<64x128xf32, #tpu.memory_space<vmem>>, vector<64x128xf32>
    %c0_124 = arith.constant 0 : index
    %c0_125 = arith.constant 0 : index
    %199 = vector.load %arg41[%c0_124, %c0_125] : memref<1x128xf32, #tpu.memory_space<vmem>>, vector<1x128xf32>
    %c0_126 = arith.constant 0 : index
    %c0_127 = arith.constant 0 : index
    %200 = vector.load %arg42[%c0_126, %c0_127] : memref<128x64xf32, #tpu.memory_space<vmem>>, vector<128x64xf32>
    %c0_128 = arith.constant 0 : index
    %c0_129 = arith.constant 0 : index
    %201 = vector.load %arg43[%c0_128, %c0_129] : memref<1x64xf32, #tpu.memory_space<vmem>>, vector<1x64xf32>
    %cst_130 = arith.constant dense<0.000000e+00> : vector<64x64xf32>
    %202 = tpu.matmul %194, %195, %cst_130 {dimension_numbers = #tpu.dot_dimension_numbers<[1], [0], [0], [1], [0, 0, 1, 1], [], []>} : vector<64x64xf32>, vector<64x64xf32>, vector<64x64xf32> -> vector<64x64xf32>
    %cst_131 = arith.constant dense<0.000000e+00> : vector<64x128xf32>
    %203 = tpu.matmul %84, %196, %cst_131 {dimension_numbers = #tpu.dot_dimension_numbers<[1], [0], [0], [1], [0, 0, 1, 1], [], []>} : vector<64x64xf32>, vector<64x128xf32>, vector<64x128xf32> -> vector<64x128xf32>
    %204 = vector.extract_strided_slice %203 {offsets = [0, 0], sizes = [64, 64], strides = [1, 1]} : vector<64x128xf32> to vector<64x64xf32>
    %205 = vector.extract_strided_slice %203 {offsets = [0, 64], sizes = [64, 64], strides = [1, 1]} : vector<64x128xf32> to vector<64x64xf32>
    %cst_132 = arith.constant dense<0.000000e+00> : vector<64x64xf32>
    %206 = tpu.matmul %202, %204, %cst_132 {dimension_numbers = #tpu.dot_dimension_numbers<[1], [1], [0], [0], [0, 0, 1, 0], [], []>} : vector<64x64xf32>, vector<64x64xf32>, vector<64x64xf32> -> vector<64x64xf32>
    %cst_133 = arith.constant 1.250000e-01 : f32
    %207 = vector.broadcast %cst_133 : f32 to vector<64x64xf32>
    %208 = arith.mulf %206, %207 : vector<64x64xf32>
    %cst_134 = arith.constant dense<0xFF800000> : vector<64xf32>
    %209 = vector.multi_reduction <maximumf>, %208, %cst_134 [1] : vector<64x64xf32> to vector<64xf32>
    %210 = vector.shape_cast %209 : vector<64xf32> to vector<64x1xf32>
    %211 = vector.broadcast %210 : vector<64x1xf32> to vector<64x64xf32>
    %212 = arith.subf %208, %211 : vector<64x64xf32>
    %213 = math.exp %212 : vector<64x64xf32>
    %cst_135 = arith.constant dense<0.000000e+00> : vector<64xf32>
    %214 = vector.multi_reduction <add>, %213, %cst_135 [1] : vector<64x64xf32> to vector<64xf32>
    %215 = vector.shape_cast %214 : vector<64xf32> to vector<64x1xf32>
    %216 = tpu.reciprocal %215 {approx = true} : vector<64x1xf32> -> vector<64x1xf32>
    %217 = vector.broadcast %216 : vector<64x1xf32> to vector<64x64xf32>
    %218 = arith.mulf %213, %217 : vector<64x64xf32>
    %cst_136 = arith.constant dense<0.000000e+00> : vector<64x64xf32>
    %219 = tpu.matmul %218, %205, %cst_136 {dimension_numbers = #tpu.dot_dimension_numbers<[1], [0], [0], [1], [0, 0, 1, 1], [], []>} : vector<64x64xf32>, vector<64x64xf32>, vector<64x64xf32> -> vector<64x64xf32>
    %cst_137 = arith.constant dense<0.000000e+00> : vector<64x64xf32>
    %220 = tpu.matmul %219, %197, %cst_137 {dimension_numbers = #tpu.dot_dimension_numbers<[1], [0], [0], [1], [0, 0, 1, 1], [], []>} : vector<64x64xf32>, vector<64x64xf32>, vector<64x64xf32> -> vector<64x64xf32>
    %221 = arith.addf %194, %220 : vector<64x64xf32>
    %cst_138 = arith.constant dense<0.000000e+00> : vector<64x128xf32>
    %222 = tpu.matmul %221, %198, %cst_138 {dimension_numbers = #tpu.dot_dimension_numbers<[1], [0], [0], [1], [0, 0, 1, 1], [], []>} : vector<64x64xf32>, vector<64x128xf32>, vector<64x128xf32> -> vector<64x128xf32>
    %223 = vector.broadcast %199 : vector<1x128xf32> to vector<64x128xf32>
    %224 = arith.addf %222, %223 : vector<64x128xf32>
    %cst_139 = arith.constant 0.000000e+00 : f32
    %225 = vector.broadcast %cst_139 : f32 to vector<64x128xf32>
    %226 = arith.maximumf %224, %225 : vector<64x128xf32>
    %cst_140 = arith.constant dense<0.000000e+00> : vector<64x64xf32>
    %227 = tpu.matmul %226, %200, %cst_140 {dimension_numbers = #tpu.dot_dimension_numbers<[1], [0], [0], [1], [0, 0, 1, 1], [], []>} : vector<64x128xf32>, vector<128x64xf32>, vector<64x64xf32> -> vector<64x64xf32>
    %228 = arith.addf %221, %227 : vector<64x64xf32>
    %229 = vector.broadcast %201 : vector<1x64xf32> to vector<64x64xf32>
    %230 = arith.addf %228, %229 : vector<64x64xf32>
    %231 = arith.addf %85, %230 : vector<64x64xf32>
    %c0_141 = arith.constant 0 : index
    %c0_142 = arith.constant 0 : index
    %232 = vector.load %arg44[%c0_141, %c0_142] : memref<64x64xf32, #tpu.memory_space<vmem>>, vector<64x64xf32>
    %c0_143 = arith.constant 0 : index
    %c0_144 = arith.constant 0 : index
    %233 = vector.load %arg45[%c0_143, %c0_144] : memref<64x64xf32, #tpu.memory_space<vmem>>, vector<64x64xf32>
    %c0_145 = arith.constant 0 : index
    %c0_146 = arith.constant 0 : index
    %234 = vector.load %arg46[%c0_145, %c0_146] : memref<1x64xf32, #tpu.memory_space<vmem>>, vector<1x64xf32>
    %c0_147 = arith.constant 0 : index
    %c0_148 = arith.constant 0 : index
    %235 = vector.load %arg47[%c0_147, %c0_148] : memref<64x64xf32, #tpu.memory_space<vmem>>, vector<64x64xf32>
    %c0_149 = arith.constant 0 : index
    %c0_150 = arith.constant 0 : index
    %236 = vector.load %arg48[%c0_149, %c0_150] : memref<1x64xf32, #tpu.memory_space<vmem>>, vector<1x64xf32>
    %c0_151 = arith.constant 0 : index
    %c0_152 = arith.constant 0 : index
    %237 = vector.load %arg49[%c0_151, %c0_152] : memref<1x64xf32, #tpu.memory_space<vmem>>, vector<1x64xf32>
    %c0_153 = arith.constant 0 : index
    %c0_154 = arith.constant 0 : index
    %238 = vector.load %arg50[%c0_153, %c0_154] : memref<1x1xf32, #tpu.memory_space<vmem>>, vector<1x1xf32>
    %cst_155 = arith.constant dense<0.000000e+00> : vector<64x64xf32>
    %239 = tpu.matmul %158, %232, %cst_155 {dimension_numbers = #tpu.dot_dimension_numbers<[1], [0], [0], [1], [0, 0, 1, 1], [], []>} : vector<64x64xf32>, vector<64x64xf32>, vector<64x64xf32> -> vector<64x64xf32>
    %c0_156 = arith.constant 0 : index
    %c0_157 = arith.constant 0 : index
    %240 = vector.load %arg52[%c0_156, %c0_157] : memref<64x64xf32, #tpu.memory_space<vmem>>, vector<64x64xf32>
    tpu.vector_store %arg52[%c0_156, %c0_157], %239 {strides = array<i32>} : memref<64x64xf32, #tpu.memory_space<vmem>>, vector<64x64xf32>,
    %cst_158 = arith.constant dense<0.000000e+00> : vector<64x64xf32>
    %241 = tpu.matmul %231, %233, %cst_158 {dimension_numbers = #tpu.dot_dimension_numbers<[1], [0], [0], [1], [0, 0, 1, 1], [], []>} : vector<64x64xf32>, vector<64x64xf32>, vector<64x64xf32> -> vector<64x64xf32>
    %242 = vector.broadcast %234 : vector<1x64xf32> to vector<64x64xf32>
    %243 = arith.addf %241, %242 : vector<64x64xf32>
    %244 = vector.shape_cast %243 : vector<64x64xf32> to vector<1x64x64xf32>
    %245 = arith.truncf %235 : vector<64x64xf32> to vector<64x64xbf16>
    %c0_i32 = arith.constant 0 : i32
    %c8_i32 = arith.constant 8 : i32
    %246 = arith.addi %c0_i32, %c8_i32 : i32
    %c1_i32 = arith.constant 1 : i32
    scf.for %arg53 = %c0_i32 to %246 step %c1_i32  : i32 {
      %c8_i32_160 = arith.constant 8 : i32
      %247 = arith.muli %arg53, %c8_i32_160 : i32
      %248 = tpu.assume_multiple %247, 8 : i32
      %249 = arith.index_cast %248 : i32 to index
      %c0_161 = arith.constant 0 : index
      %250 = vector.load %arg52[%249, %c0_161] : memref<64x64xf32, #tpu.memory_space<vmem>>, vector<8x64xf32>
      %251 = vector.shape_cast %250 : vector<8x64xf32> to vector<8x1x64xf32>
      %252 = vector.broadcast %251 : vector<8x1x64xf32> to vector<8x64x64xf32>
      %253 = vector.broadcast %244 : vector<1x64x64xf32> to vector<8x64x64xf32>
      %254 = arith.addf %252, %253 : vector<8x64x64xf32>
      %cst_162 = arith.constant 0.000000e+00 : f32
      %255 = vector.broadcast %cst_162 : f32 to vector<8x64x64xf32>
      %256 = arith.maximumf %254, %255 : vector<8x64x64xf32>
      %257 = vector.shape_cast %256 : vector<8x64x64xf32> to vector<512x64xf32>
      %258 = arith.truncf %257 : vector<512x64xf32> to vector<512x64xbf16>
      %cst_163 = arith.constant dense<0.000000e+00> : vector<512x64xf32>
      %259 = tpu.matmul %258, %245, %cst_163 {dimension_numbers = #tpu.dot_dimension_numbers<[1], [0], [0], [1], [0, 0, 1, 1], [], []>} : vector<512x64xbf16>, vector<64x64xbf16>, vector<512x64xf32> -> vector<512x64xf32>
      %260 = vector.broadcast %236 : vector<1x64xf32> to vector<512x64xf32>
      %261 = arith.addf %259, %260 : vector<512x64xf32>
      %cst_164 = arith.constant 0.000000e+00 : f32
      %262 = vector.broadcast %cst_164 : f32 to vector<512x64xf32>
      %263 = arith.maximumf %261, %262 : vector<512x64xf32>
      %cst_165 = arith.constant dense<0.000000e+00> : vector<1x512xf32>
      %264 = tpu.matmul %237, %263, %cst_165 {dimension_numbers = #tpu.dot_dimension_numbers<[1], [1], [0], [0], [0, 0, 1, 0], [], []>} : vector<1x64xf32>, vector<512x64xf32>, vector<1x512xf32> -> vector<1x512xf32>
      %265 = vector.broadcast %238 : vector<1x1xf32> to vector<1x512xf32>
      %266 = arith.addf %264, %265 : vector<1x512xf32>
      %c512_i32 = arith.constant 512 : i32
      %267 = arith.muli %arg53, %c512_i32 : i32
      %268 = tpu.assume_multiple %267, 512 : i32
      %c0_166 = arith.constant 0 : index
      %c0_167 = arith.constant 0 : index
      %269 = arith.index_cast %268 : i32 to index
      %270 = vector.load %arg51[%c0_166, %c0_167, %269] : memref<1x1x4096xf32, #tpu.memory_space<vmem>>, vector<1x1x512xf32>
      %271 = vector.shape_cast %270 : vector<1x1x512xf32> to vector<1x512xf32>
      %272 = vector.shape_cast %266 : vector<1x512xf32> to vector<1x1x512xf32>
      tpu.vector_store %arg51[%c0_166, %c0_167, %269], %272 {strides = array<i32>} : memref<1x1x4096xf32, #tpu.memory_space<vmem>>, vector<1x1x512xf32>,
    }
    %c8_i32_159 = arith.constant 8 : i32
    return
  }
  func.func @transform_0(%arg0: i32) -> (i32, i32, i32) {
    %c0_i32 = arith.constant 0 : i32
    %c0_i32_0 = arith.constant 0 : i32
    %c0_i32_1 = arith.constant 0 : i32
    return %arg0, %c0_i32, %c0_i32_0 : i32, i32, i32
  }
  func.func @transform_1(%arg0: i32) -> (i32, i32, i32) {
    %c0_i32 = arith.constant 0 : i32
    %c0_i32_0 = arith.constant 0 : i32
    %c0_i32_1 = arith.constant 0 : i32
    return %arg0, %c0_i32, %c0_i32_0 : i32, i32, i32
  }
  func.func @transform_2(%arg0: i32) -> (i32, i32, i32) {
    %c0_i32 = arith.constant 0 : i32
    %c0_i32_0 = arith.constant 0 : i32
    %c0_i32_1 = arith.constant 0 : i32
    return %arg0, %c0_i32, %c0_i32_0 : i32, i32, i32
  }
  func.func @transform_3(%arg0: i32) -> (i32, i32) {
    %c0_i32 = arith.constant 0 : i32
    %c0_i32_0 = arith.constant 0 : i32
    %c0_i32_1 = arith.constant 0 : i32
    return %c0_i32, %c0_i32_0 : i32, i32
  }
  func.func @transform_4(%arg0: i32) -> (i32, i32) {
    %c0_i32 = arith.constant 0 : i32
    %c0_i32_0 = arith.constant 0 : i32
    %c0_i32_1 = arith.constant 0 : i32
    return %c0_i32, %c0_i32_0 : i32, i32
  }
  func.func @transform_5(%arg0: i32) -> (i32, i32) {
    %c0_i32 = arith.constant 0 : i32
    %c0_i32_0 = arith.constant 0 : i32
    %c0_i32_1 = arith.constant 0 : i32
    return %c0_i32, %c0_i32_0 : i32, i32
  }
  func.func @transform_6(%arg0: i32) -> (i32, i32) {
    %c0_i32 = arith.constant 0 : i32
    %c0_i32_0 = arith.constant 0 : i32
    %c0_i32_1 = arith.constant 0 : i32
    return %c0_i32, %c0_i32_0 : i32, i32
  }
  func.func @transform_7(%arg0: i32) -> (i32, i32) {
    %c0_i32 = arith.constant 0 : i32
    %c0_i32_0 = arith.constant 0 : i32
    %c0_i32_1 = arith.constant 0 : i32
    return %c0_i32, %c0_i32_0 : i32, i32
  }
  func.func @transform_8(%arg0: i32) -> (i32, i32) {
    %c0_i32 = arith.constant 0 : i32
    %c0_i32_0 = arith.constant 0 : i32
    %c0_i32_1 = arith.constant 0 : i32
    return %c0_i32, %c0_i32_0 : i32, i32
  }
  func.func @transform_9(%arg0: i32) -> (i32, i32) {
    %c0_i32 = arith.constant 0 : i32
    %c0_i32_0 = arith.constant 0 : i32
    %c0_i32_1 = arith.constant 0 : i32
    return %c0_i32, %c0_i32_0 : i32, i32
  }
  func.func @transform_10(%arg0: i32) -> (i32, i32) {
    %c0_i32 = arith.constant 0 : i32
    %c0_i32_0 = arith.constant 0 : i32
    %c0_i32_1 = arith.constant 0 : i32
    return %c0_i32, %c0_i32_0 : i32, i32
  }
  func.func @transform_11(%arg0: i32) -> (i32, i32) {
    %c0_i32 = arith.constant 0 : i32
    %c0_i32_0 = arith.constant 0 : i32
    %c0_i32_1 = arith.constant 0 : i32
    return %c0_i32, %c0_i32_0 : i32, i32
  }
  func.func @transform_12(%arg0: i32) -> (i32, i32) {
    %c0_i32 = arith.constant 0 : i32
    %c0_i32_0 = arith.constant 0 : i32
    %c0_i32_1 = arith.constant 0 : i32
    return %c0_i32, %c0_i32_0 : i32, i32
  }
  func.func @transform_13(%arg0: i32) -> (i32, i32) {
    %c0_i32 = arith.constant 0 : i32
    %c0_i32_0 = arith.constant 0 : i32
    %c0_i32_1 = arith.constant 0 : i32
    return %c0_i32, %c0_i32_0 : i32, i32
  }
  func.func @transform_14(%arg0: i32) -> (i32, i32) {
    %c0_i32 = arith.constant 0 : i32
    %c0_i32_0 = arith.constant 0 : i32
    %c0_i32_1 = arith.constant 0 : i32
    return %c0_i32, %c0_i32_0 : i32, i32
  }
  func.func @transform_15(%arg0: i32) -> (i32, i32) {
    %c0_i32 = arith.constant 0 : i32
    %c0_i32_0 = arith.constant 0 : i32
    %c0_i32_1 = arith.constant 0 : i32
    return %c0_i32, %c0_i32_0 : i32, i32
  }
  func.func @transform_16(%arg0: i32) -> (i32, i32) {
    %c0_i32 = arith.constant 0 : i32
    %c0_i32_0 = arith.constant 0 : i32
    %c0_i32_1 = arith.constant 0 : i32
    return %c0_i32, %c0_i32_0 : i32, i32
  }
  func.func @transform_17(%arg0: i32) -> (i32, i32) {
    %c0_i32 = arith.constant 0 : i32
    %c0_i32_0 = arith.constant 0 : i32
    %c0_i32_1 = arith.constant 0 : i32
    return %c0_i32, %c0_i32_0 : i32, i32
  }
  func.func @transform_18(%arg0: i32) -> (i32, i32) {
    %c0_i32 = arith.constant 0 : i32
    %c0_i32_0 = arith.constant 0 : i32
    %c0_i32_1 = arith.constant 0 : i32
    return %c0_i32, %c0_i32_0 : i32, i32
  }
  func.func @transform_19(%arg0: i32) -> (i32, i32) {
    %c0_i32 = arith.constant 0 : i32
    %c0_i32_0 = arith.constant 0 : i32
    %c0_i32_1 = arith.constant 0 : i32
    return %c0_i32, %c0_i32_0 : i32, i32
  }
  func.func @transform_20(%arg0: i32) -> (i32, i32) {
    %c0_i32 = arith.constant 0 : i32
    %c0_i32_0 = arith.constant 0 : i32
    %c0_i32_1 = arith.constant 0 : i32
    return %c0_i32, %c0_i32_0 : i32, i32
  }
  func.func @transform_21(%arg0: i32) -> (i32, i32) {
    %c0_i32 = arith.constant 0 : i32
    %c0_i32_0 = arith.constant 0 : i32
    %c0_i32_1 = arith.constant 0 : i32
    return %c0_i32, %c0_i32_0 : i32, i32
  }
  func.func @transform_22(%arg0: i32) -> (i32, i32) {
    %c0_i32 = arith.constant 0 : i32
    %c0_i32_0 = arith.constant 0 : i32
    %c0_i32_1 = arith.constant 0 : i32
    return %c0_i32, %c0_i32_0 : i32, i32
  }
  func.func @transform_23(%arg0: i32) -> (i32, i32) {
    %c0_i32 = arith.constant 0 : i32
    %c0_i32_0 = arith.constant 0 : i32
    %c0_i32_1 = arith.constant 0 : i32
    return %c0_i32, %c0_i32_0 : i32, i32
  }
  func.func @transform_24(%arg0: i32) -> (i32, i32) {
    %c0_i32 = arith.constant 0 : i32
    %c0_i32_0 = arith.constant 0 : i32
    %c0_i32_1 = arith.constant 0 : i32
    return %c0_i32, %c0_i32_0 : i32, i32
  }
  func.func @transform_25(%arg0: i32) -> (i32, i32) {
    %c0_i32 = arith.constant 0 : i32
    %c0_i32_0 = arith.constant 0 : i32
    %c0_i32_1 = arith.constant 0 : i32
    return %c0_i32, %c0_i32_0 : i32, i32
  }
  func.func @transform_26(%arg0: i32) -> (i32, i32) {
    %c0_i32 = arith.constant 0 : i32
    %c0_i32_0 = arith.constant 0 : i32
    %c0_i32_1 = arith.constant 0 : i32
    return %c0_i32, %c0_i32_0 : i32, i32
  }
  func.func @transform_27(%arg0: i32) -> (i32, i32) {
    %c0_i32 = arith.constant 0 : i32
    %c0_i32_0 = arith.constant 0 : i32
    %c0_i32_1 = arith.constant 0 : i32
    return %c0_i32, %c0_i32_0 : i32, i32
  }
  func.func @transform_28(%arg0: i32) -> (i32, i32) {
    %c0_i32 = arith.constant 0 : i32
    %c0_i32_0 = arith.constant 0 : i32
    %c0_i32_1 = arith.constant 0 : i32
    return %c0_i32, %c0_i32_0 : i32, i32
  }
  func.func @transform_29(%arg0: i32) -> (i32, i32) {
    %c0_i32 = arith.constant 0 : i32
    %c0_i32_0 = arith.constant 0 : i32
    %c0_i32_1 = arith.constant 0 : i32
    return %c0_i32, %c0_i32_0 : i32, i32
  }
  func.func @transform_30(%arg0: i32) -> (i32, i32) {
    %c0_i32 = arith.constant 0 : i32
    %c0_i32_0 = arith.constant 0 : i32
    %c0_i32_1 = arith.constant 0 : i32
    return %c0_i32, %c0_i32_0 : i32, i32
  }
  func.func @transform_31(%arg0: i32) -> (i32, i32) {
    %c0_i32 = arith.constant 0 : i32
    %c0_i32_0 = arith.constant 0 : i32
    %c0_i32_1 = arith.constant 0 : i32
    return %c0_i32, %c0_i32_0 : i32, i32
  }
  func.func @transform_32(%arg0: i32) -> (i32, i32) {
    %c0_i32 = arith.constant 0 : i32
    %c0_i32_0 = arith.constant 0 : i32
    %c0_i32_1 = arith.constant 0 : i32
    return %c0_i32, %c0_i32_0 : i32, i32
  }
  func.func @transform_33(%arg0: i32) -> (i32, i32) {
    %c0_i32 = arith.constant 0 : i32
    %c0_i32_0 = arith.constant 0 : i32
    %c0_i32_1 = arith.constant 0 : i32
    return %c0_i32, %c0_i32_0 : i32, i32
  }
  func.func @transform_34(%arg0: i32) -> (i32, i32) {
    %c0_i32 = arith.constant 0 : i32
    %c0_i32_0 = arith.constant 0 : i32
    %c0_i32_1 = arith.constant 0 : i32
    return %c0_i32, %c0_i32_0 : i32, i32
  }
  func.func @transform_35(%arg0: i32) -> (i32, i32) {
    %c0_i32 = arith.constant 0 : i32
    %c0_i32_0 = arith.constant 0 : i32
    %c0_i32_1 = arith.constant 0 : i32
    return %c0_i32, %c0_i32_0 : i32, i32
  }
  func.func @transform_36(%arg0: i32) -> (i32, i32) {
    %c0_i32 = arith.constant 0 : i32
    %c0_i32_0 = arith.constant 0 : i32
    %c0_i32_1 = arith.constant 0 : i32
    return %c0_i32, %c0_i32_0 : i32, i32
  }
  func.func @transform_37(%arg0: i32) -> (i32, i32) {
    %c0_i32 = arith.constant 0 : i32
    %c0_i32_0 = arith.constant 0 : i32
    %c0_i32_1 = arith.constant 0 : i32
    return %c0_i32, %c0_i32_0 : i32, i32
  }
  func.func @transform_38(%arg0: i32) -> (i32, i32) {
    %c0_i32 = arith.constant 0 : i32
    %c0_i32_0 = arith.constant 0 : i32
    %c0_i32_1 = arith.constant 0 : i32
    return %c0_i32, %c0_i32_0 : i32, i32
  }
  func.func @transform_39(%arg0: i32) -> (i32, i32) {
    %c0_i32 = arith.constant 0 : i32
    %c0_i32_0 = arith.constant 0 : i32
    %c0_i32_1 = arith.constant 0 : i32
    return %c0_i32, %c0_i32_0 : i32, i32
  }
  func.func @transform_40(%arg0: i32) -> (i32, i32) {
    %c0_i32 = arith.constant 0 : i32
    %c0_i32_0 = arith.constant 0 : i32
    %c0_i32_1 = arith.constant 0 : i32
    return %c0_i32, %c0_i32_0 : i32, i32
  }
  func.func @transform_41(%arg0: i32) -> (i32, i32) {
    %c0_i32 = arith.constant 0 : i32
    %c0_i32_0 = arith.constant 0 : i32
    %c0_i32_1 = arith.constant 0 : i32
    return %c0_i32, %c0_i32_0 : i32, i32
  }
  func.func @transform_42(%arg0: i32) -> (i32, i32) {
    %c0_i32 = arith.constant 0 : i32
    %c0_i32_0 = arith.constant 0 : i32
    %c0_i32_1 = arith.constant 0 : i32
    return %c0_i32, %c0_i32_0 : i32, i32
  }
  func.func @transform_43(%arg0: i32) -> (i32, i32) {
    %c0_i32 = arith.constant 0 : i32
    %c0_i32_0 = arith.constant 0 : i32
    %c0_i32_1 = arith.constant 0 : i32
    return %c0_i32, %c0_i32_0 : i32, i32
  }
  func.func @transform_44(%arg0: i32) -> (i32, i32) {
    %c0_i32 = arith.constant 0 : i32
    %c0_i32_0 = arith.constant 0 : i32
    %c0_i32_1 = arith.constant 0 : i32
    return %c0_i32, %c0_i32_0 : i32, i32
  }
  func.func @transform_45(%arg0: i32) -> (i32, i32) {
    %c0_i32 = arith.constant 0 : i32
    %c0_i32_0 = arith.constant 0 : i32
    %c0_i32_1 = arith.constant 0 : i32
    return %c0_i32, %c0_i32_0 : i32, i32
  }
  func.func @transform_46(%arg0: i32) -> (i32, i32) {
    %c0_i32 = arith.constant 0 : i32
    %c0_i32_0 = arith.constant 0 : i32
    %c0_i32_1 = arith.constant 0 : i32
    return %c0_i32, %c0_i32_0 : i32, i32
  }
  func.func @transform_47(%arg0: i32) -> (i32, i32) {
    %c0_i32 = arith.constant 0 : i32
    %c0_i32_0 = arith.constant 0 : i32
    %c0_i32_1 = arith.constant 0 : i32
    return %c0_i32, %c0_i32_0 : i32, i32
  }
  func.func @transform_48(%arg0: i32) -> (i32, i32) {
    %c0_i32 = arith.constant 0 : i32
    %c0_i32_0 = arith.constant 0 : i32
    %c0_i32_1 = arith.constant 0 : i32
    return %c0_i32, %c0_i32_0 : i32, i32
  }
  func.func @transform_49(%arg0: i32) -> (i32, i32) {
    %c0_i32 = arith.constant 0 : i32
    %c0_i32_0 = arith.constant 0 : i32
    %c0_i32_1 = arith.constant 0 : i32
    return %c0_i32, %c0_i32_0 : i32, i32
  }
  func.func @transform_50(%arg0: i32) -> (i32, i32, i32) {
    %c0_i32 = arith.constant 0 : i32
    %c0_i32_0 = arith.constant 0 : i32
    %c0_i32_1 = arith.constant 0 : i32
    return %arg0, %c0_i32, %c0_i32_0 : i32, i32, i32
  }
}

</mosaic_0001>

<llo_original>
// kernel: forward.1
$region0: #{forward.1}
  #allocation0 [shape = 'u32[]', space=smem, size = 0x4, offset = 0x4, fixed_abs, tag = 'smem constant byte address 0x4 - core index']
  #allocation1 [shape = 'u32[144,128]{1,0:T(1,128)}', space=vmem, size = 0x12000, scoped, tag = 'internal scratch']
  #allocation2 [shape = 'f32[64,64]{1,0:T(8,128)}', space=vmem, size = 0x8000, scoped, tag = 'scratch operand']
  #allocation3 [shape = 'f32[1,1]{1,0:T(1,128)S(1)}', space=vmem, size = 0x200, scoped, tag = 'scoped memory for forward.1']
  %s0 = inlined_call_operand.smem [shape: u32[51], index: -1, kind: input, shape index: {}]
  %s1 = sld [smem:[%s0]]
  %s2 = scalar_lea.smem %s0, 1
  %s3 = sld [smem:[%s2]]
  %s4 = scalar_lea.smem %s0, 2
  %s5 = sld [smem:[%s4]]
  %s6 = scalar_lea.smem %s0, 3
  %s7 = sld [smem:[%s6]]
  %s8 = scalar_lea.smem %s0, 4
  %s9 = sld [smem:[%s8]]
  %s10 = scalar_lea.smem %s0, 5
  %s11 = sld [smem:[%s10]]
  %s12 = scalar_lea.smem %s0, 6
  %s13 = sld [smem:[%s12]]
  %s14 = scalar_lea.smem %s0, 7
  %s15 = sld [smem:[%s14]]
  %s16 = scalar_lea.smem %s0, 8
  %s17 = sld [smem:[%s16]]
  %s18 = scalar_lea.smem %s0, 9
  %s19 = sld [smem:[%s18]]
  %s20 = scalar_lea.smem %s0, 10
  %s21 = sld [smem:[%s20]]
  %s22 = scalar_lea.smem %s0, 11
  %s23 = sld [smem:[%s22]]
  %s24 = scalar_lea.smem %s0, 12
  %s25 = sld [smem:[%s24]]
  %s26 = scalar_lea.smem %s0, 13
  %s27 = sld [smem:[%s26]]
  %s28 = scalar_lea.smem %s0, 14
  %s29 = sld [smem:[%s28]]
  %s30 = scalar_lea.smem %s0, 15
  %s31 = sld [smem:[%s30]]
  %s32 = scalar_lea.smem %s0, 16
  %s33 = sld [smem:[%s32]]
  %s34 = scalar_lea.smem %s0, 17
  %s35 = sld [smem:[%s34]]
  %s36 = scalar_lea.smem %s0, 18
  %s37 = sld [smem:[%s36]]
  %s38 = scalar_lea.smem %s0, 19
  %s39 = sld [smem:[%s38]]
  %s40 = scalar_lea.smem %s0, 20
  %s41 = sld [smem:[%s40]]
  %s42 = scalar_lea.smem %s0, 21
  %s43 = sld [smem:[%s42]]
  %s44 = scalar_lea.smem %s0, 22
  %s45 = sld [smem:[%s44]]
  %s46 = scalar_lea.smem %s0, 23
  %s47 = sld [smem:[%s46]]
  %s48 = scalar_lea.smem %s0, 24
  %s49 = sld [smem:[%s48]]
  %s50 = scalar_lea.smem %s0, 25
  %s51 = sld [smem:[%s50]]
  %s52 = scalar_lea.smem %s0, 26
  %s53 = sld [smem:[%s52]]
  %s54 = scalar_lea.smem %s0, 27
  %s55 = sld [smem:[%s54]]
  %s56 = scalar_lea.smem %s0, 28
  %s57 = sld [smem:[%s56]]
  %s58 = scalar_lea.smem %s0, 29
  %s59 = sld [smem:[%s58]]
  %s60 = scalar_lea.smem %s0, 30
  %s61 = sld [smem:[%s60]]
  %s62 = scalar_lea.smem %s0, 31
  %s63 = sld [smem:[%s62]]
  %s64 = scalar_lea.smem %s0, 32
  %s65 = sld [smem:[%s64]]
  %s66 = scalar_lea.smem %s0, 33
  %s67 = sld [smem:[%s66]]
  %s68 = scalar_lea.smem %s0, 34
  %s69 = sld [smem:[%s68]]
  %s70 = scalar_lea.smem %s0, 35
  %s71 = sld [smem:[%s70]]
  %s72 = scalar_lea.smem %s0, 36
  %s73 = sld [smem:[%s72]]
  %s74 = scalar_lea.smem %s0, 37
  %s75 = sld [smem:[%s74]]
  %s76 = scalar_lea.smem %s0, 38
  %s77 = sld [smem:[%s76]]
  %s78 = scalar_lea.smem %s0, 39
  %s79 = sld [smem:[%s78]]
  %s80 = scalar_lea.smem %s0, 40
  %s81 = sld [smem:[%s80]]
  %s82 = scalar_lea.smem %s0, 41
  %s83 = sld [smem:[%s82]]
  %s84 = scalar_lea.smem %s0, 42
  %s85 = sld [smem:[%s84]]
  %s86 = scalar_lea.smem %s0, 43
  %s87 = sld [smem:[%s86]]
  %s88 = scalar_lea.smem %s0, 44
  %s89 = sld [smem:[%s88]]
  %s90 = scalar_lea.smem %s0, 45
  %s91 = sld [smem:[%s90]]
  %s92 = scalar_lea.smem %s0, 46
  %s93 = sld [smem:[%s92]]
  %s94 = scalar_lea.smem %s0, 47
  %s95 = sld [smem:[%s94]]
  %s96 = scalar_lea.smem %s0, 48
  %s97 = sld [smem:[%s96]]
  %s98 = scalar_lea.smem %s0, 49
  %s99 = sld [smem:[%s98]]
  %s100 = scalar_lea.smem %s0, 50
  %s101 = sld [smem:[%s100]]
  %s102 = sld [smem:[#allocation0]]
  $region300: #{forward.1} parent=0
    _
  %s104 = ssub.s32 1, %s102
  %s105 = scalar_select 0, %s104, %s102
  %v106 = vstv %s99
  %107 = vst [vmem:[#allocation3] sm:$0x1] %v106
  $region1: #{forward.1} parent=0
    #allocation4 [shape = 'u8[512]{0}', space=vmem, size = 0x400, scoped, tag = 'input window, operand 6, single buffered']
    #allocation5 [shape = 's32[2]{0}', space=sflag, size = 0x8, scoped, tag = 'scoped memory for forward.1']
    #allocation6 [shape = 'u8[512]{0}', space=vmem, size = 0x400, scoped, tag = 'input window, operand 8, single buffered']
    #allocation7 [shape = 's32[1]{0}', space=sflag, size = 0x4, scoped, tag = 'scoped memory for forward.1']
    #allocation8 [shape = 'u8[512]{0}', space=vmem, size = 0x400, scoped, tag = 'input window, operand 10, single buffered']
    #allocation9 [shape = 'u8[512]{0}', space=vmem, size = 0x400, scoped, tag = 'input window, operand 12, single buffered']
    #allocation10 [shape = 's32[1]{0}', space=sflag, size = 0x4, scoped, tag = 'scoped memory for forward.1']
    #allocation11 [shape = 'u8[512]{0}', space=vmem, size = 0x400, scoped, tag = 'input window, operand 14, single buffered']
    #allocation12 [shape = 'u8[512]{0}', space=vmem, size = 0x400, scoped, tag = 'input window, operand 33, single buffered']
    #allocation13 [shape = 's32[1]{0}', space=sflag, size = 0x4, scoped, tag = 'scoped memory for forward.1']
    #allocation14 [shape = 'u8[512]{0}', space=vmem, size = 0x400, scoped, tag = 'input window, operand 35, single buffered']
    #allocation15 [shape = 'u8[32768]{0}', space=vmem, size = 0x8000, scoped, tag = 'input window, operand 38, single buffered']
    #allocation16 [shape = 's32[1]{0}', space=sflag, size = 0x4, scoped, tag = 'scoped memory for forward.1']
    #allocation17 [shape = 'u8[32768]{0}', space=vmem, size = 0x8000, scoped, tag = 'input window, operand 39, single buffered']
    #allocation18 [shape = 'u8[32768]{0}', space=vmem, size = 0x8000, scoped, tag = 'input window, operand 43, single buffered']
    #allocation19 [shape = 's32[1]{0}', space=sflag, size = 0x4, scoped, tag = 'scoped memory for forward.1']
    #allocation20 [shape = 'u8[32768]{0}', space=vmem, size = 0x8000, scoped, tag = 'input window, operand 44, single buffered']
    #allocation21 [shape = 'u8[512]{0}', space=vmem, size = 0x400, scoped, tag = 'input window, operand 45, single buffered']
    #allocation22 [shape = 's32[1]{0}', space=sflag, size = 0x4, scoped, tag = 'scoped memory for forward.1']
    #allocation23 [shape = 'u8[32768]{0}', space=vmem, size = 0x8000, scoped, tag = 'input window, operand 46, single buffered']
    #allocation24 [shape = 'u8[512]{0}', space=vmem, size = 0x400, scoped, tag = 'input window, operand 47, single buffered']
    #allocation25 [shape = 's32[1]{0}', space=sflag, size = 0x4, scoped, tag = 'scoped memory for forward.1']
    #allocation26 [shape = 'u8[512]{0}', space=vmem, size = 0x400, scoped, tag = 'input window, operand 48, single buffered']
    %108 = vsyncpa [#allocation5], 0
    %109 = vsyncpa [#allocation7], 0
    %110 = vsyncpa [#allocation10], 0
    %111 = vsyncpa [#allocation13], 0
    %112 = vsyncpa [#allocation16], 0
    %113 = vsyncpa [#allocation19], 0
    %114 = vsyncpa [#allocation22], 0
    %115 = vsyncpa [#allocation25], 0
    loop: start=0, step=1, limit=4
    $region2: #{forward.1} parent=1 // loop_pre_header
      _
    $region3: #{forward.1} parent=1 // loop_header
      %s117 = sphi 0, %s121
      %p118 = scmp.ge.s32.totalorder %s117, 4
      %s127 = sphi 0, %s129
      %s130 = sphi 0, %s127
      %s131 = sphi 0, %s130
      %s147 = sphi 0, %s131
      %s153 = sphi 0, %s155
      %s156 = sphi 0, %s153
      %s157 = sphi 0, %s156
      %s173 = sphi 0, %s157
      %s179 = sphi 0, %s181
      %s182 = sphi 0, %s179
      %s183 = sphi 0, %s182
      %s199 = sphi 0, %s183
      %s203 = sphi 0, %s203
      %s205 = sphi 0, %s203
      %s206 = sphi 0, %s205
      %s220 = sphi 0, %s206
      %s224 = sphi 0, %s224
      %s226 = sphi 0, %s224
      %s227 = sphi 0, %s226
      %s241 = sphi 0, %s227
      %s245 = sphi 0, %s245
      %s247 = sphi 0, %s245
      %s248 = sphi 0, %s247
      %s262 = sphi 0, %s248
      %s266 = sphi 0, %s266
      %s268 = sphi 0, %s266
      %s269 = sphi 0, %s268
      %s283 = sphi 0, %s269
      %s287 = sphi 0, %s287
      %s289 = sphi 0, %s287
      %s290 = sphi 0, %s289
      %s304 = sphi 0, %s290
      %s308 = sphi 0, %s308
      %s310 = sphi 0, %s308
      %s311 = sphi 0, %s310
      %s325 = sphi 0, %s311
      %s329 = sphi 0, %s329
      %s331 = sphi 0, %s329
      %s332 = sphi 0, %s331
      %s346 = sphi 0, %s332
      %s350 = sphi 0, %s350
      %s352 = sphi 0, %s350
      %s353 = sphi 0, %s352
      %s367 = sphi 0, %s353
      %s371 = sphi 0, %s371
      %s373 = sphi 0, %s371
      %s374 = sphi 0, %s373
      %s388 = sphi 0, %s374
      %s392 = sphi 0, %s392
      %s394 = sphi 0, %s392
      %s395 = sphi 0, %s394
      %s409 = sphi 0, %s395
      %s413 = sphi 0, %s413
      %s415 = sphi 0, %s413
      %s416 = sphi 0, %s415
      %s430 = sphi 0, %s416
      %s434 = sphi 0, %s434
      %s436 = sphi 0, %s434
      %s437 = sphi 0, %s436
      %s451 = sphi 0, %s437
      %s455 = sphi 0, %s455
      %s457 = sphi 0, %s455
      %s458 = sphi 0, %s457
      %s472 = sphi 0, %s458
      %s476 = sphi 0, %s476
      %s478 = sphi 0, %s476
      %s479 = sphi 0, %s478
      %s493 = sphi 0, %s479
      %s497 = sphi 0, %s497
      %s499 = sphi 0, %s497
      %s500 = sphi 0, %s499
      %s514 = sphi 0, %s500
      %s518 = sphi 0, %s518
      %s520 = sphi 0, %s518
      %s521 = sphi 0, %s520
      %s535 = sphi 0, %s521
      %s539 = sphi 0, %s539
      %s541 = sphi 0, %s539
      %s542 = sphi 0, %s541
      %s556 = sphi 0, %s542
      %s560 = sphi 0, %s560
      %s562 = sphi 0, %s560
      %s563 = sphi 0, %s562
      %s577 = sphi 0, %s563
      %s581 = sphi 0, %s581
      %s583 = sphi 0, %s581
      %s584 = sphi 0, %s583
      %s598 = sphi 0, %s584
      %s602 = sphi 0, %s602
      %s604 = sphi 0, %s602
      %s605 = sphi 0, %s604
      %s619 = sphi 0, %s605
      %s623 = sphi 0, %s623
      %s625 = sphi 0, %s623
      %s626 = sphi 0, %s625
      %s640 = sphi 0, %s626
      %s644 = sphi 0, %s644
      %s646 = sphi 0, %s644
      %s647 = sphi 0, %s646
      %s661 = sphi 0, %s647
      %s665 = sphi 0, %s665
      %s667 = sphi 0, %s665
      %s668 = sphi 0, %s667
      %s682 = sphi 0, %s668
      %s686 = sphi 0, %s686
      %s688 = sphi 0, %s686
      %s689 = sphi 0, %s688
      %s703 = sphi 0, %s689
      %s707 = sphi 0, %s707
      %s709 = sphi 0, %s707
      %s710 = sphi 0, %s709
      %s724 = sphi 0, %s710
      %s728 = sphi 0, %s728
      %s730 = sphi 0, %s728
      %s731 = sphi 0, %s730
      %s745 = sphi 0, %s731
      %s749 = sphi 0, %s749
      %s751 = sphi 0, %s749
      %s752 = sphi 0, %s751
      %s766 = sphi 0, %s752
      %s770 = sphi 0, %s770
      %s772 = sphi 0, %s770
      %s773 = sphi 0, %s772
      %s787 = sphi 0, %s773
      %s791 = sphi 0, %s791
      %s793 = sphi 0, %s791
      %s794 = sphi 0, %s793
      %s808 = sphi 0, %s794
      %s812 = sphi 0, %s812
      %s814 = sphi 0, %s812
      %s815 = sphi 0, %s814
      %s829 = sphi 0, %s815
      %s833 = sphi 0, %s833
      %s835 = sphi 0, %s833
      %s836 = sphi 0, %s835
      %s850 = sphi 0, %s836
      %s854 = sphi 0, %s854
      %s856 = sphi 0, %s854
      %s857 = sphi 0, %s856
      %s871 = sphi 0, %s857
      %s875 = sphi 0, %s875
      %s877 = sphi 0, %s875
      %s878 = sphi 0, %s877
      %s892 = sphi 0, %s878
      %s896 = sphi 0, %s896
      %s898 = sphi 0, %s896
      %s899 = sphi 0, %s898
      %s913 = sphi 0, %s899
      %s917 = sphi 0, %s917
      %s919 = sphi 0, %s917
      %s920 = sphi 0, %s919
      %s934 = sphi 0, %s920
      %s938 = sphi 0, %s938
      %s940 = sphi 0, %s938
      %s941 = sphi 0, %s940
      %s955 = sphi 0, %s941
      %s959 = sphi 0, %s959
      %s961 = sphi 0, %s959
      %s962 = sphi 0, %s961
      %s976 = sphi 0, %s962
      %s980 = sphi 0, %s980
      %s982 = sphi 0, %s980
      %s983 = sphi 0, %s982
      %s997 = sphi 0, %s983
      %s1001 = sphi 0, %s1001
      %s1003 = sphi 0, %s1001
      %s1004 = sphi 0, %s1003
      %s1018 = sphi 0, %s1004
      %s1022 = sphi 0, %s1022
      %s1024 = sphi 0, %s1022
      %s1025 = sphi 0, %s1024
      %s1039 = sphi 0, %s1025
      %s1043 = sphi 0, %s1043
      %s1045 = sphi 0, %s1043
      %s1046 = sphi 0, %s1045
      %s1060 = sphi 0, %s1046
      %s1064 = sphi 0, %s1064
      %s1066 = sphi 0, %s1064
      %s1067 = sphi 0, %s1066
      %s1081 = sphi 0, %s1067
      %s1085 = sphi 0, %s1085
      %s1087 = sphi 0, %s1085
      %s1088 = sphi 0, %s1087
      %s1102 = sphi 0, %s1088
      %s1106 = sphi 0, %s1106
      %s1108 = sphi 0, %s1106
      %s1109 = sphi 0, %s1108
      %s1123 = sphi 0, %s1109
      %s1127 = sphi 0, %s1127
      %s1129 = sphi 0, %s1127
      %s1130 = sphi 0, %s1129
      %s1144 = sphi 0, %s1130
      %s1148 = sphi 0, %s1148
      %s1150 = sphi 0, %s1148
      %s1151 = sphi 0, %s1150
      %s1165 = sphi 0, %s1151
      %s1169 = sphi 0, %s1169
      %s1171 = sphi 0, %s1169
      %s1172 = sphi 0, %s1171
      %s1186 = sphi 0, %s1172
      %s1192 = sphi 0, %s1194
      %s1195 = sphi 0, %s1192
      %s1196 = sphi 0, %s1195
      %s1212 = sphi 0, %s1196
    $region4: #{forward.1} parent=1 // loop_header_branch
      %120 = sbr.rel (%p118) target = $region8
    $region5: #{forward.1} parent=1 // loop_body
      %s122 = ssub.s32 %s117, 1
      %s123 = ssub.s32 %s117, 2
      %s124 = sadd.s32 %s117, 1
      %s125 = ssub.s32 %s117, %s124
      %p126 = scmp.eq.s32.totalorder %s125, 0
      %s128 = sadd.s32 %s127, 1
      %s129 = scalar_select %p126, %s127, %s128
      %p132 = pneg %p126
      %p133 = scmp.eq.s32.totalorder %s117, 1
      %p134 = por %p132, %p133
      %p135 = scmp.ne.s32.totalorder %s127, %s130
      %p136 = scmp.eq.s32.totalorder %s117, 0
      %p137 = por %p135, %p136
      %p138 = scmp.ne.s32.totalorder %s127, %s130
      %p139 = scmp.eq.s32.totalorder %s122, 1
      %p140 = por %p138, %p139
      %p141 = scmp.ne.s32.totalorder %s130, %s131
      %p142 = scmp.eq.s32.totalorder %s122, 0
      %p143 = por %p141, %p142
      %p144 = scmp.ne.s32.totalorder %s130, %s131
      %p145 = scmp.eq.s32.totalorder %s123, 1
      %p146 = por %p144, %p145
      %p148 = scmp.ne.s32.totalorder %s131, %s147
      %p149 = scmp.eq.s32.totalorder %s123, 0
      %p150 = por %p148, %p149
      %s151 = ssub.s32 %s117, %s124
      %p152 = scmp.eq.s32.totalorder %s151, 0
      %s154 = sadd.s32 %s153, 1
      %s155 = scalar_select %p152, %s153, %s154
      %p158 = pneg %p152
      %p159 = scmp.eq.s32.totalorder %s117, 1
      %p160 = por %p158, %p159
      %p161 = scmp.ne.s32.totalorder %s153, %s156
      %p162 = scmp.eq.s32.totalorder %s117, 0
      %p163 = por %p161, %p162
      %p164 = scmp.ne.s32.totalorder %s153, %s156
      %p165 = scmp.eq.s32.totalorder %s122, 1
      %p166 = por %p164, %p165
      %p167 = scmp.ne.s32.totalorder %s156, %s157
      %p168 = scmp.eq.s32.totalorder %s122, 0
      %p169 = por %p167, %p168
      %p170 = scmp.ne.s32.totalorder %s156, %s157
      %p171 = scmp.eq.s32.totalorder %s123, 1
      %p172 = por %p170, %p171
      %p174 = scmp.ne.s32.totalorder %s157, %s173
      %p175 = scmp.eq.s32.totalorder %s123, 0
      %p176 = por %p174, %p175
      %s177 = ssub.s32 %s117, %s124
      %p178 = scmp.eq.s32.totalorder %s177, 0
      %s180 = sadd.s32 %s179, 1
      %s181 = scalar_select %p178, %s179, %s180
      %p184 = pneg %p178
      %p185 = scmp.eq.s32.totalorder %s117, 1
      %p186 = por %p184, %p185
      %p187 = scmp.ne.s32.totalorder %s179, %s182
      %p188 = scmp.eq.s32.totalorder %s117, 0
      %p189 = por %p187, %p188
      %p190 = scmp.ne.s32.totalorder %s179, %s182
      %p191 = scmp.eq.s32.totalorder %s122, 1
      %p192 = por %p190, %p191
      %p193 = scmp.ne.s32.totalorder %s182, %s183
      %p194 = scmp.eq.s32.totalorder %s122, 0
      %p195 = por %p193, %p194
      %p196 = scmp.ne.s32.totalorder %s182, %s183
      %p197 = scmp.eq.s32.totalorder %s123, 1
      %p198 = por %p196, %p197
      %p200 = scmp.ne.s32.totalorder %s183, %s199
      %p201 = scmp.eq.s32.totalorder %s123, 0
      %p202 = por %p200, %p201
      %s204 = sadd.s32 %s203, 1
      %p207 = scmp.eq.s32.totalorder %s117, 1
      %p208 = scmp.ne.s32.totalorder %s203, %s205
      %p209 = scmp.eq.s32.totalorder %s117, 0
      %p210 = por %p208, %p209
      %p211 = scmp.ne.s32.totalorder %s203, %s205
      %p212 = scmp.eq.s32.totalorder %s122, 1
      %p213 = por %p211, %p212
      %p214 = scmp.ne.s32.totalorder %s205, %s206
      %p215 = scmp.eq.s32.totalorder %s122, 0
      %p216 = por %p214, %p215
      %p217 = scmp.ne.s32.totalorder %s205, %s206
      %p218 = scmp.eq.s32.totalorder %s123, 1
      %p219 = por %p217, %p218
      %p221 = scmp.ne.s32.totalorder %s206, %s220
      %p222 = scmp.eq.s32.totalorder %s123, 0
      %p223 = por %p221, %p222
      %s225 = sadd.s32 %s224, 1
      %p228 = scmp.eq.s32.totalorder %s117, 1
      %p229 = scmp.ne.s32.totalorder %s224, %s226
      %p230 = scmp.eq.s32.totalorder %s117, 0
      %p231 = por %p229, %p230
      %p232 = scmp.ne.s32.totalorder %s224, %s226
      %p233 = scmp.eq.s32.totalorder %s122, 1
      %p234 = por %p232, %p233
      %p235 = scmp.ne.s32.totalorder %s226, %s227
      %p236 = scmp.eq.s32.totalorder %s122, 0
      %p237 = por %p235, %p236
      %p238 = scmp.ne.s32.totalorder %s226, %s227
      %p239 = scmp.eq.s32.totalorder %s123, 1
      %p240 = por %p238, %p239
      %p242 = scmp.ne.s32.totalorder %s227, %s241
      %p243 = scmp.eq.s32.totalorder %s123, 0
      %p244 = por %p242, %p243
      %s246 = sadd.s32 %s245, 1
      %p249 = scmp.eq.s32.totalorder %s117, 1
      %p250 = scmp.ne.s32.totalorder %s245, %s247
      %p251 = scmp.eq.s32.totalorder %s117, 0
      %p252 = por %p250, %p251
      %p253 = scmp.ne.s32.totalorder %s245, %s247
      %p254 = scmp.eq.s32.totalorder %s122, 1
      %p255 = por %p253, %p254
      %p256 = scmp.ne.s32.totalorder %s247, %s248
      %p257 = scmp.eq.s32.totalorder %s122, 0
      %p258 = por %p256, %p257
      %p259 = scmp.ne.s32.totalorder %s247, %s248
      %p260 = scmp.eq.s32.totalorder %s123, 1
      %p261 = por %p259, %p260
      %p263 = scmp.ne.s32.totalorder %s248, %s262
      %p264 = scmp.eq.s32.totalorder %s123, 0
      %p265 = por %p263, %p264
      %s267 = sadd.s32 %s266, 1
      %p270 = scmp.eq.s32.totalorder %s117, 1
      %p271 = scmp.ne.s32.totalorder %s266, %s268
      %p272 = scmp.eq.s32.totalorder %s117, 0
      %p273 = por %p271, %p272
      %p274 = scmp.ne.s32.totalorder %s266, %s268
      %p275 = scmp.eq.s32.totalorder %s122, 1
      %p276 = por %p274, %p275
      %p277 = scmp.ne.s32.totalorder %s268, %s269
      %p278 = scmp.eq.s32.totalorder %s122, 0
      %p279 = por %p277, %p278
      %p280 = scmp.ne.s32.totalorder %s268, %s269
      %p281 = scmp.eq.s32.totalorder %s123, 1
      %p282 = por %p280, %p281
      %p284 = scmp.ne.s32.totalorder %s269, %s283
      %p285 = scmp.eq.s32.totalorder %s123, 0
      %p286 = por %p284, %p285
      %s288 = sadd.s32 %s287, 1
      %p291 = scmp.eq.s32.totalorder %s117, 1
      %p292 = scmp.ne.s32.totalorder %s287, %s289
      %p293 = scmp.eq.s32.totalorder %s117, 0
      %p294 = por %p292, %p293
      %p295 = scmp.ne.s32.totalorder %s287, %s289
      %p296 = scmp.eq.s32.totalorder %s122, 1
      %p297 = por %p295, %p296
      %p298 = scmp.ne.s32.totalorder %s289, %s290
      %p299 = scmp.eq.s32.totalorder %s122, 0
      %p300 = por %p298, %p299
      %p301 = scmp.ne.s32.totalorder %s289, %s290
      %p302 = scmp.eq.s32.totalorder %s123, 1
      %p303 = por %p301, %p302
      %p305 = scmp.ne.s32.totalorder %s290, %s304
      %p306 = scmp.eq.s32.totalorder %s123, 0
      %p307 = por %p305, %p306
      %s309 = sadd.s32 %s308, 1
      %p312 = scmp.eq.s32.totalorder %s117, 1
      %p313 = scmp.ne.s32.totalorder %s308, %s310
      %p314 = scmp.eq.s32.totalorder %s117, 0
      %p315 = por %p313, %p314
      %p316 = scmp.ne.s32.totalorder %s308, %s310
      %p317 = scmp.eq.s32.totalorder %s122, 1
      %p318 = por %p316, %p317
      %p319 = scmp.ne.s32.totalorder %s310, %s311
      %p320 = scmp.eq.s32.totalorder %s122, 0
      %p321 = por %p319, %p320
      %p322 = scmp.ne.s32.totalorder %s310, %s311
      %p323 = scmp.eq.s32.totalorder %s123, 1
      %p324 = por %p322, %p323
      %p326 = scmp.ne.s32.totalorder %s311, %s325
      %p327 = scmp.eq.s32.totalorder %s123, 0
      %p328 = por %p326, %p327
      %s330 = sadd.s32 %s329, 1
      %p333 = scmp.eq.s32.totalorder %s117, 1
      %p334 = scmp.ne.s32.totalorder %s329, %s331
      %p335 = scmp.eq.s32.totalorder %s117, 0
      %p336 = por %p334, %p335
      %p337 = scmp.ne.s32.totalorder %s329, %s331
      %p338 = scmp.eq.s32.totalorder %s122, 1
      %p339 = por %p337, %p338
      %p340 = scmp.ne.s32.totalorder %s331, %s332
      %p341 = scmp.eq.s32.totalorder %s122, 0
      %p342 = por %p340, %p341
      %p343 = scmp.ne.s32.totalorder %s331, %s332
      %p344 = scmp.eq.s32.totalorder %s123, 1
      %p345 = por %p343, %p344
      %p347 = scmp.ne.s32.totalorder %s332, %s346
      %p348 = scmp.eq.s32.totalorder %s123, 0
      %p349 = por %p347, %p348
      %s351 = sadd.s32 %s350, 1
      %p354 = scmp.eq.s32.totalorder %s117, 1
      %p355 = scmp.ne.s32.totalorder %s350, %s352
      %p356 = scmp.eq.s32.totalorder %s117, 0
      %p357 = por %p355, %p356
      %p358 = scmp.ne.s32.totalorder %s350, %s352
      %p359 = scmp.eq.s32.totalorder %s122, 1
      %p360 = por %p358, %p359
      %p361 = scmp.ne.s32.totalorder %s352, %s353
      %p362 = scmp.eq.s32.totalorder %s122, 0
      %p363 = por %p361, %p362
      %p364 = scmp.ne.s32.totalorder %s352, %s353
      %p365 = scmp.eq.s32.totalorder %s123, 1
      %p366 = por %p364, %p365
      %p368 = scmp.ne.s32.totalorder %s353, %s367
      %p369 = scmp.eq.s32.totalorder %s123, 0
      %p370 = por %p368, %p369
      %s372 = sadd.s32 %s371, 1
      %p375 = scmp.eq.s32.totalorder %s117, 1
      %p376 = scmp.ne.s32.totalorder %s371, %s373
      %p377 = scmp.eq.s32.totalorder %s117, 0
      %p378 = por %p376, %p377
      %p379 = scmp.ne.s32.totalorder %s371, %s373
      %p380 = scmp.eq.s32.totalorder %s122, 1
      %p381 = por %p379, %p380
      %p382 = scmp.ne.s32.totalorder %s373, %s374
      %p383 = scmp.eq.s32.totalorder %s122, 0
      %p384 = por %p382, %p383
      %p385 = scmp.ne.s32.totalorder %s373, %s374
      %p386 = scmp.eq.s32.totalorder %s123, 1
      %p387 = por %p385, %p386
      %p389 = scmp.ne.s32.totalorder %s374, %s388
      %p390 = scmp.eq.s32.totalorder %s123, 0
      %p391 = por %p389, %p390
      %s393 = sadd.s32 %s392, 1
      %p396 = scmp.eq.s32.totalorder %s117, 1
      %p397 = scmp.ne.s32.totalorder %s392, %s394
      %p398 = scmp.eq.s32.totalorder %s117, 0
      %p399 = por %p397, %p398
      %p400 = scmp.ne.s32.totalorder %s392, %s394
      %p401 = scmp.eq.s32.totalorder %s122, 1
      %p402 = por %p400, %p401
      %p403 = scmp.ne.s32.totalorder %s394, %s395
      %p404 = scmp.eq.s32.totalorder %s122, 0
      %p405 = por %p403, %p404
      %p406 = scmp.ne.s32.totalorder %s394, %s395
      %p407 = scmp.eq.s32.totalorder %s123, 1
      %p408 = por %p406, %p407
      %p410 = scmp.ne.s32.totalorder %s395, %s409
      %p411 = scmp.eq.s32.totalorder %s123, 0
      %p412 = por %p410, %p411
      %s414 = sadd.s32 %s413, 1
      %p417 = scmp.eq.s32.totalorder %s117, 1
      %p418 = scmp.ne.s32.totalorder %s413, %s415
      %p419 = scmp.eq.s32.totalorder %s117, 0
      %p420 = por %p418, %p419
      %p421 = scmp.ne.s32.totalorder %s413, %s415
      %p422 = scmp.eq.s32.totalorder %s122, 1
      %p423 = por %p421, %p422
      %p424 = scmp.ne.s32.totalorder %s415, %s416
      %p425 = scmp.eq.s32.totalorder %s122, 0
      %p426 = por %p424, %p425
      %p427 = scmp.ne.s32.totalorder %s415, %s416
      %p428 = scmp.eq.s32.totalorder %s123, 1
      %p429 = por %p427, %p428
      %p431 = scmp.ne.s32.totalorder %s416, %s430
      %p432 = scmp.eq.s32.totalorder %s123, 0
      %p433 = por %p431, %p432
      %s435 = sadd.s32 %s434, 1
      %p438 = scmp.eq.s32.totalorder %s117, 1
      %p439 = scmp.ne.s32.totalorder %s434, %s436
      %p440 = scmp.eq.s32.totalorder %s117, 0
      %p441 = por %p439, %p440
      %p442 = scmp.ne.s32.totalorder %s434, %s436
      %p443 = scmp.eq.s32.totalorder %s122, 1
      %p444 = por %p442, %p443
      %p445 = scmp.ne.s32.totalorder %s436, %s437
      %p446 = scmp.eq.s32.totalorder %s122, 0
      %p447 = por %p445, %p446
      %p448 = scmp.ne.s32.totalorder %s436, %s437
      %p449 = scmp.eq.s32.totalorder %s123, 1
      %p450 = por %p448, %p449
      %p452 = scmp.ne.s32.totalorder %s437, %s451
      %p453 = scmp.eq.s32.totalorder %s123, 0
      %p454 = por %p452, %p453
      %s456 = sadd.s32 %s455, 1
      %p459 = scmp.eq.s32.totalorder %s117, 1
      %p460 = scmp.ne.s32.totalorder %s455, %s457
      %p461 = scmp.eq.s32.totalorder %s117, 0
      %p462 = por %p460, %p461
      %p463 = scmp.ne.s32.totalorder %s455, %s457
      %p464 = scmp.eq.s32.totalorder %s122, 1
      %p465 = por %p463, %p464
      %p466 = scmp.ne.s32.totalorder %s457, %s458
      %p467 = scmp.eq.s32.totalorder %s122, 0
      %p468 = por %p466, %p467
      %p469 = scmp.ne.s32.totalorder %s457, %s458
      %p470 = scmp.eq.s32.totalorder %s123, 1
      %p471 = por %p469, %p470
      %p473 = scmp.ne.s32.totalorder %s458, %s472
      %p474 = scmp.eq.s32.totalorder %s123, 0
      %p475 = por %p473, %p474
      %s477 = sadd.s32 %s476, 1
      %p480 = scmp.eq.s32.totalorder %s117, 1
      %p481 = scmp.ne.s32.totalorder %s476, %s478
      %p482 = scmp.eq.s32.totalorder %s117, 0
      %p483 = por %p481, %p482
      %p484 = scmp.ne.s32.totalorder %s476, %s478
      %p485 = scmp.eq.s32.totalorder %s122, 1
      %p486 = por %p484, %p485
      %p487 = scmp.ne.s32.totalorder %s478, %s479
      %p488 = scmp.eq.s32.totalorder %s122, 0
      %p489 = por %p487, %p488
      %p490 = scmp.ne.s32.totalorder %s478, %s479
      %p491 = scmp.eq.s32.totalorder %s123, 1
      %p492 = por %p490, %p491
      %p494 = scmp.ne.s32.totalorder %s479, %s493
      %p495 = scmp.eq.s32.totalorder %s123, 0
      %p496 = por %p494, %p495
      %s498 = sadd.s32 %s497, 1
      %p501 = scmp.eq.s32.totalorder %s117, 1
      %p502 = scmp.ne.s32.totalorder %s497, %s499
      %p503 = scmp.eq.s32.totalorder %s117, 0
      %p504 = por %p502, %p503
      %p505 = scmp.ne.s32.totalorder %s497, %s499
      %p506 = scmp.eq.s32.totalorder %s122, 1
      %p507 = por %p505, %p506
      %p508 = scmp.ne.s32.totalorder %s499, %s500
      %p509 = scmp.eq.s32.totalorder %s122, 0
      %p510 = por %p508, %p509
      %p511 = scmp.ne.s32.totalorder %s499, %s500
      %p512 = scmp.eq.s32.totalorder %s123, 1
      %p513 = por %p511, %p512
      %p515 = scmp.ne.s32.totalorder %s500, %s514
      %p516 = scmp.eq.s32.totalorder %s123, 0
      %p517 = por %p515, %p516
      %s519 = sadd.s32 %s518, 1
      %p522 = scmp.eq.s32.totalorder %s117, 1
      %p523 = scmp.ne.s32.totalorder %s518, %s520
      %p524 = scmp.eq.s32.totalorder %s117, 0
      %p525 = por %p523, %p524
      %p526 = scmp.ne.s32.totalorder %s518, %s520
      %p527 = scmp.eq.s32.totalorder %s122, 1
      %p528 = por %p526, %p527
      %p529 = scmp.ne.s32.totalorder %s520, %s521
      %p530 = scmp.eq.s32.totalorder %s122, 0
      %p531 = por %p529, %p530
      %p532 = scmp.ne.s32.totalorder %s520, %s521
      %p533 = scmp.eq.s32.totalorder %s123, 1
      %p534 = por %p532, %p533
      %p536 = scmp.ne.s32.totalorder %s521, %s535
      %p537 = scmp.eq.s32.totalorder %s123, 0
      %p538 = por %p536, %p537
      %s540 = sadd.s32 %s539, 1
      %p543 = scmp.eq.s32.totalorder %s117, 1
      %p544 = scmp.ne.s32.totalorder %s539, %s541
      %p545 = scmp.eq.s32.totalorder %s117, 0
      %p546 = por %p544, %p545
      %p547 = scmp.ne.s32.totalorder %s539, %s541
      %p548 = scmp.eq.s32.totalorder %s122, 1
      %p549 = por %p547, %p548
      %p550 = scmp.ne.s32.totalorder %s541, %s542
      %p551 = scmp.eq.s32.totalorder %s122, 0
      %p552 = por %p550, %p551
      %p553 = scmp.ne.s32.totalorder %s541, %s542
      %p554 = scmp.eq.s32.totalorder %s123, 1
      %p555 = por %p553, %p554
      %p557 = scmp.ne.s32.totalorder %s542, %s556
      %p558 = scmp.eq.s32.totalorder %s123, 0
      %p559 = por %p557, %p558
      %s561 = sadd.s32 %s560, 1
      %p564 = scmp.eq.s32.totalorder %s117, 1
      %p565 = scmp.ne.s32.totalorder %s560, %s562
      %p566 = scmp.eq.s32.totalorder %s117, 0
      %p567 = por %p565, %p566
      %p568 = scmp.ne.s32.totalorder %s560, %s562
      %p569 = scmp.eq.s32.totalorder %s122, 1
      %p570 = por %p568, %p569
      %p571 = scmp.ne.s32.totalorder %s562, %s563
      %p572 = scmp.eq.s32.totalorder %s122, 0
      %p573 = por %p571, %p572
      %p574 = scmp.ne.s32.totalorder %s562, %s563
      %p575 = scmp.eq.s32.totalorder %s123, 1
      %p576 = por %p574, %p575
      %p578 = scmp.ne.s32.totalorder %s563, %s577
      %p579 = scmp.eq.s32.totalorder %s123, 0
      %p580 = por %p578, %p579
      %s582 = sadd.s32 %s581, 1
      %p585 = scmp.eq.s32.totalorder %s117, 1
      %p586 = scmp.ne.s32.totalorder %s581, %s583
      %p587 = scmp.eq.s32.totalorder %s117, 0
      %p588 = por %p586, %p587
      %p589 = scmp.ne.s32.totalorder %s581, %s583
      %p590 = scmp.eq.s32.totalorder %s122, 1
      %p591 = por %p589, %p590
      %p592 = scmp.ne.s32.totalorder %s583, %s584
      %p593 = scmp.eq.s32.totalorder %s122, 0
      %p594 = por %p592, %p593
      %p595 = scmp.ne.s32.totalorder %s583, %s584
      %p596 = scmp.eq.s32.totalorder %s123, 1
      %p597 = por %p595, %p596
      %p599 = scmp.ne.s32.totalorder %s584, %s598
      %p600 = scmp.eq.s32.totalorder %s123, 0
      %p601 = por %p599, %p600
      %s603 = sadd.s32 %s602, 1
      %p606 = scmp.eq.s32.totalorder %s117, 1
      %p607 = scmp.ne.s32.totalorder %s602, %s604
      %p608 = scmp.eq.s32.totalorder %s117, 0
      %p609 = por %p607, %p608
      %p610 = scmp.ne.s32.totalorder %s602, %s604
      %p611 = scmp.eq.s32.totalorder %s122, 1
      %p612 = por %p610, %p611
      %p613 = scmp.ne.s32.totalorder %s604, %s605
      %p614 = scmp.eq.s32.totalorder %s122, 0
      %p615 = por %p613, %p614
      %p616 = scmp.ne.s32.totalorder %s604, %s605
      %p617 = scmp.eq.s32.totalorder %s123, 1
      %p618 = por %p616, %p617
      %p620 = scmp.ne.s32.totalorder %s605, %s619
      %p621 = scmp.eq.s32.totalorder %s123, 0
      %p622 = por %p620, %p621
      %s624 = sadd.s32 %s623, 1
      %p627 = scmp.eq.s32.totalorder %s117, 1
      %p628 = scmp.ne.s32.totalorder %s623, %s625
      %p629 = scmp.eq.s32.totalorder %s117, 0
      %p630 = por %p628, %p629
      %p631 = scmp.ne.s32.totalorder %s623, %s625
      %p632 = scmp.eq.s32.totalorder %s122, 1
      %p633 = por %p631, %p632
      %p634 = scmp.ne.s32.totalorder %s625, %s626
      %p635 = scmp.eq.s32.totalorder %s122, 0
      %p636 = por %p634, %p635
      %p637 = scmp.ne.s32.totalorder %s625, %s626
      %p638 = scmp.eq.s32.totalorder %s123, 1
      %p639 = por %p637, %p638
      %p641 = scmp.ne.s32.totalorder %s626, %s640
      %p642 = scmp.eq.s32.totalorder %s123, 0
      %p643 = por %p641, %p642
      %s645 = sadd.s32 %s644, 1
      %p648 = scmp.eq.s32.totalorder %s117, 1
      %p649 = scmp.ne.s32.totalorder %s644, %s646
      %p650 = scmp.eq.s32.totalorder %s117, 0
      %p651 = por %p649, %p650
      %p652 = scmp.ne.s32.totalorder %s644, %s646
      %p653 = scmp.eq.s32.totalorder %s122, 1
      %p654 = por %p652, %p653
      %p655 = scmp.ne.s32.totalorder %s646, %s647
      %p656 = scmp.eq.s32.totalorder %s122, 0
      %p657 = por %p655, %p656
      %p658 = scmp.ne.s32.totalorder %s646, %s647
      %p659 = scmp.eq.s32.totalorder %s123, 1
      %p660 = por %p658, %p659
      %p662 = scmp.ne.s32.totalorder %s647, %s661
      %p663 = scmp.eq.s32.totalorder %s123, 0
      %p664 = por %p662, %p663
      %s666 = sadd.s32 %s665, 1
      %p669 = scmp.eq.s32.totalorder %s117, 1
      %p670 = scmp.ne.s32.totalorder %s665, %s667
      %p671 = scmp.eq.s32.totalorder %s117, 0
      %p672 = por %p670, %p671
      %p673 = scmp.ne.s32.totalorder %s665, %s667
      %p674 = scmp.eq.s32.totalorder %s122, 1
      %p675 = por %p673, %p674
      %p676 = scmp.ne.s32.totalorder %s667, %s668
      %p677 = scmp.eq.s32.totalorder %s122, 0
      %p678 = por %p676, %p677
      %p679 = scmp.ne.s32.totalorder %s667, %s668
      %p680 = scmp.eq.s32.totalorder %s123, 1
      %p681 = por %p679, %p680
      %p683 = scmp.ne.s32.totalorder %s668, %s682
      %p684 = scmp.eq.s32.totalorder %s123, 0
      %p685 = por %p683, %p684
      %s687 = sadd.s32 %s686, 1
      %p690 = scmp.eq.s32.totalorder %s117, 1
      %p691 = scmp.ne.s32.totalorder %s686, %s688
      %p692 = scmp.eq.s32.totalorder %s117, 0
      %p693 = por %p691, %p692
      %p694 = scmp.ne.s32.totalorder %s686, %s688
      %p695 = scmp.eq.s32.totalorder %s122, 1
      %p696 = por %p694, %p695
      %p697 = scmp.ne.s32.totalorder %s688, %s689
      %p698 = scmp.eq.s32.totalorder %s122, 0
      %p699 = por %p697, %p698
      %p700 = scmp.ne.s32.totalorder %s688, %s689
      %p701 = scmp.eq.s32.totalorder %s123, 1
      %p702 = por %p700, %p701
      %p704 = scmp.ne.s32.totalorder %s689, %s703
      %p705 = scmp.eq.s32.totalorder %s123, 0
      %p706 = por %p704, %p705
      %s708 = sadd.s32 %s707, 1
      %p711 = scmp.eq.s32.totalorder %s117, 1
      %p712 = scmp.ne.s32.totalorder %s707, %s709
      %p713 = scmp.eq.s32.totalorder %s117, 0
      %p714 = por %p712, %p713
      %p715 = scmp.ne.s32.totalorder %s707, %s709
      %p716 = scmp.eq.s32.totalorder %s122, 1
      %p717 = por %p715, %p716
      %p718 = scmp.ne.s32.totalorder %s709, %s710
      %p719 = scmp.eq.s32.totalorder %s122, 0
      %p720 = por %p718, %p719
      %p721 = scmp.ne.s32.totalorder %s709, %s710
      %p722 = scmp.eq.s32.totalorder %s123, 1
      %p723 = por %p721, %p722
      %p725 = scmp.ne.s32.totalorder %s710, %s724
      %p726 = scmp.eq.s32.totalorder %s123, 0
      %p727 = por %p725, %p726
      %s729 = sadd.s32 %s728, 1
      %p732 = scmp.eq.s32.totalorder %s117, 1
      %p733 = scmp.ne.s32.totalorder %s728, %s730
      %p734 = scmp.eq.s32.totalorder %s117, 0
      %p735 = por %p733, %p734
      %p736 = scmp.ne.s32.totalorder %s728, %s730
      %p737 = scmp.eq.s32.totalorder %s122, 1
      %p738 = por %p736, %p737
      %p739 = scmp.ne.s32.totalorder %s730, %s731
      %p740 = scmp.eq.s32.totalorder %s122, 0
      %p741 = por %p739, %p740
      %p742 = scmp.ne.s32.totalorder %s730, %s731
      %p743 = scmp.eq.s32.totalorder %s123, 1
      %p744 = por %p742, %p743
      %p746 = scmp.ne.s32.totalorder %s731, %s745
      %p747 = scmp.eq.s32.totalorder %s123, 0
      %p748 = por %p746, %p747
      %s750 = sadd.s32 %s749, 1
      %p753 = scmp.eq.s32.totalorder %s117, 1
      %p754 = scmp.ne.s32.totalorder %s749, %s751
      %p755 = scmp.eq.s32.totalorder %s117, 0
      %p756 = por %p754, %p755
      %p757 = scmp.ne.s32.totalorder %s749, %s751
      %p758 = scmp.eq.s32.totalorder %s122, 1
      %p759 = por %p757, %p758
      %p760 = scmp.ne.s32.totalorder %s751, %s752
      %p761 = scmp.eq.s32.totalorder %s122, 0
      %p762 = por %p760, %p761
      %p763 = scmp.ne.s32.totalorder %s751, %s752
      %p764 = scmp.eq.s32.totalorder %s123, 1
      %p765 = por %p763, %p764
      %p767 = scmp.ne.s32.totalorder %s752, %s766
      %p768 = scmp.eq.s32.totalorder %s123, 0
      %p769 = por %p767, %p768
      %s771 = sadd.s32 %s770, 1
      %p774 = scmp.eq.s32.totalorder %s117, 1
      %p775 = scmp.ne.s32.totalorder %s770, %s772
      %p776 = scmp.eq.s32.totalorder %s117, 0
      %p777 = por %p775, %p776
      %p778 = scmp.ne.s32.totalorder %s770, %s772
      %p779 = scmp.eq.s32.totalorder %s122, 1
      %p780 = por %p778, %p779
      %p781 = scmp.ne.s32.totalorder %s772, %s773
      %p782 = scmp.eq.s32.totalorder %s122, 0
      %p783 = por %p781, %p782
      %p784 = scmp.ne.s32.totalorder %s772, %s773
      %p785 = scmp.eq.s32.totalorder %s123, 1
      %p786 = por %p784, %p785
      %p788 = scmp.ne.s32.totalorder %s773, %s787
      %p789 = scmp.eq.s32.totalorder %s123, 0
      %p790 = por %p788, %p789
      %s792 = sadd.s32 %s791, 1
      %p795 = scmp.eq.s32.totalorder %s117, 1
      %p796 = scmp.ne.s32.totalorder %s791, %s793
      %p797 = scmp.eq.s32.totalorder %s117, 0
      %p798 = por %p796, %p797
      %p799 = scmp.ne.s32.totalorder %s791, %s793
      %p800 = scmp.eq.s32.totalorder %s122, 1
      %p801 = por %p799, %p800
      %p802 = scmp.ne.s32.totalorder %s793, %s794
      %p803 = scmp.eq.s32.totalorder %s122, 0
      %p804 = por %p802, %p803
      %p805 = scmp.ne.s32.totalorder %s793, %s794
      %p806 = scmp.eq.s32.totalorder %s123, 1
      %p807 = por %p805, %p806
      %p809 = scmp.ne.s32.totalorder %s794, %s808
      %p810 = scmp.eq.s32.totalorder %s123, 0
      %p811 = por %p809, %p810
      %s813 = sadd.s32 %s812, 1
      %p816 = scmp.eq.s32.totalorder %s117, 1
      %p817 = scmp.ne.s32.totalorder %s812, %s814
      %p818 = scmp.eq.s32.totalorder %s117, 0
      %p819 = por %p817, %p818
      %p820 = scmp.ne.s32.totalorder %s812, %s814
      %p821 = scmp.eq.s32.totalorder %s122, 1
      %p822 = por %p820, %p821
      %p823 = scmp.ne.s32.totalorder %s814, %s815
      %p824 = scmp.eq.s32.totalorder %s122, 0
      %p825 = por %p823, %p824
      %p826 = scmp.ne.s32.totalorder %s814, %s815
      %p827 = scmp.eq.s32.totalorder %s123, 1
      %p828 = por %p826, %p827
      %p830 = scmp.ne.s32.totalorder %s815, %s829
      %p831 = scmp.eq.s32.totalorder %s123, 0
      %p832 = por %p830, %p831
      %s834 = sadd.s32 %s833, 1
      %p837 = scmp.eq.s32.totalorder %s117, 1
      %p838 = scmp.ne.s32.totalorder %s833, %s835
      %p839 = scmp.eq.s32.totalorder %s117, 0
      %p840 = por %p838, %p839
      %p841 = scmp.ne.s32.totalorder %s833, %s835
      %p842 = scmp.eq.s32.totalorder %s122, 1
      %p843 = por %p841, %p842
      %p844 = scmp.ne.s32.totalorder %s835, %s836
      %p845 = scmp.eq.s32.totalorder %s122, 0
      %p846 = por %p844, %p845
      %p847 = scmp.ne.s32.totalorder %s835, %s836
      %p848 = scmp.eq.s32.totalorder %s123, 1
      %p849 = por %p847, %p848
      %p851 = scmp.ne.s32.totalorder %s836, %s850
      %p852 = scmp.eq.s32.totalorder %s123, 0
      %p853 = por %p851, %p852
      %s855 = sadd.s32 %s854, 1
      %p858 = scmp.eq.s32.totalorder %s117, 1
      %p859 = scmp.ne.s32.totalorder %s854, %s856
      %p860 = scmp.eq.s32.totalorder %s117, 0
      %p861 = por %p859, %p860
      %p862 = scmp.ne.s32.totalorder %s854, %s856
      %p863 = scmp.eq.s32.totalorder %s122, 1
      %p864 = por %p862, %p863
      %p865 = scmp.ne.s32.totalorder %s856, %s857
      %p866 = scmp.eq.s32.totalorder %s122, 0
      %p867 = por %p865, %p866
      %p868 = scmp.ne.s32.totalorder %s856, %s857
      %p869 = scmp.eq.s32.totalorder %s123, 1
      %p870 = por %p868, %p869
      %p872 = scmp.ne.s32.totalorder %s857, %s871
      %p873 = scmp.eq.s32.totalorder %s123, 0
      %p874 = por %p872, %p873
      %s876 = sadd.s32 %s875, 1
      %p879 = scmp.eq.s32.totalorder %s117, 1
      %p880 = scmp.ne.s32.totalorder %s875, %s877
      %p881 = scmp.eq.s32.totalorder %s117, 0
      %p882 = por %p880, %p881
      %p883 = scmp.ne.s32.totalorder %s875, %s877
      %p884 = scmp.eq.s32.totalorder %s122, 1
      %p885 = por %p883, %p884
      %p886 = scmp.ne.s32.totalorder %s877, %s878
      %p887 = scmp.eq.s32.totalorder %s122, 0
      %p888 = por %p886, %p887
      %p889 = scmp.ne.s32.totalorder %s877, %s878
      %p890 = scmp.eq.s32.totalorder %s123, 1
      %p891 = por %p889, %p890
      %p893 = scmp.ne.s32.totalorder %s878, %s892
      %p894 = scmp.eq.s32.totalorder %s123, 0
      %p895 = por %p893, %p894
      %s897 = sadd.s32 %s896, 1
      %p900 = scmp.eq.s32.totalorder %s117, 1
      %p901 = scmp.ne.s32.totalorder %s896, %s898
      %p902 = scmp.eq.s32.totalorder %s117, 0
      %p903 = por %p901, %p902
      %p904 = scmp.ne.s32.totalorder %s896, %s898
      %p905 = scmp.eq.s32.totalorder %s122, 1
      %p906 = por %p904, %p905
      %p907 = scmp.ne.s32.totalorder %s898, %s899
      %p908 = scmp.eq.s32.totalorder %s122, 0
      %p909 = por %p907, %p908
      %p910 = scmp.ne.s32.totalorder %s898, %s899
      %p911 = scmp.eq.s32.totalorder %s123, 1
      %p912 = por %p910, %p911
      %p914 = scmp.ne.s32.totalorder %s899, %s913
      %p915 = scmp.eq.s32.totalorder %s123, 0
      %p916 = por %p914, %p915
      %s918 = sadd.s32 %s917, 1
      %p921 = scmp.eq.s32.totalorder %s117, 1
      %p922 = scmp.ne.s32.totalorder %s917, %s919
      %p923 = scmp.eq.s32.totalorder %s117, 0
      %p924 = por %p922, %p923
      %p925 = scmp.ne.s32.totalorder %s917, %s919
      %p926 = scmp.eq.s32.totalorder %s122, 1
      %p927 = por %p925, %p926
      %p928 = scmp.ne.s32.totalorder %s919, %s920
      %p929 = scmp.eq.s32.totalorder %s122, 0
      %p930 = por %p928, %p929
      %p931 = scmp.ne.s32.totalorder %s919, %s920
      %p932 = scmp.eq.s32.totalorder %s123, 1
      %p933 = por %p931, %p932
      %p935 = scmp.ne.s32.totalorder %s920, %s934
      %p936 = scmp.eq.s32.totalorder %s123, 0
      %p937 = por %p935, %p936
      %s939 = sadd.s32 %s938, 1
      %p942 = scmp.eq.s32.totalorder %s117, 1
      %p943 = scmp.ne.s32.totalorder %s938, %s940
      %p944 = scmp.eq.s32.totalorder %s117, 0
      %p945 = por %p943, %p944
      %p946 = scmp.ne.s32.totalorder %s938, %s940
      %p947 = scmp.eq.s32.totalorder %s122, 1
      %p948 = por %p946, %p947
      %p949 = scmp.ne.s32.totalorder %s940, %s941
      %p950 = scmp.eq.s32.totalorder %s122, 0
      %p951 = por %p949, %p950
      %p952 = scmp.ne.s32.totalorder %s940, %s941
      %p953 = scmp.eq.s32.totalorder %s123, 1
      %p954 = por %p952, %p953
      %p956 = scmp.ne.s32.totalorder %s941, %s955
      %p957 = scmp.eq.s32.totalorder %s123, 0
      %p958 = por %p956, %p957
      %s960 = sadd.s32 %s959, 1
      %p963 = scmp.eq.s32.totalorder %s117, 1
      %p964 = scmp.ne.s32.totalorder %s959, %s961
      %p965 = scmp.eq.s32.totalorder %s117, 0
      %p966 = por %p964, %p965
      %p967 = scmp.ne.s32.totalorder %s959, %s961
      %p968 = scmp.eq.s32.totalorder %s122, 1
      %p969 = por %p967, %p968
      %p970 = scmp.ne.s32.totalorder %s961, %s962
      %p971 = scmp.eq.s32.totalorder %s122, 0
      %p972 = por %p970, %p971
      %p973 = scmp.ne.s32.totalorder %s961, %s962
      %p974 = scmp.eq.s32.totalorder %s123, 1
      %p975 = por %p973, %p974
      %p977 = scmp.ne.s32.totalorder %s962, %s976
      %p978 = scmp.eq.s32.totalorder %s123, 0
      %p979 = por %p977, %p978
      %s981 = sadd.s32 %s980, 1
      %p984 = scmp.eq.s32.totalorder %s117, 1
      %p985 = scmp.ne.s32.totalorder %s980, %s982
      %p986 = scmp.eq.s32.totalorder %s117, 0
      %p987 = por %p985, %p986
      %p988 = scmp.ne.s32.totalorder %s980, %s982
      %p989 = scmp.eq.s32.totalorder %s122, 1
      %p990 = por %p988, %p989
      %p991 = scmp.ne.s32.totalorder %s982, %s983
      %p992 = scmp.eq.s32.totalorder %s122, 0
      %p993 = por %p991, %p992
      %p994 = scmp.ne.s32.totalorder %s982, %s983
      %p995 = scmp.eq.s32.totalorder %s123, 1
      %p996 = por %p994, %p995
      %p998 = scmp.ne.s32.totalorder %s983, %s997
      %p999 = scmp.eq.s32.totalorder %s123, 0
      %p1000 = por %p998, %p999
      %s1002 = sadd.s32 %s1001, 1
      %p1005 = scmp.eq.s32.totalorder %s117, 1
      %p1006 = scmp.ne.s32.totalorder %s1001, %s1003
      %p1007 = scmp.eq.s32.totalorder %s117, 0
      %p1008 = por %p1006, %p1007
      %p1009 = scmp.ne.s32.totalorder %s1001, %s1003
      %p1010 = scmp.eq.s32.totalorder %s122, 1
      %p1011 = por %p1009, %p1010
      %p1012 = scmp.ne.s32.totalorder %s1003, %s1004
      %p1013 = scmp.eq.s32.totalorder %s122, 0
      %p1014 = por %p1012, %p1013
      %p1015 = scmp.ne.s32.totalorder %s1003, %s1004
      %p1016 = scmp.eq.s32.totalorder %s123, 1
      %p1017 = por %p1015, %p1016
      %p1019 = scmp.ne.s32.totalorder %s1004, %s1018
      %p1020 = scmp.eq.s32.totalorder %s123, 0
      %p1021 = por %p1019, %p1020
      %s1023 = sadd.s32 %s1022, 1
      %p1026 = scmp.eq.s32.totalorder %s117, 1
      %p1027 = scmp.ne.s32.totalorder %s1022, %s1024
      %p1028 = scmp.eq.s32.totalorder %s117, 0
      %p1029 = por %p1027, %p1028
      %p1030 = scmp.ne.s32.totalorder %s1022, %s1024
      %p1031 = scmp.eq.s32.totalorder %s122, 1
      %p1032 = por %p1030, %p1031
      %p1033 = scmp.ne.s32.totalorder %s1024, %s1025
      %p1034 = scmp.eq.s32.totalorder %s122, 0
      %p1035 = por %p1033, %p1034
      %p1036 = scmp.ne.s32.totalorder %s1024, %s1025
      %p1037 = scmp.eq.s32.totalorder %s123, 1
      %p1038 = por %p1036, %p1037
      %p1040 = scmp.ne.s32.totalorder %s1025, %s1039
      %p1041 = scmp.eq.s32.totalorder %s123, 0
      %p1042 = por %p1040, %p1041
      %s1044 = sadd.s32 %s1043, 1
      %p1047 = scmp.eq.s32.totalorder %s117, 1
      %p1048 = scmp.ne.s32.totalorder %s1043, %s1045
      %p1049 = scmp.eq.s32.totalorder %s117, 0
      %p1050 = por %p1048, %p1049
      %p1051 = scmp.ne.s32.totalorder %s1043, %s1045
      %p1052 = scmp.eq.s32.totalorder %s122, 1
      %p1053 = por %p1051, %p1052
      %p1054 = scmp.ne.s32.totalorder %s1045, %s1046
      %p1055 = scmp.eq.s32.totalorder %s122, 0
      %p1056 = por %p1054, %p1055
      %p1057 = scmp.ne.s32.totalorder %s1045, %s1046
      %p1058 = scmp.eq.s32.totalorder %s123, 1
      %p1059 = por %p1057, %p1058
      %p1061 = scmp.ne.s32.totalorder %s1046, %s1060
      %p1062 = scmp.eq.s32.totalorder %s123, 0
      %p1063 = por %p1061, %p1062
      %s1065 = sadd.s32 %s1064, 1
      %p1068 = scmp.eq.s32.totalorder %s117, 1
      %p1069 = scmp.ne.s32.totalorder %s1064, %s1066
      %p1070 = scmp.eq.s32.totalorder %s117, 0
      %p1071 = por %p1069, %p1070
      %p1072 = scmp.ne.s32.totalorder %s1064, %s1066
      %p1073 = scmp.eq.s32.totalorder %s122, 1
      %p1074 = por %p1072, %p1073
      %p1075 = scmp.ne.s32.totalorder %s1066, %s1067
      %p1076 = scmp.eq.s32.totalorder %s122, 0
      %p1077 = por %p1075, %p1076
      %p1078 = scmp.ne.s32.totalorder %s1066, %s1067
      %p1079 = scmp.eq.s32.totalorder %s123, 1
      %p1080 = por %p1078, %p1079
      %p1082 = scmp.ne.s32.totalorder %s1067, %s1081
      %p1083 = scmp.eq.s32.totalorder %s123, 0
      %p1084 = por %p1082, %p1083
      %s1086 = sadd.s32 %s1085, 1
      %p1089 = scmp.eq.s32.totalorder %s117, 1
      %p1090 = scmp.ne.s32.totalorder %s1085, %s1087
      %p1091 = scmp.eq.s32.totalorder %s117, 0
      %p1092 = por %p1090, %p1091
      %p1093 = scmp.ne.s32.totalorder %s1085, %s1087
      %p1094 = scmp.eq.s32.totalorder %s122, 1
      %p1095 = por %p1093, %p1094
      %p1096 = scmp.ne.s32.totalorder %s1087, %s1088
      %p1097 = scmp.eq.s32.totalorder %s122, 0
      %p1098 = por %p1096, %p1097
      %p1099 = scmp.ne.s32.totalorder %s1087, %s1088
      %p1100 = scmp.eq.s32.totalorder %s123, 1
      %p1101 = por %p1099, %p1100
      %p1103 = scmp.ne.s32.totalorder %s1088, %s1102
      %p1104 = scmp.eq.s32.totalorder %s123, 0
      %p1105 = por %p1103, %p1104
      %s1107 = sadd.s32 %s1106, 1
      %p1110 = scmp.eq.s32.totalorder %s117, 1
      %p1111 = scmp.ne.s32.totalorder %s1106, %s1108
      %p1112 = scmp.eq.s32.totalorder %s117, 0
      %p1113 = por %p1111, %p1112
      %p1114 = scmp.ne.s32.totalorder %s1106, %s1108
      %p1115 = scmp.eq.s32.totalorder %s122, 1
      %p1116 = por %p1114, %p1115
      %p1117 = scmp.ne.s32.totalorder %s1108, %s1109
      %p1118 = scmp.eq.s32.totalorder %s122, 0
      %p1119 = por %p1117, %p1118
      %p1120 = scmp.ne.s32.totalorder %s1108, %s1109
      %p1121 = scmp.eq.s32.totalorder %s123, 1
      %p1122 = por %p1120, %p1121
      %p1124 = scmp.ne.s32.totalorder %s1109, %s1123
      %p1125 = scmp.eq.s32.totalorder %s123, 0
      %p1126 = por %p1124, %p1125
      %s1128 = sadd.s32 %s1127, 1
      %p1131 = scmp.eq.s32.totalorder %s117, 1
      %p1132 = scmp.ne.s32.totalorder %s1127, %s1129
      %p1133 = scmp.eq.s32.totalorder %s117, 0
      %p1134 = por %p1132, %p1133
      %p1135 = scmp.ne.s32.totalorder %s1127, %s1129
      %p1136 = scmp.eq.s32.totalorder %s122, 1
      %p1137 = por %p1135, %p1136
      %p1138 = scmp.ne.s32.totalorder %s1129, %s1130
      %p1139 = scmp.eq.s32.totalorder %s122, 0
      %p1140 = por %p1138, %p1139
      %p1141 = scmp.ne.s32.totalorder %s1129, %s1130
      %p1142 = scmp.eq.s32.totalorder %s123, 1
      %p1143 = por %p1141, %p1142
      %p1145 = scmp.ne.s32.totalorder %s1130, %s1144
      %p1146 = scmp.eq.s32.totalorder %s123, 0
      %p1147 = por %p1145, %p1146
      %s1149 = sadd.s32 %s1148, 1
      %p1152 = scmp.eq.s32.totalorder %s117, 1
      %p1153 = scmp.ne.s32.totalorder %s1148, %s1150
      %p1154 = scmp.eq.s32.totalorder %s117, 0
      %p1155 = por %p1153, %p1154
      %p1156 = scmp.ne.s32.totalorder %s1148, %s1150
      %p1157 = scmp.eq.s32.totalorder %s122, 1
      %p1158 = por %p1156, %p1157
      %p1159 = scmp.ne.s32.totalorder %s1150, %s1151
      %p1160 = scmp.eq.s32.totalorder %s122, 0
      %p1161 = por %p1159, %p1160
      %p1162 = scmp.ne.s32.totalorder %s1150, %s1151
      %p1163 = scmp.eq.s32.totalorder %s123, 1
      %p1164 = por %p1162, %p1163
      %p1166 = scmp.ne.s32.totalorder %s1151, %s1165
      %p1167 = scmp.eq.s32.totalorder %s123, 0
      %p1168 = por %p1166, %p1167
      %s1170 = sadd.s32 %s1169, 1
      %p1173 = scmp.eq.s32.totalorder %s117, 1
      %p1174 = scmp.ne.s32.totalorder %s1169, %s1171
      %p1175 = scmp.eq.s32.totalorder %s117, 0
      %p1176 = por %p1174, %p1175
      %p1177 = scmp.ne.s32.totalorder %s1169, %s1171
      %p1178 = scmp.eq.s32.totalorder %s122, 1
      %p1179 = por %p1177, %p1178
      %p1180 = scmp.ne.s32.totalorder %s1171, %s1172
      %p1181 = scmp.eq.s32.totalorder %s122, 0
      %p1182 = por %p1180, %p1181
      %p1183 = scmp.ne.s32.totalorder %s1171, %s1172
      %p1184 = scmp.eq.s32.totalorder %s123, 1
      %p1185 = por %p1183, %p1184
      %p1187 = scmp.ne.s32.totalorder %s1172, %s1186
      %p1188 = scmp.eq.s32.totalorder %s123, 0
      %p1189 = por %p1187, %p1188
      %s1190 = ssub.s32 %s117, %s124
      %p1191 = scmp.eq.s32.totalorder %s1190, 0
      %s1193 = sadd.s32 %s1192, 1
      %s1194 = scalar_select %p1191, %s1192, %s1193
      %p1197 = pneg %p1191
      %p1198 = scmp.eq.s32.totalorder %s117, 1
      %p1199 = por %p1197, %p1198
      %p1200 = scmp.ne.s32.totalorder %s1192, %s1195
      %p1201 = scmp.eq.s32.totalorder %s117, 0
      %p1202 = por %p1200, %p1201
      %p1203 = scmp.ne.s32.totalorder %s1192, %s1195
      %p1204 = scmp.eq.s32.totalorder %s122, 1
      %p1205 = por %p1203, %p1204
      %p1206 = scmp.ne.s32.totalorder %s1195, %s1196
      %p1207 = scmp.eq.s32.totalorder %s122, 0
      %p1208 = por %p1206, %p1207
      %p1209 = scmp.ne.s32.totalorder %s1195, %s1196
      %p1210 = scmp.eq.s32.totalorder %s123, 1
      %p1211 = por %p1209, %p1210
      %p1213 = scmp.ne.s32.totalorder %s1196, %s1212
      %p1214 = scmp.eq.s32.totalorder %s123, 0
      %p1215 = por %p1213, %p1214
      %p1216 = scmp.le.s32.totalorder 1, %s117
      %p1217 = scmp.lt.s32.totalorder %s117, 3
      %p1218 = pnand %p1216, %p1217
      %p1219 = pneg %p1218
      // Predicated region
      $region9: #{forward.1} parent=5 // pred_check
        _
      $region10: #{forward.1} parent=5 // pred_check_branch
        %1221 = sbr.rel (%p1218) target = $region12
      $region11: #{forward.1} parent=5 // pred_region
        %s1222 = ssub.s32 %s117, 1
        // Predicated region
        $region13: #{forward.1} parent=11 // pred_check
          %p1223 = pneg %p216
        $region14: #{forward.1} parent=11 // pred_check_branch
          %1225 = sbr.rel (%p1223) target = $region16
        $region15: #{forward.1} parent=11 // pred_region
          _
        $region16: #{forward.1} parent=11 // pred_fallthru
          _
        // Predicated region
        $region17: #{forward.1} parent=11 // pred_check
          %p1226 = pneg %p237
        $region18: #{forward.1} parent=11 // pred_check_branch
          %1228 = sbr.rel (%p1226) target = $region20
        $region19: #{forward.1} parent=11 // pred_region
          _
        $region20: #{forward.1} parent=11 // pred_fallthru
          _
        // Predicated region
        $region21: #{forward.1} parent=11 // pred_check
          %p1229 = pneg %p258
        $region22: #{forward.1} parent=11 // pred_check_branch
          %1231 = sbr.rel (%p1229) target = $region24
        $region23: #{forward.1} parent=11 // pred_region
          _
        $region24: #{forward.1} parent=11 // pred_fallthru
          _
        // Predicated region
        $region25: #{forward.1} parent=11 // pred_check
          %p1232 = pneg %p279
        $region26: #{forward.1} parent=11 // pred_check_branch
          %1234 = sbr.rel (%p1232) target = $region28
        $region27: #{forward.1} parent=11 // pred_region
          %s1236 = ssub.s32 16, 16
          %1237 = vsyncadd [#allocation5], %s1236
          %s1239 = sshll.u32 [#allocation4], 4
          %s1240 = int_to_ptr.vmem [resolvable:$true] %s1239
          %1242 = dma.hbm_to_vmem [thread:$0]  %s13, 16, %s1240, [#allocation5]
        $region28: #{forward.1} parent=11 // pred_fallthru
          _
        // Predicated region
        $region29: #{forward.1} parent=11 // pred_check
          %p1243 = pneg %p300
        $region30: #{forward.1} parent=11 // pred_check_branch
          %1245 = sbr.rel (%p1243) target = $region32
        $region31: #{forward.1} parent=11 // pred_region
          _
        $region32: #{forward.1} parent=11 // pred_fallthru
          _
        // Predicated region
        $region33: #{forward.1} parent=11 // pred_check
          %p1246 = pneg %p321
        $region34: #{forward.1} parent=11 // pred_check_branch
          %1248 = sbr.rel (%p1246) target = $region36
        $region35: #{forward.1} parent=11 // pred_region
          %s1250 = ssub.s32 16, 16
          %1251 = vsyncadd [#allocation7], %s1250
          %s1253 = sshll.u32 [#allocation6], 4
          %s1254 = int_to_ptr.vmem [resolvable:$true] %s1253
          %1256 = dma.hbm_to_vmem [thread:$0]  %s17, 16, %s1254, [#allocation7]
        $region36: #{forward.1} parent=11 // pred_fallthru
          _
        // Predicated region
        $region37: #{forward.1} parent=11 // pred_check
          %p1257 = pneg %p342
        $region38: #{forward.1} parent=11 // pred_check_branch
          %1259 = sbr.rel (%p1257) target = $region40
        $region39: #{forward.1} parent=11 // pred_region
          _
        $region40: #{forward.1} parent=11 // pred_fallthru
          _
        // Predicated region
        $region41: #{forward.1} parent=11 // pred_check
          %p1260 = pneg %p363
        $region42: #{forward.1} parent=11 // pred_check_branch
          %1262 = sbr.rel (%p1260) target = $region44
        $region43: #{forward.1} parent=11 // pred_region
          %s1264 = ssub.s32 16, 16
          %1265 = vsyncadd [#allocation7], %s1264
          %s1267 = sshll.u32 [#allocation8], 4
          %s1268 = int_to_ptr.vmem [resolvable:$true] %s1267
          %1270 = dma.hbm_to_vmem [thread:$0]  %s21, 16, %s1268, [#allocation7]
        $region44: #{forward.1} parent=11 // pred_fallthru
          _
        // Predicated region
        $region45: #{forward.1} parent=11 // pred_check
          %p1271 = pneg %p384
        $region46: #{forward.1} parent=11 // pred_check_branch
          %1273 = sbr.rel (%p1271) target = $region48
        $region47: #{forward.1} parent=11 // pred_region
          _
        $region48: #{forward.1} parent=11 // pred_fallthru
          _
        // Predicated region
        $region49: #{forward.1} parent=11 // pred_check
          %p1274 = pneg %p405
        $region50: #{forward.1} parent=11 // pred_check_branch
          %1276 = sbr.rel (%p1274) target = $region52
        $region51: #{forward.1} parent=11 // pred_region
          %s1278 = ssub.s32 16, 16
          %1279 = vsyncadd [#allocation10], %s1278
          %s1281 = sshll.u32 [#allocation9], 4
          %s1282 = int_to_ptr.vmem [resolvable:$true] %s1281
          %1284 = dma.hbm_to_vmem [thread:$0]  %s25, 16, %s1282, [#allocation10]
        $region52: #{forward.1} parent=11 // pred_fallthru
          _
        // Predicated region
        $region53: #{forward.1} parent=11 // pred_check
          %p1285 = pneg %p426
        $region54: #{forward.1} parent=11 // pred_check_branch
          %1287 = sbr.rel (%p1285) target = $region56
        $region55: #{forward.1} parent=11 // pred_region
          _
        $region56: #{forward.1} parent=11 // pred_fallthru
          _
        // Predicated region
        $region57: #{forward.1} parent=11 // pred_check
          %p1288 = pneg %p447
        $region58: #{forward.1} parent=11 // pred_check_branch
          %1290 = sbr.rel (%p1288) target = $region60
        $region59: #{forward.1} parent=11 // pred_region
          %s1292 = ssub.s32 16, 16
          %1293 = vsyncadd [#allocation10], %s1292
          %s1295 = sshll.u32 [#allocation11], 4
          %s1296 = int_to_ptr.vmem [resolvable:$true] %s1295
          %1298 = dma.hbm_to_vmem [thread:$0]  %s29, 16, %s1296, [#allocation10]
        $region60: #{forward.1} parent=11 // pred_fallthru
          _
        // Predicated region
        $region61: #{forward.1} parent=11 // pred_check
          %p1299 = pneg %p468
        $region62: #{forward.1} parent=11 // pred_check_branch
          %1301 = sbr.rel (%p1299) target = $region64
        $region63: #{forward.1} parent=11 // pred_region
          _
        $region64: #{forward.1} parent=11 // pred_fallthru
          _
        // Predicated region
        $region65: #{forward.1} parent=11 // pred_check
          %p1302 = pneg %p489
        $region66: #{forward.1} parent=11 // pred_check_branch
          %1304 = sbr.rel (%p1302) target = $region68
        $region67: #{forward.1} parent=11 // pred_region
          _
        $region68: #{forward.1} parent=11 // pred_fallthru
          _
        // Predicated region
        $region69: #{forward.1} parent=11 // pred_check
          %p1305 = pneg %p510
        $region70: #{forward.1} parent=11 // pred_check_branch
          %1307 = sbr.rel (%p1305) target = $region72
        $region71: #{forward.1} parent=11 // pred_region
          _
        $region72: #{forward.1} parent=11 // pred_fallthru
          _
        // Predicated region
        $region73: #{forward.1} parent=11 // pred_check
          %p1308 = pneg %p531
        $region74: #{forward.1} parent=11 // pred_check_branch
          %1310 = sbr.rel (%p1308) target = $region76
        $region75: #{forward.1} parent=11 // pred_region
          _
        $region76: #{forward.1} parent=11 // pred_fallthru
          _
        // Predicated region
        $region77: #{forward.1} parent=11 // pred_check
          %p1311 = pneg %p552
        $region78: #{forward.1} parent=11 // pred_check_branch
          %1313 = sbr.rel (%p1311) target = $region80
        $region79: #{forward.1} parent=11 // pred_region
          _
        $region80: #{forward.1} parent=11 // pred_fallthru
          _
        // Predicated region
        $region81: #{forward.1} parent=11 // pred_check
          %p1314 = pneg %p573
        $region82: #{forward.1} parent=11 // pred_check_branch
          %1316 = sbr.rel (%p1314) target = $region84
        $region83: #{forward.1} parent=11 // pred_region
          _
        $region84: #{forward.1} parent=11 // pred_fallthru
          _
        // Predicated region
        $region85: #{forward.1} parent=11 // pred_check
          %p1317 = pneg %p594
        $region86: #{forward.1} parent=11 // pred_check_branch
          %1319 = sbr.rel (%p1317) target = $region88
        $region87: #{forward.1} parent=11 // pred_region
          _
        $region88: #{forward.1} parent=11 // pred_fallthru
          _
        // Predicated region
        $region89: #{forward.1} parent=11 // pred_check
          %p1320 = pneg %p615
        $region90: #{forward.1} parent=11 // pred_check_branch
          %1322 = sbr.rel (%p1320) target = $region92
        $region91: #{forward.1} parent=11 // pred_region
          _
        $region92: #{forward.1} parent=11 // pred_fallthru
          _
        // Predicated region
        $region93: #{forward.1} parent=11 // pred_check
          %p1323 = pneg %p636
        $region94: #{forward.1} parent=11 // pred_check_branch
          %1325 = sbr.rel (%p1323) target = $region96
        $region95: #{forward.1} parent=11 // pred_region
          _
        $region96: #{forward.1} parent=11 // pred_fallthru
          _
        // Predicated region
        $region97: #{forward.1} parent=11 // pred_check
          %p1326 = pneg %p657
        $region98: #{forward.1} parent=11 // pred_check_branch
          %1328 = sbr.rel (%p1326) target = $region100
        $region99: #{forward.1} parent=11 // pred_region
          _
        $region100: #{forward.1} parent=11 // pred_fallthru
          _
        // Predicated region
        $region101: #{forward.1} parent=11 // pred_check
          %p1329 = pneg %p678
        $region102: #{forward.1} parent=11 // pred_check_branch
          %1331 = sbr.rel (%p1329) target = $region104
        $region103: #{forward.1} parent=11 // pred_region
          _
        $region104: #{forward.1} parent=11 // pred_fallthru
          _
        // Predicated region
        $region105: #{forward.1} parent=11 // pred_check
          %p1332 = pneg %p699
        $region106: #{forward.1} parent=11 // pred_check_branch
          %1334 = sbr.rel (%p1332) target = $region108
        $region107: #{forward.1} parent=11 // pred_region
          _
        $region108: #{forward.1} parent=11 // pred_fallthru
          _
        // Predicated region
        $region109: #{forward.1} parent=11 // pred_check
          %p1335 = pneg %p720
        $region110: #{forward.1} parent=11 // pred_check_branch
          %1337 = sbr.rel (%p1335) target = $region112
        $region111: #{forward.1} parent=11 // pred_region
          _
        $region112: #{forward.1} parent=11 // pred_fallthru
          _
        // Predicated region
        $region113: #{forward.1} parent=11 // pred_check
          %p1338 = pneg %p741
        $region114: #{forward.1} parent=11 // pred_check_branch
          %1340 = sbr.rel (%p1338) target = $region116
        $region115: #{forward.1} parent=11 // pred_region
          _
        $region116: #{forward.1} parent=11 // pred_fallthru
          _
        // Predicated region
        $region117: #{forward.1} parent=11 // pred_check
          %p1341 = pneg %p762
        $region118: #{forward.1} parent=11 // pred_check_branch
          %1343 = sbr.rel (%p1341) target = $region120
        $region119: #{forward.1} parent=11 // pred_region
          _
        $region120: #{forward.1} parent=11 // pred_fallthru
          _
        // Predicated region
        $region121: #{forward.1} parent=11 // pred_check
          %p1344 = pneg %p783
        $region122: #{forward.1} parent=11 // pred_check_branch
          %1346 = sbr.rel (%p1344) target = $region124
        $region123: #{forward.1} parent=11 // pred_region
          _
        $region124: #{forward.1} parent=11 // pred_fallthru
          _
        // Predicated region
        $region125: #{forward.1} parent=11 // pred_check
          %p1347 = pneg %p804
        $region126: #{forward.1} parent=11 // pred_check_branch
          %1349 = sbr.rel (%p1347) target = $region128
        $region127: #{forward.1} parent=11 // pred_region
          _
        $region128: #{forward.1} parent=11 // pred_fallthru
          _
        // Predicated region
        $region129: #{forward.1} parent=11 // pred_check
          %p1350 = pneg %p825
        $region130: #{forward.1} parent=11 // pred_check_branch
          %1352 = sbr.rel (%p1350) target = $region132
        $region131: #{forward.1} parent=11 // pred_region
          _
        $region132: #{forward.1} parent=11 // pred_fallthru
          _
        // Predicated region
        $region133: #{forward.1} parent=11 // pred_check
          %p1353 = pneg %p846
        $region134: #{forward.1} parent=11 // pred_check_branch
          %1355 = sbr.rel (%p1353) target = $region136
        $region135: #{forward.1} parent=11 // pred_region
          %s1357 = ssub.s32 16, 16
          %1358 = vsyncadd [#allocation13], %s1357
          %s1360 = sshll.u32 [#allocation12], 4
          %s1361 = int_to_ptr.vmem [resolvable:$true] %s1360
          %1363 = dma.hbm_to_vmem [thread:$0]  %s67, 16, %s1361, [#allocation13]
        $region136: #{forward.1} parent=11 // pred_fallthru
          _
        // Predicated region
        $region137: #{forward.1} parent=11 // pred_check
          %p1364 = pneg %p867
        $region138: #{forward.1} parent=11 // pred_check_branch
          %1366 = sbr.rel (%p1364) target = $region140
        $region139: #{forward.1} parent=11 // pred_region
          _
        $region140: #{forward.1} parent=11 // pred_fallthru
          _
        // Predicated region
        $region141: #{forward.1} parent=11 // pred_check
          %p1367 = pneg %p888
        $region142: #{forward.1} parent=11 // pred_check_branch
          %1369 = sbr.rel (%p1367) target = $region144
        $region143: #{forward.1} parent=11 // pred_region
          %s1371 = ssub.s32 16, 16
          %1372 = vsyncadd [#allocation13], %s1371
          %s1374 = sshll.u32 [#allocation14], 4
          %s1375 = int_to_ptr.vmem [resolvable:$true] %s1374
          %1377 = dma.hbm_to_vmem [thread:$0]  %s71, 16, %s1375, [#allocation13]
        $region144: #{forward.1} parent=11 // pred_fallthru
          _
        // Predicated region
        $region145: #{forward.1} parent=11 // pred_check
          %p1378 = pneg %p909
        $region146: #{forward.1} parent=11 // pred_check_branch
          %1380 = sbr.rel (%p1378) target = $region148
        $region147: #{forward.1} parent=11 // pred_region
          _
        $region148: #{forward.1} parent=11 // pred_fallthru
          _
        // Predicated region
        $region149: #{forward.1} parent=11 // pred_check
          %p1381 = pneg %p930
        $region150: #{forward.1} parent=11 // pred_check_branch
          %1383 = sbr.rel (%p1381) target = $region152
        $region151: #{forward.1} parent=11 // pred_region
          _
        $region152: #{forward.1} parent=11 // pred_fallthru
          _
        // Predicated region
        $region153: #{forward.1} parent=11 // pred_check
          %p1384 = pneg %p951
        $region154: #{forward.1} parent=11 // pred_check_branch
          %1386 = sbr.rel (%p1384) target = $region156
        $region155: #{forward.1} parent=11 // pred_region
          %s1388 = ssub.s32 1024, 1024
          %1389 = vsyncadd [#allocation16], %s1388
          %s1390 = sshll.u32 [#allocation15], 4
          %s1391 = int_to_ptr.vmem [resolvable:$true] %s1390
          %1396 = dma.hbm_to_vmem [thread:$0]  %s77, 1024, %s1391, [#allocation16], 128, 128, 8
        $region156: #{forward.1} parent=11 // pred_fallthru
          _
        // Predicated region
        $region157: #{forward.1} parent=11 // pred_check
          %p1397 = pneg %p972
        $region158: #{forward.1} parent=11 // pred_check_branch
          %1399 = sbr.rel (%p1397) target = $region160
        $region159: #{forward.1} parent=11 // pred_region
          %s1401 = ssub.s32 1024, 1024
          %1402 = vsyncadd [#allocation16], %s1401
          %s1403 = sshll.u32 [#allocation17], 4
          %s1404 = int_to_ptr.vmem [resolvable:$true] %s1403
          %1409 = dma.hbm_to_vmem [thread:$0]  %s79, 1024, %s1404, [#allocation16], 128, 128, 8
        $region160: #{forward.1} parent=11 // pred_fallthru
          _
        // Predicated region
        $region161: #{forward.1} parent=11 // pred_check
          %p1410 = pneg %p993
        $region162: #{forward.1} parent=11 // pred_check_branch
          %1412 = sbr.rel (%p1410) target = $region164
        $region163: #{forward.1} parent=11 // pred_region
          _
        $region164: #{forward.1} parent=11 // pred_fallthru
          _
        // Predicated region
        $region165: #{forward.1} parent=11 // pred_check
          %p1413 = pneg %p1014
        $region166: #{forward.1} parent=11 // pred_check_branch
          %1415 = sbr.rel (%p1413) target = $region168
        $region167: #{forward.1} parent=11 // pred_region
          _
        $region168: #{forward.1} parent=11 // pred_fallthru
          _
        // Predicated region
        $region169: #{forward.1} parent=11 // pred_check
          %p1416 = pneg %p1035
        $region170: #{forward.1} parent=11 // pred_check_branch
          %1418 = sbr.rel (%p1416) target = $region172
        $region171: #{forward.1} parent=11 // pred_region
          _
        $region172: #{forward.1} parent=11 // pred_fallthru
          _
        // Predicated region
        $region173: #{forward.1} parent=11 // pred_check
          %p1419 = pneg %p1056
        $region174: #{forward.1} parent=11 // pred_check_branch
          %1421 = sbr.rel (%p1419) target = $region176
        $region175: #{forward.1} parent=11 // pred_region
          %s1423 = ssub.s32 1024, 1024
          %1424 = vsyncadd [#allocation19], %s1423
          %s1425 = sshll.u32 [#allocation18], 4
          %s1426 = int_to_ptr.vmem [resolvable:$true] %s1425
          %1431 = dma.hbm_to_vmem [thread:$0]  %s87, 1024, %s1426, [#allocation19], 128, 128, 8
        $region176: #{forward.1} parent=11 // pred_fallthru
          _
        // Predicated region
        $region177: #{forward.1} parent=11 // pred_check
          %p1432 = pneg %p1077
        $region178: #{forward.1} parent=11 // pred_check_branch
          %1434 = sbr.rel (%p1432) target = $region180
        $region179: #{forward.1} parent=11 // pred_region
          %s1436 = ssub.s32 1024, 1024
          %1437 = vsyncadd [#allocation19], %s1436
          %s1438 = sshll.u32 [#allocation20], 4
          %s1439 = int_to_ptr.vmem [resolvable:$true] %s1438
          %1444 = dma.hbm_to_vmem [thread:$0]  %s89, 1024, %s1439, [#allocation19], 128, 128, 8
        $region180: #{forward.1} parent=11 // pred_fallthru
          _
        // Predicated region
        $region181: #{forward.1} parent=11 // pred_check
          %p1445 = pneg %p1098
        $region182: #{forward.1} parent=11 // pred_check_branch
          %1447 = sbr.rel (%p1445) target = $region184
        $region183: #{forward.1} parent=11 // pred_region
          %s1449 = ssub.s32 16, 16
          %1450 = vsyncadd [#allocation22], %s1449
          %s1452 = sshll.u32 [#allocation21], 4
          %s1453 = int_to_ptr.vmem [resolvable:$true] %s1452
          %1455 = dma.hbm_to_vmem [thread:$0]  %s91, 16, %s1453, [#allocation22]
        $region184: #{forward.1} parent=11 // pred_fallthru
          _
        // Predicated region
        $region185: #{forward.1} parent=11 // pred_check
          %p1456 = pneg %p1119
        $region186: #{forward.1} parent=11 // pred_check_branch
          %1458 = sbr.rel (%p1456) target = $region188
        $region187: #{forward.1} parent=11 // pred_region
          %s1460 = ssub.s32 1024, 1024
          %1461 = vsyncadd [#allocation22], %s1460
          %s1462 = sshll.u32 [#allocation23], 4
          %s1463 = int_to_ptr.vmem [resolvable:$true] %s1462
          %1468 = dma.hbm_to_vmem [thread:$0]  %s93, 1024, %s1463, [#allocation22], 128, 128, 8
        $region188: #{forward.1} parent=11 // pred_fallthru
          _
        // Predicated region
        $region189: #{forward.1} parent=11 // pred_check
          %p1469 = pneg %p1140
        $region190: #{forward.1} parent=11 // pred_check_branch
          %1471 = sbr.rel (%p1469) target = $region192
        $region191: #{forward.1} parent=11 // pred_region
          %s1473 = ssub.s32 16, 16
          %1474 = vsyncadd [#allocation25], %s1473
          %s1476 = sshll.u32 [#allocation24], 4
          %s1477 = int_to_ptr.vmem [resolvable:$true] %s1476
          %1479 = dma.hbm_to_vmem [thread:$0]  %s95, 16, %s1477, [#allocation25]
        $region192: #{forward.1} parent=11 // pred_fallthru
          _
        // Predicated region
        $region193: #{forward.1} parent=11 // pred_check
          %p1480 = pneg %p1161
        $region194: #{forward.1} parent=11 // pred_check_branch
          %1482 = sbr.rel (%p1480) target = $region196
        $region195: #{forward.1} parent=11 // pred_region
          %s1484 = ssub.s32 16, 16
          %1485 = vsyncadd [#allocation25], %s1484
          %s1487 = sshll.u32 [#allocation26], 4
          %s1488 = int_to_ptr.vmem [resolvable:$true] %s1487
          %1490 = dma.hbm_to_vmem [thread:$0]  %s97, 16, %s1488, [#allocation25]
        $region196: #{forward.1} parent=11 // pred_fallthru
          _
        // Predicated region
        $region197: #{forward.1} parent=11 // pred_check
          %p1491 = pneg %p1182
        $region198: #{forward.1} parent=11 // pred_check_branch
          %1493 = sbr.rel (%p1491) target = $region200
        $region199: #{forward.1} parent=11 // pred_region
          _
        $region200: #{forward.1} parent=11 // pred_fallthru
          _
      $region12: #{forward.1} parent=5 // pred_fallthru
        _
      %p1494 = scmp.lt.s32.totalorder %s117, 2
      // Predicated region
      $region201: #{forward.1} parent=5 // pred_check
        %p1495 = pneg %p1494
      $region202: #{forward.1} parent=5 // pred_check_branch
        %1497 = sbr.rel (%p1495) target = $region204
      $region203: #{forward.1} parent=5 // pred_region
        // Predicated region
        $region205: #{forward.1} parent=203 // pred_check
          %p1498 = pneg %p137
        $region206: #{forward.1} parent=203 // pred_check_branch
          %1500 = sbr.rel (%p1498) target = $region208
        $region207: #{forward.1} parent=203 // pred_region
          %p1501 = scmp.lt.s32.totalorder %s117, 1
          %s1502 = scalar_select %p1501, %s117, 1
          %s1503 = smul.addr %s1502, 8
          %s1504 = smul.addr %s1503, 8
          %s1505 = scalar_lea.vmem %s1, %s1504
        $region208: #{forward.1} parent=203 // pred_fallthru
          _
        // Predicated region
        $region209: #{forward.1} parent=203 // pred_check
          %p1506 = pneg %p163
        $region210: #{forward.1} parent=203 // pred_check_branch
          %1508 = sbr.rel (%p1506) target = $region212
        $region211: #{forward.1} parent=203 // pred_region
          %p1509 = scmp.lt.s32.totalorder %s117, 1
          %s1510 = scalar_select %p1509, %s117, 1
          %s1511 = smul.addr %s1510, 8
          %s1512 = smul.addr %s1511, 8
          %s1513 = scalar_lea.vmem %s3, %s1512
        $region212: #{forward.1} parent=203 // pred_fallthru
          _
        // Predicated region
        $region213: #{forward.1} parent=203 // pred_check
          %p1514 = pneg %p189
        $region214: #{forward.1} parent=203 // pred_check_branch
          %1516 = sbr.rel (%p1514) target = $region216
        $region215: #{forward.1} parent=203 // pred_region
          %p1517 = scmp.lt.s32.totalorder %s117, 1
          %s1518 = scalar_select %p1517, %s117, 1
          %s1519 = scalar_lea.vmem %s5, %s1518
        $region216: #{forward.1} parent=203 // pred_fallthru
          _
      $region204: #{forward.1} parent=5 // pred_fallthru
        _
      %p1520 = scmp.le.s32.totalorder 1, %s117
      %p1521 = scmp.lt.s32.totalorder %s117, 3
      %p1522 = pnand %p1520, %p1521
      %p1523 = pneg %p1522
      // Predicated region
      $region217: #{forward.1} parent=5 // pred_check
        _
      $region218: #{forward.1} parent=5 // pred_check_branch
        %1525 = sbr.rel (%p1522) target = $region220
      $region219: #{forward.1} parent=5 // pred_region
        %s1526 = ssub.s32 %s117, 1
        // Predicated region
        $region221: #{forward.1} parent=219 // pred_check
          %p1527 = pneg %p279
        $region222: #{forward.1} parent=219 // pred_check_branch
          %1529 = sbr.rel (%p1527) target = $region224
        $region223: #{forward.1} parent=219 // pred_region
          %1530 = dma.done [#allocation5], 16
        $region224: #{forward.1} parent=219 // pred_fallthru
          _
        // Predicated region
        $region225: #{forward.1} parent=219 // pred_check
          %p1531 = pneg %p321
        $region226: #{forward.1} parent=219 // pred_check_branch
          %1533 = sbr.rel (%p1531) target = $region228
        $region227: #{forward.1} parent=219 // pred_region
          %1534 = dma.done [#allocation7], 16
        $region228: #{forward.1} parent=219 // pred_fallthru
          _
        // Predicated region
        $region229: #{forward.1} parent=219 // pred_check
          %p1535 = pneg %p363
        $region230: #{forward.1} parent=219 // pred_check_branch
          %1537 = sbr.rel (%p1535) target = $region232
        $region231: #{forward.1} parent=219 // pred_region
          %1538 = dma.done [#allocation7], 16
        $region232: #{forward.1} parent=219 // pred_fallthru
          _
        // Predicated region
        $region233: #{forward.1} parent=219 // pred_check
          %p1539 = pneg %p405
        $region234: #{forward.1} parent=219 // pred_check_branch
          %1541 = sbr.rel (%p1539) target = $region236
        $region235: #{forward.1} parent=219 // pred_region
          %1542 = dma.done [#allocation10], 16
        $region236: #{forward.1} parent=219 // pred_fallthru
          _
        // Predicated region
        $region237: #{forward.1} parent=219 // pred_check
          %p1543 = pneg %p447
        $region238: #{forward.1} parent=219 // pred_check_branch
          %1545 = sbr.rel (%p1543) target = $region240
        $region239: #{forward.1} parent=219 // pred_region
          %1546 = dma.done [#allocation10], 16
        $region240: #{forward.1} parent=219 // pred_fallthru
          _
        // Predicated region
        $region241: #{forward.1} parent=219 // pred_check
          %p1547 = pneg %p846
        $region242: #{forward.1} parent=219 // pred_check_branch
          %1549 = sbr.rel (%p1547) target = $region244
        $region243: #{forward.1} parent=219 // pred_region
          %1550 = dma.done [#allocation13], 16
        $region244: #{forward.1} parent=219 // pred_fallthru
          _
        // Predicated region
        $region245: #{forward.1} parent=219 // pred_check
          %p1551 = pneg %p888
        $region246: #{forward.1} parent=219 // pred_check_branch
          %1553 = sbr.rel (%p1551) target = $region248
        $region247: #{forward.1} parent=219 // pred_region
          %1554 = dma.done [#allocation13], 16
        $region248: #{forward.1} parent=219 // pred_fallthru
          _
        // Predicated region
        $region249: #{forward.1} parent=219 // pred_check
          %p1555 = pneg %p951
        $region250: #{forward.1} parent=219 // pred_check_branch
          %1557 = sbr.rel (%p1555) target = $region252
        $region251: #{forward.1} parent=219 // pred_region
          %1558 = dma.done [#allocation16], 1024
        $region252: #{forward.1} parent=219 // pred_fallthru
          _
        // Predicated region
        $region253: #{forward.1} parent=219 // pred_check
          %p1559 = pneg %p972
        $region254: #{forward.1} parent=219 // pred_check_branch
          %1561 = sbr.rel (%p1559) target = $region256
        $region255: #{forward.1} parent=219 // pred_region
          %1562 = dma.done [#allocation16], 1024
        $region256: #{forward.1} parent=219 // pred_fallthru
          _
        // Predicated region
        $region257: #{forward.1} parent=219 // pred_check
          %p1563 = pneg %p1056
        $region258: #{forward.1} parent=219 // pred_check_branch
          %1565 = sbr.rel (%p1563) target = $region260
        $region259: #{forward.1} parent=219 // pred_region
          %1566 = dma.done [#allocation19], 1024
        $region260: #{forward.1} parent=219 // pred_fallthru
          _
        // Predicated region
        $region261: #{forward.1} parent=219 // pred_check
          %p1567 = pneg %p1077
        $region262: #{forward.1} parent=219 // pred_check_branch
          %1569 = sbr.rel (%p1567) target = $region264
        $region263: #{forward.1} parent=219 // pred_region
          %1570 = dma.done [#allocation19], 1024
        $region264: #{forward.1} parent=219 // pred_fallthru
          _
        // Predicated region
        $region265: #{forward.1} parent=219 // pred_check
          %p1571 = pneg %p1098
        $region266: #{forward.1} parent=219 // pred_check_branch
          %1573 = sbr.rel (%p1571) target = $region268
        $region267: #{forward.1} parent=219 // pred_region
          %1574 = dma.done [#allocation22], 16
        $region268: #{forward.1} parent=219 // pred_fallthru
          _
        // Predicated region
        $region269: #{forward.1} parent=219 // pred_check
          %p1575 = pneg %p1119
        $region270: #{forward.1} parent=219 // pred_check_branch
          %1577 = sbr.rel (%p1575) target = $region272
        $region271: #{forward.1} parent=219 // pred_region
          %1578 = dma.done [#allocation22], 1024
        $region272: #{forward.1} parent=219 // pred_fallthru
          _
        // Predicated region
        $region273: #{forward.1} parent=219 // pred_check
          %p1579 = pneg %p1140
        $region274: #{forward.1} parent=219 // pred_check_branch
          %1581 = sbr.rel (%p1579) target = $region276
        $region275: #{forward.1} parent=219 // pred_region
          %1582 = dma.done [#allocation25], 16
        $region276: #{forward.1} parent=219 // pred_fallthru
          _
        // Predicated region
        $region277: #{forward.1} parent=219 // pred_check
          %p1583 = pneg %p1161
        $region278: #{forward.1} parent=219 // pred_check_branch
          %1585 = sbr.rel (%p1583) target = $region280
        $region279: #{forward.1} parent=219 // pred_region
          %1586 = dma.done [#allocation25], 16
        $region280: #{forward.1} parent=219 // pred_fallthru
          _
        %p1587 = scmp.lt.s32.totalorder %s122, 1
        %s1588 = scalar_select %p1587, %s122, 1
        %s1589 = smul.addr %s1588, 8
        %s1590 = smul.addr %s1589, 8
        %s1591 = scalar_lea.vmem %s1, %s1590
        %p1592 = pneg %p143
        %p1593 = pneg %p140
        %p1594 = scmp.lt.s32.totalorder %s122, 1
        %s1595 = scalar_select %p1594, %s122, 1
        %s1596 = smul.addr %s1595, 8
        %s1597 = smul.addr %s1596, 8
        %s1598 = scalar_lea.vmem %s3, %s1597
        %p1599 = pneg %p169
        %p1600 = pneg %p166
        %p1601 = scmp.lt.s32.totalorder %s122, 1
        %s1602 = scalar_select %p1601, %s122, 1
        %s1603 = scalar_lea.vmem %s5, %s1602
        %p1604 = pneg %p195
        %p1605 = pneg %p192
        %p1606 = pneg %p216
        %p1607 = pneg %p213
        %p1608 = pneg %p237
        %p1609 = pneg %p234
        %p1610 = pneg %p258
        %p1611 = pneg %p255
        %p1612 = pneg %p279
        %p1613 = pneg %p276
        %p1614 = pneg %p300
        %p1615 = pneg %p297
        %p1616 = pneg %p321
        %p1617 = pneg %p318
        %p1618 = pneg %p342
        %p1619 = pneg %p339
        %p1620 = pneg %p363
        %p1621 = pneg %p360
        %p1622 = pneg %p384
        %p1623 = pneg %p381
        %p1624 = pneg %p405
        %p1625 = pneg %p402
        %p1626 = pneg %p426
        %p1627 = pneg %p423
        %p1628 = pneg %p447
        %p1629 = pneg %p444
        %p1630 = pneg %p468
        %p1631 = pneg %p465
        %p1632 = pneg %p489
        %p1633 = pneg %p486
        %p1634 = pneg %p510
        %p1635 = pneg %p507
        %p1636 = pneg %p531
        %p1637 = pneg %p528
        %p1638 = pneg %p552
        %p1639 = pneg %p549
        %p1640 = pneg %p573
        %p1641 = pneg %p570
        %p1642 = pneg %p594
        %p1643 = pneg %p591
        %p1644 = pneg %p615
        %p1645 = pneg %p612
        %p1646 = pneg %p636
        %p1647 = pneg %p633
        %p1648 = pneg %p657
        %p1649 = pneg %p654
        %p1650 = pneg %p678
        %p1651 = pneg %p675
        %p1652 = pneg %p699
        %p1653 = pneg %p696
        %p1654 = pneg %p720
        %p1655 = pneg %p717
        %p1656 = pneg %p741
        %p1657 = pneg %p738
        %p1658 = pneg %p762
        %p1659 = pneg %p759
        %p1660 = pneg %p783
        %p1661 = pneg %p780
        %p1662 = pneg %p804
        %p1663 = pneg %p801
        %p1664 = pneg %p825
        %p1665 = pneg %p822
        %p1666 = pneg %p846
        %p1667 = pneg %p843
        %p1668 = pneg %p867
        %p1669 = pneg %p864
        %p1670 = pneg %p888
        %p1671 = pneg %p885
        %p1672 = pneg %p909
        %p1673 = pneg %p906
        %p1674 = pneg %p930
        %p1675 = pneg %p927
        %p1676 = pneg %p951
        %p1677 = pneg %p948
        %p1678 = pneg %p972
        %p1679 = pneg %p969
        %p1680 = pneg %p993
        %p1681 = pneg %p990
        %p1682 = pneg %p1014
        %p1683 = pneg %p1011
        %p1684 = pneg %p1035
        %p1685 = pneg %p1032
        %p1686 = pneg %p1056
        %p1687 = pneg %p1053
        %p1688 = pneg %p1077
        %p1689 = pneg %p1074
        %p1690 = pneg %p1098
        %p1691 = pneg %p1095
        %p1692 = pneg %p1119
        %p1693 = pneg %p1116
        %p1694 = pneg %p1140
        %p1695 = pneg %p1137
        %p1696 = pneg %p1161
        %p1697 = pneg %p1158
        %p1698 = pneg %p1182
        %p1699 = pneg %p1179
        %p1700 = pneg %p1208
        %p1701 = pneg %p1205
        %p1702 = scmp.lt.s32.totalorder %s122, 1
        %s1703 = scalar_select %p1702, %s122, 1
        %s1704 = smul.addr %s1703, 32
        %s1705 = scalar_lea.vmem %s101, %s1704
        %p1706 = scmp.lt.s32.totalorder %s122, 1
        %s1707 = scalar_select %p1706, %s122, 1
        %s1708 = smul.addr %s1707, 8
        %s1709 = smul.addr %s1708, 8
        %s1710 = scalar_lea.vmem %s1, %s1709
        %p1711 = scmp.lt.s32.totalorder %s122, 1
        %s1712 = scalar_select %p1711, %s122, 1
        %s1713 = smul.addr %s1712, 8
        %s1714 = smul.addr %s1713, 8
        %s1715 = scalar_lea.vmem %s3, %s1714
        %p1716 = scmp.lt.s32.totalorder %s122, 1
        %s1717 = scalar_select %p1716, %s122, 1
        %s1718 = scalar_lea.vmem %s5, %s1717
        %p1719 = scmp.lt.s32.totalorder %s122, 1
        %s1720 = scalar_select %p1719, %s122, 1
        %s1721 = smul.addr %s1720, 32
        %s1722 = scalar_lea.vmem %s101, %s1721
        %v1724 = vld [vmem:[%s1710] sm:$0xff]
        %v1725 = vld [vmem:[%s1710 + $0x8] sm:$0xff]
        %v1726 = vld [vmem:[%s1710 + $0x10] sm:$0xff]
        %v1727 = vld [vmem:[%s1710 + $0x18] sm:$0xff]
        %v1728 = vld [vmem:[%s1710 + $0x20] sm:$0xff]
        %v1729 = vld [vmem:[%s1710 + $0x28] sm:$0xff]
        %v1730 = vld [vmem:[%s1710 + $0x30] sm:$0xff]
        %v1731 = vld [vmem:[%s1710 + $0x38] sm:$0xff]
        %v1732 = vld [vmem:[%s1715] sm:$0xff]
        %v1733 = vld [vmem:[%s1715 + $0x8] sm:$0xff]
        %v1734 = vld [vmem:[%s1715 + $0x10] sm:$0xff]
        %v1735 = vld [vmem:[%s1715 + $0x18] sm:$0xff]
        %v1736 = vld [vmem:[%s1715 + $0x20] sm:$0xff]
        %v1737 = vld [vmem:[%s1715 + $0x28] sm:$0xff]
        %v1738 = vld [vmem:[%s1715 + $0x30] sm:$0xff]
        %v1739 = vld [vmem:[%s1715 + $0x38] sm:$0xff]
        %v1740 = vld [vmem:[%s1718] sm:$0x1]
        %vm1741 = vcmask 23552
        %v1742 = vsel %vm1741, %v1724, 0.0
        %v1743 = vsel %vm1741, %v1725, 0.0
        %v1744 = vadd.f32 %v1742, %v1743
        %v1745 = vsel %vm1741, %v1726, 0.0
        %v1746 = vadd.f32 %v1744, %v1745
        %v1747 = vsel %vm1741, %v1727, 0.0
        %v1748 = vadd.f32 %v1746, %v1747
        %v1749 = vsel %vm1741, %v1728, 0.0
        %v1750 = vadd.f32 %v1748, %v1749
        %v1751 = vsel %vm1741, %v1729, 0.0
        %v1752 = vadd.f32 %v1750, %v1751
        %v1753 = vsel %vm1741, %v1730, 0.0
        %v1754 = vadd.f32 %v1752, %v1753
        %v1755 = vsel %vm1741, %v1731, 0.0
        %v1756 = vadd.f32 %v1754, %v1755
        %v1757 = vrot.slane %v1756, 4
        %v1758 = vadd.f32 %v1756, %v1757
        %v1759 = vrot.slane %v1758, 2
        %v1760 = vadd.f32 %v1758, %v1759
        %v1761 = vrot.slane %v1760, 1
        %v1762 = vadd.f32 %v1760, %v1761
        %v1763 = vrcp.pop 64.0
        %v1764 = vmul.f32 %v1762, %v1763
        %v1765 = vsub.f32 %v1724, %v1764
        %v1766 = vsub.f32 %v1725, %v1764
        %v1767 = vsub.f32 %v1726, %v1764
        %v1768 = vsub.f32 %v1727, %v1764
        %v1769 = vsub.f32 %v1728, %v1764
        %v1770 = vsub.f32 %v1729, %v1764
        %v1771 = vsub.f32 %v1730, %v1764
        %v1772 = vsub.f32 %v1731, %v1764
        %v1773 = vld [vmem:[%s7] sm:$0x7]
        %v1774 = vld [vmem:[%s9] sm:$0x1]
        %v1775 = vld [vmem:[%s11] sm:$0xff]
        %v1776 = vld [vmem:[%s11 + $0x8] sm:$0xff]
        %v1777 = vld [vmem:[%s11 + $0x10] sm:$0xff]
        %v1778 = vld [vmem:[%s11 + $0x18] sm:$0xff]
        %v1779 = vld [vmem:[%s11 + $0x20] sm:$0xff]
        %v1780 = vld [vmem:[%s11 + $0x28] sm:$0xff]
        %v1781 = vld [vmem:[%s11 + $0x30] sm:$0xff]
        %v1782 = vld [vmem:[%s11 + $0x38] sm:$0xff]
        %v1783 = vld [vmem:[#allocation4] sm:$0x1]
        %v1784 = vld [vmem:[%s15] sm:$0xff]
        %v1785 = vld [vmem:[%s15 + $0x8] sm:$0xff]
        %v1786 = vld [vmem:[%s15 + $0x10] sm:$0xff]
        %v1787 = vld [vmem:[%s15 + $0x18] sm:$0xff]
        %v1788 = vld [vmem:[%s15 + $0x20] sm:$0xff]
        %v1789 = vld [vmem:[%s15 + $0x28] sm:$0xff]
        %v1790 = vld [vmem:[%s15 + $0x30] sm:$0xff]
        %v1791 = vld [vmem:[%s15 + $0x38] sm:$0xff]
        %v1792 = vld [vmem:[#allocation6] sm:$0x1]
        %1794 = vset.pattern.permute.xlu0 0
        %1795 = vperm.xlu0 %1794, %v1765
        %v1796 = vpop.permute.xlu0 %1795
        %1799 = vset.pattern.permute.xlu0 0
        %1800 = vperm.xlu0 %1799, %v1766
        %v1801 = vpop.permute.xlu0 %1800
        %1804 = vset.pattern.permute.xlu0 0
        %1805 = vperm.xlu0 %1804, %v1767
        %v1806 = vpop.permute.xlu0 %1805
        %1809 = vset.pattern.permute.xlu0 0
        %1810 = vperm.xlu0 %1809, %v1768
        %v1811 = vpop.permute.xlu0 %1810
        %1814 = vset.pattern.permute.xlu0 0
        %1815 = vperm.xlu0 %1814, %v1769
        %v1816 = vpop.permute.xlu0 %1815
        %1819 = vset.pattern.permute.xlu0 0
        %1820 = vperm.xlu0 %1819, %v1770
        %v1821 = vpop.permute.xlu0 %1820
        %1824 = vset.pattern.permute.xlu0 0
        %1825 = vperm.xlu0 %1824, %v1771
        %v1826 = vpop.permute.xlu0 %1825
        %1829 = vset.pattern.permute.xlu0 0
        %1830 = vperm.xlu0 %1829, %v1772
        %v1831 = vpop.permute.xlu0 %1830
        %v1833 = vlaneseq
        %v1834 = vshrl.u32 %v1833, 7
        %v1835 = vsub.s32 0, %v1834
        %v1836 = vrot.slane %v1773, %v1835
        %v1837 = vmul.f32 %v1796, %v1836
        %v1838 = vmul.f32 %v1801, %v1836
        %v1839 = vmul.f32 %v1806, %v1836
        %v1840 = vmul.f32 %v1811, %v1836
        %v1841 = vmul.f32 %v1816, %v1836
        %v1842 = vmul.f32 %v1821, %v1836
        %v1843 = vmul.f32 %v1826, %v1836
        %v1844 = vmul.f32 %v1831, %v1836
        %1845 = vset.pattern.permute.xlu0 1
        %1846 = vperm.xlu0 %1845, %v1765
        %v1847 = vpop.permute.xlu0 %1846
        %1849 = vset.pattern.permute.xlu0 1
        %1850 = vperm.xlu0 %1849, %v1766
        %v1851 = vpop.permute.xlu0 %1850
        %1853 = vset.pattern.permute.xlu0 1
        %1854 = vperm.xlu0 %1853, %v1767
        %v1855 = vpop.permute.xlu0 %1854
        %1857 = vset.pattern.permute.xlu0 1
        %1858 = vperm.xlu0 %1857, %v1768
        %v1859 = vpop.permute.xlu0 %1858
        %1861 = vset.pattern.permute.xlu0 1
        %1862 = vperm.xlu0 %1861, %v1769
        %v1863 = vpop.permute.xlu0 %1862
        %1865 = vset.pattern.permute.xlu0 1
        %1866 = vperm.xlu0 %1865, %v1770
        %v1867 = vpop.permute.xlu0 %1866
        %1869 = vset.pattern.permute.xlu0 1
        %1870 = vperm.xlu0 %1869, %v1771
        %v1871 = vpop.permute.xlu0 %1870
        %1873 = vset.pattern.permute.xlu0 1
        %1874 = vperm.xlu0 %1873, %v1772
        %v1875 = vpop.permute.xlu0 %1874
        %v1877 = vlaneseq
        %v1878 = vshrl.u32 %v1877, 7
        %v1879 = vsub.s32 1, %v1878
        %v1880 = vrot.slane %v1773, %v1879
        %v1881 = vmul.f32 %v1847, %v1880
        %v1882 = vmul.f32 %v1851, %v1880
        %v1883 = vmul.f32 %v1855, %v1880
        %v1884 = vmul.f32 %v1859, %v1880
        %v1885 = vmul.f32 %v1863, %v1880
        %v1886 = vmul.f32 %v1867, %v1880
        %v1887 = vmul.f32 %v1871, %v1880
        %v1888 = vmul.f32 %v1875, %v1880
        %v1889 = vadd.f32 %v1837, %v1881
        %v1890 = vadd.f32 %v1838, %v1882
        %v1891 = vadd.f32 %v1839, %v1883
        %v1892 = vadd.f32 %v1840, %v1884
        %v1893 = vadd.f32 %v1841, %v1885
        %v1894 = vadd.f32 %v1842, %v1886
        %v1895 = vadd.f32 %v1843, %v1887
        %v1896 = vadd.f32 %v1844, %v1888
        %1897 = vset.pattern.permute.xlu0 2
        %1898 = vperm.xlu0 %1897, %v1765
        %v1899 = vpop.permute.xlu0 %1898
        %1901 = vset.pattern.permute.xlu0 2
        %1902 = vperm.xlu0 %1901, %v1766
        %v1903 = vpop.permute.xlu0 %1902
        %1905 = vset.pattern.permute.xlu0 2
        %1906 = vperm.xlu0 %1905, %v1767
        %v1907 = vpop.permute.xlu0 %1906
        %1909 = vset.pattern.permute.xlu0 2
        %1910 = vperm.xlu0 %1909, %v1768
        %v1911 = vpop.permute.xlu0 %1910
        %1913 = vset.pattern.permute.xlu0 2
        %1914 = vperm.xlu0 %1913, %v1769
        %v1915 = vpop.permute.xlu0 %1914
        %1917 = vset.pattern.permute.xlu0 2
        %1918 = vperm.xlu0 %1917, %v1770
        %v1919 = vpop.permute.xlu0 %1918
        %1921 = vset.pattern.permute.xlu0 2
        %1922 = vperm.xlu0 %1921, %v1771
        %v1923 = vpop.permute.xlu0 %1922
        %1925 = vset.pattern.permute.xlu0 2
        %1926 = vperm.xlu0 %1925, %v1772
        %v1927 = vpop.permute.xlu0 %1926
        %v1929 = vlaneseq
        %v1930 = vshrl.u32 %v1929, 7
        %v1931 = vsub.s32 2, %v1930
        %v1932 = vrot.slane %v1773, %v1931
        %v1933 = vmul.f32 %v1899, %v1932
        %v1934 = vmul.f32 %v1903, %v1932
        %v1935 = vmul.f32 %v1907, %v1932
        %v1936 = vmul.f32 %v1911, %v1932
        %v1937 = vmul.f32 %v1915, %v1932
        %v1938 = vmul.f32 %v1919, %v1932
        %v1939 = vmul.f32 %v1923, %v1932
        %v1940 = vmul.f32 %v1927, %v1932
        %v1941 = vadd.f32 %v1889, %v1933
        %v1942 = vadd.f32 %v1890, %v1934
        %v1943 = vadd.f32 %v1891, %v1935
        %v1944 = vadd.f32 %v1892, %v1936
        %v1945 = vadd.f32 %v1893, %v1937
        %v1946 = vadd.f32 %v1894, %v1938
        %v1947 = vadd.f32 %v1895, %v1939
        %v1948 = vadd.f32 %v1896, %v1940
        %v1950 = vlaneseq
        %v1951 = vshrl.u32 %v1950, 7
        %v1952 = vsub.s32 0, %v1951
        %v1953 = vrot.slane %v1774, %v1952
        %v1955 = vadd.f32 %v1941, %v1953
        %v1956 = vadd.f32 %v1942, %v1953
        %v1957 = vadd.f32 %v1943, %v1953
        %v1958 = vadd.f32 %v1944, %v1953
        %v1959 = vadd.f32 %v1945, %v1953
        %v1960 = vadd.f32 %v1946, %v1953
        %v1961 = vadd.f32 %v1947, %v1953
        %v1962 = vadd.f32 %v1948, %v1953
        %v1963 = vmax.f32 %v1955, 0.0
        %v1964 = vmax.f32 %v1956, 0.0
        %v1965 = vmax.f32 %v1957, 0.0
        %v1966 = vmax.f32 %v1958, 0.0
        %v1967 = vmax.f32 %v1959, 0.0
        %v1968 = vmax.f32 %v1960, 0.0
        %v1969 = vmax.f32 %v1961, 0.0
        %v1970 = vmax.f32 %v1962, 0.0
        %v1972 = vlaneseq
        %v1973 = vshrl.u32 %v1972, 7
        %v1974 = vsub.s32 0, %v1973
        %v1975 = vrot.slane %v1783, %v1974
        %vm1977 = vcmask 523264
        %v1979 = vsel %vm1977, %v1963, 0
        %v1982 = vsel %vm1977, %v1964, 0
        %v1985 = vsel %vm1977, %v1965, 0
        %v1988 = vsel %vm1977, %v1966, 0
        %v1991 = vsel %vm1977, %v1967, 0
        %v1994 = vsel %vm1977, %v1968, 0
        %v1997 = vsel %vm1977, %v1969, 0
        %v2000 = vsel %vm1977, %v1970, 0
        %2002 = vmatprep.subr.mxu0 0.0
        %2003 = vmatpush1.msra.mxu0 %v1775
        %2004 = vmatprep.subr.mxu0 0.0
        %2005 = vmatpush1.msra.mxu0 %v1776
        %2006 = vmatprep.subr.mxu0 0.0
        %2007 = vmatpush1.msra.mxu0 %v1777
        %2008 = vmatprep.subr.mxu0 0.0
        %2009 = vmatpush1.msra.mxu0 %v1778
        %2010 = vmatprep.subr.mxu0 0.0
        %2011 = vmatpush1.msra.mxu0 %v1779
        %2012 = vmatprep.subr.mxu0 0.0
        %2013 = vmatpush1.msra.mxu0 %v1780
        %2014 = vmatprep.subr.mxu0 0.0
        %2015 = vmatpush1.msra.mxu0 %v1781
        %2016 = vmatprep.subr.mxu0 0.0
        %2017 = vmatpush1.msra.mxu0 %v1782
        %2018 = vmatprep.subr.mxu0 0.0
        %2019 = vmatpush1.msra.mxu0 0.0
        %2020 = vmatprep.subr.mxu0 0.0
        %2021 = vmatpush1.msra.mxu0 0.0
        %2022 = vmatprep.subr.mxu0 0.0
        %2023 = vmatpush1.msra.mxu0 0.0
        %2024 = vmatprep.subr.mxu0 0.0
        %2025 = vmatpush1.msra.mxu0 0.0
        %2026 = vmatprep.subr.mxu0 0.0
        %2027 = vmatpush1.msra.mxu0 0.0
        %2028 = vmatprep.subr.mxu0 0.0
        %2029 = vmatpush1.msra.mxu0 0.0
        %2030 = vmatprep.subr.mxu0 0.0
        %2031 = vmatpush1.msra.mxu0 0.0
        %2032 = vmatprep.subr.mxu0 0.0
        %2033 = vmatpush1.msra.mxu0 0.0
        %2034 = vmatprep.subr.mxu0 0.0
        %2035 = vmatpush1.msra.mxu0 0.0
        %2036 = vmatprep.subr.mxu0 0.0
        %2037 = vmatpush1.msra.mxu0 0.0
        %2038 = vmatprep.subr.mxu0 0.0
        %2039 = vmatpush1.msra.mxu0 0.0
        %2040 = vmatprep.subr.mxu0 0.0
        %2041 = vmatpush1.msra.mxu0 0.0
        %2042 = vmatprep.subr.mxu0 0.0
        %2043 = vmatpush1.msra.mxu0 0.0
        %2044 = vmatprep.subr.mxu0 0.0
        %2045 = vmatpush1.msra.mxu0 0.0
        %2046 = vmatprep.subr.mxu0 0.0
        %2047 = vmatpush1.msra.mxu0 0.0
        %2048 = vmatprep.subr.mxu0 0.0
        %2049 = vmatpush1.msra.mxu0 0.0
        %2050 = vmatprep.subr.mxu0 0.0
        %2051 = vmatpush1.msra.mxu0 0.0
        %2052 = vmatprep.subr.mxu0 0.0
        %2053 = vmatpush1.msra.mxu0 0.0
        %2054 = vmatprep.subr.mxu0 0.0
        %2055 = vmatpush1.msra.mxu0 0.0
        %2056 = vmatprep.subr.mxu0 0.0
        %2057 = vmatpush1.msra.mxu0 0.0
        %2058 = vmatprep.subr.mxu0 0.0
        %2059 = vmatpush1.msra.mxu0 0.0
        %2060 = vmatprep.subr.mxu0 0.0
        %2061 = vmatpush1.msra.mxu0 0.0
        %2062 = vmatprep.subr.mxu0 0.0
        %2063 = vmatpush1.msra.mxu0 0.0
        %2064 = vmatprep.subr.mxu0 0.0
        %2065 = vmatpush1.msra.mxu0 0.0
        %2066 = vmatprep.mubr.f32.mxu0 0.0
        %2067 = vmatmul.mubr.f32.gmra.mrb[0].mxu0 %v1979
        %v2068 = vpop.f32.mrb[0].mxu0
        %v2069 = vadd.f32 %v1975, %v2068
        %v2070 = vpop.f32.mrb[0].mxu0
        %2071 = vmatprep.mubr.f32.mxu0 0.0
        %2072 = vmatmul.mubr.f32.gmra.mrb[0].mxu0 %v1982
        %v2073 = vpop.f32.mrb[0].mxu0
        %v2074 = vadd.f32 %v1975, %v2073
        %v2075 = vpop.f32.mrb[0].mxu0
        %2076 = vmatprep.mubr.f32.mxu0 0.0
        %2077 = vmatmul.mubr.f32.gmra.mrb[0].mxu0 %v1985
        %v2078 = vpop.f32.mrb[0].mxu0
        %v2079 = vadd.f32 %v1975, %v2078
        %v2080 = vpop.f32.mrb[0].mxu0
        %2081 = vmatprep.mubr.f32.mxu0 0.0
        %2082 = vmatmul.mubr.f32.gmra.mrb[0].mxu0 %v1988
        %v2083 = vpop.f32.mrb[0].mxu0
        %v2084 = vadd.f32 %v1975, %v2083
        %v2085 = vpop.f32.mrb[0].mxu0
        %2086 = vmatprep.mubr.f32.mxu0 0.0
        %2087 = vmatmul.mubr.f32.gmra.mrb[0].mxu0 %v1991
        %v2088 = vpop.f32.mrb[0].mxu0
        %v2089 = vadd.f32 %v1975, %v2088
        %v2090 = vpop.f32.mrb[0].mxu0
        %2091 = vmatprep.mubr.f32.mxu0 0.0
        %2092 = vmatmul.mubr.f32.gmra.mrb[0].mxu0 %v1994
        %v2093 = vpop.f32.mrb[0].mxu0
        %v2094 = vadd.f32 %v1975, %v2093
        %v2095 = vpop.f32.mrb[0].mxu0
        %2096 = vmatprep.mubr.f32.mxu0 0.0
        %2097 = vmatmul.mubr.f32.gmra.mrb[0].mxu0 %v1997
        %v2098 = vpop.f32.mrb[0].mxu0
        %v2099 = vadd.f32 %v1975, %v2098
        %v2100 = vpop.f32.mrb[0].mxu0
        %2101 = vmatprep.mubr.f32.mxu0 0.0
        %2102 = vmatmul.mubr.f32.gmra.mrb[0].mxu0 %v2000
        %v2103 = vpop.f32.mrb[0].mxu0
        %v2104 = vadd.f32 %v1975, %v2103
        %v2105 = vpop.f32.mrb[0].mxu0
        %2106 = vdwg.mxu0
        %v2107 = vmax.f32 %v2069, 0.0
        %v2108 = vmax.f32 %v2074, 0.0
        %v2109 = vmax.f32 %v2079, 0.0
        %v2110 = vmax.f32 %v2084, 0.0
        %v2111 = vmax.f32 %v2089, 0.0
        %v2112 = vmax.f32 %v2094, 0.0
        %v2113 = vmax.f32 %v2099, 0.0
        %v2114 = vmax.f32 %v2104, 0.0
        %v2116 = vlaneseq
        %v2117 = vshrl.u32 %v2116, 7
        %v2118 = vsub.s32 0, %v2117
        %v2119 = vrot.slane %v1792, %v2118
        %v2122 = vsel %vm1977, %v2107, 0
        %v2125 = vsel %vm1977, %v2108, 0
        %v2128 = vsel %vm1977, %v2109, 0
        %v2131 = vsel %vm1977, %v2110, 0
        %v2134 = vsel %vm1977, %v2111, 0
        %v2137 = vsel %vm1977, %v2112, 0
        %v2140 = vsel %vm1977, %v2113, 0
        %v2143 = vsel %vm1977, %v2114, 0
        %2145 = vmatprep.subr.mxu0 0.0
        %2146 = vmatpush1.msra.mxu0 %v1784
        %2147 = vmatprep.subr.mxu0 0.0
        %2148 = vmatpush1.msra.mxu0 %v1785
        %2149 = vmatprep.subr.mxu0 0.0
        %2150 = vmatpush1.msra.mxu0 %v1786
        %2151 = vmatprep.subr.mxu0 0.0
        %2152 = vmatpush1.msra.mxu0 %v1787
        %2153 = vmatprep.subr.mxu0 0.0
        %2154 = vmatpush1.msra.mxu0 %v1788
        %2155 = vmatprep.subr.mxu0 0.0
        %2156 = vmatpush1.msra.mxu0 %v1789
        %2157 = vmatprep.subr.mxu0 0.0
        %2158 = vmatpush1.msra.mxu0 %v1790
        %2159 = vmatprep.subr.mxu0 0.0
        %2160 = vmatpush1.msra.mxu0 %v1791
        %2161 = vmatprep.subr.mxu0 0.0
        %2162 = vmatpush1.msra.mxu0 0.0
        %2163 = vmatprep.subr.mxu0 0.0
        %2164 = vmatpush1.msra.mxu0 0.0
        %2165 = vmatprep.subr.mxu0 0.0
        %2166 = vmatpush1.msra.mxu0 0.0
        %2167 = vmatprep.subr.mxu0 0.0
        %2168 = vmatpush1.msra.mxu0 0.0
        %2169 = vmatprep.subr.mxu0 0.0
        %2170 = vmatpush1.msra.mxu0 0.0
        %2171 = vmatprep.subr.mxu0 0.0
        %2172 = vmatpush1.msra.mxu0 0.0
        %2173 = vmatprep.subr.mxu0 0.0
        %2174 = vmatpush1.msra.mxu0 0.0
        %2175 = vmatprep.subr.mxu0 0.0
        %2176 = vmatpush1.msra.mxu0 0.0
        %2177 = vmatprep.subr.mxu0 0.0
        %2178 = vmatpush1.msra.mxu0 0.0
        %2179 = vmatprep.subr.mxu0 0.0
        %2180 = vmatpush1.msra.mxu0 0.0
        %2181 = vmatprep.subr.mxu0 0.0
        %2182 = vmatpush1.msra.mxu0 0.0
        %2183 = vmatprep.subr.mxu0 0.0
        %2184 = vmatpush1.msra.mxu0 0.0
        %2185 = vmatprep.subr.mxu0 0.0
        %2186 = vmatpush1.msra.mxu0 0.0
        %2187 = vmatprep.subr.mxu0 0.0
        %2188 = vmatpush1.msra.mxu0 0.0
        %2189 = vmatprep.subr.mxu0 0.0
        %2190 = vmatpush1.msra.mxu0 0.0
        %2191 = vmatprep.subr.mxu0 0.0
        %2192 = vmatpush1.msra.mxu0 0.0
        %2193 = vmatprep.subr.mxu0 0.0
        %2194 = vmatpush1.msra.mxu0 0.0
        %2195 = vmatprep.subr.mxu0 0.0
        %2196 = vmatpush1.msra.mxu0 0.0
        %2197 = vmatprep.subr.mxu0 0.0
        %2198 = vmatpush1.msra.mxu0 0.0
        %2199 = vmatprep.subr.mxu0 0.0
        %2200 = vmatpush1.msra.mxu0 0.0
        %2201 = vmatprep.subr.mxu0 0.0
        %2202 = vmatpush1.msra.mxu0 0.0
        %2203 = vmatprep.subr.mxu0 0.0
        %2204 = vmatpush1.msra.mxu0 0.0
        %2205 = vmatprep.subr.mxu0 0.0
        %2206 = vmatpush1.msra.mxu0 0.0
        %2207 = vmatprep.subr.mxu0 0.0
        %2208 = vmatpush1.msra.mxu0 0.0
        %2209 = vmatprep.mubr.f32.mxu0 0.0
        %2210 = vmatmul.mubr.f32.gmra.mrb[0].mxu0 %v2122
        %v2211 = vpop.f32.mrb[0].mxu0
        %v2212 = vadd.f32 %v2119, %v2211
        %v2213 = vpop.f32.mrb[0].mxu0
        %2214 = vmatprep.mubr.f32.mxu0 0.0
        %2215 = vmatmul.mubr.f32.gmra.mrb[0].mxu0 %v2125
        %v2216 = vpop.f32.mrb[0].mxu0
        %v2217 = vadd.f32 %v2119, %v2216
        %v2218 = vpop.f32.mrb[0].mxu0
        %2219 = vmatprep.mubr.f32.mxu0 0.0
        %2220 = vmatmul.mubr.f32.gmra.mrb[0].mxu0 %v2128
        %v2221 = vpop.f32.mrb[0].mxu0
        %v2222 = vadd.f32 %v2119, %v2221
        %v2223 = vpop.f32.mrb[0].mxu0
        %2224 = vmatprep.mubr.f32.mxu0 0.0
        %2225 = vmatmul.mubr.f32.gmra.mrb[0].mxu0 %v2131
        %v2226 = vpop.f32.mrb[0].mxu0
        %v2227 = vadd.f32 %v2119, %v2226
        %v2228 = vpop.f32.mrb[0].mxu0
        %2229 = vmatprep.mubr.f32.mxu0 0.0
        %2230 = vmatmul.mubr.f32.gmra.mrb[0].mxu0 %v2134
        %v2231 = vpop.f32.mrb[0].mxu0
        %v2232 = vadd.f32 %v2119, %v2231
        %v2233 = vpop.f32.mrb[0].mxu0
        %2234 = vmatprep.mubr.f32.mxu0 0.0
        %2235 = vmatmul.mubr.f32.gmra.mrb[0].mxu0 %v2137
        %v2236 = vpop.f32.mrb[0].mxu0
        %v2237 = vadd.f32 %v2119, %v2236
        %v2238 = vpop.f32.mrb[0].mxu0
        %2239 = vmatprep.mubr.f32.mxu0 0.0
        %2240 = vmatmul.mubr.f32.gmra.mrb[0].mxu0 %v2140
        %v2241 = vpop.f32.mrb[0].mxu0
        %v2242 = vadd.f32 %v2119, %v2241
        %v2243 = vpop.f32.mrb[0].mxu0
        %2244 = vmatprep.mubr.f32.mxu0 0.0
        %2245 = vmatmul.mubr.f32.gmra.mrb[0].mxu0 %v2143
        %v2246 = vpop.f32.mrb[0].mxu0
        %v2247 = vadd.f32 %v2119, %v2246
        %v2248 = vpop.f32.mrb[0].mxu0
        %2249 = vdwg.mxu0
        %v2250 = vld [vmem:[%s19] sm:$0x7]
        %v2251 = vld [vmem:[#allocation8] sm:$0x1]
        %v2252 = vld [vmem:[%s23] sm:$0xff]
        %v2253 = vld [vmem:[%s23 + $0x8] sm:$0xff]
        %v2254 = vld [vmem:[%s23 + $0x10] sm:$0xff]
        %v2255 = vld [vmem:[%s23 + $0x18] sm:$0xff]
        %v2256 = vld [vmem:[%s23 + $0x20] sm:$0xff]
        %v2257 = vld [vmem:[%s23 + $0x28] sm:$0xff]
        %v2258 = vld [vmem:[%s23 + $0x30] sm:$0xff]
        %v2259 = vld [vmem:[%s23 + $0x38] sm:$0xff]
        %v2260 = vld [vmem:[#allocation9] sm:$0x1]
        %v2261 = vld [vmem:[%s27] sm:$0xff]
        %v2262 = vld [vmem:[%s27 + $0x8] sm:$0xff]
        %v2263 = vld [vmem:[%s27 + $0x10] sm:$0xff]
        %v2264 = vld [vmem:[%s27 + $0x18] sm:$0xff]
        %v2265 = vld [vmem:[%s27 + $0x20] sm:$0xff]
        %v2266 = vld [vmem:[%s27 + $0x28] sm:$0xff]
        %v2267 = vld [vmem:[%s27 + $0x30] sm:$0xff]
        %v2268 = vld [vmem:[%s27 + $0x38] sm:$0xff]
        %v2269 = vld [vmem:[#allocation11] sm:$0x1]
        %2271 = vset.pattern.permute.xlu0 0
        %2272 = vperm.xlu0 %2271, %v1732
        %v2273 = vpop.permute.xlu0 %2272
        %2276 = vset.pattern.permute.xlu0 0
        %2277 = vperm.xlu0 %2276, %v1733
        %v2278 = vpop.permute.xlu0 %2277
        %2281 = vset.pattern.permute.xlu0 0
        %2282 = vperm.xlu0 %2281, %v1734
        %v2283 = vpop.permute.xlu0 %2282
        %2286 = vset.pattern.permute.xlu0 0
        %2287 = vperm.xlu0 %2286, %v1735
        %v2288 = vpop.permute.xlu0 %2287
        %2291 = vset.pattern.permute.xlu0 0
        %2292 = vperm.xlu0 %2291, %v1736
        %v2293 = vpop.permute.xlu0 %2292
        %2296 = vset.pattern.permute.xlu0 0
        %2297 = vperm.xlu0 %2296, %v1737
        %v2298 = vpop.permute.xlu0 %2297
        %2301 = vset.pattern.permute.xlu0 0
        %2302 = vperm.xlu0 %2301, %v1738
        %v2303 = vpop.permute.xlu0 %2302
        %2306 = vset.pattern.permute.xlu0 0
        %2307 = vperm.xlu0 %2306, %v1739
        %v2308 = vpop.permute.xlu0 %2307
        %v2310 = vlaneseq
        %v2311 = vshrl.u32 %v2310, 7
        %v2312 = vsub.s32 0, %v2311
        %v2313 = vrot.slane %v2250, %v2312
        %v2314 = vmul.f32 %v2273, %v2313
        %v2315 = vmul.f32 %v2278, %v2313
        %v2316 = vmul.f32 %v2283, %v2313
        %v2317 = vmul.f32 %v2288, %v2313
        %v2318 = vmul.f32 %v2293, %v2313
        %v2319 = vmul.f32 %v2298, %v2313
        %v2320 = vmul.f32 %v2303, %v2313
        %v2321 = vmul.f32 %v2308, %v2313
        %2322 = vset.pattern.permute.xlu0 1
        %2323 = vperm.xlu0 %2322, %v1732
        %v2324 = vpop.permute.xlu0 %2323
        %2326 = vset.pattern.permute.xlu0 1
        %2327 = vperm.xlu0 %2326, %v1733
        %v2328 = vpop.permute.xlu0 %2327
        %2330 = vset.pattern.permute.xlu0 1
        %2331 = vperm.xlu0 %2330, %v1734
        %v2332 = vpop.permute.xlu0 %2331
        %2334 = vset.pattern.permute.xlu0 1
        %2335 = vperm.xlu0 %2334, %v1735
        %v2336 = vpop.permute.xlu0 %2335
        %2338 = vset.pattern.permute.xlu0 1
        %2339 = vperm.xlu0 %2338, %v1736
        %v2340 = vpop.permute.xlu0 %2339
        %2342 = vset.pattern.permute.xlu0 1
        %2343 = vperm.xlu0 %2342, %v1737
        %v2344 = vpop.permute.xlu0 %2343
        %2346 = vset.pattern.permute.xlu0 1
        %2347 = vperm.xlu0 %2346, %v1738
        %v2348 = vpop.permute.xlu0 %2347
        %2350 = vset.pattern.permute.xlu0 1
        %2351 = vperm.xlu0 %2350, %v1739
        %v2352 = vpop.permute.xlu0 %2351
        %v2354 = vlaneseq
        %v2355 = vshrl.u32 %v2354, 7
        %v2356 = vsub.s32 1, %v2355
        %v2357 = vrot.slane %v2250, %v2356
        %v2358 = vmul.f32 %v2324, %v2357
        %v2359 = vmul.f32 %v2328, %v2357
        %v2360 = vmul.f32 %v2332, %v2357
        %v2361 = vmul.f32 %v2336, %v2357
        %v2362 = vmul.f32 %v2340, %v2357
        %v2363 = vmul.f32 %v2344, %v2357
        %v2364 = vmul.f32 %v2348, %v2357
        %v2365 = vmul.f32 %v2352, %v2357
        %v2366 = vadd.f32 %v2314, %v2358
        %v2367 = vadd.f32 %v2315, %v2359
        %v2368 = vadd.f32 %v2316, %v2360
        %v2369 = vadd.f32 %v2317, %v2361
        %v2370 = vadd.f32 %v2318, %v2362
        %v2371 = vadd.f32 %v2319, %v2363
        %v2372 = vadd.f32 %v2320, %v2364
        %v2373 = vadd.f32 %v2321, %v2365
        %2374 = vset.pattern.permute.xlu0 2
        %2375 = vperm.xlu0 %2374, %v1732
        %v2376 = vpop.permute.xlu0 %2375
        %2378 = vset.pattern.permute.xlu0 2
        %2379 = vperm.xlu0 %2378, %v1733
        %v2380 = vpop.permute.xlu0 %2379
        %2382 = vset.pattern.permute.xlu0 2
        %2383 = vperm.xlu0 %2382, %v1734
        %v2384 = vpop.permute.xlu0 %2383
        %2386 = vset.pattern.permute.xlu0 2
        %2387 = vperm.xlu0 %2386, %v1735
        %v2388 = vpop.permute.xlu0 %2387
        %2390 = vset.pattern.permute.xlu0 2
        %2391 = vperm.xlu0 %2390, %v1736
        %v2392 = vpop.permute.xlu0 %2391
        %2394 = vset.pattern.permute.xlu0 2
        %2395 = vperm.xlu0 %2394, %v1737
        %v2396 = vpop.permute.xlu0 %2395
        %2398 = vset.pattern.permute.xlu0 2
        %2399 = vperm.xlu0 %2398, %v1738
        %v2400 = vpop.permute.xlu0 %2399
        %2402 = vset.pattern.permute.xlu0 2
        %2403 = vperm.xlu0 %2402, %v1739
        %v2404 = vpop.permute.xlu0 %2403
        %v2406 = vlaneseq
        %v2407 = vshrl.u32 %v2406, 7
        %v2408 = vsub.s32 2, %v2407
        %v2409 = vrot.slane %v2250, %v2408
        %v2410 = vmul.f32 %v2376, %v2409
        %v2411 = vmul.f32 %v2380, %v2409
        %v2412 = vmul.f32 %v2384, %v2409
        %v2413 = vmul.f32 %v2388, %v2409
        %v2414 = vmul.f32 %v2392, %v2409
        %v2415 = vmul.f32 %v2396, %v2409
        %v2416 = vmul.f32 %v2400, %v2409
        %v2417 = vmul.f32 %v2404, %v2409
        %v2418 = vadd.f32 %v2366, %v2410
        %v2419 = vadd.f32 %v2367, %v2411
        %v2420 = vadd.f32 %v2368, %v2412
        %v2421 = vadd.f32 %v2369, %v2413
        %v2422 = vadd.f32 %v2370, %v2414
        %v2423 = vadd.f32 %v2371, %v2415
        %v2424 = vadd.f32 %v2372, %v2416
        %v2425 = vadd.f32 %v2373, %v2417
        %v2427 = vlaneseq
        %v2428 = vshrl.u32 %v2427, 7
        %v2429 = vsub.s32 0, %v2428
        %v2430 = vrot.slane %v2251, %v2429
        %v2432 = vadd.f32 %v2418, %v2430
        %v2433 = vadd.f32 %v2419, %v2430
        %v2434 = vadd.f32 %v2420, %v2430
        %v2435 = vadd.f32 %v2421, %v2430
        %v2436 = vadd.f32 %v2422, %v2430
        %v2437 = vadd.f32 %v2423, %v2430
        %v2438 = vadd.f32 %v2424, %v2430
        %v2439 = vadd.f32 %v2425, %v2430
        %v2440 = vmax.f32 %v2432, 0.0
        %v2441 = vmax.f32 %v2433, 0.0
        %v2442 = vmax.f32 %v2434, 0.0
        %v2443 = vmax.f32 %v2435, 0.0
        %v2444 = vmax.f32 %v2436, 0.0
        %v2445 = vmax.f32 %v2437, 0.0
        %v2446 = vmax.f32 %v2438, 0.0
        %v2447 = vmax.f32 %v2439, 0.0
        %v2449 = vlaneseq
        %v2450 = vshrl.u32 %v2449, 7
        %v2451 = vsub.s32 0, %v2450
        %v2452 = vrot.slane %v2260, %v2451
        %v2455 = vsel %vm1977, %v2440, 0
        %v2458 = vsel %vm1977, %v2441, 0
        %v2461 = vsel %vm1977, %v2442, 0
        %v2464 = vsel %vm1977, %v2443, 0
        %v2467 = vsel %vm1977, %v2444, 0
        %v2470 = vsel %vm1977, %v2445, 0
        %v2473 = vsel %vm1977, %v2446, 0
        %v2476 = vsel %vm1977, %v2447, 0
        %2478 = vmatprep.subr.mxu0 0.0
        %2479 = vmatpush1.msra.mxu0 %v2252
        %2480 = vmatprep.subr.mxu0 0.0
        %2481 = vmatpush1.msra.mxu0 %v2253
        %2482 = vmatprep.subr.mxu0 0.0
        %2483 = vmatpush1.msra.mxu0 %v2254
        %2484 = vmatprep.subr.mxu0 0.0
        %2485 = vmatpush1.msra.mxu0 %v2255
        %2486 = vmatprep.subr.mxu0 0.0
        %2487 = vmatpush1.msra.mxu0 %v2256
        %2488 = vmatprep.subr.mxu0 0.0
        %2489 = vmatpush1.msra.mxu0 %v2257
        %2490 = vmatprep.subr.mxu0 0.0
        %2491 = vmatpush1.msra.mxu0 %v2258
        %2492 = vmatprep.subr.mxu0 0.0
        %2493 = vmatpush1.msra.mxu0 %v2259
        %2494 = vmatprep.subr.mxu0 0.0
        %2495 = vmatpush1.msra.mxu0 0.0
        %2496 = vmatprep.subr.mxu0 0.0
        %2497 = vmatpush1.msra.mxu0 0.0
        %2498 = vmatprep.subr.mxu0 0.0
        %2499 = vmatpush1.msra.mxu0 0.0
        %2500 = vmatprep.subr.mxu0 0.0
        %2501 = vmatpush1.msra.mxu0 0.0
        %2502 = vmatprep.subr.mxu0 0.0
        %2503 = vmatpush1.msra.mxu0 0.0
        %2504 = vmatprep.subr.mxu0 0.0
        %2505 = vmatpush1.msra.mxu0 0.0
        %2506 = vmatprep.subr.mxu0 0.0
        %2507 = vmatpush1.msra.mxu0 0.0
        %2508 = vmatprep.subr.mxu0 0.0
        %2509 = vmatpush1.msra.mxu0 0.0
        %2510 = vmatprep.subr.mxu0 0.0
        %2511 = vmatpush1.msra.mxu0 0.0
        %2512 = vmatprep.subr.mxu0 0.0
        %2513 = vmatpush1.msra.mxu0 0.0
        %2514 = vmatprep.subr.mxu0 0.0
        %2515 = vmatpush1.msra.mxu0 0.0
        %2516 = vmatprep.subr.mxu0 0.0
        %2517 = vmatpush1.msra.mxu0 0.0
        %2518 = vmatprep.subr.mxu0 0.0
        %2519 = vmatpush1.msra.mxu0 0.0
        %2520 = vmatprep.subr.mxu0 0.0
        %2521 = vmatpush1.msra.mxu0 0.0
        %2522 = vmatprep.subr.mxu0 0.0
        %2523 = vmatpush1.msra.mxu0 0.0
        %2524 = vmatprep.subr.mxu0 0.0
        %2525 = vmatpush1.msra.mxu0 0.0
        %2526 = vmatprep.subr.mxu0 0.0
        %2527 = vmatpush1.msra.mxu0 0.0
        %2528 = vmatprep.subr.mxu0 0.0
        %2529 = vmatpush1.msra.mxu0 0.0
        %2530 = vmatprep.subr.mxu0 0.0
        %2531 = vmatpush1.msra.mxu0 0.0
        %2532 = vmatprep.subr.mxu0 0.0
        %2533 = vmatpush1.msra.mxu0 0.0
        %2534 = vmatprep.subr.mxu0 0.0
        %2535 = vmatpush1.msra.mxu0 0.0
        %2536 = vmatprep.subr.mxu0 0.0
        %2537 = vmatpush1.msra.mxu0 0.0
        %2538 = vmatprep.subr.mxu0 0.0
        %2539 = vmatpush1.msra.mxu0 0.0
        %2540 = vmatprep.subr.mxu0 0.0
        %2541 = vmatpush1.msra.mxu0 0.0
        %2542 = vmatprep.mubr.f32.mxu0 0.0
        %2543 = vmatmul.mubr.f32.gmra.mrb[0].mxu0 %v2455
        %v2544 = vpop.f32.mrb[0].mxu0
        %v2545 = vadd.f32 %v2452, %v2544
        %v2546 = vpop.f32.mrb[0].mxu0
        %2547 = vmatprep.mubr.f32.mxu0 0.0
        %2548 = vmatmul.mubr.f32.gmra.mrb[0].mxu0 %v2458
        %v2549 = vpop.f32.mrb[0].mxu0
        %v2550 = vadd.f32 %v2452, %v2549
        %v2551 = vpop.f32.mrb[0].mxu0
        %2552 = vmatprep.mubr.f32.mxu0 0.0
        %2553 = vmatmul.mubr.f32.gmra.mrb[0].mxu0 %v2461
        %v2554 = vpop.f32.mrb[0].mxu0
        %v2555 = vadd.f32 %v2452, %v2554
        %v2556 = vpop.f32.mrb[0].mxu0
        %2557 = vmatprep.mubr.f32.mxu0 0.0
        %2558 = vmatmul.mubr.f32.gmra.mrb[0].mxu0 %v2464
        %v2559 = vpop.f32.mrb[0].mxu0
        %v2560 = vadd.f32 %v2452, %v2559
        %v2561 = vpop.f32.mrb[0].mxu0
        %2562 = vmatprep.mubr.f32.mxu0 0.0
        %2563 = vmatmul.mubr.f32.gmra.mrb[0].mxu0 %v2467
        %v2564 = vpop.f32.mrb[0].mxu0
        %v2565 = vadd.f32 %v2452, %v2564
        %v2566 = vpop.f32.mrb[0].mxu0
        %2567 = vmatprep.mubr.f32.mxu0 0.0
        %2568 = vmatmul.mubr.f32.gmra.mrb[0].mxu0 %v2470
        %v2569 = vpop.f32.mrb[0].mxu0
        %v2570 = vadd.f32 %v2452, %v2569
        %v2571 = vpop.f32.mrb[0].mxu0
        %2572 = vmatprep.mubr.f32.mxu0 0.0
        %2573 = vmatmul.mubr.f32.gmra.mrb[0].mxu0 %v2473
        %v2574 = vpop.f32.mrb[0].mxu0
        %v2575 = vadd.f32 %v2452, %v2574
        %v2576 = vpop.f32.mrb[0].mxu0
        %2577 = vmatprep.mubr.f32.mxu0 0.0
        %2578 = vmatmul.mubr.f32.gmra.mrb[0].mxu0 %v2476
        %v2579 = vpop.f32.mrb[0].mxu0
        %v2580 = vadd.f32 %v2452, %v2579
        %v2581 = vpop.f32.mrb[0].mxu0
        %2582 = vdwg.mxu0
        %v2583 = vmax.f32 %v2545, 0.0
        %v2584 = vmax.f32 %v2550, 0.0
        %v2585 = vmax.f32 %v2555, 0.0
        %v2586 = vmax.f32 %v2560, 0.0
        %v2587 = vmax.f32 %v2565, 0.0
        %v2588 = vmax.f32 %v2570, 0.0
        %v2589 = vmax.f32 %v2575, 0.0
        %v2590 = vmax.f32 %v2580, 0.0
        %v2592 = vlaneseq
        %v2593 = vshrl.u32 %v2592, 7
        %v2594 = vsub.s32 0, %v2593
        %v2595 = vrot.slane %v2269, %v2594
        %v2598 = vsel %vm1977, %v2583, 0
        %v2601 = vsel %vm1977, %v2584, 0
        %v2604 = vsel %vm1977, %v2585, 0
        %v2607 = vsel %vm1977, %v2586, 0
        %v2610 = vsel %vm1977, %v2587, 0
        %v2613 = vsel %vm1977, %v2588, 0
        %v2616 = vsel %vm1977, %v2589, 0
        %v2619 = vsel %vm1977, %v2590, 0
        %2621 = vmatprep.subr.mxu0 0.0
        %2622 = vmatpush1.msra.mxu0 %v2261
        %2623 = vmatprep.subr.mxu0 0.0
        %2624 = vmatpush1.msra.mxu0 %v2262
        %2625 = vmatprep.subr.mxu0 0.0
        %2626 = vmatpush1.msra.mxu0 %v2263
        %2627 = vmatprep.subr.mxu0 0.0
        %2628 = vmatpush1.msra.mxu0 %v2264
        %2629 = vmatprep.subr.mxu0 0.0
        %2630 = vmatpush1.msra.mxu0 %v2265
        %2631 = vmatprep.subr.mxu0 0.0
        %2632 = vmatpush1.msra.mxu0 %v2266
        %2633 = vmatprep.subr.mxu0 0.0
        %2634 = vmatpush1.msra.mxu0 %v2267
        %2635 = vmatprep.subr.mxu0 0.0
        %2636 = vmatpush1.msra.mxu0 %v2268
        %2637 = vmatprep.subr.mxu0 0.0
        %2638 = vmatpush1.msra.mxu0 0.0
        %2639 = vmatprep.subr.mxu0 0.0
        %2640 = vmatpush1.msra.mxu0 0.0
        %2641 = vmatprep.subr.mxu0 0.0
        %2642 = vmatpush1.msra.mxu0 0.0
        %2643 = vmatprep.subr.mxu0 0.0
        %2644 = vmatpush1.msra.mxu0 0.0
        %2645 = vmatprep.subr.mxu0 0.0
        %2646 = vmatpush1.msra.mxu0 0.0
        %2647 = vmatprep.subr.mxu0 0.0
        %2648 = vmatpush1.msra.mxu0 0.0
        %2649 = vmatprep.subr.mxu0 0.0
        %2650 = vmatpush1.msra.mxu0 0.0
        %2651 = vmatprep.subr.mxu0 0.0
        %2652 = vmatpush1.msra.mxu0 0.0
        %2653 = vmatprep.subr.mxu0 0.0
        %2654 = vmatpush1.msra.mxu0 0.0
        %2655 = vmatprep.subr.mxu0 0.0
        %2656 = vmatpush1.msra.mxu0 0.0
        %2657 = vmatprep.subr.mxu0 0.0
        %2658 = vmatpush1.msra.mxu0 0.0
        %2659 = vmatprep.subr.mxu0 0.0
        %2660 = vmatpush1.msra.mxu0 0.0
        %2661 = vmatprep.subr.mxu0 0.0
        %2662 = vmatpush1.msra.mxu0 0.0
        %2663 = vmatprep.subr.mxu0 0.0
        %2664 = vmatpush1.msra.mxu0 0.0
        %2665 = vmatprep.subr.mxu0 0.0
        %2666 = vmatpush1.msra.mxu0 0.0
        %2667 = vmatprep.subr.mxu0 0.0
        %2668 = vmatpush1.msra.mxu0 0.0
        %2669 = vmatprep.subr.mxu0 0.0
        %2670 = vmatpush1.msra.mxu0 0.0
        %2671 = vmatprep.subr.mxu0 0.0
        %2672 = vmatpush1.msra.mxu0 0.0
        %2673 = vmatprep.subr.mxu0 0.0
        %2674 = vmatpush1.msra.mxu0 0.0
        %2675 = vmatprep.subr.mxu0 0.0
        %2676 = vmatpush1.msra.mxu0 0.0
        %2677 = vmatprep.subr.mxu0 0.0
        %2678 = vmatpush1.msra.mxu0 0.0
        %2679 = vmatprep.subr.mxu0 0.0
        %2680 = vmatpush1.msra.mxu0 0.0
        %2681 = vmatprep.subr.mxu0 0.0
        %2682 = vmatpush1.msra.mxu0 0.0
        %2683 = vmatprep.subr.mxu0 0.0
        %2684 = vmatpush1.msra.mxu0 0.0
        %2685 = vmatprep.mubr.f32.mxu0 0.0
        %2686 = vmatmul.mubr.f32.gmra.mrb[0].mxu0 %v2598
        %v2687 = vpop.f32.mrb[0].mxu0
        %v2688 = vadd.f32 %v2595, %v2687
        %v2689 = vpop.f32.mrb[0].mxu0
        %2690 = vmatprep.mubr.f32.mxu0 0.0
        %2691 = vmatmul.mubr.f32.gmra.mrb[0].mxu0 %v2601
        %v2692 = vpop.f32.mrb[0].mxu0
        %v2693 = vadd.f32 %v2595, %v2692
        %v2694 = vpop.f32.mrb[0].mxu0
        %2695 = vmatprep.mubr.f32.mxu0 0.0
        %2696 = vmatmul.mubr.f32.gmra.mrb[0].mxu0 %v2604
        %v2697 = vpop.f32.mrb[0].mxu0
        %v2698 = vadd.f32 %v2595, %v2697
        %v2699 = vpop.f32.mrb[0].mxu0
        %2700 = vmatprep.mubr.f32.mxu0 0.0
        %2701 = vmatmul.mubr.f32.gmra.mrb[0].mxu0 %v2607
        %v2702 = vpop.f32.mrb[0].mxu0
        %v2703 = vadd.f32 %v2595, %v2702
        %v2704 = vpop.f32.mrb[0].mxu0
        %2705 = vmatprep.mubr.f32.mxu0 0.0
        %2706 = vmatmul.mubr.f32.gmra.mrb[0].mxu0 %v2610
        %v2707 = vpop.f32.mrb[0].mxu0
        %v2708 = vadd.f32 %v2595, %v2707
        %v2709 = vpop.f32.mrb[0].mxu0
        %2710 = vmatprep.mubr.f32.mxu0 0.0
        %2711 = vmatmul.mubr.f32.gmra.mrb[0].mxu0 %v2613
        %v2712 = vpop.f32.mrb[0].mxu0
        %v2713 = vadd.f32 %v2595, %v2712
        %v2714 = vpop.f32.mrb[0].mxu0
        %2715 = vmatprep.mubr.f32.mxu0 0.0
        %2716 = vmatmul.mubr.f32.gmra.mrb[0].mxu0 %v2616
        %v2717 = vpop.f32.mrb[0].mxu0
        %v2718 = vadd.f32 %v2595, %v2717
        %v2719 = vpop.f32.mrb[0].mxu0
        %2720 = vmatprep.mubr.f32.mxu0 0.0
        %2721 = vmatmul.mubr.f32.gmra.mrb[0].mxu0 %v2619
        %v2722 = vpop.f32.mrb[0].mxu0
        %v2723 = vadd.f32 %v2595, %v2722
        %v2724 = vpop.f32.mrb[0].mxu0
        %2725 = vdwg.mxu0
        %v2727 = vlaneseq
        %v2728 = vshrl.u32 %v2727, 7
        %v2729 = vsub.s32 0, %v2728
        %v2730 = vrot.slane %v1740, %v2729
        %2731 = vrot.lane.b32.xlu0 %v2730, 32
        %v2732 = vpop.permute.xlu0 %2731
        %vm2734 = vcmask 261120
        %v2735 = vsel %vm2734, %v2212, %v2732
        %v2736 = vsel %vm2734, %v2217, %v2732
        %v2737 = vsel %vm2734, %v2222, %v2732
        %v2738 = vsel %vm2734, %v2227, %v2732
        %v2739 = vsel %vm2734, %v2232, %v2732
        %v2740 = vsel %vm2734, %v2237, %v2732
        %v2741 = vsel %vm2734, %v2242, %v2732
        %v2742 = vsel %vm2734, %v2247, %v2732
        %v2743 = vsel %vm2734, %v2688, %v2732
        %v2744 = vsel %vm2734, %v2693, %v2732
        %v2745 = vsel %vm2734, %v2698, %v2732
        %v2746 = vsel %vm2734, %v2703, %v2732
        %v2747 = vsel %vm2734, %v2708, %v2732
        %v2748 = vsel %vm2734, %v2713, %v2732
        %v2749 = vsel %vm2734, %v2718, %v2732
        %v2750 = vsel %vm2734, %v2723, %v2732
        %v2751 = vld [vmem:[%s31] sm:$0xff]
        %v2752 = vld [vmem:[%s31 + $0x8] sm:$0xff]
        %v2753 = vld [vmem:[%s31 + $0x10] sm:$0xff]
        %v2754 = vld [vmem:[%s31 + $0x18] sm:$0xff]
        %v2755 = vld [vmem:[%s31 + $0x20] sm:$0xff]
        %v2756 = vld [vmem:[%s31 + $0x28] sm:$0xff]
        %v2757 = vld [vmem:[%s31 + $0x30] sm:$0xff]
        %v2758 = vld [vmem:[%s31 + $0x38] sm:$0xff]
        %v2759 = vld [vmem:[%s33] sm:$0xff]
        %v2760 = vld [vmem:[%s33 + $0x8] sm:$0xff]
        %v2761 = vld [vmem:[%s33 + $0x10] sm:$0xff]
        %v2762 = vld [vmem:[%s33 + $0x18] sm:$0xff]
        %v2763 = vld [vmem:[%s33 + $0x20] sm:$0xff]
        %v2764 = vld [vmem:[%s33 + $0x28] sm:$0xff]
        %v2765 = vld [vmem:[%s33 + $0x30] sm:$0xff]
        %v2766 = vld [vmem:[%s33 + $0x38] sm:$0xff]
        %v2767 = vld [vmem:[%s35] sm:$0xff]
        %v2768 = vld [vmem:[%s35 + $0x8] sm:$0xff]
        %v2769 = vld [vmem:[%s35 + $0x10] sm:$0xff]
        %v2770 = vld [vmem:[%s35 + $0x18] sm:$0xff]
        %v2771 = vld [vmem:[%s35 + $0x20] sm:$0xff]
        %v2772 = vld [vmem:[%s35 + $0x28] sm:$0xff]
        %v2773 = vld [vmem:[%s35 + $0x30] sm:$0xff]
        %v2774 = vld [vmem:[%s35 + $0x38] sm:$0xff]
        %v2775 = vld [vmem:[%s37] sm:$0xff]
        %v2776 = vld [vmem:[%s37 + $0x8] sm:$0xff]
        %v2777 = vld [vmem:[%s37 + $0x10] sm:$0xff]
        %v2778 = vld [vmem:[%s37 + $0x18] sm:$0xff]
        %v2779 = vld [vmem:[%s37 + $0x20] sm:$0xff]
        %v2780 = vld [vmem:[%s37 + $0x28] sm:$0xff]
        %v2781 = vld [vmem:[%s37 + $0x30] sm:$0xff]
        %v2782 = vld [vmem:[%s37 + $0x38] sm:$0xff]
        %v2783 = vld [vmem:[%s39] sm:$0x1]
        %v2784 = vld [vmem:[%s41] sm:$0xff]
        %v2785 = vld [vmem:[%s41 + $0x8] sm:$0xff]
        %v2786 = vld [vmem:[%s41 + $0x10] sm:$0xff]
        %v2787 = vld [vmem:[%s41 + $0x18] sm:$0xff]
        %v2788 = vld [vmem:[%s41 + $0x20] sm:$0xff]
        %v2789 = vld [vmem:[%s41 + $0x28] sm:$0xff]
        %v2790 = vld [vmem:[%s41 + $0x30] sm:$0xff]
        %v2791 = vld [vmem:[%s41 + $0x38] sm:$0xff]
        %v2792 = vld [vmem:[%s41 + $0x40] sm:$0xff]
        %v2793 = vld [vmem:[%s41 + $0x48] sm:$0xff]
        %v2794 = vld [vmem:[%s41 + $0x50] sm:$0xff]
        %v2795 = vld [vmem:[%s41 + $0x58] sm:$0xff]
        %v2796 = vld [vmem:[%s41 + $0x60] sm:$0xff]
        %v2797 = vld [vmem:[%s41 + $0x68] sm:$0xff]
        %v2798 = vld [vmem:[%s41 + $0x70] sm:$0xff]
        %v2799 = vld [vmem:[%s41 + $0x78] sm:$0xff]
        %v2800 = vld [vmem:[%s43] sm:$0x1]
        %v2802 = vsel %vm1977, %v2735, 0
        %v2805 = vsel %vm1977, %v2736, 0
        %v2808 = vsel %vm1977, %v2737, 0
        %v2811 = vsel %vm1977, %v2738, 0
        %v2814 = vsel %vm1977, %v2739, 0
        %v2817 = vsel %vm1977, %v2740, 0
        %v2820 = vsel %vm1977, %v2741, 0
        %v2823 = vsel %vm1977, %v2742, 0
        %2825 = vmatprep.subr.mxu0 0.0
        %2826 = vmatpush1.msra.mxu0 %v2751
        %2827 = vmatprep.subr.mxu0 0.0
        %2828 = vmatpush1.msra.mxu0 %v2752
        %2829 = vmatprep.subr.mxu0 0.0
        %2830 = vmatpush1.msra.mxu0 %v2753
        %2831 = vmatprep.subr.mxu0 0.0
        %2832 = vmatpush1.msra.mxu0 %v2754
        %2833 = vmatprep.subr.mxu0 0.0
        %2834 = vmatpush1.msra.mxu0 %v2755
        %2835 = vmatprep.subr.mxu0 0.0
        %2836 = vmatpush1.msra.mxu0 %v2756
        %2837 = vmatprep.subr.mxu0 0.0
        %2838 = vmatpush1.msra.mxu0 %v2757
        %2839 = vmatprep.subr.mxu0 0.0
        %2840 = vmatpush1.msra.mxu0 %v2758
        %2841 = vmatprep.subr.mxu0 0.0
        %2842 = vmatpush1.msra.mxu0 0.0
        %2843 = vmatprep.subr.mxu0 0.0
        %2844 = vmatpush1.msra.mxu0 0.0
        %2845 = vmatprep.subr.mxu0 0.0
        %2846 = vmatpush1.msra.mxu0 0.0
        %2847 = vmatprep.subr.mxu0 0.0
        %2848 = vmatpush1.msra.mxu0 0.0
        %2849 = vmatprep.subr.mxu0 0.0
        %2850 = vmatpush1.msra.mxu0 0.0
        %2851 = vmatprep.subr.mxu0 0.0
        %2852 = vmatpush1.msra.mxu0 0.0
        %2853 = vmatprep.subr.mxu0 0.0
        %2854 = vmatpush1.msra.mxu0 0.0
        %2855 = vmatprep.subr.mxu0 0.0
        %2856 = vmatpush1.msra.mxu0 0.0
        %2857 = vmatprep.subr.mxu0 0.0
        %2858 = vmatpush1.msra.mxu0 0.0
        %2859 = vmatprep.subr.mxu0 0.0
        %2860 = vmatpush1.msra.mxu0 0.0
        %2861 = vmatprep.subr.mxu0 0.0
        %2862 = vmatpush1.msra.mxu0 0.0
        %2863 = vmatprep.subr.mxu0 0.0
        %2864 = vmatpush1.msra.mxu0 0.0
        %2865 = vmatprep.subr.mxu0 0.0
        %2866 = vmatpush1.msra.mxu0 0.0
        %2867 = vmatprep.subr.mxu0 0.0
        %2868 = vmatpush1.msra.mxu0 0.0
        %2869 = vmatprep.subr.mxu0 0.0
        %2870 = vmatpush1.msra.mxu0 0.0
        %2871 = vmatprep.subr.mxu0 0.0
        %2872 = vmatpush1.msra.mxu0 0.0
        %2873 = vmatprep.subr.mxu0 0.0
        %2874 = vmatpush1.msra.mxu0 0.0
        %2875 = vmatprep.subr.mxu0 0.0
        %2876 = vmatpush1.msra.mxu0 0.0
        %2877 = vmatprep.subr.mxu0 0.0
        %2878 = vmatpush1.msra.mxu0 0.0
        %2879 = vmatprep.subr.mxu0 0.0
        %2880 = vmatpush1.msra.mxu0 0.0
        %2881 = vmatprep.subr.mxu0 0.0
        %2882 = vmatpush1.msra.mxu0 0.0
        %2883 = vmatprep.subr.mxu0 0.0
        %2884 = vmatpush1.msra.mxu0 0.0
        %2885 = vmatprep.subr.mxu0 0.0
        %2886 = vmatpush1.msra.mxu0 0.0
        %2887 = vmatprep.subr.mxu0 0.0
        %2888 = vmatpush1.msra.mxu0 0.0
        %2889 = vmatprep.mubr.f32.mxu0 0.0
        %2890 = vmatmul.mubr.f32.gmra.mrb[0].mxu0 %v2802
        %v2891 = vpop.f32.mrb[0].mxu0
        %v2892 = vadd.f32 0.0, %v2891
        %v2893 = vpop.f32.mrb[0].mxu0
        %2894 = vmatprep.mubr.f32.mxu0 0.0
        %2895 = vmatmul.mubr.f32.gmra.mrb[0].mxu0 %v2805
        %v2896 = vpop.f32.mrb[0].mxu0
        %v2897 = vadd.f32 0.0, %v2896
        %v2898 = vpop.f32.mrb[0].mxu0
        %2899 = vmatprep.mubr.f32.mxu0 0.0
        %2900 = vmatmul.mubr.f32.gmra.mrb[0].mxu0 %v2808
        %v2901 = vpop.f32.mrb[0].mxu0
        %v2902 = vadd.f32 0.0, %v2901
        %v2903 = vpop.f32.mrb[0].mxu0
        %2904 = vmatprep.mubr.f32.mxu0 0.0
        %2905 = vmatmul.mubr.f32.gmra.mrb[0].mxu0 %v2811
        %v2906 = vpop.f32.mrb[0].mxu0
        %v2907 = vadd.f32 0.0, %v2906
        %v2908 = vpop.f32.mrb[0].mxu0
        %2909 = vmatprep.mubr.f32.mxu0 0.0
        %2910 = vmatmul.mubr.f32.gmra.mrb[0].mxu0 %v2814
        %v2911 = vpop.f32.mrb[0].mxu0
        %v2912 = vadd.f32 0.0, %v2911
        %v2913 = vpop.f32.mrb[0].mxu0
        %2914 = vmatprep.mubr.f32.mxu0 0.0
        %2915 = vmatmul.mubr.f32.gmra.mrb[0].mxu0 %v2817
        %v2916 = vpop.f32.mrb[0].mxu0
        %v2917 = vadd.f32 0.0, %v2916
        %v2918 = vpop.f32.mrb[0].mxu0
        %2919 = vmatprep.mubr.f32.mxu0 0.0
        %2920 = vmatmul.mubr.f32.gmra.mrb[0].mxu0 %v2820
        %v2921 = vpop.f32.mrb[0].mxu0
        %v2922 = vadd.f32 0.0, %v2921
        %v2923 = vpop.f32.mrb[0].mxu0
        %2924 = vmatprep.mubr.f32.mxu0 0.0
        %2925 = vmatmul.mubr.f32.gmra.mrb[0].mxu0 %v2823
        %v2926 = vpop.f32.mrb[0].mxu0
        %v2927 = vadd.f32 0.0, %v2926
        %v2928 = vpop.f32.mrb[0].mxu0
        %2929 = vdwg.mxu0
        %v2931 = vsel %vm1977, %v2743, 0
        %v2934 = vsel %vm1977, %v2744, 0
        %v2937 = vsel %vm1977, %v2745, 0
        %v2940 = vsel %vm1977, %v2746, 0
        %v2943 = vsel %vm1977, %v2747, 0
        %v2946 = vsel %vm1977, %v2748, 0
        %v2949 = vsel %vm1977, %v2749, 0
        %v2952 = vsel %vm1977, %v2750, 0
        %2954 = vmatprep.subr.mxu0 0.0
        %2955 = vmatpush1.msra.mxu0 %v2759
        %2956 = vmatprep.subr.mxu0 0.0
        %2957 = vmatpush1.msra.mxu0 %v2760
        %2958 = vmatprep.subr.mxu0 0.0
        %2959 = vmatpush1.msra.mxu0 %v2761
        %2960 = vmatprep.subr.mxu0 0.0
        %2961 = vmatpush1.msra.mxu0 %v2762
        %2962 = vmatprep.subr.mxu0 0.0
        %2963 = vmatpush1.msra.mxu0 %v2763
        %2964 = vmatprep.subr.mxu0 0.0
        %2965 = vmatpush1.msra.mxu0 %v2764
        %2966 = vmatprep.subr.mxu0 0.0
        %2967 = vmatpush1.msra.mxu0 %v2765
        %2968 = vmatprep.subr.mxu0 0.0
        %2969 = vmatpush1.msra.mxu0 %v2766
        %2970 = vmatprep.subr.mxu0 0.0
        %2971 = vmatpush1.msra.mxu0 0.0
        %2972 = vmatprep.subr.mxu0 0.0
        %2973 = vmatpush1.msra.mxu0 0.0
        %2974 = vmatprep.subr.mxu0 0.0
        %2975 = vmatpush1.msra.mxu0 0.0
        %2976 = vmatprep.subr.mxu0 0.0
        %2977 = vmatpush1.msra.mxu0 0.0
        %2978 = vmatprep.subr.mxu0 0.0
        %2979 = vmatpush1.msra.mxu0 0.0
        %2980 = vmatprep.subr.mxu0 0.0
        %2981 = vmatpush1.msra.mxu0 0.0
        %2982 = vmatprep.subr.mxu0 0.0
        %2983 = vmatpush1.msra.mxu0 0.0
        %2984 = vmatprep.subr.mxu0 0.0
        %2985 = vmatpush1.msra.mxu0 0.0
        %2986 = vmatprep.subr.mxu0 0.0
        %2987 = vmatpush1.msra.mxu0 0.0
        %2988 = vmatprep.subr.mxu0 0.0
        %2989 = vmatpush1.msra.mxu0 0.0
        %2990 = vmatprep.subr.mxu0 0.0
        %2991 = vmatpush1.msra.mxu0 0.0
        %2992 = vmatprep.subr.mxu0 0.0
        %2993 = vmatpush1.msra.mxu0 0.0
        %2994 = vmatprep.subr.mxu0 0.0
        %2995 = vmatpush1.msra.mxu0 0.0
        %2996 = vmatprep.subr.mxu0 0.0
        %2997 = vmatpush1.msra.mxu0 0.0
        %2998 = vmatprep.subr.mxu0 0.0
        %2999 = vmatpush1.msra.mxu0 0.0
        %3000 = vmatprep.subr.mxu0 0.0
        %3001 = vmatpush1.msra.mxu0 0.0
        %3002 = vmatprep.subr.mxu0 0.0
        %3003 = vmatpush1.msra.mxu0 0.0
        %3004 = vmatprep.subr.mxu0 0.0
        %3005 = vmatpush1.msra.mxu0 0.0
        %3006 = vmatprep.subr.mxu0 0.0
        %3007 = vmatpush1.msra.mxu0 0.0
        %3008 = vmatprep.subr.mxu0 0.0
        %3009 = vmatpush1.msra.mxu0 0.0
        %3010 = vmatprep.subr.mxu0 0.0
        %3011 = vmatpush1.msra.mxu0 0.0
        %3012 = vmatprep.subr.mxu0 0.0
        %3013 = vmatpush1.msra.mxu0 0.0
        %3014 = vmatprep.subr.mxu0 0.0
        %3015 = vmatpush1.msra.mxu0 0.0
        %3016 = vmatprep.subr.mxu0 0.0
        %3017 = vmatpush1.msra.mxu0 0.0
        %3018 = vmatprep.mubr.f32.mxu0 0.0
        %3019 = vmatmul.mubr.f32.gmra.mrb[0].mxu0 %v2931
        %v3020 = vpop.f32.mrb[0].mxu0
        %v3021 = vadd.f32 0.0, %v3020
        %v3022 = vpop.f32.mrb[0].mxu0
        %3023 = vmatprep.mubr.f32.mxu0 0.0
        %3024 = vmatmul.mubr.f32.gmra.mrb[0].mxu0 %v2934
        %v3025 = vpop.f32.mrb[0].mxu0
        %v3026 = vadd.f32 0.0, %v3025
        %v3027 = vpop.f32.mrb[0].mxu0
        %3028 = vmatprep.mubr.f32.mxu0 0.0
        %3029 = vmatmul.mubr.f32.gmra.mrb[0].mxu0 %v2937
        %v3030 = vpop.f32.mrb[0].mxu0
        %v3031 = vadd.f32 0.0, %v3030
        %v3032 = vpop.f32.mrb[0].mxu0
        %3033 = vmatprep.mubr.f32.mxu0 0.0
        %3034 = vmatmul.mubr.f32.gmra.mrb[0].mxu0 %v2940
        %v3035 = vpop.f32.mrb[0].mxu0
        %v3036 = vadd.f32 0.0, %v3035
        %v3037 = vpop.f32.mrb[0].mxu0
        %3038 = vmatprep.mubr.f32.mxu0 0.0
        %3039 = vmatmul.mubr.f32.gmra.mrb[0].mxu0 %v2943
        %v3040 = vpop.f32.mrb[0].mxu0
        %v3041 = vadd.f32 0.0, %v3040
        %v3042 = vpop.f32.mrb[0].mxu0
        %3043 = vmatprep.mubr.f32.mxu0 0.0
        %3044 = vmatmul.mubr.f32.gmra.mrb[0].mxu0 %v2946
        %v3045 = vpop.f32.mrb[0].mxu0
        %v3046 = vadd.f32 0.0, %v3045
        %v3047 = vpop.f32.mrb[0].mxu0
        %3048 = vmatprep.mubr.f32.mxu0 0.0
        %3049 = vmatmul.mubr.f32.gmra.mrb[0].mxu0 %v2949
        %v3050 = vpop.f32.mrb[0].mxu0
        %v3051 = vadd.f32 0.0, %v3050
        %v3052 = vpop.f32.mrb[0].mxu0
        %3053 = vmatprep.mubr.f32.mxu0 0.0
        %3054 = vmatmul.mubr.f32.gmra.mrb[0].mxu0 %v2952
        %v3055 = vpop.f32.mrb[0].mxu0
        %v3056 = vadd.f32 0.0, %v3055
        %v3057 = vpop.f32.mrb[0].mxu0
        %3058 = vdwg.mxu0
        %v3060 = vsel %vm1977, %v2892, 0
        %v3063 = vsel %vm1977, %v2897, 0
        %v3066 = vsel %vm1977, %v2902, 0
        %v3069 = vsel %vm1977, %v2907, 0
        %v3072 = vsel %vm1977, %v2912, 0
        %v3075 = vsel %vm1977, %v2917, 0
        %v3078 = vsel %vm1977, %v2922, 0
        %v3081 = vsel %vm1977, %v2927, 0
        %v3084 = vsel %vm1977, %v3021, 0
        %v3087 = vsel %vm1977, %v3026, 0
        %v3090 = vsel %vm1977, %v3031, 0
        %v3093 = vsel %vm1977, %v3036, 0
        %v3096 = vsel %vm1977, %v3041, 0
        %v3099 = vsel %vm1977, %v3046, 0
        %v3102 = vsel %vm1977, %v3051, 0
        %v3105 = vsel %vm1977, %v3056, 0
        %3107 = vmatprep.subr.mxu0 0.0
        %3108 = vmatpush1.xpose.msra.mxu0 %v3084
        %3109 = vmatprep.subr.mxu0 0.0
        %3110 = vmatpush1.xpose.msra.mxu0 %v3087
        %3111 = vmatprep.subr.mxu0 0.0
        %3112 = vmatpush1.xpose.msra.mxu0 %v3090
        %3113 = vmatprep.subr.mxu0 0.0
        %3114 = vmatpush1.xpose.msra.mxu0 %v3093
        %3115 = vmatprep.subr.mxu0 0.0
        %3116 = vmatpush1.xpose.msra.mxu0 %v3096
        %3117 = vmatprep.subr.mxu0 0.0
        %3118 = vmatpush1.xpose.msra.mxu0 %v3099
        %3119 = vmatprep.subr.mxu0 0.0
        %3120 = vmatpush1.xpose.msra.mxu0 %v3102
        %3121 = vmatprep.subr.mxu0 0.0
        %3122 = vmatpush1.xpose.msra.mxu0 %v3105
        %3123 = vmatprep.subr.mxu0 0.0
        %3124 = vmatpush1.xpose.msra.mxu0 0.0
        %3125 = vmatprep.subr.mxu0 0.0
        %3126 = vmatpush1.xpose.msra.mxu0 0.0
        %3127 = vmatprep.subr.mxu0 0.0
        %3128 = vmatpush1.xpose.msra.mxu0 0.0
        %3129 = vmatprep.subr.mxu0 0.0
        %3130 = vmatpush1.xpose.msra.mxu0 0.0
        %3131 = vmatprep.subr.mxu0 0.0
        %3132 = vmatpush1.xpose.msra.mxu0 0.0
        %3133 = vmatprep.subr.mxu0 0.0
        %3134 = vmatpush1.xpose.msra.mxu0 0.0
        %3135 = vmatprep.subr.mxu0 0.0
        %3136 = vmatpush1.xpose.msra.mxu0 0.0
        %3137 = vmatprep.subr.mxu0 0.0
        %3138 = vmatpush1.xpose.msra.mxu0 0.0
        %3139 = vmatprep.subr.mxu0 0.0
        %3140 = vmatpush1.xpose.msra.mxu0 0.0
        %3141 = vmatprep.subr.mxu0 0.0
        %3142 = vmatpush1.xpose.msra.mxu0 0.0
        %3143 = vmatprep.subr.mxu0 0.0
        %3144 = vmatpush1.xpose.msra.mxu0 0.0
        %3145 = vmatprep.subr.mxu0 0.0
        %3146 = vmatpush1.xpose.msra.mxu0 0.0
        %3147 = vmatprep.subr.mxu0 0.0
        %3148 = vmatpush1.xpose.msra.mxu0 0.0
        %3149 = vmatprep.subr.mxu0 0.0
        %3150 = vmatpush1.xpose.msra.mxu0 0.0
        %3151 = vmatprep.subr.mxu0 0.0
        %3152 = vmatpush1.xpose.msra.mxu0 0.0
        %3153 = vmatprep.subr.mxu0 0.0
        %3154 = vmatpush1.xpose.msra.mxu0 0.0
        %3155 = vmatprep.subr.mxu0 0.0
        %3156 = vmatpush1.xpose.msra.mxu0 0.0
        %3157 = vmatprep.subr.mxu0 0.0
        %3158 = vmatpush1.xpose.msra.mxu0 0.0
        %3159 = vmatprep.subr.mxu0 0.0
        %3160 = vmatpush1.xpose.msra.mxu0 0.0
        %3161 = vmatprep.subr.mxu0 0.0
        %3162 = vmatpush1.xpose.msra.mxu0 0.0
        %3163 = vmatprep.subr.mxu0 0.0
        %3164 = vmatpush1.xpose.msra.mxu0 0.0
        %3165 = vmatprep.subr.mxu0 0.0
        %3166 = vmatpush1.xpose.msra.mxu0 0.0
        %3167 = vmatprep.subr.mxu0 0.0
        %3168 = vmatpush1.xpose.msra.mxu0 0.0
        %3169 = vmatprep.subr.mxu0 0.0
        %3170 = vmatpush1.xpose.msra.mxu0 0.0
        %3171 = vmatprep.mubr.f32.mxu0 0.0
        %3172 = vmatmul.mubr.f32.gmra.mrb[0].mxu0 %v3060
        %v3173 = vpop.f32.mrb[0].mxu0
        %v3174 = vadd.f32 0.0, %v3173
        %v3175 = vpop.f32.mrb[0].mxu0
        %3176 = vmatprep.mubr.f32.mxu0 0.0
        %3177 = vmatmul.mubr.f32.gmra.mrb[0].mxu0 %v3063
        %v3178 = vpop.f32.mrb[0].mxu0
        %v3179 = vadd.f32 0.0, %v3178
        %v3180 = vpop.f32.mrb[0].mxu0
        %3181 = vmatprep.mubr.f32.mxu0 0.0
        %3182 = vmatmul.mubr.f32.gmra.mrb[0].mxu0 %v3066
        %v3183 = vpop.f32.mrb[0].mxu0
        %v3184 = vadd.f32 0.0, %v3183
        %v3185 = vpop.f32.mrb[0].mxu0
        %3186 = vmatprep.mubr.f32.mxu0 0.0
        %3187 = vmatmul.mubr.f32.gmra.mrb[0].mxu0 %v3069
        %v3188 = vpop.f32.mrb[0].mxu0
        %v3189 = vadd.f32 0.0, %v3188
        %v3190 = vpop.f32.mrb[0].mxu0
        %3191 = vmatprep.mubr.f32.mxu0 0.0
        %3192 = vmatmul.mubr.f32.gmra.mrb[0].mxu0 %v3072
        %v3193 = vpop.f32.mrb[0].mxu0
        %v3194 = vadd.f32 0.0, %v3193
        %v3195 = vpop.f32.mrb[0].mxu0
        %3196 = vmatprep.mubr.f32.mxu0 0.0
        %3197 = vmatmul.mubr.f32.gmra.mrb[0].mxu0 %v3075
        %v3198 = vpop.f32.mrb[0].mxu0
        %v3199 = vadd.f32 0.0, %v3198
        %v3200 = vpop.f32.mrb[0].mxu0
        %3201 = vmatprep.mubr.f32.mxu0 0.0
        %3202 = vmatmul.mubr.f32.gmra.mrb[0].mxu0 %v3078
        %v3203 = vpop.f32.mrb[0].mxu0
        %v3204 = vadd.f32 0.0, %v3203
        %v3205 = vpop.f32.mrb[0].mxu0
        %3206 = vmatprep.mubr.f32.mxu0 0.0
        %3207 = vmatmul.mubr.f32.gmra.mrb[0].mxu0 %v3081
        %v3208 = vpop.f32.mrb[0].mxu0
        %v3209 = vadd.f32 0.0, %v3208
        %v3210 = vpop.f32.mrb[0].mxu0
        %3211 = vdwg.mxu0
        %v3212 = vmul.f32 %v3174, 0.125
        %v3213 = vmul.f32 %v3179, 0.125
        %v3214 = vmul.f32 %v3184, 0.125
        %v3215 = vmul.f32 %v3189, 0.125
        %v3216 = vmul.f32 %v3194, 0.125
        %v3217 = vmul.f32 %v3199, 0.125
        %v3218 = vmul.f32 %v3204, 0.125
        %v3219 = vmul.f32 %v3209, 0.125
        %v3220 = vsel %vm1977, %v3212, -inf
        %3221 = vmax.xlane.f32.xlu0 %v3220
        %v3222 = vpop.xlane.xlu0 %3221
        %v3223 = vsel %vm1977, %v3213, -inf
        %3224 = vmax.xlane.f32.xlu0 %v3223
        %v3225 = vpop.xlane.xlu0 %3224
        %v3226 = vsel %vm1977, %v3214, -inf
        %3227 = vmax.xlane.f32.xlu0 %v3226
        %v3228 = vpop.xlane.xlu0 %3227
        %v3229 = vsel %vm1977, %v3215, -inf
        %3230 = vmax.xlane.f32.xlu0 %v3229
        %v3231 = vpop.xlane.xlu0 %3230
        %v3232 = vsel %vm1977, %v3216, -inf
        %3233 = vmax.xlane.f32.xlu0 %v3232
        %v3234 = vpop.xlane.xlu0 %3233
        %v3235 = vsel %vm1977, %v3217, -inf
        %3236 = vmax.xlane.f32.xlu0 %v3235
        %v3237 = vpop.xlane.xlu0 %3236
        %v3238 = vsel %vm1977, %v3218, -inf
        %3239 = vmax.xlane.f32.xlu0 %v3238
        %v3240 = vpop.xlane.xlu0 %3239
        %v3241 = vsel %vm1977, %v3219, -inf
        %3242 = vmax.xlane.f32.xlu0 %v3241
        %v3243 = vpop.xlane.xlu0 %3242
        %v3244 = vsub.f32 %v3212, %v3222
        %v3245 = vsub.f32 %v3213, %v3225
        %v3246 = vsub.f32 %v3214, %v3228
        %v3247 = vsub.f32 %v3215, %v3231
        %v3248 = vsub.f32 %v3216, %v3234
        %v3249 = vsub.f32 %v3217, %v3237
        %v3250 = vsub.f32 %v3218, %v3240
        %v3251 = vsub.f32 %v3219, %v3243
        %v3252 = vmul.f32 %v3244, 1.442695
        %v3253 = vpow.pop %v3252
        %v3254 = vmul.f32 %v3245, 1.442695
        %v3255 = vpow.pop %v3254
        %v3256 = vmul.f32 %v3246, 1.442695
        %v3257 = vpow.pop %v3256
        %v3258 = vmul.f32 %v3247, 1.442695
        %v3259 = vpow.pop %v3258
        %v3260 = vmul.f32 %v3248, 1.442695
        %v3261 = vpow.pop %v3260
        %v3262 = vmul.f32 %v3249, 1.442695
        %v3263 = vpow.pop %v3262
        %v3264 = vmul.f32 %v3250, 1.442695
        %v3265 = vpow.pop %v3264
        %v3266 = vmul.f32 %v3251, 1.442695
        %v3267 = vpow.pop %v3266
        %v3268 = vsel %vm1977, %v3253, 0.0
        %3269 = vadd.xlane.f32.xlu0 %v3268
        %v3270 = vpop.xlane.xlu0 %3269
        %v3271 = vsel %vm1977, %v3255, 0.0
        %3272 = vadd.xlane.f32.xlu0 %v3271
        %v3273 = vpop.xlane.xlu0 %3272
        %v3274 = vsel %vm1977, %v3257, 0.0
        %3275 = vadd.xlane.f32.xlu0 %v3274
        %v3276 = vpop.xlane.xlu0 %3275
        %v3277 = vsel %vm1977, %v3259, 0.0
        %3278 = vadd.xlane.f32.xlu0 %v3277
        %v3279 = vpop.xlane.xlu0 %3278
        %v3280 = vsel %vm1977, %v3261, 0.0
        %3281 = vadd.xlane.f32.xlu0 %v3280
        %v3282 = vpop.xlane.xlu0 %3281
        %v3283 = vsel %vm1977, %v3263, 0.0
        %3284 = vadd.xlane.f32.xlu0 %v3283
        %v3285 = vpop.xlane.xlu0 %3284
        %v3286 = vsel %vm1977, %v3265, 0.0
        %3287 = vadd.xlane.f32.xlu0 %v3286
        %v3288 = vpop.xlane.xlu0 %3287
        %v3289 = vsel %vm1977, %v3267, 0.0
        %3290 = vadd.xlane.f32.xlu0 %v3289
        %v3291 = vpop.xlane.xlu0 %3290
        %v3292 = vrcp.pop %v3270
        %v3293 = vrcp.pop %v3273
        %v3294 = vrcp.pop %v3276
        %v3295 = vrcp.pop %v3279
        %v3296 = vrcp.pop %v3282
        %v3297 = vrcp.pop %v3285
        %v3298 = vrcp.pop %v3288
        %v3299 = vrcp.pop %v3291
        %v3300 = vmul.f32 %v3253, %v3292
        %v3301 = vmul.f32 %v3255, %v3293
        %v3302 = vmul.f32 %v3257, %v3294
        %v3303 = vmul.f32 %v3259, %v3295
        %v3304 = vmul.f32 %v3261, %v3296
        %v3305 = vmul.f32 %v3263, %v3297
        %v3306 = vmul.f32 %v3265, %v3298
        %v3307 = vmul.f32 %v3267, %v3299
        %3308 = vrot.lane.b32.xlu0 %v3021, 64
        %v3309 = vpop.permute.xlu0 %3308
        %3310 = vrot.lane.b32.xlu0 %v3026, 64
        %v3311 = vpop.permute.xlu0 %3310
        %3312 = vrot.lane.b32.xlu0 %v3031, 64
        %v3313 = vpop.permute.xlu0 %3312
        %3314 = vrot.lane.b32.xlu0 %v3036, 64
        %v3315 = vpop.permute.xlu0 %3314
        %3316 = vrot.lane.b32.xlu0 %v3041, 64
        %v3317 = vpop.permute.xlu0 %3316
        %3318 = vrot.lane.b32.xlu0 %v3046, 64
        %v3319 = vpop.permute.xlu0 %3318
        %3320 = vrot.lane.b32.xlu0 %v3051, 64
        %v3321 = vpop.permute.xlu0 %3320
        %3322 = vrot.lane.b32.xlu0 %v3056, 64
        %v3323 = vpop.permute.xlu0 %3322
        %v3333 = vsel %vm1977, %v3300, 0
        %v3336 = vsel %vm1977, %v3301, 0
        %v3339 = vsel %vm1977, %v3302, 0
        %v3342 = vsel %vm1977, %v3303, 0
        %v3345 = vsel %vm1977, %v3304, 0
        %v3348 = vsel %vm1977, %v3305, 0
        %v3351 = vsel %vm1977, %v3306, 0
        %v3354 = vsel %vm1977, %v3307, 0
        %3356 = vmatprep.subr.mxu0 0.0
        %3357 = vmatpush1.msra.mxu0 %v3309
        %3358 = vmatprep.subr.mxu0 0.0
        %3359 = vmatpush1.msra.mxu0 %v3311
        %3360 = vmatprep.subr.mxu0 0.0
        %3361 = vmatpush1.msra.mxu0 %v3313
        %3362 = vmatprep.subr.mxu0 0.0
        %3363 = vmatpush1.msra.mxu0 %v3315
        %3364 = vmatprep.subr.mxu0 0.0
        %3365 = vmatpush1.msra.mxu0 %v3317
        %3366 = vmatprep.subr.mxu0 0.0
        %3367 = vmatpush1.msra.mxu0 %v3319
        %3368 = vmatprep.subr.mxu0 0.0
        %3369 = vmatpush1.msra.mxu0 %v3321
        %3370 = vmatprep.subr.mxu0 0.0
        %3371 = vmatpush1.msra.mxu0 %v3323
        %3372 = vmatprep.subr.mxu0 0.0
        %3373 = vmatpush1.msra.mxu0 0.0
        %3374 = vmatprep.subr.mxu0 0.0
        %3375 = vmatpush1.msra.mxu0 0.0
        %3376 = vmatprep.subr.mxu0 0.0
        %3377 = vmatpush1.msra.mxu0 0.0
        %3378 = vmatprep.subr.mxu0 0.0
        %3379 = vmatpush1.msra.mxu0 0.0
        %3380 = vmatprep.subr.mxu0 0.0
        %3381 = vmatpush1.msra.mxu0 0.0
        %3382 = vmatprep.subr.mxu0 0.0
        %3383 = vmatpush1.msra.mxu0 0.0
        %3384 = vmatprep.subr.mxu0 0.0
        %3385 = vmatpush1.msra.mxu0 0.0
        %3386 = vmatprep.subr.mxu0 0.0
        %3387 = vmatpush1.msra.mxu0 0.0
        %3388 = vmatprep.subr.mxu0 0.0
        %3389 = vmatpush1.msra.mxu0 0.0
        %3390 = vmatprep.subr.mxu0 0.0
        %3391 = vmatpush1.msra.mxu0 0.0
        %3392 = vmatprep.subr.mxu0 0.0
        %3393 = vmatpush1.msra.mxu0 0.0
        %3394 = vmatprep.subr.mxu0 0.0
        %3395 = vmatpush1.msra.mxu0 0.0
        %3396 = vmatprep.subr.mxu0 0.0
        %3397 = vmatpush1.msra.mxu0 0.0
        %3398 = vmatprep.subr.mxu0 0.0
        %3399 = vmatpush1.msra.mxu0 0.0
        %3400 = vmatprep.subr.mxu0 0.0
        %3401 = vmatpush1.msra.mxu0 0.0
        %3402 = vmatprep.subr.mxu0 0.0
        %3403 = vmatpush1.msra.mxu0 0.0
        %3404 = vmatprep.subr.mxu0 0.0
        %3405 = vmatpush1.msra.mxu0 0.0
        %3406 = vmatprep.subr.mxu0 0.0
        %3407 = vmatpush1.msra.mxu0 0.0
        %3408 = vmatprep.subr.mxu0 0.0
        %3409 = vmatpush1.msra.mxu0 0.0
        %3410 = vmatprep.subr.mxu0 0.0
        %3411 = vmatpush1.msra.mxu0 0.0
        %3412 = vmatprep.subr.mxu0 0.0
        %3413 = vmatpush1.msra.mxu0 0.0
        %3414 = vmatprep.subr.mxu0 0.0
        %3415 = vmatpush1.msra.mxu0 0.0
        %3416 = vmatprep.subr.mxu0 0.0
        %3417 = vmatpush1.msra.mxu0 0.0
        %3418 = vmatprep.subr.mxu0 0.0
        %3419 = vmatpush1.msra.mxu0 0.0
        %3420 = vmatprep.mubr.f32.mxu0 0.0
        %3421 = vmatmul.mubr.f32.gmra.mrb[0].mxu0 %v3333
        %v3422 = vpop.f32.mrb[0].mxu0
        %v3423 = vadd.f32 0.0, %v3422
        %v3424 = vpop.f32.mrb[0].mxu0
        %3425 = vmatprep.mubr.f32.mxu0 0.0
        %3426 = vmatmul.mubr.f32.gmra.mrb[0].mxu0 %v3336
        %v3427 = vpop.f32.mrb[0].mxu0
        %v3428 = vadd.f32 0.0, %v3427
        %v3429 = vpop.f32.mrb[0].mxu0
        %3430 = vmatprep.mubr.f32.mxu0 0.0
        %3431 = vmatmul.mubr.f32.gmra.mrb[0].mxu0 %v3339
        %v3432 = vpop.f32.mrb[0].mxu0
        %v3433 = vadd.f32 0.0, %v3432
        %v3434 = vpop.f32.mrb[0].mxu0
        %3435 = vmatprep.mubr.f32.mxu0 0.0
        %3436 = vmatmul.mubr.f32.gmra.mrb[0].mxu0 %v3342
        %v3437 = vpop.f32.mrb[0].mxu0
        %v3438 = vadd.f32 0.0, %v3437
        %v3439 = vpop.f32.mrb[0].mxu0
        %3440 = vmatprep.mubr.f32.mxu0 0.0
        %3441 = vmatmul.mubr.f32.gmra.mrb[0].mxu0 %v3345
        %v3442 = vpop.f32.mrb[0].mxu0
        %v3443 = vadd.f32 0.0, %v3442
        %v3444 = vpop.f32.mrb[0].mxu0
        %3445 = vmatprep.mubr.f32.mxu0 0.0
        %3446 = vmatmul.mubr.f32.gmra.mrb[0].mxu0 %v3348
        %v3447 = vpop.f32.mrb[0].mxu0
        %v3448 = vadd.f32 0.0, %v3447
        %v3449 = vpop.f32.mrb[0].mxu0
        %3450 = vmatprep.mubr.f32.mxu0 0.0
        %3451 = vmatmul.mubr.f32.gmra.mrb[0].mxu0 %v3351
        %v3452 = vpop.f32.mrb[0].mxu0
        %v3453 = vadd.f32 0.0, %v3452
        %v3454 = vpop.f32.mrb[0].mxu0
        %3455 = vmatprep.mubr.f32.mxu0 0.0
        %3456 = vmatmul.mubr.f32.gmra.mrb[0].mxu0 %v3354
        %v3457 = vpop.f32.mrb[0].mxu0
        %v3458 = vadd.f32 0.0, %v3457
        %v3459 = vpop.f32.mrb[0].mxu0
        %3460 = vdwg.mxu0
        %v3462 = vsel %vm1977, %v3423, 0
        %v3465 = vsel %vm1977, %v3428, 0
        %v3468 = vsel %vm1977, %v3433, 0
        %v3471 = vsel %vm1977, %v3438, 0
        %v3474 = vsel %vm1977, %v3443, 0
        %v3477 = vsel %vm1977, %v3448, 0
        %v3480 = vsel %vm1977, %v3453, 0
        %v3483 = vsel %vm1977, %v3458, 0
        %3485 = vmatprep.subr.mxu0 0.0
        %3486 = vmatpush1.msra.mxu0 %v2767
        %3487 = vmatprep.subr.mxu0 0.0
        %3488 = vmatpush1.msra.mxu0 %v2768
        %3489 = vmatprep.subr.mxu0 0.0
        %3490 = vmatpush1.msra.mxu0 %v2769
        %3491 = vmatprep.subr.mxu0 0.0
        %3492 = vmatpush1.msra.mxu0 %v2770
        %3493 = vmatprep.subr.mxu0 0.0
        %3494 = vmatpush1.msra.mxu0 %v2771
        %3495 = vmatprep.subr.mxu0 0.0
        %3496 = vmatpush1.msra.mxu0 %v2772
        %3497 = vmatprep.subr.mxu0 0.0
        %3498 = vmatpush1.msra.mxu0 %v2773
        %3499 = vmatprep.subr.mxu0 0.0
        %3500 = vmatpush1.msra.mxu0 %v2774
        %3501 = vmatprep.subr.mxu0 0.0
        %3502 = vmatpush1.msra.mxu0 0.0
        %3503 = vmatprep.subr.mxu0 0.0
        %3504 = vmatpush1.msra.mxu0 0.0
        %3505 = vmatprep.subr.mxu0 0.0
        %3506 = vmatpush1.msra.mxu0 0.0
        %3507 = vmatprep.subr.mxu0 0.0
        %3508 = vmatpush1.msra.mxu0 0.0
        %3509 = vmatprep.subr.mxu0 0.0
        %3510 = vmatpush1.msra.mxu0 0.0
        %3511 = vmatprep.subr.mxu0 0.0
        %3512 = vmatpush1.msra.mxu0 0.0
        %3513 = vmatprep.subr.mxu0 0.0
        %3514 = vmatpush1.msra.mxu0 0.0
        %3515 = vmatprep.subr.mxu0 0.0
        %3516 = vmatpush1.msra.mxu0 0.0
        %3517 = vmatprep.subr.mxu0 0.0
        %3518 = vmatpush1.msra.mxu0 0.0
        %3519 = vmatprep.subr.mxu0 0.0
        %3520 = vmatpush1.msra.mxu0 0.0
        %3521 = vmatprep.subr.mxu0 0.0
        %3522 = vmatpush1.msra.mxu0 0.0
        %3523 = vmatprep.subr.mxu0 0.0
        %3524 = vmatpush1.msra.mxu0 0.0
        %3525 = vmatprep.subr.mxu0 0.0
        %3526 = vmatpush1.msra.mxu0 0.0
        %3527 = vmatprep.subr.mxu0 0.0
        %3528 = vmatpush1.msra.mxu0 0.0
        %3529 = vmatprep.subr.mxu0 0.0
        %3530 = vmatpush1.msra.mxu0 0.0
        %3531 = vmatprep.subr.mxu0 0.0
        %3532 = vmatpush1.msra.mxu0 0.0
        %3533 = vmatprep.subr.mxu0 0.0
        %3534 = vmatpush1.msra.mxu0 0.0
        %3535 = vmatprep.subr.mxu0 0.0
        %3536 = vmatpush1.msra.mxu0 0.0
        %3537 = vmatprep.subr.mxu0 0.0
        %3538 = vmatpush1.msra.mxu0 0.0
        %3539 = vmatprep.subr.mxu0 0.0
        %3540 = vmatpush1.msra.mxu0 0.0
        %3541 = vmatprep.subr.mxu0 0.0
        %3542 = vmatpush1.msra.mxu0 0.0
        %3543 = vmatprep.subr.mxu0 0.0
        %3544 = vmatpush1.msra.mxu0 0.0
        %3545 = vmatprep.subr.mxu0 0.0
        %3546 = vmatpush1.msra.mxu0 0.0
        %3547 = vmatprep.subr.mxu0 0.0
        %3548 = vmatpush1.msra.mxu0 0.0
        %3549 = vmatprep.mubr.f32.mxu0 0.0
        %3550 = vmatmul.mubr.f32.gmra.mrb[0].mxu0 %v3462
        %v3551 = vpop.f32.mrb[0].mxu0
        %v3552 = vadd.f32 0.0, %v3551
        %v3553 = vpop.f32.mrb[0].mxu0
        %3554 = vmatprep.mubr.f32.mxu0 0.0
        %3555 = vmatmul.mubr.f32.gmra.mrb[0].mxu0 %v3465
        %v3556 = vpop.f32.mrb[0].mxu0
        %v3557 = vadd.f32 0.0, %v3556
        %v3558 = vpop.f32.mrb[0].mxu0
        %3559 = vmatprep.mubr.f32.mxu0 0.0
        %3560 = vmatmul.mubr.f32.gmra.mrb[0].mxu0 %v3468
        %v3561 = vpop.f32.mrb[0].mxu0
        %v3562 = vadd.f32 0.0, %v3561
        %v3563 = vpop.f32.mrb[0].mxu0
        %3564 = vmatprep.mubr.f32.mxu0 0.0
        %3565 = vmatmul.mubr.f32.gmra.mrb[0].mxu0 %v3471
        %v3566 = vpop.f32.mrb[0].mxu0
        %v3567 = vadd.f32 0.0, %v3566
        %v3568 = vpop.f32.mrb[0].mxu0
        %3569 = vmatprep.mubr.f32.mxu0 0.0
        %3570 = vmatmul.mubr.f32.gmra.mrb[0].mxu0 %v3474
        %v3571 = vpop.f32.mrb[0].mxu0
        %v3572 = vadd.f32 0.0, %v3571
        %v3573 = vpop.f32.mrb[0].mxu0
        %3574 = vmatprep.mubr.f32.mxu0 0.0
        %3575 = vmatmul.mubr.f32.gmra.mrb[0].mxu0 %v3477
        %v3576 = vpop.f32.mrb[0].mxu0
        %v3577 = vadd.f32 0.0, %v3576
        %v3578 = vpop.f32.mrb[0].mxu0
        %3579 = vmatprep.mubr.f32.mxu0 0.0
        %3580 = vmatmul.mubr.f32.gmra.mrb[0].mxu0 %v3480
        %v3581 = vpop.f32.mrb[0].mxu0
        %v3582 = vadd.f32 0.0, %v3581
        %v3583 = vpop.f32.mrb[0].mxu0
        %3584 = vmatprep.mubr.f32.mxu0 0.0
        %3585 = vmatmul.mubr.f32.gmra.mrb[0].mxu0 %v3483
        %v3586 = vpop.f32.mrb[0].mxu0
        %v3587 = vadd.f32 0.0, %v3586
        %v3588 = vpop.f32.mrb[0].mxu0
        %3589 = vdwg.mxu0
        %v3590 = vadd.f32 %v2735, %v3552
        %v3591 = vadd.f32 %v2736, %v3557
        %v3592 = vadd.f32 %v2737, %v3562
        %v3593 = vadd.f32 %v2738, %v3567
        %v3594 = vadd.f32 %v2739, %v3572
        %v3595 = vadd.f32 %v2740, %v3577
        %v3596 = vadd.f32 %v2741, %v3582
        %v3597 = vadd.f32 %v2742, %v3587
        %v3599 = vlaneseq
        %v3600 = vshrl.u32 %v3599, 7
        %v3601 = vsub.s32 0, %v3600
        %v3602 = vrot.slane %v2783, %v3601
        %v3605 = vsel %vm1977, %v3590, 0
        %v3608 = vsel %vm1977, %v3591, 0
        %v3611 = vsel %vm1977, %v3592, 0
        %v3614 = vsel %vm1977, %v3593, 0
        %v3617 = vsel %vm1977, %v3594, 0
        %v3620 = vsel %vm1977, %v3595, 0
        %v3623 = vsel %vm1977, %v3596, 0
        %v3626 = vsel %vm1977, %v3597, 0
        %3628 = vmatprep.subr.mxu0 0.0
        %3629 = vmatpush1.msra.mxu0 %v2775
        %3630 = vmatprep.subr.mxu0 0.0
        %3631 = vmatpush1.msra.mxu0 %v2776
        %3632 = vmatprep.subr.mxu0 0.0
        %3633 = vmatpush1.msra.mxu0 %v2777
        %3634 = vmatprep.subr.mxu0 0.0
        %3635 = vmatpush1.msra.mxu0 %v2778
        %3636 = vmatprep.subr.mxu0 0.0
        %3637 = vmatpush1.msra.mxu0 %v2779
        %3638 = vmatprep.subr.mxu0 0.0
        %3639 = vmatpush1.msra.mxu0 %v2780
        %3640 = vmatprep.subr.mxu0 0.0
        %3641 = vmatpush1.msra.mxu0 %v2781
        %3642 = vmatprep.subr.mxu0 0.0
        %3643 = vmatpush1.msra.mxu0 %v2782
        %3644 = vmatprep.subr.mxu0 0.0
        %3645 = vmatpush1.msra.mxu0 0.0
        %3646 = vmatprep.subr.mxu0 0.0
        %3647 = vmatpush1.msra.mxu0 0.0
        %3648 = vmatprep.subr.mxu0 0.0
        %3649 = vmatpush1.msra.mxu0 0.0
        %3650 = vmatprep.subr.mxu0 0.0
        %3651 = vmatpush1.msra.mxu0 0.0
        %3652 = vmatprep.subr.mxu0 0.0
        %3653 = vmatpush1.msra.mxu0 0.0
        %3654 = vmatprep.subr.mxu0 0.0
        %3655 = vmatpush1.msra.mxu0 0.0
        %3656 = vmatprep.subr.mxu0 0.0
        %3657 = vmatpush1.msra.mxu0 0.0
        %3658 = vmatprep.subr.mxu0 0.0
        %3659 = vmatpush1.msra.mxu0 0.0
        %3660 = vmatprep.subr.mxu0 0.0
        %3661 = vmatpush1.msra.mxu0 0.0
        %3662 = vmatprep.subr.mxu0 0.0
        %3663 = vmatpush1.msra.mxu0 0.0
        %3664 = vmatprep.subr.mxu0 0.0
        %3665 = vmatpush1.msra.mxu0 0.0
        %3666 = vmatprep.subr.mxu0 0.0
        %3667 = vmatpush1.msra.mxu0 0.0
        %3668 = vmatprep.subr.mxu0 0.0
        %3669 = vmatpush1.msra.mxu0 0.0
        %3670 = vmatprep.subr.mxu0 0.0
        %3671 = vmatpush1.msra.mxu0 0.0
        %3672 = vmatprep.subr.mxu0 0.0
        %3673 = vmatpush1.msra.mxu0 0.0
        %3674 = vmatprep.subr.mxu0 0.0
        %3675 = vmatpush1.msra.mxu0 0.0
        %3676 = vmatprep.subr.mxu0 0.0
        %3677 = vmatpush1.msra.mxu0 0.0
        %3678 = vmatprep.subr.mxu0 0.0
        %3679 = vmatpush1.msra.mxu0 0.0
        %3680 = vmatprep.subr.mxu0 0.0
        %3681 = vmatpush1.msra.mxu0 0.0
        %3682 = vmatprep.subr.mxu0 0.0
        %3683 = vmatpush1.msra.mxu0 0.0
        %3684 = vmatprep.subr.mxu0 0.0
        %3685 = vmatpush1.msra.mxu0 0.0
        %3686 = vmatprep.subr.mxu0 0.0
        %3687 = vmatpush1.msra.mxu0 0.0
        %3688 = vmatprep.subr.mxu0 0.0
        %3689 = vmatpush1.msra.mxu0 0.0
        %3690 = vmatprep.subr.mxu0 0.0
        %3691 = vmatpush1.msra.mxu0 0.0
        %3692 = vmatprep.mubr.f32.mxu0 0.0
        %3693 = vmatmul.mubr.f32.gmra.mrb[0].mxu0 %v3605
        %v3694 = vpop.f32.mrb[0].mxu0
        %v3695 = vadd.f32 %v3602, %v3694
        %v3696 = vpop.f32.mrb[0].mxu0
        %3697 = vmatprep.mubr.f32.mxu0 0.0
        %3698 = vmatmul.mubr.f32.gmra.mrb[0].mxu0 %v3608
        %v3699 = vpop.f32.mrb[0].mxu0
        %v3700 = vadd.f32 %v3602, %v3699
        %v3701 = vpop.f32.mrb[0].mxu0
        %3702 = vmatprep.mubr.f32.mxu0 0.0
        %3703 = vmatmul.mubr.f32.gmra.mrb[0].mxu0 %v3611
        %v3704 = vpop.f32.mrb[0].mxu0
        %v3705 = vadd.f32 %v3602, %v3704
        %v3706 = vpop.f32.mrb[0].mxu0
        %3707 = vmatprep.mubr.f32.mxu0 0.0
        %3708 = vmatmul.mubr.f32.gmra.mrb[0].mxu0 %v3614
        %v3709 = vpop.f32.mrb[0].mxu0
        %v3710 = vadd.f32 %v3602, %v3709
        %v3711 = vpop.f32.mrb[0].mxu0
        %3712 = vmatprep.mubr.f32.mxu0 0.0
        %3713 = vmatmul.mubr.f32.gmra.mrb[0].mxu0 %v3617
        %v3714 = vpop.f32.mrb[0].mxu0
        %v3715 = vadd.f32 %v3602, %v3714
        %v3716 = vpop.f32.mrb[0].mxu0
        %3717 = vmatprep.mubr.f32.mxu0 0.0
        %3718 = vmatmul.mubr.f32.gmra.mrb[0].mxu0 %v3620
        %v3719 = vpop.f32.mrb[0].mxu0
        %v3720 = vadd.f32 %v3602, %v3719
        %v3721 = vpop.f32.mrb[0].mxu0
        %3722 = vmatprep.mubr.f32.mxu0 0.0
        %3723 = vmatmul.mubr.f32.gmra.mrb[0].mxu0 %v3623
        %v3724 = vpop.f32.mrb[0].mxu0
        %v3725 = vadd.f32 %v3602, %v3724
        %v3726 = vpop.f32.mrb[0].mxu0
        %3727 = vmatprep.mubr.f32.mxu0 0.0
        %3728 = vmatmul.mubr.f32.gmra.mrb[0].mxu0 %v3626
        %v3729 = vpop.f32.mrb[0].mxu0
        %v3730 = vadd.f32 %v3602, %v3729
        %v3731 = vpop.f32.mrb[0].mxu0
        %3732 = vdwg.mxu0
        %v3733 = vmax.f32 %v3695, 0.0
        %v3734 = vmax.f32 %v3700, 0.0
        %v3735 = vmax.f32 %v3705, 0.0
        %v3736 = vmax.f32 %v3710, 0.0
        %v3737 = vmax.f32 %v3715, 0.0
        %v3738 = vmax.f32 %v3720, 0.0
        %v3739 = vmax.f32 %v3725, 0.0
        %v3740 = vmax.f32 %v3730, 0.0
        %3741 = vmatprep.subr.mxu0 0.0
        %3742 = vmatpush1.msra.mxu0 %v2784
        %3743 = vmatprep.subr.mxu0 0.0
        %3744 = vmatpush1.msra.mxu0 %v2785
        %3745 = vmatprep.subr.mxu0 0.0
        %3746 = vmatpush1.msra.mxu0 %v2786
        %3747 = vmatprep.subr.mxu0 0.0
        %3748 = vmatpush1.msra.mxu0 %v2787
        %3749 = vmatprep.subr.mxu0 0.0
        %3750 = vmatpush1.msra.mxu0 %v2788
        %3751 = vmatprep.subr.mxu0 0.0
        %3752 = vmatpush1.msra.mxu0 %v2789
        %3753 = vmatprep.subr.mxu0 0.0
        %3754 = vmatpush1.msra.mxu0 %v2790
        %3755 = vmatprep.subr.mxu0 0.0
        %3756 = vmatpush1.msra.mxu0 %v2791
        %3757 = vmatprep.subr.mxu0 0.0
        %3758 = vmatpush1.msra.mxu0 %v2792
        %3759 = vmatprep.subr.mxu0 0.0
        %3760 = vmatpush1.msra.mxu0 %v2793
        %3761 = vmatprep.subr.mxu0 0.0
        %3762 = vmatpush1.msra.mxu0 %v2794
        %3763 = vmatprep.subr.mxu0 0.0
        %3764 = vmatpush1.msra.mxu0 %v2795
        %3765 = vmatprep.subr.mxu0 0.0
        %3766 = vmatpush1.msra.mxu0 %v2796
        %3767 = vmatprep.subr.mxu0 0.0
        %3768 = vmatpush1.msra.mxu0 %v2797
        %3769 = vmatprep.subr.mxu0 0.0
        %3770 = vmatpush1.msra.mxu0 %v2798
        %3771 = vmatprep.subr.mxu0 0.0
        %3772 = vmatpush1.msra.mxu0 %v2799
        %3773 = vmatprep.subr.mxu0 0.0
        %3774 = vmatpush1.msra.mxu0 0.0
        %3775 = vmatprep.subr.mxu0 0.0
        %3776 = vmatpush1.msra.mxu0 0.0
        %3777 = vmatprep.subr.mxu0 0.0
        %3778 = vmatpush1.msra.mxu0 0.0
        %3779 = vmatprep.subr.mxu0 0.0
        %3780 = vmatpush1.msra.mxu0 0.0
        %3781 = vmatprep.subr.mxu0 0.0
        %3782 = vmatpush1.msra.mxu0 0.0
        %3783 = vmatprep.subr.mxu0 0.0
        %3784 = vmatpush1.msra.mxu0 0.0
        %3785 = vmatprep.subr.mxu0 0.0
        %3786 = vmatpush1.msra.mxu0 0.0
        %3787 = vmatprep.subr.mxu0 0.0
        %3788 = vmatpush1.msra.mxu0 0.0
        %3789 = vmatprep.subr.mxu0 0.0
        %3790 = vmatpush1.msra.mxu0 0.0
        %3791 = vmatprep.subr.mxu0 0.0
        %3792 = vmatpush1.msra.mxu0 0.0
        %3793 = vmatprep.subr.mxu0 0.0
        %3794 = vmatpush1.msra.mxu0 0.0
        %3795 = vmatprep.subr.mxu0 0.0
        %3796 = vmatpush1.msra.mxu0 0.0
        %3797 = vmatprep.subr.mxu0 0.0
        %3798 = vmatpush1.msra.mxu0 0.0
        %3799 = vmatprep.subr.mxu0 0.0
        %3800 = vmatpush1.msra.mxu0 0.0
        %3801 = vmatprep.subr.mxu0 0.0
        %3802 = vmatpush1.msra.mxu0 0.0
        %3803 = vmatprep.subr.mxu0 0.0
        %3804 = vmatpush1.msra.mxu0 0.0
        %3805 = vmatprep.mubr.f32.mxu0 0.0
        %3806 = vmatmul.mubr.f32.gmra.mrb[0].mxu0 %v3733
        %v3807 = vpop.f32.mrb[0].mxu0
        %v3808 = vadd.f32 0.0, %v3807
        %v3809 = vpop.f32.mrb[0].mxu0
        %3810 = vmatprep.mubr.f32.mxu0 0.0
        %3811 = vmatmul.mubr.f32.gmra.mrb[0].mxu0 %v3734
        %v3812 = vpop.f32.mrb[0].mxu0
        %v3813 = vadd.f32 0.0, %v3812
        %v3814 = vpop.f32.mrb[0].mxu0
        %3815 = vmatprep.mubr.f32.mxu0 0.0
        %3816 = vmatmul.mubr.f32.gmra.mrb[0].mxu0 %v3735
        %v3817 = vpop.f32.mrb[0].mxu0
        %v3818 = vadd.f32 0.0, %v3817
        %v3819 = vpop.f32.mrb[0].mxu0
        %3820 = vmatprep.mubr.f32.mxu0 0.0
        %3821 = vmatmul.mubr.f32.gmra.mrb[0].mxu0 %v3736
        %v3822 = vpop.f32.mrb[0].mxu0
        %v3823 = vadd.f32 0.0, %v3822
        %v3824 = vpop.f32.mrb[0].mxu0
        %3825 = vmatprep.mubr.f32.mxu0 0.0
        %3826 = vmatmul.mubr.f32.gmra.mrb[0].mxu0 %v3737
        %v3827 = vpop.f32.mrb[0].mxu0
        %v3828 = vadd.f32 0.0, %v3827
        %v3829 = vpop.f32.mrb[0].mxu0
        %3830 = vmatprep.mubr.f32.mxu0 0.0
        %3831 = vmatmul.mubr.f32.gmra.mrb[0].mxu0 %v3738
        %v3832 = vpop.f32.mrb[0].mxu0
        %v3833 = vadd.f32 0.0, %v3832
        %v3834 = vpop.f32.mrb[0].mxu0
        %3835 = vmatprep.mubr.f32.mxu0 0.0
        %3836 = vmatmul.mubr.f32.gmra.mrb[0].mxu0 %v3739
        %v3837 = vpop.f32.mrb[0].mxu0
        %v3838 = vadd.f32 0.0, %v3837
        %v3839 = vpop.f32.mrb[0].mxu0
        %3840 = vmatprep.mubr.f32.mxu0 0.0
        %3841 = vmatmul.mubr.f32.gmra.mrb[0].mxu0 %v3740
        %v3842 = vpop.f32.mrb[0].mxu0
        %v3843 = vadd.f32 0.0, %v3842
        %v3844 = vpop.f32.mrb[0].mxu0
        %3845 = vdwg.mxu0
        %v3846 = vadd.f32 %v3590, %v3808
        %v3847 = vadd.f32 %v3591, %v3813
        %v3848 = vadd.f32 %v3592, %v3818
        %v3849 = vadd.f32 %v3593, %v3823
        %v3850 = vadd.f32 %v3594, %v3828
        %v3851 = vadd.f32 %v3595, %v3833
        %v3852 = vadd.f32 %v3596, %v3838
        %v3853 = vadd.f32 %v3597, %v3843
        %v3855 = vlaneseq
        %v3856 = vshrl.u32 %v3855, 7
        %v3857 = vsub.s32 0, %v3856
        %v3858 = vrot.slane %v2800, %v3857
        %v3860 = vadd.f32 %v3846, %v3858
        %v3861 = vadd.f32 %v3847, %v3858
        %v3862 = vadd.f32 %v3848, %v3858
        %v3863 = vadd.f32 %v3849, %v3858
        %v3864 = vadd.f32 %v3850, %v3858
        %v3865 = vadd.f32 %v3851, %v3858
        %v3866 = vadd.f32 %v3852, %v3858
        %v3867 = vadd.f32 %v3853, %v3858
        %v3868 = vld [vmem:[%s45] sm:$0xff]
        %v3869 = vld [vmem:[%s45 + $0x8] sm:$0xff]
        %v3870 = vld [vmem:[%s45 + $0x10] sm:$0xff]
        %v3871 = vld [vmem:[%s45 + $0x18] sm:$0xff]
        %v3872 = vld [vmem:[%s45 + $0x20] sm:$0xff]
        %v3873 = vld [vmem:[%s45 + $0x28] sm:$0xff]
        %v3874 = vld [vmem:[%s45 + $0x30] sm:$0xff]
        %v3875 = vld [vmem:[%s45 + $0x38] sm:$0xff]
        %v3876 = vld [vmem:[%s47] sm:$0xff]
        %v3877 = vld [vmem:[%s47 + $0x8] sm:$0xff]
        %v3878 = vld [vmem:[%s47 + $0x10] sm:$0xff]
        %v3879 = vld [vmem:[%s47 + $0x18] sm:$0xff]
        %v3880 = vld [vmem:[%s47 + $0x20] sm:$0xff]
        %v3881 = vld [vmem:[%s47 + $0x28] sm:$0xff]
        %v3882 = vld [vmem:[%s47 + $0x30] sm:$0xff]
        %v3883 = vld [vmem:[%s47 + $0x38] sm:$0xff]
        %v3884 = vld [vmem:[%s49] sm:$0xff]
        %v3885 = vld [vmem:[%s49 + $0x8] sm:$0xff]
        %v3886 = vld [vmem:[%s49 + $0x10] sm:$0xff]
        %v3887 = vld [vmem:[%s49 + $0x18] sm:$0xff]
        %v3888 = vld [vmem:[%s49 + $0x20] sm:$0xff]
        %v3889 = vld [vmem:[%s49 + $0x28] sm:$0xff]
        %v3890 = vld [vmem:[%s49 + $0x30] sm:$0xff]
        %v3891 = vld [vmem:[%s49 + $0x38] sm:$0xff]
        %v3892 = vld [vmem:[%s51] sm:$0xff]
        %v3893 = vld [vmem:[%s51 + $0x8] sm:$0xff]
        %v3894 = vld [vmem:[%s51 + $0x10] sm:$0xff]
        %v3895 = vld [vmem:[%s51 + $0x18] sm:$0xff]
        %v3896 = vld [vmem:[%s51 + $0x20] sm:$0xff]
        %v3897 = vld [vmem:[%s51 + $0x28] sm:$0xff]
        %v3898 = vld [vmem:[%s51 + $0x30] sm:$0xff]
        %v3899 = vld [vmem:[%s51 + $0x38] sm:$0xff]
        %v3900 = vld [vmem:[%s53] sm:$0x1]
        %v3901 = vld [vmem:[%s55] sm:$0xff]
        %v3902 = vld [vmem:[%s55 + $0x8] sm:$0xff]
        %v3903 = vld [vmem:[%s55 + $0x10] sm:$0xff]
        %v3904 = vld [vmem:[%s55 + $0x18] sm:$0xff]
        %v3905 = vld [vmem:[%s55 + $0x20] sm:$0xff]
        %v3906 = vld [vmem:[%s55 + $0x28] sm:$0xff]
        %v3907 = vld [vmem:[%s55 + $0x30] sm:$0xff]
        %v3908 = vld [vmem:[%s55 + $0x38] sm:$0xff]
        %v3909 = vld [vmem:[%s55 + $0x40] sm:$0xff]
        %v3910 = vld [vmem:[%s55 + $0x48] sm:$0xff]
        %v3911 = vld [vmem:[%s55 + $0x50] sm:$0xff]
        %v3912 = vld [vmem:[%s55 + $0x58] sm:$0xff]
        %v3913 = vld [vmem:[%s55 + $0x60] sm:$0xff]
        %v3914 = vld [vmem:[%s55 + $0x68] sm:$0xff]
        %v3915 = vld [vmem:[%s55 + $0x70] sm:$0xff]
        %v3916 = vld [vmem:[%s55 + $0x78] sm:$0xff]
        %v3917 = vld [vmem:[%s57] sm:$0x1]
        %v3919 = vsel %vm1977, %v3860, 0
        %v3922 = vsel %vm1977, %v3861, 0
        %v3925 = vsel %vm1977, %v3862, 0
        %v3928 = vsel %vm1977, %v3863, 0
        %v3931 = vsel %vm1977, %v3864, 0
        %v3934 = vsel %vm1977, %v3865, 0
        %v3937 = vsel %vm1977, %v3866, 0
        %v3940 = vsel %vm1977, %v3867, 0
        %3942 = vmatprep.subr.mxu0 0.0
        %3943 = vmatpush1.msra.mxu0 %v3868
        %3944 = vmatprep.subr.mxu0 0.0
        %3945 = vmatpush1.msra.mxu0 %v3869
        %3946 = vmatprep.subr.mxu0 0.0
        %3947 = vmatpush1.msra.mxu0 %v3870
        %3948 = vmatprep.subr.mxu0 0.0
        %3949 = vmatpush1.msra.mxu0 %v3871
        %3950 = vmatprep.subr.mxu0 0.0
        %3951 = vmatpush1.msra.mxu0 %v3872
        %3952 = vmatprep.subr.mxu0 0.0
        %3953 = vmatpush1.msra.mxu0 %v3873
        %3954 = vmatprep.subr.mxu0 0.0
        %3955 = vmatpush1.msra.mxu0 %v3874
        %3956 = vmatprep.subr.mxu0 0.0
        %3957 = vmatpush1.msra.mxu0 %v3875
        %3958 = vmatprep.subr.mxu0 0.0
        %3959 = vmatpush1.msra.mxu0 0.0
        %3960 = vmatprep.subr.mxu0 0.0
        %3961 = vmatpush1.msra.mxu0 0.0
        %3962 = vmatprep.subr.mxu0 0.0
        %3963 = vmatpush1.msra.mxu0 0.0
        %3964 = vmatprep.subr.mxu0 0.0
        %3965 = vmatpush1.msra.mxu0 0.0
        %3966 = vmatprep.subr.mxu0 0.0
        %3967 = vmatpush1.msra.mxu0 0.0
        %3968 = vmatprep.subr.mxu0 0.0
        %3969 = vmatpush1.msra.mxu0 0.0
        %3970 = vmatprep.subr.mxu0 0.0
        %3971 = vmatpush1.msra.mxu0 0.0
        %3972 = vmatprep.subr.mxu0 0.0
        %3973 = vmatpush1.msra.mxu0 0.0
        %3974 = vmatprep.subr.mxu0 0.0
        %3975 = vmatpush1.msra.mxu0 0.0
        %3976 = vmatprep.subr.mxu0 0.0
        %3977 = vmatpush1.msra.mxu0 0.0
        %3978 = vmatprep.subr.mxu0 0.0
        %3979 = vmatpush1.msra.mxu0 0.0
        %3980 = vmatprep.subr.mxu0 0.0
        %3981 = vmatpush1.msra.mxu0 0.0
        %3982 = vmatprep.subr.mxu0 0.0
        %3983 = vmatpush1.msra.mxu0 0.0
        %3984 = vmatprep.subr.mxu0 0.0
        %3985 = vmatpush1.msra.mxu0 0.0
        %3986 = vmatprep.subr.mxu0 0.0
        %3987 = vmatpush1.msra.mxu0 0.0
        %3988 = vmatprep.subr.mxu0 0.0
        %3989 = vmatpush1.msra.mxu0 0.0
        %3990 = vmatprep.subr.mxu0 0.0
        %3991 = vmatpush1.msra.mxu0 0.0
        %3992 = vmatprep.subr.mxu0 0.0
        %3993 = vmatpush1.msra.mxu0 0.0
        %3994 = vmatprep.subr.mxu0 0.0
        %3995 = vmatpush1.msra.mxu0 0.0
        %3996 = vmatprep.subr.mxu0 0.0
        %3997 = vmatpush1.msra.mxu0 0.0
        %3998 = vmatprep.subr.mxu0 0.0
        %3999 = vmatpush1.msra.mxu0 0.0
        %4000 = vmatprep.subr.mxu0 0.0
        %4001 = vmatpush1.msra.mxu0 0.0
        %4002 = vmatprep.subr.mxu0 0.0
        %4003 = vmatpush1.msra.mxu0 0.0
        %4004 = vmatprep.subr.mxu0 0.0
        %4005 = vmatpush1.msra.mxu0 0.0
        %4006 = vmatprep.mubr.f32.mxu0 0.0
        %4007 = vmatmul.mubr.f32.gmra.mrb[0].mxu0 %v3919
        %v4008 = vpop.f32.mrb[0].mxu0
        %v4009 = vadd.f32 0.0, %v4008
        %v4010 = vpop.f32.mrb[0].mxu0
        %4011 = vmatprep.mubr.f32.mxu0 0.0
        %4012 = vmatmul.mubr.f32.gmra.mrb[0].mxu0 %v3922
        %v4013 = vpop.f32.mrb[0].mxu0
        %v4014 = vadd.f32 0.0, %v4013
        %v4015 = vpop.f32.mrb[0].mxu0
        %4016 = vmatprep.mubr.f32.mxu0 0.0
        %4017 = vmatmul.mubr.f32.gmra.mrb[0].mxu0 %v3925
        %v4018 = vpop.f32.mrb[0].mxu0
        %v4019 = vadd.f32 0.0, %v4018
        %v4020 = vpop.f32.mrb[0].mxu0
        %4021 = vmatprep.mubr.f32.mxu0 0.0
        %4022 = vmatmul.mubr.f32.gmra.mrb[0].mxu0 %v3928
        %v4023 = vpop.f32.mrb[0].mxu0
        %v4024 = vadd.f32 0.0, %v4023
        %v4025 = vpop.f32.mrb[0].mxu0
        %4026 = vmatprep.mubr.f32.mxu0 0.0
        %4027 = vmatmul.mubr.f32.gmra.mrb[0].mxu0 %v3931
        %v4028 = vpop.f32.mrb[0].mxu0
        %v4029 = vadd.f32 0.0, %v4028
        %v4030 = vpop.f32.mrb[0].mxu0
        %4031 = vmatprep.mubr.f32.mxu0 0.0
        %4032 = vmatmul.mubr.f32.gmra.mrb[0].mxu0 %v3934
        %v4033 = vpop.f32.mrb[0].mxu0
        %v4034 = vadd.f32 0.0, %v4033
        %v4035 = vpop.f32.mrb[0].mxu0
        %4036 = vmatprep.mubr.f32.mxu0 0.0
        %4037 = vmatmul.mubr.f32.gmra.mrb[0].mxu0 %v3937
        %v4038 = vpop.f32.mrb[0].mxu0
        %v4039 = vadd.f32 0.0, %v4038
        %v4040 = vpop.f32.mrb[0].mxu0
        %4041 = vmatprep.mubr.f32.mxu0 0.0
        %4042 = vmatmul.mubr.f32.gmra.mrb[0].mxu0 %v3940
        %v4043 = vpop.f32.mrb[0].mxu0
        %v4044 = vadd.f32 0.0, %v4043
        %v4045 = vpop.f32.mrb[0].mxu0
        %4046 = vdwg.mxu0
        %4047 = vmatprep.subr.mxu0 0.0
        %4048 = vmatpush1.msra.mxu0 %v3876
        %4049 = vmatprep.subr.mxu0 0.0
        %4050 = vmatpush1.msra.mxu0 %v3877
        %4051 = vmatprep.subr.mxu0 0.0
        %4052 = vmatpush1.msra.mxu0 %v3878
        %4053 = vmatprep.subr.mxu0 0.0
        %4054 = vmatpush1.msra.mxu0 %v3879
        %4055 = vmatprep.subr.mxu0 0.0
        %4056 = vmatpush1.msra.mxu0 %v3880
        %4057 = vmatprep.subr.mxu0 0.0
        %4058 = vmatpush1.msra.mxu0 %v3881
        %4059 = vmatprep.subr.mxu0 0.0
        %4060 = vmatpush1.msra.mxu0 %v3882
        %4061 = vmatprep.subr.mxu0 0.0
        %4062 = vmatpush1.msra.mxu0 %v3883
        %4063 = vmatprep.subr.mxu0 0.0
        %4064 = vmatpush1.msra.mxu0 0.0
        %4065 = vmatprep.subr.mxu0 0.0
        %4066 = vmatpush1.msra.mxu0 0.0
        %4067 = vmatprep.subr.mxu0 0.0
        %4068 = vmatpush1.msra.mxu0 0.0
        %4069 = vmatprep.subr.mxu0 0.0
        %4070 = vmatpush1.msra.mxu0 0.0
        %4071 = vmatprep.subr.mxu0 0.0
        %4072 = vmatpush1.msra.mxu0 0.0
        %4073 = vmatprep.subr.mxu0 0.0
        %4074 = vmatpush1.msra.mxu0 0.0
        %4075 = vmatprep.subr.mxu0 0.0
        %4076 = vmatpush1.msra.mxu0 0.0
        %4077 = vmatprep.subr.mxu0 0.0
        %4078 = vmatpush1.msra.mxu0 0.0
        %4079 = vmatprep.subr.mxu0 0.0
        %4080 = vmatpush1.msra.mxu0 0.0
        %4081 = vmatprep.subr.mxu0 0.0
        %4082 = vmatpush1.msra.mxu0 0.0
        %4083 = vmatprep.subr.mxu0 0.0
        %4084 = vmatpush1.msra.mxu0 0.0
        %4085 = vmatprep.subr.mxu0 0.0
        %4086 = vmatpush1.msra.mxu0 0.0
        %4087 = vmatprep.subr.mxu0 0.0
        %4088 = vmatpush1.msra.mxu0 0.0
        %4089 = vmatprep.subr.mxu0 0.0
        %4090 = vmatpush1.msra.mxu0 0.0
        %4091 = vmatprep.subr.mxu0 0.0
        %4092 = vmatpush1.msra.mxu0 0.0
        %4093 = vmatprep.subr.mxu0 0.0
        %4094 = vmatpush1.msra.mxu0 0.0
        %4095 = vmatprep.subr.mxu0 0.0
        %4096 = vmatpush1.msra.mxu0 0.0
        %4097 = vmatprep.subr.mxu0 0.0
        %4098 = vmatpush1.msra.mxu0 0.0
        %4099 = vmatprep.subr.mxu0 0.0
        %4100 = vmatpush1.msra.mxu0 0.0
        %4101 = vmatprep.subr.mxu0 0.0
        %4102 = vmatpush1.msra.mxu0 0.0
        %4103 = vmatprep.subr.mxu0 0.0
        %4104 = vmatpush1.msra.mxu0 0.0
        %4105 = vmatprep.subr.mxu0 0.0
        %4106 = vmatpush1.msra.mxu0 0.0
        %4107 = vmatprep.subr.mxu0 0.0
        %4108 = vmatpush1.msra.mxu0 0.0
        %4109 = vmatprep.subr.mxu0 0.0
        %4110 = vmatpush1.msra.mxu0 0.0
        %4111 = vmatprep.mubr.f32.mxu0 0.0
        %4112 = vmatmul.mubr.f32.gmra.mrb[0].mxu0 %v2931
        %v4113 = vpop.f32.mrb[0].mxu0
        %v4114 = vadd.f32 0.0, %v4113
        %v4115 = vpop.f32.mrb[0].mxu0
        %4116 = vmatprep.mubr.f32.mxu0 0.0
        %4117 = vmatmul.mubr.f32.gmra.mrb[0].mxu0 %v2934
        %v4118 = vpop.f32.mrb[0].mxu0
        %v4119 = vadd.f32 0.0, %v4118
        %v4120 = vpop.f32.mrb[0].mxu0
        %4121 = vmatprep.mubr.f32.mxu0 0.0
        %4122 = vmatmul.mubr.f32.gmra.mrb[0].mxu0 %v2937
        %v4123 = vpop.f32.mrb[0].mxu0
        %v4124 = vadd.f32 0.0, %v4123
        %v4125 = vpop.f32.mrb[0].mxu0
        %4126 = vmatprep.mubr.f32.mxu0 0.0
        %4127 = vmatmul.mubr.f32.gmra.mrb[0].mxu0 %v2940
        %v4128 = vpop.f32.mrb[0].mxu0
        %v4129 = vadd.f32 0.0, %v4128
        %v4130 = vpop.f32.mrb[0].mxu0
        %4131 = vmatprep.mubr.f32.mxu0 0.0
        %4132 = vmatmul.mubr.f32.gmra.mrb[0].mxu0 %v2943
        %v4133 = vpop.f32.mrb[0].mxu0
        %v4134 = vadd.f32 0.0, %v4133
        %v4135 = vpop.f32.mrb[0].mxu0
        %4136 = vmatprep.mubr.f32.mxu0 0.0
        %4137 = vmatmul.mubr.f32.gmra.mrb[0].mxu0 %v2946
        %v4138 = vpop.f32.mrb[0].mxu0
        %v4139 = vadd.f32 0.0, %v4138
        %v4140 = vpop.f32.mrb[0].mxu0
        %4141 = vmatprep.mubr.f32.mxu0 0.0
        %4142 = vmatmul.mubr.f32.gmra.mrb[0].mxu0 %v2949
        %v4143 = vpop.f32.mrb[0].mxu0
        %v4144 = vadd.f32 0.0, %v4143
        %v4145 = vpop.f32.mrb[0].mxu0
        %4146 = vmatprep.mubr.f32.mxu0 0.0
        %4147 = vmatmul.mubr.f32.gmra.mrb[0].mxu0 %v2952
        %v4148 = vpop.f32.mrb[0].mxu0
        %v4149 = vadd.f32 0.0, %v4148
        %v4150 = vpop.f32.mrb[0].mxu0
        %4151 = vdwg.mxu0
        %v4153 = vsel %vm1977, %v4009, 0
        %v4156 = vsel %vm1977, %v4014, 0
        %v4159 = vsel %vm1977, %v4019, 0
        %v4162 = vsel %vm1977, %v4024, 0
        %v4165 = vsel %vm1977, %v4029, 0
        %v4168 = vsel %vm1977, %v4034, 0
        %v4171 = vsel %vm1977, %v4039, 0
        %v4174 = vsel %vm1977, %v4044, 0
        %v4177 = vsel %vm1977, %v4114, 0
        %v4180 = vsel %vm1977, %v4119, 0
        %v4183 = vsel %vm1977, %v4124, 0
        %v4186 = vsel %vm1977, %v4129, 0
        %v4189 = vsel %vm1977, %v4134, 0
        %v4192 = vsel %vm1977, %v4139, 0
        %v4195 = vsel %vm1977, %v4144, 0
        %v4198 = vsel %vm1977, %v4149, 0
        %4200 = vmatprep.subr.mxu0 0.0
        %4201 = vmatpush1.xpose.msra.mxu0 %v4177
        %4202 = vmatprep.subr.mxu0 0.0
        %4203 = vmatpush1.xpose.msra.mxu0 %v4180
        %4204 = vmatprep.subr.mxu0 0.0
        %4205 = vmatpush1.xpose.msra.mxu0 %v4183
        %4206 = vmatprep.subr.mxu0 0.0
        %4207 = vmatpush1.xpose.msra.mxu0 %v4186
        %4208 = vmatprep.subr.mxu0 0.0
        %4209 = vmatpush1.xpose.msra.mxu0 %v4189
        %4210 = vmatprep.subr.mxu0 0.0
        %4211 = vmatpush1.xpose.msra.mxu0 %v4192
        %4212 = vmatprep.subr.mxu0 0.0
        %4213 = vmatpush1.xpose.msra.mxu0 %v4195
        %4214 = vmatprep.subr.mxu0 0.0
        %4215 = vmatpush1.xpose.msra.mxu0 %v4198
        %4216 = vmatprep.subr.mxu0 0.0
        %4217 = vmatpush1.xpose.msra.mxu0 0.0
        %4218 = vmatprep.subr.mxu0 0.0
        %4219 = vmatpush1.xpose.msra.mxu0 0.0
        %4220 = vmatprep.subr.mxu0 0.0
        %4221 = vmatpush1.xpose.msra.mxu0 0.0
        %4222 = vmatprep.subr.mxu0 0.0
        %4223 = vmatpush1.xpose.msra.mxu0 0.0
        %4224 = vmatprep.subr.mxu0 0.0
        %4225 = vmatpush1.xpose.msra.mxu0 0.0
        %4226 = vmatprep.subr.mxu0 0.0
        %4227 = vmatpush1.xpose.msra.mxu0 0.0
        %4228 = vmatprep.subr.mxu0 0.0
        %4229 = vmatpush1.xpose.msra.mxu0 0.0
        %4230 = vmatprep.subr.mxu0 0.0
        %4231 = vmatpush1.xpose.msra.mxu0 0.0
        %4232 = vmatprep.subr.mxu0 0.0
        %4233 = vmatpush1.xpose.msra.mxu0 0.0
        %4234 = vmatprep.subr.mxu0 0.0
        %4235 = vmatpush1.xpose.msra.mxu0 0.0
        %4236 = vmatprep.subr.mxu0 0.0
        %4237 = vmatpush1.xpose.msra.mxu0 0.0
        %4238 = vmatprep.subr.mxu0 0.0
        %4239 = vmatpush1.xpose.msra.mxu0 0.0
        %4240 = vmatprep.subr.mxu0 0.0
        %4241 = vmatpush1.xpose.msra.mxu0 0.0
        %4242 = vmatprep.subr.mxu0 0.0
        %4243 = vmatpush1.xpose.msra.mxu0 0.0
        %4244 = vmatprep.subr.mxu0 0.0
        %4245 = vmatpush1.xpose.msra.mxu0 0.0
        %4246 = vmatprep.subr.mxu0 0.0
        %4247 = vmatpush1.xpose.msra.mxu0 0.0
        %4248 = vmatprep.subr.mxu0 0.0
        %4249 = vmatpush1.xpose.msra.mxu0 0.0
        %4250 = vmatprep.subr.mxu0 0.0
        %4251 = vmatpush1.xpose.msra.mxu0 0.0
        %4252 = vmatprep.subr.mxu0 0.0
        %4253 = vmatpush1.xpose.msra.mxu0 0.0
        %4254 = vmatprep.subr.mxu0 0.0
        %4255 = vmatpush1.xpose.msra.mxu0 0.0
        %4256 = vmatprep.subr.mxu0 0.0
        %4257 = vmatpush1.xpose.msra.mxu0 0.0
        %4258 = vmatprep.subr.mxu0 0.0
        %4259 = vmatpush1.xpose.msra.mxu0 0.0
        %4260 = vmatprep.subr.mxu0 0.0
        %4261 = vmatpush1.xpose.msra.mxu0 0.0
        %4262 = vmatprep.subr.mxu0 0.0
        %4263 = vmatpush1.xpose.msra.mxu0 0.0
        %4264 = vmatprep.mubr.f32.mxu0 0.0
        %4265 = vmatmul.mubr.f32.gmra.mrb[0].mxu0 %v4153
        %v4266 = vpop.f32.mrb[0].mxu0
        %v4267 = vadd.f32 0.0, %v4266
        %v4268 = vpop.f32.mrb[0].mxu0
        %4269 = vmatprep.mubr.f32.mxu0 0.0
        %4270 = vmatmul.mubr.f32.gmra.mrb[0].mxu0 %v4156
        %v4271 = vpop.f32.mrb[0].mxu0
        %v4272 = vadd.f32 0.0, %v4271
        %v4273 = vpop.f32.mrb[0].mxu0
        %4274 = vmatprep.mubr.f32.mxu0 0.0
        %4275 = vmatmul.mubr.f32.gmra.mrb[0].mxu0 %v4159
        %v4276 = vpop.f32.mrb[0].mxu0
        %v4277 = vadd.f32 0.0, %v4276
        %v4278 = vpop.f32.mrb[0].mxu0
        %4279 = vmatprep.mubr.f32.mxu0 0.0
        %4280 = vmatmul.mubr.f32.gmra.mrb[0].mxu0 %v4162
        %v4281 = vpop.f32.mrb[0].mxu0
        %v4282 = vadd.f32 0.0, %v4281
        %v4283 = vpop.f32.mrb[0].mxu0
        %4284 = vmatprep.mubr.f32.mxu0 0.0
        %4285 = vmatmul.mubr.f32.gmra.mrb[0].mxu0 %v4165
        %v4286 = vpop.f32.mrb[0].mxu0
        %v4287 = vadd.f32 0.0, %v4286
        %v4288 = vpop.f32.mrb[0].mxu0
        %4289 = vmatprep.mubr.f32.mxu0 0.0
        %4290 = vmatmul.mubr.f32.gmra.mrb[0].mxu0 %v4168
        %v4291 = vpop.f32.mrb[0].mxu0
        %v4292 = vadd.f32 0.0, %v4291
        %v4293 = vpop.f32.mrb[0].mxu0
        %4294 = vmatprep.mubr.f32.mxu0 0.0
        %4295 = vmatmul.mubr.f32.gmra.mrb[0].mxu0 %v4171
        %v4296 = vpop.f32.mrb[0].mxu0
        %v4297 = vadd.f32 0.0, %v4296
        %v4298 = vpop.f32.mrb[0].mxu0
        %4299 = vmatprep.mubr.f32.mxu0 0.0
        %4300 = vmatmul.mubr.f32.gmra.mrb[0].mxu0 %v4174
        %v4301 = vpop.f32.mrb[0].mxu0
        %v4302 = vadd.f32 0.0, %v4301
        %v4303 = vpop.f32.mrb[0].mxu0
        %4304 = vdwg.mxu0
        %v4305 = vmul.f32 %v4267, 0.125
        %v4306 = vmul.f32 %v4272, 0.125
        %v4307 = vmul.f32 %v4277, 0.125
        %v4308 = vmul.f32 %v4282, 0.125
        %v4309 = vmul.f32 %v4287, 0.125
        %v4310 = vmul.f32 %v4292, 0.125
        %v4311 = vmul.f32 %v4297, 0.125
        %v4312 = vmul.f32 %v4302, 0.125
        %v4313 = vsel %vm1977, %v4305, -inf
        %4314 = vmax.xlane.f32.xlu0 %v4313
        %v4315 = vpop.xlane.xlu0 %4314
        %v4316 = vsel %vm1977, %v4306, -inf
        %4317 = vmax.xlane.f32.xlu0 %v4316
        %v4318 = vpop.xlane.xlu0 %4317
        %v4319 = vsel %vm1977, %v4307, -inf
        %4320 = vmax.xlane.f32.xlu0 %v4319
        %v4321 = vpop.xlane.xlu0 %4320
        %v4322 = vsel %vm1977, %v4308, -inf
        %4323 = vmax.xlane.f32.xlu0 %v4322
        %v4324 = vpop.xlane.xlu0 %4323
        %v4325 = vsel %vm1977, %v4309, -inf
        %4326 = vmax.xlane.f32.xlu0 %v4325
        %v4327 = vpop.xlane.xlu0 %4326
        %v4328 = vsel %vm1977, %v4310, -inf
        %4329 = vmax.xlane.f32.xlu0 %v4328
        %v4330 = vpop.xlane.xlu0 %4329
        %v4331 = vsel %vm1977, %v4311, -inf
        %4332 = vmax.xlane.f32.xlu0 %v4331
        %v4333 = vpop.xlane.xlu0 %4332
        %v4334 = vsel %vm1977, %v4312, -inf
        %4335 = vmax.xlane.f32.xlu0 %v4334
        %v4336 = vpop.xlane.xlu0 %4335
        %v4337 = vsub.f32 %v4305, %v4315
        %v4338 = vsub.f32 %v4306, %v4318
        %v4339 = vsub.f32 %v4307, %v4321
        %v4340 = vsub.f32 %v4308, %v4324
        %v4341 = vsub.f32 %v4309, %v4327
        %v4342 = vsub.f32 %v4310, %v4330
        %v4343 = vsub.f32 %v4311, %v4333
        %v4344 = vsub.f32 %v4312, %v4336
        %v4345 = vmul.f32 %v4337, 1.442695
        %v4346 = vpow.pop %v4345
        %v4347 = vmul.f32 %v4338, 1.442695
        %v4348 = vpow.pop %v4347
        %v4349 = vmul.f32 %v4339, 1.442695
        %v4350 = vpow.pop %v4349
        %v4351 = vmul.f32 %v4340, 1.442695
        %v4352 = vpow.pop %v4351
        %v4353 = vmul.f32 %v4341, 1.442695
        %v4354 = vpow.pop %v4353
        %v4355 = vmul.f32 %v4342, 1.442695
        %v4356 = vpow.pop %v4355
        %v4357 = vmul.f32 %v4343, 1.442695
        %v4358 = vpow.pop %v4357
        %v4359 = vmul.f32 %v4344, 1.442695
        %v4360 = vpow.pop %v4359
        %v4361 = vsel %vm1977, %v4346, 0.0
        %4362 = vadd.xlane.f32.xlu0 %v4361
        %v4363 = vpop.xlane.xlu0 %4362
        %v4364 = vsel %vm1977, %v4348, 0.0
        %4365 = vadd.xlane.f32.xlu0 %v4364
        %v4366 = vpop.xlane.xlu0 %4365
        %v4367 = vsel %vm1977, %v4350, 0.0
        %4368 = vadd.xlane.f32.xlu0 %v4367
        %v4369 = vpop.xlane.xlu0 %4368
        %v4370 = vsel %vm1977, %v4352, 0.0
        %4371 = vadd.xlane.f32.xlu0 %v4370
        %v4372 = vpop.xlane.xlu0 %4371
        %v4373 = vsel %vm1977, %v4354, 0.0
        %4374 = vadd.xlane.f32.xlu0 %v4373
        %v4375 = vpop.xlane.xlu0 %4374
        %v4376 = vsel %vm1977, %v4356, 0.0
        %4377 = vadd.xlane.f32.xlu0 %v4376
        %v4378 = vpop.xlane.xlu0 %4377
        %v4379 = vsel %vm1977, %v4358, 0.0
        %4380 = vadd.xlane.f32.xlu0 %v4379
        %v4381 = vpop.xlane.xlu0 %4380
        %v4382 = vsel %vm1977, %v4360, 0.0
        %4383 = vadd.xlane.f32.xlu0 %v4382
        %v4384 = vpop.xlane.xlu0 %4383
        %v4385 = vrcp.pop %v4363
        %v4386 = vrcp.pop %v4366
        %v4387 = vrcp.pop %v4369
        %v4388 = vrcp.pop %v4372
        %v4389 = vrcp.pop %v4375
        %v4390 = vrcp.pop %v4378
        %v4391 = vrcp.pop %v4381
        %v4392 = vrcp.pop %v4384
        %v4393 = vmul.f32 %v4346, %v4385
        %v4394 = vmul.f32 %v4348, %v4386
        %v4395 = vmul.f32 %v4350, %v4387
        %v4396 = vmul.f32 %v4352, %v4388
        %v4397 = vmul.f32 %v4354, %v4389
        %v4398 = vmul.f32 %v4356, %v4390
        %v4399 = vmul.f32 %v4358, %v4391
        %v4400 = vmul.f32 %v4360, %v4392
        %4401 = vrot.lane.b32.xlu0 %v4114, 64
        %v4402 = vpop.permute.xlu0 %4401
        %4403 = vrot.lane.b32.xlu0 %v4119, 64
        %v4404 = vpop.permute.xlu0 %4403
        %4405 = vrot.lane.b32.xlu0 %v4124, 64
        %v4406 = vpop.permute.xlu0 %4405
        %4407 = vrot.lane.b32.xlu0 %v4129, 64
        %v4408 = vpop.permute.xlu0 %4407
        %4409 = vrot.lane.b32.xlu0 %v4134, 64
        %v4410 = vpop.permute.xlu0 %4409
        %4411 = vrot.lane.b32.xlu0 %v4139, 64
        %v4412 = vpop.permute.xlu0 %4411
        %4413 = vrot.lane.b32.xlu0 %v4144, 64
        %v4414 = vpop.permute.xlu0 %4413
        %4415 = vrot.lane.b32.xlu0 %v4149, 64
        %v4416 = vpop.permute.xlu0 %4415
        %v4426 = vsel %vm1977, %v4393, 0
        %v4429 = vsel %vm1977, %v4394, 0
        %v4432 = vsel %vm1977, %v4395, 0
        %v4435 = vsel %vm1977, %v4396, 0
        %v4438 = vsel %vm1977, %v4397, 0
        %v4441 = vsel %vm1977, %v4398, 0
        %v4444 = vsel %vm1977, %v4399, 0
        %v4447 = vsel %vm1977, %v4400, 0
        %4449 = vmatprep.subr.mxu0 0.0
        %4450 = vmatpush1.msra.mxu0 %v4402
        %4451 = vmatprep.subr.mxu0 0.0
        %4452 = vmatpush1.msra.mxu0 %v4404
        %4453 = vmatprep.subr.mxu0 0.0
        %4454 = vmatpush1.msra.mxu0 %v4406
        %4455 = vmatprep.subr.mxu0 0.0
        %4456 = vmatpush1.msra.mxu0 %v4408
        %4457 = vmatprep.subr.mxu0 0.0
        %4458 = vmatpush1.msra.mxu0 %v4410
        %4459 = vmatprep.subr.mxu0 0.0
        %4460 = vmatpush1.msra.mxu0 %v4412
        %4461 = vmatprep.subr.mxu0 0.0
        %4462 = vmatpush1.msra.mxu0 %v4414
        %4463 = vmatprep.subr.mxu0 0.0
        %4464 = vmatpush1.msra.mxu0 %v4416
        %4465 = vmatprep.subr.mxu0 0.0
        %4466 = vmatpush1.msra.mxu0 0.0
        %4467 = vmatprep.subr.mxu0 0.0
        %4468 = vmatpush1.msra.mxu0 0.0
        %4469 = vmatprep.subr.mxu0 0.0
        %4470 = vmatpush1.msra.mxu0 0.0
        %4471 = vmatprep.subr.mxu0 0.0
        %4472 = vmatpush1.msra.mxu0 0.0
        %4473 = vmatprep.subr.mxu0 0.0
        %4474 = vmatpush1.msra.mxu0 0.0
        %4475 = vmatprep.subr.mxu0 0.0
        %4476 = vmatpush1.msra.mxu0 0.0
        %4477 = vmatprep.subr.mxu0 0.0
        %4478 = vmatpush1.msra.mxu0 0.0
        %4479 = vmatprep.subr.mxu0 0.0
        %4480 = vmatpush1.msra.mxu0 0.0
        %4481 = vmatprep.subr.mxu0 0.0
        %4482 = vmatpush1.msra.mxu0 0.0
        %4483 = vmatprep.subr.mxu0 0.0
        %4484 = vmatpush1.msra.mxu0 0.0
        %4485 = vmatprep.subr.mxu0 0.0
        %4486 = vmatpush1.msra.mxu0 0.0
        %4487 = vmatprep.subr.mxu0 0.0
        %4488 = vmatpush1.msra.mxu0 0.0
        %4489 = vmatprep.subr.mxu0 0.0
        %4490 = vmatpush1.msra.mxu0 0.0
        %4491 = vmatprep.subr.mxu0 0.0
        %4492 = vmatpush1.msra.mxu0 0.0
        %4493 = vmatprep.subr.mxu0 0.0
        %4494 = vmatpush1.msra.mxu0 0.0
        %4495 = vmatprep.subr.mxu0 0.0
        %4496 = vmatpush1.msra.mxu0 0.0
        %4497 = vmatprep.subr.mxu0 0.0
        %4498 = vmatpush1.msra.mxu0 0.0
        %4499 = vmatprep.subr.mxu0 0.0
        %4500 = vmatpush1.msra.mxu0 0.0
        %4501 = vmatprep.subr.mxu0 0.0
        %4502 = vmatpush1.msra.mxu0 0.0
        %4503 = vmatprep.subr.mxu0 0.0
        %4504 = vmatpush1.msra.mxu0 0.0
        %4505 = vmatprep.subr.mxu0 0.0
        %4506 = vmatpush1.msra.mxu0 0.0
        %4507 = vmatprep.subr.mxu0 0.0
        %4508 = vmatpush1.msra.mxu0 0.0
        %4509 = vmatprep.subr.mxu0 0.0
        %4510 = vmatpush1.msra.mxu0 0.0
        %4511 = vmatprep.subr.mxu0 0.0
        %4512 = vmatpush1.msra.mxu0 0.0
        %4513 = vmatprep.mubr.f32.mxu0 0.0
        %4514 = vmatmul.mubr.f32.gmra.mrb[0].mxu0 %v4426
        %v4515 = vpop.f32.mrb[0].mxu0
        %v4516 = vadd.f32 0.0, %v4515
        %v4517 = vpop.f32.mrb[0].mxu0
        %4518 = vmatprep.mubr.f32.mxu0 0.0
        %4519 = vmatmul.mubr.f32.gmra.mrb[0].mxu0 %v4429
        %v4520 = vpop.f32.mrb[0].mxu0
        %v4521 = vadd.f32 0.0, %v4520
        %v4522 = vpop.f32.mrb[0].mxu0
        %4523 = vmatprep.mubr.f32.mxu0 0.0
        %4524 = vmatmul.mubr.f32.gmra.mrb[0].mxu0 %v4432
        %v4525 = vpop.f32.mrb[0].mxu0
        %v4526 = vadd.f32 0.0, %v4525
        %v4527 = vpop.f32.mrb[0].mxu0
        %4528 = vmatprep.mubr.f32.mxu0 0.0
        %4529 = vmatmul.mubr.f32.gmra.mrb[0].mxu0 %v4435
        %v4530 = vpop.f32.mrb[0].mxu0
        %v4531 = vadd.f32 0.0, %v4530
        %v4532 = vpop.f32.mrb[0].mxu0
        %4533 = vmatprep.mubr.f32.mxu0 0.0
        %4534 = vmatmul.mubr.f32.gmra.mrb[0].mxu0 %v4438
        %v4535 = vpop.f32.mrb[0].mxu0
        %v4536 = vadd.f32 0.0, %v4535
        %v4537 = vpop.f32.mrb[0].mxu0
        %4538 = vmatprep.mubr.f32.mxu0 0.0
        %4539 = vmatmul.mubr.f32.gmra.mrb[0].mxu0 %v4441
        %v4540 = vpop.f32.mrb[0].mxu0
        %v4541 = vadd.f32 0.0, %v4540
        %v4542 = vpop.f32.mrb[0].mxu0
        %4543 = vmatprep.mubr.f32.mxu0 0.0
        %4544 = vmatmul.mubr.f32.gmra.mrb[0].mxu0 %v4444
        %v4545 = vpop.f32.mrb[0].mxu0
        %v4546 = vadd.f32 0.0, %v4545
        %v4547 = vpop.f32.mrb[0].mxu0
        %4548 = vmatprep.mubr.f32.mxu0 0.0
        %4549 = vmatmul.mubr.f32.gmra.mrb[0].mxu0 %v4447
        %v4550 = vpop.f32.mrb[0].mxu0
        %v4551 = vadd.f32 0.0, %v4550
        %v4552 = vpop.f32.mrb[0].mxu0
        %4553 = vdwg.mxu0
        %v4555 = vsel %vm1977, %v4516, 0
        %v4558 = vsel %vm1977, %v4521, 0
        %v4561 = vsel %vm1977, %v4526, 0
        %v4564 = vsel %vm1977, %v4531, 0
        %v4567 = vsel %vm1977, %v4536, 0
        %v4570 = vsel %vm1977, %v4541, 0
        %v4573 = vsel %vm1977, %v4546, 0
        %v4576 = vsel %vm1977, %v4551, 0
        %4578 = vmatprep.subr.mxu0 0.0
        %4579 = vmatpush1.msra.mxu0 %v3884
        %4580 = vmatprep.subr.mxu0 0.0
        %4581 = vmatpush1.msra.mxu0 %v3885
        %4582 = vmatprep.subr.mxu0 0.0
        %4583 = vmatpush1.msra.mxu0 %v3886
        %4584 = vmatprep.subr.mxu0 0.0
        %4585 = vmatpush1.msra.mxu0 %v3887
        %4586 = vmatprep.subr.mxu0 0.0
        %4587 = vmatpush1.msra.mxu0 %v3888
        %4588 = vmatprep.subr.mxu0 0.0
        %4589 = vmatpush1.msra.mxu0 %v3889
        %4590 = vmatprep.subr.mxu0 0.0
        %4591 = vmatpush1.msra.mxu0 %v3890
        %4592 = vmatprep.subr.mxu0 0.0
        %4593 = vmatpush1.msra.mxu0 %v3891
        %4594 = vmatprep.subr.mxu0 0.0
        %4595 = vmatpush1.msra.mxu0 0.0
        %4596 = vmatprep.subr.mxu0 0.0
        %4597 = vmatpush1.msra.mxu0 0.0
        %4598 = vmatprep.subr.mxu0 0.0
        %4599 = vmatpush1.msra.mxu0 0.0
        %4600 = vmatprep.subr.mxu0 0.0
        %4601 = vmatpush1.msra.mxu0 0.0
        %4602 = vmatprep.subr.mxu0 0.0
        %4603 = vmatpush1.msra.mxu0 0.0
        %4604 = vmatprep.subr.mxu0 0.0
        %4605 = vmatpush1.msra.mxu0 0.0
        %4606 = vmatprep.subr.mxu0 0.0
        %4607 = vmatpush1.msra.mxu0 0.0
        %4608 = vmatprep.subr.mxu0 0.0
        %4609 = vmatpush1.msra.mxu0 0.0
        %4610 = vmatprep.subr.mxu0 0.0
        %4611 = vmatpush1.msra.mxu0 0.0
        %4612 = vmatprep.subr.mxu0 0.0
        %4613 = vmatpush1.msra.mxu0 0.0
        %4614 = vmatprep.subr.mxu0 0.0
        %4615 = vmatpush1.msra.mxu0 0.0
        %4616 = vmatprep.subr.mxu0 0.0
        %4617 = vmatpush1.msra.mxu0 0.0
        %4618 = vmatprep.subr.mxu0 0.0
        %4619 = vmatpush1.msra.mxu0 0.0
        %4620 = vmatprep.subr.mxu0 0.0
        %4621 = vmatpush1.msra.mxu0 0.0
        %4622 = vmatprep.subr.mxu0 0.0
        %4623 = vmatpush1.msra.mxu0 0.0
        %4624 = vmatprep.subr.mxu0 0.0
        %4625 = vmatpush1.msra.mxu0 0.0
        %4626 = vmatprep.subr.mxu0 0.0
        %4627 = vmatpush1.msra.mxu0 0.0
        %4628 = vmatprep.subr.mxu0 0.0
        %4629 = vmatpush1.msra.mxu0 0.0
        %4630 = vmatprep.subr.mxu0 0.0
        %4631 = vmatpush1.msra.mxu0 0.0
        %4632 = vmatprep.subr.mxu0 0.0
        %4633 = vmatpush1.msra.mxu0 0.0
        %4634 = vmatprep.subr.mxu0 0.0
        %4635 = vmatpush1.msra.mxu0 0.0
        %4636 = vmatprep.subr.mxu0 0.0
        %4637 = vmatpush1.msra.mxu0 0.0
        %4638 = vmatprep.subr.mxu0 0.0
        %4639 = vmatpush1.msra.mxu0 0.0
        %4640 = vmatprep.subr.mxu0 0.0
        %4641 = vmatpush1.msra.mxu0 0.0
        %4642 = vmatprep.mubr.f32.mxu0 0.0
        %4643 = vmatmul.mubr.f32.gmra.mrb[0].mxu0 %v4555
        %v4644 = vpop.f32.mrb[0].mxu0
        %v4645 = vadd.f32 0.0, %v4644
        %v4646 = vpop.f32.mrb[0].mxu0
        %4647 = vmatprep.mubr.f32.mxu0 0.0
        %4648 = vmatmul.mubr.f32.gmra.mrb[0].mxu0 %v4558
        %v4649 = vpop.f32.mrb[0].mxu0
        %v4650 = vadd.f32 0.0, %v4649
        %v4651 = vpop.f32.mrb[0].mxu0
        %4652 = vmatprep.mubr.f32.mxu0 0.0
        %4653 = vmatmul.mubr.f32.gmra.mrb[0].mxu0 %v4561
        %v4654 = vpop.f32.mrb[0].mxu0
        %v4655 = vadd.f32 0.0, %v4654
        %v4656 = vpop.f32.mrb[0].mxu0
        %4657 = vmatprep.mubr.f32.mxu0 0.0
        %4658 = vmatmul.mubr.f32.gmra.mrb[0].mxu0 %v4564
        %v4659 = vpop.f32.mrb[0].mxu0
        %v4660 = vadd.f32 0.0, %v4659
        %v4661 = vpop.f32.mrb[0].mxu0
        %4662 = vmatprep.mubr.f32.mxu0 0.0
        %4663 = vmatmul.mubr.f32.gmra.mrb[0].mxu0 %v4567
        %v4664 = vpop.f32.mrb[0].mxu0
        %v4665 = vadd.f32 0.0, %v4664
        %v4666 = vpop.f32.mrb[0].mxu0
        %4667 = vmatprep.mubr.f32.mxu0 0.0
        %4668 = vmatmul.mubr.f32.gmra.mrb[0].mxu0 %v4570
        %v4669 = vpop.f32.mrb[0].mxu0
        %v4670 = vadd.f32 0.0, %v4669
        %v4671 = vpop.f32.mrb[0].mxu0
        %4672 = vmatprep.mubr.f32.mxu0 0.0
        %4673 = vmatmul.mubr.f32.gmra.mrb[0].mxu0 %v4573
        %v4674 = vpop.f32.mrb[0].mxu0
        %v4675 = vadd.f32 0.0, %v4674
        %v4676 = vpop.f32.mrb[0].mxu0
        %4677 = vmatprep.mubr.f32.mxu0 0.0
        %4678 = vmatmul.mubr.f32.gmra.mrb[0].mxu0 %v4576
        %v4679 = vpop.f32.mrb[0].mxu0
        %v4680 = vadd.f32 0.0, %v4679
        %v4681 = vpop.f32.mrb[0].mxu0
        %4682 = vdwg.mxu0
        %v4683 = vadd.f32 %v3860, %v4645
        %v4684 = vadd.f32 %v3861, %v4650
        %v4685 = vadd.f32 %v3862, %v4655
        %v4686 = vadd.f32 %v3863, %v4660
        %v4687 = vadd.f32 %v3864, %v4665
        %v4688 = vadd.f32 %v3865, %v4670
        %v4689 = vadd.f32 %v3866, %v4675
        %v4690 = vadd.f32 %v3867, %v4680
        %v4692 = vlaneseq
        %v4693 = vshrl.u32 %v4692, 7
        %v4694 = vsub.s32 0, %v4693
        %v4695 = vrot.slane %v3900, %v4694
        %v4698 = vsel %vm1977, %v4683, 0
        %v4701 = vsel %vm1977, %v4684, 0
        %v4704 = vsel %vm1977, %v4685, 0
        %v4707 = vsel %vm1977, %v4686, 0
        %v4710 = vsel %vm1977, %v4687, 0
        %v4713 = vsel %vm1977, %v4688, 0
        %v4716 = vsel %vm1977, %v4689, 0
        %v4719 = vsel %vm1977, %v4690, 0
        %4721 = vmatprep.subr.mxu0 0.0
        %4722 = vmatpush1.msra.mxu0 %v3892
        %4723 = vmatprep.subr.mxu0 0.0
        %4724 = vmatpush1.msra.mxu0 %v3893
        %4725 = vmatprep.subr.mxu0 0.0
        %4726 = vmatpush1.msra.mxu0 %v3894
        %4727 = vmatprep.subr.mxu0 0.0
        %4728 = vmatpush1.msra.mxu0 %v3895
        %4729 = vmatprep.subr.mxu0 0.0
        %4730 = vmatpush1.msra.mxu0 %v3896
        %4731 = vmatprep.subr.mxu0 0.0
        %4732 = vmatpush1.msra.mxu0 %v3897
        %4733 = vmatprep.subr.mxu0 0.0
        %4734 = vmatpush1.msra.mxu0 %v3898
        %4735 = vmatprep.subr.mxu0 0.0
        %4736 = vmatpush1.msra.mxu0 %v3899
        %4737 = vmatprep.subr.mxu0 0.0
        %4738 = vmatpush1.msra.mxu0 0.0
        %4739 = vmatprep.subr.mxu0 0.0
        %4740 = vmatpush1.msra.mxu0 0.0
        %4741 = vmatprep.subr.mxu0 0.0
        %4742 = vmatpush1.msra.mxu0 0.0
        %4743 = vmatprep.subr.mxu0 0.0
        %4744 = vmatpush1.msra.mxu0 0.0
        %4745 = vmatprep.subr.mxu0 0.0
        %4746 = vmatpush1.msra.mxu0 0.0
        %4747 = vmatprep.subr.mxu0 0.0
        %4748 = vmatpush1.msra.mxu0 0.0
        %4749 = vmatprep.subr.mxu0 0.0
        %4750 = vmatpush1.msra.mxu0 0.0
        %4751 = vmatprep.subr.mxu0 0.0
        %4752 = vmatpush1.msra.mxu0 0.0
        %4753 = vmatprep.subr.mxu0 0.0
        %4754 = vmatpush1.msra.mxu0 0.0
        %4755 = vmatprep.subr.mxu0 0.0
        %4756 = vmatpush1.msra.mxu0 0.0
        %4757 = vmatprep.subr.mxu0 0.0
        %4758 = vmatpush1.msra.mxu0 0.0
        %4759 = vmatprep.subr.mxu0 0.0
        %4760 = vmatpush1.msra.mxu0 0.0
        %4761 = vmatprep.subr.mxu0 0.0
        %4762 = vmatpush1.msra.mxu0 0.0
        %4763 = vmatprep.subr.mxu0 0.0
        %4764 = vmatpush1.msra.mxu0 0.0
        %4765 = vmatprep.subr.mxu0 0.0
        %4766 = vmatpush1.msra.mxu0 0.0
        %4767 = vmatprep.subr.mxu0 0.0
        %4768 = vmatpush1.msra.mxu0 0.0
        %4769 = vmatprep.subr.mxu0 0.0
        %4770 = vmatpush1.msra.mxu0 0.0
        %4771 = vmatprep.subr.mxu0 0.0
        %4772 = vmatpush1.msra.mxu0 0.0
        %4773 = vmatprep.subr.mxu0 0.0
        %4774 = vmatpush1.msra.mxu0 0.0
        %4775 = vmatprep.subr.mxu0 0.0
        %4776 = vmatpush1.msra.mxu0 0.0
        %4777 = vmatprep.subr.mxu0 0.0
        %4778 = vmatpush1.msra.mxu0 0.0
        %4779 = vmatprep.subr.mxu0 0.0
        %4780 = vmatpush1.msra.mxu0 0.0
        %4781 = vmatprep.subr.mxu0 0.0
        %4782 = vmatpush1.msra.mxu0 0.0
        %4783 = vmatprep.subr.mxu0 0.0
        %4784 = vmatpush1.msra.mxu0 0.0
        %4785 = vmatprep.mubr.f32.mxu0 0.0
        %4786 = vmatmul.mubr.f32.gmra.mrb[0].mxu0 %v4698
        %v4787 = vpop.f32.mrb[0].mxu0
        %v4788 = vadd.f32 %v4695, %v4787
        %v4789 = vpop.f32.mrb[0].mxu0
        %4790 = vmatprep.mubr.f32.mxu0 0.0
        %4791 = vmatmul.mubr.f32.gmra.mrb[0].mxu0 %v4701
        %v4792 = vpop.f32.mrb[0].mxu0
        %v4793 = vadd.f32 %v4695, %v4792
        %v4794 = vpop.f32.mrb[0].mxu0
        %4795 = vmatprep.mubr.f32.mxu0 0.0
        %4796 = vmatmul.mubr.f32.gmra.mrb[0].mxu0 %v4704
        %v4797 = vpop.f32.mrb[0].mxu0
        %v4798 = vadd.f32 %v4695, %v4797
        %v4799 = vpop.f32.mrb[0].mxu0
        %4800 = vmatprep.mubr.f32.mxu0 0.0
        %4801 = vmatmul.mubr.f32.gmra.mrb[0].mxu0 %v4707
        %v4802 = vpop.f32.mrb[0].mxu0
        %v4803 = vadd.f32 %v4695, %v4802
        %v4804 = vpop.f32.mrb[0].mxu0
        %4805 = vmatprep.mubr.f32.mxu0 0.0
        %4806 = vmatmul.mubr.f32.gmra.mrb[0].mxu0 %v4710
        %v4807 = vpop.f32.mrb[0].mxu0
        %v4808 = vadd.f32 %v4695, %v4807
        %v4809 = vpop.f32.mrb[0].mxu0
        %4810 = vmatprep.mubr.f32.mxu0 0.0
        %4811 = vmatmul.mubr.f32.gmra.mrb[0].mxu0 %v4713
        %v4812 = vpop.f32.mrb[0].mxu0
        %v4813 = vadd.f32 %v4695, %v4812
        %v4814 = vpop.f32.mrb[0].mxu0
        %4815 = vmatprep.mubr.f32.mxu0 0.0
        %4816 = vmatmul.mubr.f32.gmra.mrb[0].mxu0 %v4716
        %v4817 = vpop.f32.mrb[0].mxu0
        %v4818 = vadd.f32 %v4695, %v4817
        %v4819 = vpop.f32.mrb[0].mxu0
        %4820 = vmatprep.mubr.f32.mxu0 0.0
        %4821 = vmatmul.mubr.f32.gmra.mrb[0].mxu0 %v4719
        %v4822 = vpop.f32.mrb[0].mxu0
        %v4823 = vadd.f32 %v4695, %v4822
        %v4824 = vpop.f32.mrb[0].mxu0
        %4825 = vdwg.mxu0
        %v4826 = vmax.f32 %v4788, 0.0
        %v4827 = vmax.f32 %v4793, 0.0
        %v4828 = vmax.f32 %v4798, 0.0
        %v4829 = vmax.f32 %v4803, 0.0
        %v4830 = vmax.f32 %v4808, 0.0
        %v4831 = vmax.f32 %v4813, 0.0
        %v4832 = vmax.f32 %v4818, 0.0
        %v4833 = vmax.f32 %v4823, 0.0
        %4834 = vmatprep.subr.mxu0 0.0
        %4835 = vmatpush1.msra.mxu0 %v3901
        %4836 = vmatprep.subr.mxu0 0.0
        %4837 = vmatpush1.msra.mxu0 %v3902
        %4838 = vmatprep.subr.mxu0 0.0
        %4839 = vmatpush1.msra.mxu0 %v3903
        %4840 = vmatprep.subr.mxu0 0.0
        %4841 = vmatpush1.msra.mxu0 %v3904
        %4842 = vmatprep.subr.mxu0 0.0
        %4843 = vmatpush1.msra.mxu0 %v3905
        %4844 = vmatprep.subr.mxu0 0.0
        %4845 = vmatpush1.msra.mxu0 %v3906
        %4846 = vmatprep.subr.mxu0 0.0
        %4847 = vmatpush1.msra.mxu0 %v3907
        %4848 = vmatprep.subr.mxu0 0.0
        %4849 = vmatpush1.msra.mxu0 %v3908
        %4850 = vmatprep.subr.mxu0 0.0
        %4851 = vmatpush1.msra.mxu0 %v3909
        %4852 = vmatprep.subr.mxu0 0.0
        %4853 = vmatpush1.msra.mxu0 %v3910
        %4854 = vmatprep.subr.mxu0 0.0
        %4855 = vmatpush1.msra.mxu0 %v3911
        %4856 = vmatprep.subr.mxu0 0.0
        %4857 = vmatpush1.msra.mxu0 %v3912
        %4858 = vmatprep.subr.mxu0 0.0
        %4859 = vmatpush1.msra.mxu0 %v3913
        %4860 = vmatprep.subr.mxu0 0.0
        %4861 = vmatpush1.msra.mxu0 %v3914
        %4862 = vmatprep.subr.mxu0 0.0
        %4863 = vmatpush1.msra.mxu0 %v3915
        %4864 = vmatprep.subr.mxu0 0.0
        %4865 = vmatpush1.msra.mxu0 %v3916
        %4866 = vmatprep.subr.mxu0 0.0
        %4867 = vmatpush1.msra.mxu0 0.0
        %4868 = vmatprep.subr.mxu0 0.0
        %4869 = vmatpush1.msra.mxu0 0.0
        %4870 = vmatprep.subr.mxu0 0.0
        %4871 = vmatpush1.msra.mxu0 0.0
        %4872 = vmatprep.subr.mxu0 0.0
        %4873 = vmatpush1.msra.mxu0 0.0
        %4874 = vmatprep.subr.mxu0 0.0
        %4875 = vmatpush1.msra.mxu0 0.0
        %4876 = vmatprep.subr.mxu0 0.0
        %4877 = vmatpush1.msra.mxu0 0.0
        %4878 = vmatprep.subr.mxu0 0.0
        %4879 = vmatpush1.msra.mxu0 0.0
        %4880 = vmatprep.subr.mxu0 0.0
        %4881 = vmatpush1.msra.mxu0 0.0
        %4882 = vmatprep.subr.mxu0 0.0
        %4883 = vmatpush1.msra.mxu0 0.0
        %4884 = vmatprep.subr.mxu0 0.0
        %4885 = vmatpush1.msra.mxu0 0.0
        %4886 = vmatprep.subr.mxu0 0.0
        %4887 = vmatpush1.msra.mxu0 0.0
        %4888 = vmatprep.subr.mxu0 0.0
        %4889 = vmatpush1.msra.mxu0 0.0
        %4890 = vmatprep.subr.mxu0 0.0
        %4891 = vmatpush1.msra.mxu0 0.0
        %4892 = vmatprep.subr.mxu0 0.0
        %4893 = vmatpush1.msra.mxu0 0.0
        %4894 = vmatprep.subr.mxu0 0.0
        %4895 = vmatpush1.msra.mxu0 0.0
        %4896 = vmatprep.subr.mxu0 0.0
        %4897 = vmatpush1.msra.mxu0 0.0
        %4898 = vmatprep.mubr.f32.mxu0 0.0
        %4899 = vmatmul.mubr.f32.gmra.mrb[0].mxu0 %v4826
        %v4900 = vpop.f32.mrb[0].mxu0
        %v4901 = vadd.f32 0.0, %v4900
        %v4902 = vpop.f32.mrb[0].mxu0
        %4903 = vmatprep.mubr.f32.mxu0 0.0
        %4904 = vmatmul.mubr.f32.gmra.mrb[0].mxu0 %v4827
        %v4905 = vpop.f32.mrb[0].mxu0
        %v4906 = vadd.f32 0.0, %v4905
        %v4907 = vpop.f32.mrb[0].mxu0
        %4908 = vmatprep.mubr.f32.mxu0 0.0
        %4909 = vmatmul.mubr.f32.gmra.mrb[0].mxu0 %v4828
        %v4910 = vpop.f32.mrb[0].mxu0
        %v4911 = vadd.f32 0.0, %v4910
        %v4912 = vpop.f32.mrb[0].mxu0
        %4913 = vmatprep.mubr.f32.mxu0 0.0
        %4914 = vmatmul.mubr.f32.gmra.mrb[0].mxu0 %v4829
        %v4915 = vpop.f32.mrb[0].mxu0
        %v4916 = vadd.f32 0.0, %v4915
        %v4917 = vpop.f32.mrb[0].mxu0
        %4918 = vmatprep.mubr.f32.mxu0 0.0
        %4919 = vmatmul.mubr.f32.gmra.mrb[0].mxu0 %v4830
        %v4920 = vpop.f32.mrb[0].mxu0
        %v4921 = vadd.f32 0.0, %v4920
        %v4922 = vpop.f32.mrb[0].mxu0
        %4923 = vmatprep.mubr.f32.mxu0 0.0
        %4924 = vmatmul.mubr.f32.gmra.mrb[0].mxu0 %v4831
        %v4925 = vpop.f32.mrb[0].mxu0
        %v4926 = vadd.f32 0.0, %v4925
        %v4927 = vpop.f32.mrb[0].mxu0
        %4928 = vmatprep.mubr.f32.mxu0 0.0
        %4929 = vmatmul.mubr.f32.gmra.mrb[0].mxu0 %v4832
        %v4930 = vpop.f32.mrb[0].mxu0
        %v4931 = vadd.f32 0.0, %v4930
        %v4932 = vpop.f32.mrb[0].mxu0
        %4933 = vmatprep.mubr.f32.mxu0 0.0
        %4934 = vmatmul.mubr.f32.gmra.mrb[0].mxu0 %v4833
        %v4935 = vpop.f32.mrb[0].mxu0
        %v4936 = vadd.f32 0.0, %v4935
        %v4937 = vpop.f32.mrb[0].mxu0
        %4938 = vdwg.mxu0
        %v4939 = vadd.f32 %v4683, %v4901
        %v4940 = vadd.f32 %v4684, %v4906
        %v4941 = vadd.f32 %v4685, %v4911
        %v4942 = vadd.f32 %v4686, %v4916
        %v4943 = vadd.f32 %v4687, %v4921
        %v4944 = vadd.f32 %v4688, %v4926
        %v4945 = vadd.f32 %v4689, %v4931
        %v4946 = vadd.f32 %v4690, %v4936
        %v4948 = vlaneseq
        %v4949 = vshrl.u32 %v4948, 7
        %v4950 = vsub.s32 0, %v4949
        %v4951 = vrot.slane %v3917, %v4950
        %v4953 = vadd.f32 %v4939, %v4951
        %v4954 = vadd.f32 %v4940, %v4951
        %v4955 = vadd.f32 %v4941, %v4951
        %v4956 = vadd.f32 %v4942, %v4951
        %v4957 = vadd.f32 %v4943, %v4951
        %v4958 = vadd.f32 %v4944, %v4951
        %v4959 = vadd.f32 %v4945, %v4951
        %v4960 = vadd.f32 %v4946, %v4951
        %v4961 = vadd.f32 %v2735, %v4953
        %v4962 = vadd.f32 %v2736, %v4954
        %v4963 = vadd.f32 %v2737, %v4955
        %v4964 = vadd.f32 %v2738, %v4956
        %v4965 = vadd.f32 %v2739, %v4957
        %v4966 = vadd.f32 %v2740, %v4958
        %v4967 = vadd.f32 %v2741, %v4959
        %v4968 = vadd.f32 %v2742, %v4960
        %v4969 = vld [vmem:[%s59] sm:$0xff]
        %v4970 = vld [vmem:[%s59 + $0x8] sm:$0xff]
        %v4971 = vld [vmem:[%s59 + $0x10] sm:$0xff]
        %v4972 = vld [vmem:[%s59 + $0x18] sm:$0xff]
        %v4973 = vld [vmem:[%s59 + $0x20] sm:$0xff]
        %v4974 = vld [vmem:[%s59 + $0x28] sm:$0xff]
        %v4975 = vld [vmem:[%s59 + $0x30] sm:$0xff]
        %v4976 = vld [vmem:[%s59 + $0x38] sm:$0xff]
        %v4977 = vld [vmem:[%s61] sm:$0xff]
        %v4978 = vld [vmem:[%s61 + $0x8] sm:$0xff]
        %v4979 = vld [vmem:[%s61 + $0x10] sm:$0xff]
        %v4980 = vld [vmem:[%s61 + $0x18] sm:$0xff]
        %v4981 = vld [vmem:[%s61 + $0x20] sm:$0xff]
        %v4982 = vld [vmem:[%s61 + $0x28] sm:$0xff]
        %v4983 = vld [vmem:[%s61 + $0x30] sm:$0xff]
        %v4984 = vld [vmem:[%s61 + $0x38] sm:$0xff]
        %v4985 = vld [vmem:[%s63] sm:$0xff]
        %v4986 = vld [vmem:[%s63 + $0x8] sm:$0xff]
        %v4987 = vld [vmem:[%s63 + $0x10] sm:$0xff]
        %v4988 = vld [vmem:[%s63 + $0x18] sm:$0xff]
        %v4989 = vld [vmem:[%s63 + $0x20] sm:$0xff]
        %v4990 = vld [vmem:[%s63 + $0x28] sm:$0xff]
        %v4991 = vld [vmem:[%s63 + $0x30] sm:$0xff]
        %v4992 = vld [vmem:[%s63 + $0x38] sm:$0xff]
        %v4993 = vld [vmem:[%s65] sm:$0xff]
        %v4994 = vld [vmem:[%s65 + $0x8] sm:$0xff]
        %v4995 = vld [vmem:[%s65 + $0x10] sm:$0xff]
        %v4996 = vld [vmem:[%s65 + $0x18] sm:$0xff]
        %v4997 = vld [vmem:[%s65 + $0x20] sm:$0xff]
        %v4998 = vld [vmem:[%s65 + $0x28] sm:$0xff]
        %v4999 = vld [vmem:[%s65 + $0x30] sm:$0xff]
        %v5000 = vld [vmem:[%s65 + $0x38] sm:$0xff]
        %v5001 = vld [vmem:[#allocation12] sm:$0x1]
        %v5002 = vld [vmem:[%s69] sm:$0xff]
        %v5003 = vld [vmem:[%s69 + $0x8] sm:$0xff]
        %v5004 = vld [vmem:[%s69 + $0x10] sm:$0xff]
        %v5005 = vld [vmem:[%s69 + $0x18] sm:$0xff]
        %v5006 = vld [vmem:[%s69 + $0x20] sm:$0xff]
        %v5007 = vld [vmem:[%s69 + $0x28] sm:$0xff]
        %v5008 = vld [vmem:[%s69 + $0x30] sm:$0xff]
        %v5009 = vld [vmem:[%s69 + $0x38] sm:$0xff]
        %v5010 = vld [vmem:[%s69 + $0x40] sm:$0xff]
        %v5011 = vld [vmem:[%s69 + $0x48] sm:$0xff]
        %v5012 = vld [vmem:[%s69 + $0x50] sm:$0xff]
        %v5013 = vld [vmem:[%s69 + $0x58] sm:$0xff]
        %v5014 = vld [vmem:[%s69 + $0x60] sm:$0xff]
        %v5015 = vld [vmem:[%s69 + $0x68] sm:$0xff]
        %v5016 = vld [vmem:[%s69 + $0x70] sm:$0xff]
        %v5017 = vld [vmem:[%s69 + $0x78] sm:$0xff]
        %v5018 = vld [vmem:[#allocation14] sm:$0x1]
        %5019 = vmatprep.subr.mxu0 0.0
        %5020 = vmatpush1.msra.mxu0 %v4969
        %5021 = vmatprep.subr.mxu0 0.0
        %5022 = vmatpush1.msra.mxu0 %v4970
        %5023 = vmatprep.subr.mxu0 0.0
        %5024 = vmatpush1.msra.mxu0 %v4971
        %5025 = vmatprep.subr.mxu0 0.0
        %5026 = vmatpush1.msra.mxu0 %v4972
        %5027 = vmatprep.subr.mxu0 0.0
        %5028 = vmatpush1.msra.mxu0 %v4973
        %5029 = vmatprep.subr.mxu0 0.0
        %5030 = vmatpush1.msra.mxu0 %v4974
        %5031 = vmatprep.subr.mxu0 0.0
        %5032 = vmatpush1.msra.mxu0 %v4975
        %5033 = vmatprep.subr.mxu0 0.0
        %5034 = vmatpush1.msra.mxu0 %v4976
        %5035 = vmatprep.subr.mxu0 0.0
        %5036 = vmatpush1.msra.mxu0 0.0
        %5037 = vmatprep.subr.mxu0 0.0
        %5038 = vmatpush1.msra.mxu0 0.0
        %5039 = vmatprep.subr.mxu0 0.0
        %5040 = vmatpush1.msra.mxu0 0.0
        %5041 = vmatprep.subr.mxu0 0.0
        %5042 = vmatpush1.msra.mxu0 0.0
        %5043 = vmatprep.subr.mxu0 0.0
        %5044 = vmatpush1.msra.mxu0 0.0
        %5045 = vmatprep.subr.mxu0 0.0
        %5046 = vmatpush1.msra.mxu0 0.0
        %5047 = vmatprep.subr.mxu0 0.0
        %5048 = vmatpush1.msra.mxu0 0.0
        %5049 = vmatprep.subr.mxu0 0.0
        %5050 = vmatpush1.msra.mxu0 0.0
        %5051 = vmatprep.subr.mxu0 0.0
        %5052 = vmatpush1.msra.mxu0 0.0
        %5053 = vmatprep.subr.mxu0 0.0
        %5054 = vmatpush1.msra.mxu0 0.0
        %5055 = vmatprep.subr.mxu0 0.0
        %5056 = vmatpush1.msra.mxu0 0.0
        %5057 = vmatprep.subr.mxu0 0.0
        %5058 = vmatpush1.msra.mxu0 0.0
        %5059 = vmatprep.subr.mxu0 0.0
        %5060 = vmatpush1.msra.mxu0 0.0
        %5061 = vmatprep.subr.mxu0 0.0
        %5062 = vmatpush1.msra.mxu0 0.0
        %5063 = vmatprep.subr.mxu0 0.0
        %5064 = vmatpush1.msra.mxu0 0.0
        %5065 = vmatprep.subr.mxu0 0.0
        %5066 = vmatpush1.msra.mxu0 0.0
        %5067 = vmatprep.subr.mxu0 0.0
        %5068 = vmatpush1.msra.mxu0 0.0
        %5069 = vmatprep.subr.mxu0 0.0
        %5070 = vmatpush1.msra.mxu0 0.0
        %5071 = vmatprep.subr.mxu0 0.0
        %5072 = vmatpush1.msra.mxu0 0.0
        %5073 = vmatprep.subr.mxu0 0.0
        %5074 = vmatpush1.msra.mxu0 0.0
        %5075 = vmatprep.subr.mxu0 0.0
        %5076 = vmatpush1.msra.mxu0 0.0
        %5077 = vmatprep.subr.mxu0 0.0
        %5078 = vmatpush1.msra.mxu0 0.0
        %5079 = vmatprep.subr.mxu0 0.0
        %5080 = vmatpush1.msra.mxu0 0.0
        %5081 = vmatprep.subr.mxu0 0.0
        %5082 = vmatpush1.msra.mxu0 0.0
        %5083 = vmatprep.mubr.f32.mxu0 0.0
        %5084 = vmatmul.mubr.f32.gmra.mrb[0].mxu0 %v2931
        %v5085 = vpop.f32.mrb[0].mxu0
        %v5086 = vadd.f32 0.0, %v5085
        %v5087 = vpop.f32.mrb[0].mxu0
        %5088 = vmatprep.mubr.f32.mxu0 0.0
        %5089 = vmatmul.mubr.f32.gmra.mrb[0].mxu0 %v2934
        %v5090 = vpop.f32.mrb[0].mxu0
        %v5091 = vadd.f32 0.0, %v5090
        %v5092 = vpop.f32.mrb[0].mxu0
        %5093 = vmatprep.mubr.f32.mxu0 0.0
        %5094 = vmatmul.mubr.f32.gmra.mrb[0].mxu0 %v2937
        %v5095 = vpop.f32.mrb[0].mxu0
        %v5096 = vadd.f32 0.0, %v5095
        %v5097 = vpop.f32.mrb[0].mxu0
        %5098 = vmatprep.mubr.f32.mxu0 0.0
        %5099 = vmatmul.mubr.f32.gmra.mrb[0].mxu0 %v2940
        %v5100 = vpop.f32.mrb[0].mxu0
        %v5101 = vadd.f32 0.0, %v5100
        %v5102 = vpop.f32.mrb[0].mxu0
        %5103 = vmatprep.mubr.f32.mxu0 0.0
        %5104 = vmatmul.mubr.f32.gmra.mrb[0].mxu0 %v2943
        %v5105 = vpop.f32.mrb[0].mxu0
        %v5106 = vadd.f32 0.0, %v5105
        %v5107 = vpop.f32.mrb[0].mxu0
        %5108 = vmatprep.mubr.f32.mxu0 0.0
        %5109 = vmatmul.mubr.f32.gmra.mrb[0].mxu0 %v2946
        %v5110 = vpop.f32.mrb[0].mxu0
        %v5111 = vadd.f32 0.0, %v5110
        %v5112 = vpop.f32.mrb[0].mxu0
        %5113 = vmatprep.mubr.f32.mxu0 0.0
        %5114 = vmatmul.mubr.f32.gmra.mrb[0].mxu0 %v2949
        %v5115 = vpop.f32.mrb[0].mxu0
        %v5116 = vadd.f32 0.0, %v5115
        %v5117 = vpop.f32.mrb[0].mxu0
        %5118 = vmatprep.mubr.f32.mxu0 0.0
        %5119 = vmatmul.mubr.f32.gmra.mrb[0].mxu0 %v2952
        %v5120 = vpop.f32.mrb[0].mxu0
        %v5121 = vadd.f32 0.0, %v5120
        %v5122 = vpop.f32.mrb[0].mxu0
        %5123 = vdwg.mxu0
        %5124 = vmatprep.subr.mxu0 0.0
        %5125 = vmatpush1.msra.mxu0 %v4977
        %5126 = vmatprep.subr.mxu0 0.0
        %5127 = vmatpush1.msra.mxu0 %v4978
        %5128 = vmatprep.subr.mxu0 0.0
        %5129 = vmatpush1.msra.mxu0 %v4979
        %5130 = vmatprep.subr.mxu0 0.0
        %5131 = vmatpush1.msra.mxu0 %v4980
        %5132 = vmatprep.subr.mxu0 0.0
        %5133 = vmatpush1.msra.mxu0 %v4981
        %5134 = vmatprep.subr.mxu0 0.0
        %5135 = vmatpush1.msra.mxu0 %v4982
        %5136 = vmatprep.subr.mxu0 0.0
        %5137 = vmatpush1.msra.mxu0 %v4983
        %5138 = vmatprep.subr.mxu0 0.0
        %5139 = vmatpush1.msra.mxu0 %v4984
        %5140 = vmatprep.subr.mxu0 0.0
        %5141 = vmatpush1.msra.mxu0 0.0
        %5142 = vmatprep.subr.mxu0 0.0
        %5143 = vmatpush1.msra.mxu0 0.0
        %5144 = vmatprep.subr.mxu0 0.0
        %5145 = vmatpush1.msra.mxu0 0.0
        %5146 = vmatprep.subr.mxu0 0.0
        %5147 = vmatpush1.msra.mxu0 0.0
        %5148 = vmatprep.subr.mxu0 0.0
        %5149 = vmatpush1.msra.mxu0 0.0
        %5150 = vmatprep.subr.mxu0 0.0
        %5151 = vmatpush1.msra.mxu0 0.0
        %5152 = vmatprep.subr.mxu0 0.0
        %5153 = vmatpush1.msra.mxu0 0.0
        %5154 = vmatprep.subr.mxu0 0.0
        %5155 = vmatpush1.msra.mxu0 0.0
        %5156 = vmatprep.subr.mxu0 0.0
        %5157 = vmatpush1.msra.mxu0 0.0
        %5158 = vmatprep.subr.mxu0 0.0
        %5159 = vmatpush1.msra.mxu0 0.0
        %5160 = vmatprep.subr.mxu0 0.0
        %5161 = vmatpush1.msra.mxu0 0.0
        %5162 = vmatprep.subr.mxu0 0.0
        %5163 = vmatpush1.msra.mxu0 0.0
        %5164 = vmatprep.subr.mxu0 0.0
        %5165 = vmatpush1.msra.mxu0 0.0
        %5166 = vmatprep.subr.mxu0 0.0
        %5167 = vmatpush1.msra.mxu0 0.0
        %5168 = vmatprep.subr.mxu0 0.0
        %5169 = vmatpush1.msra.mxu0 0.0
        %5170 = vmatprep.subr.mxu0 0.0
        %5171 = vmatpush1.msra.mxu0 0.0
        %5172 = vmatprep.subr.mxu0 0.0
        %5173 = vmatpush1.msra.mxu0 0.0
        %5174 = vmatprep.subr.mxu0 0.0
        %5175 = vmatpush1.msra.mxu0 0.0
        %5176 = vmatprep.subr.mxu0 0.0
        %5177 = vmatpush1.msra.mxu0 0.0
        %5178 = vmatprep.subr.mxu0 0.0
        %5179 = vmatpush1.msra.mxu0 0.0
        %5180 = vmatprep.subr.mxu0 0.0
        %5181 = vmatpush1.msra.mxu0 0.0
        %5182 = vmatprep.subr.mxu0 0.0
        %5183 = vmatpush1.msra.mxu0 0.0
        %5184 = vmatprep.subr.mxu0 0.0
        %5185 = vmatpush1.msra.mxu0 0.0
        %5186 = vmatprep.subr.mxu0 0.0
        %5187 = vmatpush1.msra.mxu0 0.0
        %5188 = vmatprep.mubr.f32.mxu0 0.0
        %5189 = vmatmul.mubr.f32.gmra.mrb[0].mxu0 %v2802
        %v5190 = vpop.f32.mrb[0].mxu0
        %v5191 = vadd.f32 0.0, %v5190
        %v5192 = vpop.f32.mrb[0].mxu0
        %5193 = vmatprep.mubr.f32.mxu0 0.0
        %5194 = vmatmul.mubr.f32.gmra.mrb[0].mxu0 %v2805
        %v5195 = vpop.f32.mrb[0].mxu0
        %v5196 = vadd.f32 0.0, %v5195
        %v5197 = vpop.f32.mrb[0].mxu0
        %5198 = vmatprep.mubr.f32.mxu0 0.0
        %5199 = vmatmul.mubr.f32.gmra.mrb[0].mxu0 %v2808
        %v5200 = vpop.f32.mrb[0].mxu0
        %v5201 = vadd.f32 0.0, %v5200
        %v5202 = vpop.f32.mrb[0].mxu0
        %5203 = vmatprep.mubr.f32.mxu0 0.0
        %5204 = vmatmul.mubr.f32.gmra.mrb[0].mxu0 %v2811
        %v5205 = vpop.f32.mrb[0].mxu0
        %v5206 = vadd.f32 0.0, %v5205
        %v5207 = vpop.f32.mrb[0].mxu0
        %5208 = vmatprep.mubr.f32.mxu0 0.0
        %5209 = vmatmul.mubr.f32.gmra.mrb[0].mxu0 %v2814
        %v5210 = vpop.f32.mrb[0].mxu0
        %v5211 = vadd.f32 0.0, %v5210
        %v5212 = vpop.f32.mrb[0].mxu0
        %5213 = vmatprep.mubr.f32.mxu0 0.0
        %5214 = vmatmul.mubr.f32.gmra.mrb[0].mxu0 %v2817
        %v5215 = vpop.f32.mrb[0].mxu0
        %v5216 = vadd.f32 0.0, %v5215
        %v5217 = vpop.f32.mrb[0].mxu0
        %5218 = vmatprep.mubr.f32.mxu0 0.0
        %5219 = vmatmul.mubr.f32.gmra.mrb[0].mxu0 %v2820
        %v5220 = vpop.f32.mrb[0].mxu0
        %v5221 = vadd.f32 0.0, %v5220
        %v5222 = vpop.f32.mrb[0].mxu0
        %5223 = vmatprep.mubr.f32.mxu0 0.0
        %5224 = vmatmul.mubr.f32.gmra.mrb[0].mxu0 %v2823
        %v5225 = vpop.f32.mrb[0].mxu0
        %v5226 = vadd.f32 0.0, %v5225
        %v5227 = vpop.f32.mrb[0].mxu0
        %5228 = vdwg.mxu0
        %v5230 = vsel %vm1977, %v5086, 0
        %v5233 = vsel %vm1977, %v5091, 0
        %v5236 = vsel %vm1977, %v5096, 0
        %v5239 = vsel %vm1977, %v5101, 0
        %v5242 = vsel %vm1977, %v5106, 0
        %v5245 = vsel %vm1977, %v5111, 0
        %v5248 = vsel %vm1977, %v5116, 0
        %v5251 = vsel %vm1977, %v5121, 0
        %v5254 = vsel %vm1977, %v5191, 0
        %v5257 = vsel %vm1977, %v5196, 0
        %v5260 = vsel %vm1977, %v5201, 0
        %v5263 = vsel %vm1977, %v5206, 0
        %v5266 = vsel %vm1977, %v5211, 0
        %v5269 = vsel %vm1977, %v5216, 0
        %v5272 = vsel %vm1977, %v5221, 0
        %v5275 = vsel %vm1977, %v5226, 0
        %5277 = vmatprep.subr.mxu0 0.0
        %5278 = vmatpush1.xpose.msra.mxu0 %v5254
        %5279 = vmatprep.subr.mxu0 0.0
        %5280 = vmatpush1.xpose.msra.mxu0 %v5257
        %5281 = vmatprep.subr.mxu0 0.0
        %5282 = vmatpush1.xpose.msra.mxu0 %v5260
        %5283 = vmatprep.subr.mxu0 0.0
        %5284 = vmatpush1.xpose.msra.mxu0 %v5263
        %5285 = vmatprep.subr.mxu0 0.0
        %5286 = vmatpush1.xpose.msra.mxu0 %v5266
        %5287 = vmatprep.subr.mxu0 0.0
        %5288 = vmatpush1.xpose.msra.mxu0 %v5269
        %5289 = vmatprep.subr.mxu0 0.0
        %5290 = vmatpush1.xpose.msra.mxu0 %v5272
        %5291 = vmatprep.subr.mxu0 0.0
        %5292 = vmatpush1.xpose.msra.mxu0 %v5275
        %5293 = vmatprep.subr.mxu0 0.0
        %5294 = vmatpush1.xpose.msra.mxu0 0.0
        %5295 = vmatprep.subr.mxu0 0.0
        %5296 = vmatpush1.xpose.msra.mxu0 0.0
        %5297 = vmatprep.subr.mxu0 0.0
        %5298 = vmatpush1.xpose.msra.mxu0 0.0
        %5299 = vmatprep.subr.mxu0 0.0
        %5300 = vmatpush1.xpose.msra.mxu0 0.0
        %5301 = vmatprep.subr.mxu0 0.0
        %5302 = vmatpush1.xpose.msra.mxu0 0.0
        %5303 = vmatprep.subr.mxu0 0.0
        %5304 = vmatpush1.xpose.msra.mxu0 0.0
        %5305 = vmatprep.subr.mxu0 0.0
        %5306 = vmatpush1.xpose.msra.mxu0 0.0
        %5307 = vmatprep.subr.mxu0 0.0
        %5308 = vmatpush1.xpose.msra.mxu0 0.0
        %5309 = vmatprep.subr.mxu0 0.0
        %5310 = vmatpush1.xpose.msra.mxu0 0.0
        %5311 = vmatprep.subr.mxu0 0.0
        %5312 = vmatpush1.xpose.msra.mxu0 0.0
        %5313 = vmatprep.subr.mxu0 0.0
        %5314 = vmatpush1.xpose.msra.mxu0 0.0
        %5315 = vmatprep.subr.mxu0 0.0
        %5316 = vmatpush1.xpose.msra.mxu0 0.0
        %5317 = vmatprep.subr.mxu0 0.0
        %5318 = vmatpush1.xpose.msra.mxu0 0.0
        %5319 = vmatprep.subr.mxu0 0.0
        %5320 = vmatpush1.xpose.msra.mxu0 0.0
        %5321 = vmatprep.subr.mxu0 0.0
        %5322 = vmatpush1.xpose.msra.mxu0 0.0
        %5323 = vmatprep.subr.mxu0 0.0
        %5324 = vmatpush1.xpose.msra.mxu0 0.0
        %5325 = vmatprep.subr.mxu0 0.0
        %5326 = vmatpush1.xpose.msra.mxu0 0.0
        %5327 = vmatprep.subr.mxu0 0.0
        %5328 = vmatpush1.xpose.msra.mxu0 0.0
        %5329 = vmatprep.subr.mxu0 0.0
        %5330 = vmatpush1.xpose.msra.mxu0 0.0
        %5331 = vmatprep.subr.mxu0 0.0
        %5332 = vmatpush1.xpose.msra.mxu0 0.0
        %5333 = vmatprep.subr.mxu0 0.0
        %5334 = vmatpush1.xpose.msra.mxu0 0.0
        %5335 = vmatprep.subr.mxu0 0.0
        %5336 = vmatpush1.xpose.msra.mxu0 0.0
        %5337 = vmatprep.subr.mxu0 0.0
        %5338 = vmatpush1.xpose.msra.mxu0 0.0
        %5339 = vmatprep.subr.mxu0 0.0
        %5340 = vmatpush1.xpose.msra.mxu0 0.0
        %5341 = vmatprep.mubr.f32.mxu0 0.0
        %5342 = vmatmul.mubr.f32.gmra.mrb[0].mxu0 %v5230
        %v5343 = vpop.f32.mrb[0].mxu0
        %v5344 = vadd.f32 0.0, %v5343
        %v5345 = vpop.f32.mrb[0].mxu0
        %5346 = vmatprep.mubr.f32.mxu0 0.0
        %5347 = vmatmul.mubr.f32.gmra.mrb[0].mxu0 %v5233
        %v5348 = vpop.f32.mrb[0].mxu0
        %v5349 = vadd.f32 0.0, %v5348
        %v5350 = vpop.f32.mrb[0].mxu0
        %5351 = vmatprep.mubr.f32.mxu0 0.0
        %5352 = vmatmul.mubr.f32.gmra.mrb[0].mxu0 %v5236
        %v5353 = vpop.f32.mrb[0].mxu0
        %v5354 = vadd.f32 0.0, %v5353
        %v5355 = vpop.f32.mrb[0].mxu0
        %5356 = vmatprep.mubr.f32.mxu0 0.0
        %5357 = vmatmul.mubr.f32.gmra.mrb[0].mxu0 %v5239
        %v5358 = vpop.f32.mrb[0].mxu0
        %v5359 = vadd.f32 0.0, %v5358
        %v5360 = vpop.f32.mrb[0].mxu0
        %5361 = vmatprep.mubr.f32.mxu0 0.0
        %5362 = vmatmul.mubr.f32.gmra.mrb[0].mxu0 %v5242
        %v5363 = vpop.f32.mrb[0].mxu0
        %v5364 = vadd.f32 0.0, %v5363
        %v5365 = vpop.f32.mrb[0].mxu0
        %5366 = vmatprep.mubr.f32.mxu0 0.0
        %5367 = vmatmul.mubr.f32.gmra.mrb[0].mxu0 %v5245
        %v5368 = vpop.f32.mrb[0].mxu0
        %v5369 = vadd.f32 0.0, %v5368
        %v5370 = vpop.f32.mrb[0].mxu0
        %5371 = vmatprep.mubr.f32.mxu0 0.0
        %5372 = vmatmul.mubr.f32.gmra.mrb[0].mxu0 %v5248
        %v5373 = vpop.f32.mrb[0].mxu0
        %v5374 = vadd.f32 0.0, %v5373
        %v5375 = vpop.f32.mrb[0].mxu0
        %5376 = vmatprep.mubr.f32.mxu0 0.0
        %5377 = vmatmul.mubr.f32.gmra.mrb[0].mxu0 %v5251
        %v5378 = vpop.f32.mrb[0].mxu0
        %v5379 = vadd.f32 0.0, %v5378
        %v5380 = vpop.f32.mrb[0].mxu0
        %5381 = vdwg.mxu0
        %v5382 = vmul.f32 %v5344, 0.125
        %v5383 = vmul.f32 %v5349, 0.125
        %v5384 = vmul.f32 %v5354, 0.125
        %v5385 = vmul.f32 %v5359, 0.125
        %v5386 = vmul.f32 %v5364, 0.125
        %v5387 = vmul.f32 %v5369, 0.125
        %v5388 = vmul.f32 %v5374, 0.125
        %v5389 = vmul.f32 %v5379, 0.125
        %v5390 = vsel %vm1977, %v5382, -inf
        %5391 = vmax.xlane.f32.xlu0 %v5390
        %v5392 = vpop.xlane.xlu0 %5391
        %v5393 = vsel %vm1977, %v5383, -inf
        %5394 = vmax.xlane.f32.xlu0 %v5393
        %v5395 = vpop.xlane.xlu0 %5394
        %v5396 = vsel %vm1977, %v5384, -inf
        %5397 = vmax.xlane.f32.xlu0 %v5396
        %v5398 = vpop.xlane.xlu0 %5397
        %v5399 = vsel %vm1977, %v5385, -inf
        %5400 = vmax.xlane.f32.xlu0 %v5399
        %v5401 = vpop.xlane.xlu0 %5400
        %v5402 = vsel %vm1977, %v5386, -inf
        %5403 = vmax.xlane.f32.xlu0 %v5402
        %v5404 = vpop.xlane.xlu0 %5403
        %v5405 = vsel %vm1977, %v5387, -inf
        %5406 = vmax.xlane.f32.xlu0 %v5405
        %v5407 = vpop.xlane.xlu0 %5406
        %v5408 = vsel %vm1977, %v5388, -inf
        %5409 = vmax.xlane.f32.xlu0 %v5408
        %v5410 = vpop.xlane.xlu0 %5409
        %v5411 = vsel %vm1977, %v5389, -inf
        %5412 = vmax.xlane.f32.xlu0 %v5411
        %v5413 = vpop.xlane.xlu0 %5412
        %v5414 = vsub.f32 %v5382, %v5392
        %v5415 = vsub.f32 %v5383, %v5395
        %v5416 = vsub.f32 %v5384, %v5398
        %v5417 = vsub.f32 %v5385, %v5401
        %v5418 = vsub.f32 %v5386, %v5404
        %v5419 = vsub.f32 %v5387, %v5407
        %v5420 = vsub.f32 %v5388, %v5410
        %v5421 = vsub.f32 %v5389, %v5413
        %v5422 = vmul.f32 %v5414, 1.442695
        %v5423 = vpow.pop %v5422
        %v5424 = vmul.f32 %v5415, 1.442695
        %v5425 = vpow.pop %v5424
        %v5426 = vmul.f32 %v5416, 1.442695
        %v5427 = vpow.pop %v5426
        %v5428 = vmul.f32 %v5417, 1.442695
        %v5429 = vpow.pop %v5428
        %v5430 = vmul.f32 %v5418, 1.442695
        %v5431 = vpow.pop %v5430
        %v5432 = vmul.f32 %v5419, 1.442695
        %v5433 = vpow.pop %v5432
        %v5434 = vmul.f32 %v5420, 1.442695
        %v5435 = vpow.pop %v5434
        %v5436 = vmul.f32 %v5421, 1.442695
        %v5437 = vpow.pop %v5436
        %v5438 = vsel %vm1977, %v5423, 0.0
        %5439 = vadd.xlane.f32.xlu0 %v5438
        %v5440 = vpop.xlane.xlu0 %5439
        %v5441 = vsel %vm1977, %v5425, 0.0
        %5442 = vadd.xlane.f32.xlu0 %v5441
        %v5443 = vpop.xlane.xlu0 %5442
        %v5444 = vsel %vm1977, %v5427, 0.0
        %5445 = vadd.xlane.f32.xlu0 %v5444
        %v5446 = vpop.xlane.xlu0 %5445
        %v5447 = vsel %vm1977, %v5429, 0.0
        %5448 = vadd.xlane.f32.xlu0 %v5447
        %v5449 = vpop.xlane.xlu0 %5448
        %v5450 = vsel %vm1977, %v5431, 0.0
        %5451 = vadd.xlane.f32.xlu0 %v5450
        %v5452 = vpop.xlane.xlu0 %5451
        %v5453 = vsel %vm1977, %v5433, 0.0
        %5454 = vadd.xlane.f32.xlu0 %v5453
        %v5455 = vpop.xlane.xlu0 %5454
        %v5456 = vsel %vm1977, %v5435, 0.0
        %5457 = vadd.xlane.f32.xlu0 %v5456
        %v5458 = vpop.xlane.xlu0 %5457
        %v5459 = vsel %vm1977, %v5437, 0.0
        %5460 = vadd.xlane.f32.xlu0 %v5459
        %v5461 = vpop.xlane.xlu0 %5460
        %v5462 = vrcp.pop %v5440
        %v5463 = vrcp.pop %v5443
        %v5464 = vrcp.pop %v5446
        %v5465 = vrcp.pop %v5449
        %v5466 = vrcp.pop %v5452
        %v5467 = vrcp.pop %v5455
        %v5468 = vrcp.pop %v5458
        %v5469 = vrcp.pop %v5461
        %v5470 = vmul.f32 %v5423, %v5462
        %v5471 = vmul.f32 %v5425, %v5463
        %v5472 = vmul.f32 %v5427, %v5464
        %v5473 = vmul.f32 %v5429, %v5465
        %v5474 = vmul.f32 %v5431, %v5466
        %v5475 = vmul.f32 %v5433, %v5467
        %v5476 = vmul.f32 %v5435, %v5468
        %v5477 = vmul.f32 %v5437, %v5469
        %5478 = vrot.lane.b32.xlu0 %v5191, 64
        %v5479 = vpop.permute.xlu0 %5478
        %5480 = vrot.lane.b32.xlu0 %v5196, 64
        %v5481 = vpop.permute.xlu0 %5480
        %5482 = vrot.lane.b32.xlu0 %v5201, 64
        %v5483 = vpop.permute.xlu0 %5482
        %5484 = vrot.lane.b32.xlu0 %v5206, 64
        %v5485 = vpop.permute.xlu0 %5484
        %5486 = vrot.lane.b32.xlu0 %v5211, 64
        %v5487 = vpop.permute.xlu0 %5486
        %5488 = vrot.lane.b32.xlu0 %v5216, 64
        %v5489 = vpop.permute.xlu0 %5488
        %5490 = vrot.lane.b32.xlu0 %v5221, 64
        %v5491 = vpop.permute.xlu0 %5490
        %5492 = vrot.lane.b32.xlu0 %v5226, 64
        %v5493 = vpop.permute.xlu0 %5492
        %v5503 = vsel %vm1977, %v5470, 0
        %v5506 = vsel %vm1977, %v5471, 0
        %v5509 = vsel %vm1977, %v5472, 0
        %v5512 = vsel %vm1977, %v5473, 0
        %v5515 = vsel %vm1977, %v5474, 0
        %v5518 = vsel %vm1977, %v5475, 0
        %v5521 = vsel %vm1977, %v5476, 0
        %v5524 = vsel %vm1977, %v5477, 0
        %5526 = vmatprep.subr.mxu0 0.0
        %5527 = vmatpush1.msra.mxu0 %v5479
        %5528 = vmatprep.subr.mxu0 0.0
        %5529 = vmatpush1.msra.mxu0 %v5481
        %5530 = vmatprep.subr.mxu0 0.0
        %5531 = vmatpush1.msra.mxu0 %v5483
        %5532 = vmatprep.subr.mxu0 0.0
        %5533 = vmatpush1.msra.mxu0 %v5485
        %5534 = vmatprep.subr.mxu0 0.0
        %5535 = vmatpush1.msra.mxu0 %v5487
        %5536 = vmatprep.subr.mxu0 0.0
        %5537 = vmatpush1.msra.mxu0 %v5489
        %5538 = vmatprep.subr.mxu0 0.0
        %5539 = vmatpush1.msra.mxu0 %v5491
        %5540 = vmatprep.subr.mxu0 0.0
        %5541 = vmatpush1.msra.mxu0 %v5493
        %5542 = vmatprep.subr.mxu0 0.0
        %5543 = vmatpush1.msra.mxu0 0.0
        %5544 = vmatprep.subr.mxu0 0.0
        %5545 = vmatpush1.msra.mxu0 0.0
        %5546 = vmatprep.subr.mxu0 0.0
        %5547 = vmatpush1.msra.mxu0 0.0
        %5548 = vmatprep.subr.mxu0 0.0
        %5549 = vmatpush1.msra.mxu0 0.0
        %5550 = vmatprep.subr.mxu0 0.0
        %5551 = vmatpush1.msra.mxu0 0.0
        %5552 = vmatprep.subr.mxu0 0.0
        %5553 = vmatpush1.msra.mxu0 0.0
        %5554 = vmatprep.subr.mxu0 0.0
        %5555 = vmatpush1.msra.mxu0 0.0
        %5556 = vmatprep.subr.mxu0 0.0
        %5557 = vmatpush1.msra.mxu0 0.0
        %5558 = vmatprep.subr.mxu0 0.0
        %5559 = vmatpush1.msra.mxu0 0.0
        %5560 = vmatprep.subr.mxu0 0.0
        %5561 = vmatpush1.msra.mxu0 0.0
        %5562 = vmatprep.subr.mxu0 0.0
        %5563 = vmatpush1.msra.mxu0 0.0
        %5564 = vmatprep.subr.mxu0 0.0
        %5565 = vmatpush1.msra.mxu0 0.0
        %5566 = vmatprep.subr.mxu0 0.0
        %5567 = vmatpush1.msra.mxu0 0.0
        %5568 = vmatprep.subr.mxu0 0.0
        %5569 = vmatpush1.msra.mxu0 0.0
        %5570 = vmatprep.subr.mxu0 0.0
        %5571 = vmatpush1.msra.mxu0 0.0
        %5572 = vmatprep.subr.mxu0 0.0
        %5573 = vmatpush1.msra.mxu0 0.0
        %5574 = vmatprep.subr.mxu0 0.0
        %5575 = vmatpush1.msra.mxu0 0.0
        %5576 = vmatprep.subr.mxu0 0.0
        %5577 = vmatpush1.msra.mxu0 0.0
        %5578 = vmatprep.subr.mxu0 0.0
        %5579 = vmatpush1.msra.mxu0 0.0
        %5580 = vmatprep.subr.mxu0 0.0
        %5581 = vmatpush1.msra.mxu0 0.0
        %5582 = vmatprep.subr.mxu0 0.0
        %5583 = vmatpush1.msra.mxu0 0.0
        %5584 = vmatprep.subr.mxu0 0.0
        %5585 = vmatpush1.msra.mxu0 0.0
        %5586 = vmatprep.subr.mxu0 0.0
        %5587 = vmatpush1.msra.mxu0 0.0
        %5588 = vmatprep.subr.mxu0 0.0
        %5589 = vmatpush1.msra.mxu0 0.0
        %5590 = vmatprep.mubr.f32.mxu0 0.0
        %5591 = vmatmul.mubr.f32.gmra.mrb[0].mxu0 %v5503
        %v5592 = vpop.f32.mrb[0].mxu0
        %v5593 = vadd.f32 0.0, %v5592
        %v5594 = vpop.f32.mrb[0].mxu0
        %5595 = vmatprep.mubr.f32.mxu0 0.0
        %5596 = vmatmul.mubr.f32.gmra.mrb[0].mxu0 %v5506
        %v5597 = vpop.f32.mrb[0].mxu0
        %v5598 = vadd.f32 0.0, %v5597
        %v5599 = vpop.f32.mrb[0].mxu0
        %5600 = vmatprep.mubr.f32.mxu0 0.0
        %5601 = vmatmul.mubr.f32.gmra.mrb[0].mxu0 %v5509
        %v5602 = vpop.f32.mrb[0].mxu0
        %v5603 = vadd.f32 0.0, %v5602
        %v5604 = vpop.f32.mrb[0].mxu0
        %5605 = vmatprep.mubr.f32.mxu0 0.0
        %5606 = vmatmul.mubr.f32.gmra.mrb[0].mxu0 %v5512
        %v5607 = vpop.f32.mrb[0].mxu0
        %v5608 = vadd.f32 0.0, %v5607
        %v5609 = vpop.f32.mrb[0].mxu0
        %5610 = vmatprep.mubr.f32.mxu0 0.0
        %5611 = vmatmul.mubr.f32.gmra.mrb[0].mxu0 %v5515
        %v5612 = vpop.f32.mrb[0].mxu0
        %v5613 = vadd.f32 0.0, %v5612
        %v5614 = vpop.f32.mrb[0].mxu0
        %5615 = vmatprep.mubr.f32.mxu0 0.0
        %5616 = vmatmul.mubr.f32.gmra.mrb[0].mxu0 %v5518
        %v5617 = vpop.f32.mrb[0].mxu0
        %v5618 = vadd.f32 0.0, %v5617
        %v5619 = vpop.f32.mrb[0].mxu0
        %5620 = vmatprep.mubr.f32.mxu0 0.0
        %5621 = vmatmul.mubr.f32.gmra.mrb[0].mxu0 %v5521
        %v5622 = vpop.f32.mrb[0].mxu0
        %v5623 = vadd.f32 0.0, %v5622
        %v5624 = vpop.f32.mrb[0].mxu0
        %5625 = vmatprep.mubr.f32.mxu0 0.0
        %5626 = vmatmul.mubr.f32.gmra.mrb[0].mxu0 %v5524
        %v5627 = vpop.f32.mrb[0].mxu0
        %v5628 = vadd.f32 0.0, %v5627
        %v5629 = vpop.f32.mrb[0].mxu0
        %5630 = vdwg.mxu0
        %v5632 = vsel %vm1977, %v5593, 0
        %v5635 = vsel %vm1977, %v5598, 0
        %v5638 = vsel %vm1977, %v5603, 0
        %v5641 = vsel %vm1977, %v5608, 0
        %v5644 = vsel %vm1977, %v5613, 0
        %v5647 = vsel %vm1977, %v5618, 0
        %v5650 = vsel %vm1977, %v5623, 0
        %v5653 = vsel %vm1977, %v5628, 0
        %5655 = vmatprep.subr.mxu0 0.0
        %5656 = vmatpush1.msra.mxu0 %v4985
        %5657 = vmatprep.subr.mxu0 0.0
        %5658 = vmatpush1.msra.mxu0 %v4986
        %5659 = vmatprep.subr.mxu0 0.0
        %5660 = vmatpush1.msra.mxu0 %v4987
        %5661 = vmatprep.subr.mxu0 0.0
        %5662 = vmatpush1.msra.mxu0 %v4988
        %5663 = vmatprep.subr.mxu0 0.0
        %5664 = vmatpush1.msra.mxu0 %v4989
        %5665 = vmatprep.subr.mxu0 0.0
        %5666 = vmatpush1.msra.mxu0 %v4990
        %5667 = vmatprep.subr.mxu0 0.0
        %5668 = vmatpush1.msra.mxu0 %v4991
        %5669 = vmatprep.subr.mxu0 0.0
        %5670 = vmatpush1.msra.mxu0 %v4992
        %5671 = vmatprep.subr.mxu0 0.0
        %5672 = vmatpush1.msra.mxu0 0.0
        %5673 = vmatprep.subr.mxu0 0.0
        %5674 = vmatpush1.msra.mxu0 0.0
        %5675 = vmatprep.subr.mxu0 0.0
        %5676 = vmatpush1.msra.mxu0 0.0
        %5677 = vmatprep.subr.mxu0 0.0
        %5678 = vmatpush1.msra.mxu0 0.0
        %5679 = vmatprep.subr.mxu0 0.0
        %5680 = vmatpush1.msra.mxu0 0.0
        %5681 = vmatprep.subr.mxu0 0.0
        %5682 = vmatpush1.msra.mxu0 0.0
        %5683 = vmatprep.subr.mxu0 0.0
        %5684 = vmatpush1.msra.mxu0 0.0
        %5685 = vmatprep.subr.mxu0 0.0
        %5686 = vmatpush1.msra.mxu0 0.0
        %5687 = vmatprep.subr.mxu0 0.0
        %5688 = vmatpush1.msra.mxu0 0.0
        %5689 = vmatprep.subr.mxu0 0.0
        %5690 = vmatpush1.msra.mxu0 0.0
        %5691 = vmatprep.subr.mxu0 0.0
        %5692 = vmatpush1.msra.mxu0 0.0
        %5693 = vmatprep.subr.mxu0 0.0
        %5694 = vmatpush1.msra.mxu0 0.0
        %5695 = vmatprep.subr.mxu0 0.0
        %5696 = vmatpush1.msra.mxu0 0.0
        %5697 = vmatprep.subr.mxu0 0.0
        %5698 = vmatpush1.msra.mxu0 0.0
        %5699 = vmatprep.subr.mxu0 0.0
        %5700 = vmatpush1.msra.mxu0 0.0
        %5701 = vmatprep.subr.mxu0 0.0
        %5702 = vmatpush1.msra.mxu0 0.0
        %5703 = vmatprep.subr.mxu0 0.0
        %5704 = vmatpush1.msra.mxu0 0.0
        %5705 = vmatprep.subr.mxu0 0.0
        %5706 = vmatpush1.msra.mxu0 0.0
        %5707 = vmatprep.subr.mxu0 0.0
        %5708 = vmatpush1.msra.mxu0 0.0
        %5709 = vmatprep.subr.mxu0 0.0
        %5710 = vmatpush1.msra.mxu0 0.0
        %5711 = vmatprep.subr.mxu0 0.0
        %5712 = vmatpush1.msra.mxu0 0.0
        %5713 = vmatprep.subr.mxu0 0.0
        %5714 = vmatpush1.msra.mxu0 0.0
        %5715 = vmatprep.subr.mxu0 0.0
        %5716 = vmatpush1.msra.mxu0 0.0
        %5717 = vmatprep.subr.mxu0 0.0
        %5718 = vmatpush1.msra.mxu0 0.0
        %5719 = vmatprep.mubr.f32.mxu0 0.0
        %5720 = vmatmul.mubr.f32.gmra.mrb[0].mxu0 %v5632
        %v5721 = vpop.f32.mrb[0].mxu0
        %v5722 = vadd.f32 0.0, %v5721
        %v5723 = vpop.f32.mrb[0].mxu0
        %5724 = vmatprep.mubr.f32.mxu0 0.0
        %5725 = vmatmul.mubr.f32.gmra.mrb[0].mxu0 %v5635
        %v5726 = vpop.f32.mrb[0].mxu0
        %v5727 = vadd.f32 0.0, %v5726
        %v5728 = vpop.f32.mrb[0].mxu0
        %5729 = vmatprep.mubr.f32.mxu0 0.0
        %5730 = vmatmul.mubr.f32.gmra.mrb[0].mxu0 %v5638
        %v5731 = vpop.f32.mrb[0].mxu0
        %v5732 = vadd.f32 0.0, %v5731
        %v5733 = vpop.f32.mrb[0].mxu0
        %5734 = vmatprep.mubr.f32.mxu0 0.0
        %5735 = vmatmul.mubr.f32.gmra.mrb[0].mxu0 %v5641
        %v5736 = vpop.f32.mrb[0].mxu0
        %v5737 = vadd.f32 0.0, %v5736
        %v5738 = vpop.f32.mrb[0].mxu0
        %5739 = vmatprep.mubr.f32.mxu0 0.0
        %5740 = vmatmul.mubr.f32.gmra.mrb[0].mxu0 %v5644
        %v5741 = vpop.f32.mrb[0].mxu0
        %v5742 = vadd.f32 0.0, %v5741
        %v5743 = vpop.f32.mrb[0].mxu0
        %5744 = vmatprep.mubr.f32.mxu0 0.0
        %5745 = vmatmul.mubr.f32.gmra.mrb[0].mxu0 %v5647
        %v5746 = vpop.f32.mrb[0].mxu0
        %v5747 = vadd.f32 0.0, %v5746
        %v5748 = vpop.f32.mrb[0].mxu0
        %5749 = vmatprep.mubr.f32.mxu0 0.0
        %5750 = vmatmul.mubr.f32.gmra.mrb[0].mxu0 %v5650
        %v5751 = vpop.f32.mrb[0].mxu0
        %v5752 = vadd.f32 0.0, %v5751
        %v5753 = vpop.f32.mrb[0].mxu0
        %5754 = vmatprep.mubr.f32.mxu0 0.0
        %5755 = vmatmul.mubr.f32.gmra.mrb[0].mxu0 %v5653
        %v5756 = vpop.f32.mrb[0].mxu0
        %v5757 = vadd.f32 0.0, %v5756
        %v5758 = vpop.f32.mrb[0].mxu0
        %5759 = vdwg.mxu0
        %v5760 = vadd.f32 %v2743, %v5722
        %v5761 = vadd.f32 %v2744, %v5727
        %v5762 = vadd.f32 %v2745, %v5732
        %v5763 = vadd.f32 %v2746, %v5737
        %v5764 = vadd.f32 %v2747, %v5742
        %v5765 = vadd.f32 %v2748, %v5747
        %v5766 = vadd.f32 %v2749, %v5752
        %v5767 = vadd.f32 %v2750, %v5757
        %v5769 = vlaneseq
        %v5770 = vshrl.u32 %v5769, 7
        %v5771 = vsub.s32 0, %v5770
        %v5772 = vrot.slane %v5001, %v5771
        %v5775 = vsel %vm1977, %v5760, 0
        %v5778 = vsel %vm1977, %v5761, 0
        %v5781 = vsel %vm1977, %v5762, 0
        %v5784 = vsel %vm1977, %v5763, 0
        %v5787 = vsel %vm1977, %v5764, 0
        %v5790 = vsel %vm1977, %v5765, 0
        %v5793 = vsel %vm1977, %v5766, 0
        %v5796 = vsel %vm1977, %v5767, 0
        %5798 = vmatprep.subr.mxu0 0.0
        %5799 = vmatpush1.msra.mxu0 %v4993
        %5800 = vmatprep.subr.mxu0 0.0
        %5801 = vmatpush1.msra.mxu0 %v4994
        %5802 = vmatprep.subr.mxu0 0.0
        %5803 = vmatpush1.msra.mxu0 %v4995
        %5804 = vmatprep.subr.mxu0 0.0
        %5805 = vmatpush1.msra.mxu0 %v4996
        %5806 = vmatprep.subr.mxu0 0.0
        %5807 = vmatpush1.msra.mxu0 %v4997
        %5808 = vmatprep.subr.mxu0 0.0
        %5809 = vmatpush1.msra.mxu0 %v4998
        %5810 = vmatprep.subr.mxu0 0.0
        %5811 = vmatpush1.msra.mxu0 %v4999
        %5812 = vmatprep.subr.mxu0 0.0
        %5813 = vmatpush1.msra.mxu0 %v5000
        %5814 = vmatprep.subr.mxu0 0.0
        %5815 = vmatpush1.msra.mxu0 0.0
        %5816 = vmatprep.subr.mxu0 0.0
        %5817 = vmatpush1.msra.mxu0 0.0
        %5818 = vmatprep.subr.mxu0 0.0
        %5819 = vmatpush1.msra.mxu0 0.0
        %5820 = vmatprep.subr.mxu0 0.0
        %5821 = vmatpush1.msra.mxu0 0.0
        %5822 = vmatprep.subr.mxu0 0.0
        %5823 = vmatpush1.msra.mxu0 0.0
        %5824 = vmatprep.subr.mxu0 0.0
        %5825 = vmatpush1.msra.mxu0 0.0
        %5826 = vmatprep.subr.mxu0 0.0
        %5827 = vmatpush1.msra.mxu0 0.0
        %5828 = vmatprep.subr.mxu0 0.0
        %5829 = vmatpush1.msra.mxu0 0.0
        %5830 = vmatprep.subr.mxu0 0.0
        %5831 = vmatpush1.msra.mxu0 0.0
        %5832 = vmatprep.subr.mxu0 0.0
        %5833 = vmatpush1.msra.mxu0 0.0
        %5834 = vmatprep.subr.mxu0 0.0
        %5835 = vmatpush1.msra.mxu0 0.0
        %5836 = vmatprep.subr.mxu0 0.0
        %5837 = vmatpush1.msra.mxu0 0.0
        %5838 = vmatprep.subr.mxu0 0.0
        %5839 = vmatpush1.msra.mxu0 0.0
        %5840 = vmatprep.subr.mxu0 0.0
        %5841 = vmatpush1.msra.mxu0 0.0
        %5842 = vmatprep.subr.mxu0 0.0
        %5843 = vmatpush1.msra.mxu0 0.0
        %5844 = vmatprep.subr.mxu0 0.0
        %5845 = vmatpush1.msra.mxu0 0.0
        %5846 = vmatprep.subr.mxu0 0.0
        %5847 = vmatpush1.msra.mxu0 0.0
        %5848 = vmatprep.subr.mxu0 0.0
        %5849 = vmatpush1.msra.mxu0 0.0
        %5850 = vmatprep.subr.mxu0 0.0
        %5851 = vmatpush1.msra.mxu0 0.0
        %5852 = vmatprep.subr.mxu0 0.0
        %5853 = vmatpush1.msra.mxu0 0.0
        %5854 = vmatprep.subr.mxu0 0.0
        %5855 = vmatpush1.msra.mxu0 0.0
        %5856 = vmatprep.subr.mxu0 0.0
        %5857 = vmatpush1.msra.mxu0 0.0
        %5858 = vmatprep.subr.mxu0 0.0
        %5859 = vmatpush1.msra.mxu0 0.0
        %5860 = vmatprep.subr.mxu0 0.0
        %5861 = vmatpush1.msra.mxu0 0.0
        %5862 = vmatprep.mubr.f32.mxu0 0.0
        %5863 = vmatmul.mubr.f32.gmra.mrb[0].mxu0 %v5775
        %v5864 = vpop.f32.mrb[0].mxu0
        %v5865 = vadd.f32 %v5772, %v5864
        %v5866 = vpop.f32.mrb[0].mxu0
        %5867 = vmatprep.mubr.f32.mxu0 0.0
        %5868 = vmatmul.mubr.f32.gmra.mrb[0].mxu0 %v5778
        %v5869 = vpop.f32.mrb[0].mxu0
        %v5870 = vadd.f32 %v5772, %v5869
        %v5871 = vpop.f32.mrb[0].mxu0
        %5872 = vmatprep.mubr.f32.mxu0 0.0
        %5873 = vmatmul.mubr.f32.gmra.mrb[0].mxu0 %v5781
        %v5874 = vpop.f32.mrb[0].mxu0
        %v5875 = vadd.f32 %v5772, %v5874
        %v5876 = vpop.f32.mrb[0].mxu0
        %5877 = vmatprep.mubr.f32.mxu0 0.0
        %5878 = vmatmul.mubr.f32.gmra.mrb[0].mxu0 %v5784
        %v5879 = vpop.f32.mrb[0].mxu0
        %v5880 = vadd.f32 %v5772, %v5879
        %v5881 = vpop.f32.mrb[0].mxu0
        %5882 = vmatprep.mubr.f32.mxu0 0.0
        %5883 = vmatmul.mubr.f32.gmra.mrb[0].mxu0 %v5787
        %v5884 = vpop.f32.mrb[0].mxu0
        %v5885 = vadd.f32 %v5772, %v5884
        %v5886 = vpop.f32.mrb[0].mxu0
        %5887 = vmatprep.mubr.f32.mxu0 0.0
        %5888 = vmatmul.mubr.f32.gmra.mrb[0].mxu0 %v5790
        %v5889 = vpop.f32.mrb[0].mxu0
        %v5890 = vadd.f32 %v5772, %v5889
        %v5891 = vpop.f32.mrb[0].mxu0
        %5892 = vmatprep.mubr.f32.mxu0 0.0
        %5893 = vmatmul.mubr.f32.gmra.mrb[0].mxu0 %v5793
        %v5894 = vpop.f32.mrb[0].mxu0
        %v5895 = vadd.f32 %v5772, %v5894
        %v5896 = vpop.f32.mrb[0].mxu0
        %5897 = vmatprep.mubr.f32.mxu0 0.0
        %5898 = vmatmul.mubr.f32.gmra.mrb[0].mxu0 %v5796
        %v5899 = vpop.f32.mrb[0].mxu0
        %v5900 = vadd.f32 %v5772, %v5899
        %v5901 = vpop.f32.mrb[0].mxu0
        %5902 = vdwg.mxu0
        %v5903 = vmax.f32 %v5865, 0.0
        %v5904 = vmax.f32 %v5870, 0.0
        %v5905 = vmax.f32 %v5875, 0.0
        %v5906 = vmax.f32 %v5880, 0.0
        %v5907 = vmax.f32 %v5885, 0.0
        %v5908 = vmax.f32 %v5890, 0.0
        %v5909 = vmax.f32 %v5895, 0.0
        %v5910 = vmax.f32 %v5900, 0.0
        %5911 = vmatprep.subr.mxu0 0.0
        %5912 = vmatpush1.msra.mxu0 %v5002
        %5913 = vmatprep.subr.mxu0 0.0
        %5914 = vmatpush1.msra.mxu0 %v5003
        %5915 = vmatprep.subr.mxu0 0.0
        %5916 = vmatpush1.msra.mxu0 %v5004
        %5917 = vmatprep.subr.mxu0 0.0
        %5918 = vmatpush1.msra.mxu0 %v5005
        %5919 = vmatprep.subr.mxu0 0.0
        %5920 = vmatpush1.msra.mxu0 %v5006
        %5921 = vmatprep.subr.mxu0 0.0
        %5922 = vmatpush1.msra.mxu0 %v5007
        %5923 = vmatprep.subr.mxu0 0.0
        %5924 = vmatpush1.msra.mxu0 %v5008
        %5925 = vmatprep.subr.mxu0 0.0
        %5926 = vmatpush1.msra.mxu0 %v5009
        %5927 = vmatprep.subr.mxu0 0.0
        %5928 = vmatpush1.msra.mxu0 %v5010
        %5929 = vmatprep.subr.mxu0 0.0
        %5930 = vmatpush1.msra.mxu0 %v5011
        %5931 = vmatprep.subr.mxu0 0.0
        %5932 = vmatpush1.msra.mxu0 %v5012
        %5933 = vmatprep.subr.mxu0 0.0
        %5934 = vmatpush1.msra.mxu0 %v5013
        %5935 = vmatprep.subr.mxu0 0.0
        %5936 = vmatpush1.msra.mxu0 %v5014
        %5937 = vmatprep.subr.mxu0 0.0
        %5938 = vmatpush1.msra.mxu0 %v5015
        %5939 = vmatprep.subr.mxu0 0.0
        %5940 = vmatpush1.msra.mxu0 %v5016
        %5941 = vmatprep.subr.mxu0 0.0
        %5942 = vmatpush1.msra.mxu0 %v5017
        %5943 = vmatprep.subr.mxu0 0.0
        %5944 = vmatpush1.msra.mxu0 0.0
        %5945 = vmatprep.subr.mxu0 0.0
        %5946 = vmatpush1.msra.mxu0 0.0
        %5947 = vmatprep.subr.mxu0 0.0
        %5948 = vmatpush1.msra.mxu0 0.0
        %5949 = vmatprep.subr.mxu0 0.0
        %5950 = vmatpush1.msra.mxu0 0.0
        %5951 = vmatprep.subr.mxu0 0.0
        %5952 = vmatpush1.msra.mxu0 0.0
        %5953 = vmatprep.subr.mxu0 0.0
        %5954 = vmatpush1.msra.mxu0 0.0
        %5955 = vmatprep.subr.mxu0 0.0
        %5956 = vmatpush1.msra.mxu0 0.0
        %5957 = vmatprep.subr.mxu0 0.0
        %5958 = vmatpush1.msra.mxu0 0.0
        %5959 = vmatprep.subr.mxu0 0.0
        %5960 = vmatpush1.msra.mxu0 0.0
        %5961 = vmatprep.subr.mxu0 0.0
        %5962 = vmatpush1.msra.mxu0 0.0
        %5963 = vmatprep.subr.mxu0 0.0
        %5964 = vmatpush1.msra.mxu0 0.0
        %5965 = vmatprep.subr.mxu0 0.0
        %5966 = vmatpush1.msra.mxu0 0.0
        %5967 = vmatprep.subr.mxu0 0.0
        %5968 = vmatpush1.msra.mxu0 0.0
        %5969 = vmatprep.subr.mxu0 0.0
        %5970 = vmatpush1.msra.mxu0 0.0
        %5971 = vmatprep.subr.mxu0 0.0
        %5972 = vmatpush1.msra.mxu0 0.0
        %5973 = vmatprep.subr.mxu0 0.0
        %5974 = vmatpush1.msra.mxu0 0.0
        %5975 = vmatprep.mubr.f32.mxu0 0.0
        %5976 = vmatmul.mubr.f32.gmra.mrb[0].mxu0 %v5903
        %v5977 = vpop.f32.mrb[0].mxu0
        %v5978 = vadd.f32 0.0, %v5977
        %v5979 = vpop.f32.mrb[0].mxu0
        %5980 = vmatprep.mubr.f32.mxu0 0.0
        %5981 = vmatmul.mubr.f32.gmra.mrb[0].mxu0 %v5904
        %v5982 = vpop.f32.mrb[0].mxu0
        %v5983 = vadd.f32 0.0, %v5982
        %v5984 = vpop.f32.mrb[0].mxu0
        %5985 = vmatprep.mubr.f32.mxu0 0.0
        %5986 = vmatmul.mubr.f32.gmra.mrb[0].mxu0 %v5905
        %v5987 = vpop.f32.mrb[0].mxu0
        %v5988 = vadd.f32 0.0, %v5987
        %v5989 = vpop.f32.mrb[0].mxu0
        %5990 = vmatprep.mubr.f32.mxu0 0.0
        %5991 = vmatmul.mubr.f32.gmra.mrb[0].mxu0 %v5906
        %v5992 = vpop.f32.mrb[0].mxu0
        %v5993 = vadd.f32 0.0, %v5992
        %v5994 = vpop.f32.mrb[0].mxu0
        %5995 = vmatprep.mubr.f32.mxu0 0.0
        %5996 = vmatmul.mubr.f32.gmra.mrb[0].mxu0 %v5907
        %v5997 = vpop.f32.mrb[0].mxu0
        %v5998 = vadd.f32 0.0, %v5997
        %v5999 = vpop.f32.mrb[0].mxu0
        %6000 = vmatprep.mubr.f32.mxu0 0.0
        %6001 = vmatmul.mubr.f32.gmra.mrb[0].mxu0 %v5908
        %v6002 = vpop.f32.mrb[0].mxu0
        %v6003 = vadd.f32 0.0, %v6002
        %v6004 = vpop.f32.mrb[0].mxu0
        %6005 = vmatprep.mubr.f32.mxu0 0.0
        %6006 = vmatmul.mubr.f32.gmra.mrb[0].mxu0 %v5909
        %v6007 = vpop.f32.mrb[0].mxu0
        %v6008 = vadd.f32 0.0, %v6007
        %v6009 = vpop.f32.mrb[0].mxu0
        %6010 = vmatprep.mubr.f32.mxu0 0.0
        %6011 = vmatmul.mubr.f32.gmra.mrb[0].mxu0 %v5910
        %v6012 = vpop.f32.mrb[0].mxu0
        %v6013 = vadd.f32 0.0, %v6012
        %v6014 = vpop.f32.mrb[0].mxu0
        %6015 = vdwg.mxu0
        %v6016 = vadd.f32 %v5760, %v5978
        %v6017 = vadd.f32 %v5761, %v5983
        %v6018 = vadd.f32 %v5762, %v5988
        %v6019 = vadd.f32 %v5763, %v5993
        %v6020 = vadd.f32 %v5764, %v5998
        %v6021 = vadd.f32 %v5765, %v6003
        %v6022 = vadd.f32 %v5766, %v6008
        %v6023 = vadd.f32 %v5767, %v6013
        %v6025 = vlaneseq
        %v6026 = vshrl.u32 %v6025, 7
        %v6027 = vsub.s32 0, %v6026
        %v6028 = vrot.slane %v5018, %v6027
        %v6030 = vadd.f32 %v6016, %v6028
        %v6031 = vadd.f32 %v6017, %v6028
        %v6032 = vadd.f32 %v6018, %v6028
        %v6033 = vadd.f32 %v6019, %v6028
        %v6034 = vadd.f32 %v6020, %v6028
        %v6035 = vadd.f32 %v6021, %v6028
        %v6036 = vadd.f32 %v6022, %v6028
        %v6037 = vadd.f32 %v6023, %v6028
        %v6038 = vld [vmem:[%s73] sm:$0xff]
        %v6039 = vld [vmem:[%s73 + $0x8] sm:$0xff]
        %v6040 = vld [vmem:[%s73 + $0x10] sm:$0xff]
        %v6041 = vld [vmem:[%s73 + $0x18] sm:$0xff]
        %v6042 = vld [vmem:[%s73 + $0x20] sm:$0xff]
        %v6043 = vld [vmem:[%s73 + $0x28] sm:$0xff]
        %v6044 = vld [vmem:[%s73 + $0x30] sm:$0xff]
        %v6045 = vld [vmem:[%s73 + $0x38] sm:$0xff]
        %v6046 = vld [vmem:[%s75] sm:$0xff]
        %v6047 = vld [vmem:[%s75 + $0x8] sm:$0xff]
        %v6048 = vld [vmem:[%s75 + $0x10] sm:$0xff]
        %v6049 = vld [vmem:[%s75 + $0x18] sm:$0xff]
        %v6050 = vld [vmem:[%s75 + $0x20] sm:$0xff]
        %v6051 = vld [vmem:[%s75 + $0x28] sm:$0xff]
        %v6052 = vld [vmem:[%s75 + $0x30] sm:$0xff]
        %v6053 = vld [vmem:[%s75 + $0x38] sm:$0xff]
        %v6054 = vld [vmem:[#allocation15] sm:$0xff]
        %v6055 = vld [vmem:[#allocation15 + $0x8] sm:$0xff]
        %v6056 = vld [vmem:[#allocation15 + $0x10] sm:$0xff]
        %v6057 = vld [vmem:[#allocation15 + $0x18] sm:$0xff]
        %v6058 = vld [vmem:[#allocation15 + $0x20] sm:$0xff]
        %v6059 = vld [vmem:[#allocation15 + $0x28] sm:$0xff]
        %v6060 = vld [vmem:[#allocation15 + $0x30] sm:$0xff]
        %v6061 = vld [vmem:[#allocation15 + $0x38] sm:$0xff]
        %v6062 = vld [vmem:[#allocation17] sm:$0xff]
        %v6063 = vld [vmem:[#allocation17 + $0x8] sm:$0xff]
        %v6064 = vld [vmem:[#allocation17 + $0x10] sm:$0xff]
        %v6065 = vld [vmem:[#allocation17 + $0x18] sm:$0xff]
        %v6066 = vld [vmem:[#allocation17 + $0x20] sm:$0xff]
        %v6067 = vld [vmem:[#allocation17 + $0x28] sm:$0xff]
        %v6068 = vld [vmem:[#allocation17 + $0x30] sm:$0xff]
        %v6069 = vld [vmem:[#allocation17 + $0x38] sm:$0xff]
        %v6070 = vld [vmem:[%s81] sm:$0x1]
        %v6071 = vld [vmem:[%s83] sm:$0xff]
        %v6072 = vld [vmem:[%s83 + $0x8] sm:$0xff]
        %v6073 = vld [vmem:[%s83 + $0x10] sm:$0xff]
        %v6074 = vld [vmem:[%s83 + $0x18] sm:$0xff]
        %v6075 = vld [vmem:[%s83 + $0x20] sm:$0xff]
        %v6076 = vld [vmem:[%s83 + $0x28] sm:$0xff]
        %v6077 = vld [vmem:[%s83 + $0x30] sm:$0xff]
        %v6078 = vld [vmem:[%s83 + $0x38] sm:$0xff]
        %v6079 = vld [vmem:[%s83 + $0x40] sm:$0xff]
        %v6080 = vld [vmem:[%s83 + $0x48] sm:$0xff]
        %v6081 = vld [vmem:[%s83 + $0x50] sm:$0xff]
        %v6082 = vld [vmem:[%s83 + $0x58] sm:$0xff]
        %v6083 = vld [vmem:[%s83 + $0x60] sm:$0xff]
        %v6084 = vld [vmem:[%s83 + $0x68] sm:$0xff]
        %v6085 = vld [vmem:[%s83 + $0x70] sm:$0xff]
        %v6086 = vld [vmem:[%s83 + $0x78] sm:$0xff]
        %v6087 = vld [vmem:[%s85] sm:$0x1]
        %v6089 = vsel %vm1977, %v6030, 0
        %v6092 = vsel %vm1977, %v6031, 0
        %v6095 = vsel %vm1977, %v6032, 0
        %v6098 = vsel %vm1977, %v6033, 0
        %v6101 = vsel %vm1977, %v6034, 0
        %v6104 = vsel %vm1977, %v6035, 0
        %v6107 = vsel %vm1977, %v6036, 0
        %v6110 = vsel %vm1977, %v6037, 0
        %6112 = vmatprep.subr.mxu0 0.0
        %6113 = vmatpush1.msra.mxu0 %v6038
        %6114 = vmatprep.subr.mxu0 0.0
        %6115 = vmatpush1.msra.mxu0 %v6039
        %6116 = vmatprep.subr.mxu0 0.0
        %6117 = vmatpush1.msra.mxu0 %v6040
        %6118 = vmatprep.subr.mxu0 0.0
        %6119 = vmatpush1.msra.mxu0 %v6041
        %6120 = vmatprep.subr.mxu0 0.0
        %6121 = vmatpush1.msra.mxu0 %v6042
        %6122 = vmatprep.subr.mxu0 0.0
        %6123 = vmatpush1.msra.mxu0 %v6043
        %6124 = vmatprep.subr.mxu0 0.0
        %6125 = vmatpush1.msra.mxu0 %v6044
        %6126 = vmatprep.subr.mxu0 0.0
        %6127 = vmatpush1.msra.mxu0 %v6045
        %6128 = vmatprep.subr.mxu0 0.0
        %6129 = vmatpush1.msra.mxu0 0.0
        %6130 = vmatprep.subr.mxu0 0.0
        %6131 = vmatpush1.msra.mxu0 0.0
        %6132 = vmatprep.subr.mxu0 0.0
        %6133 = vmatpush1.msra.mxu0 0.0
        %6134 = vmatprep.subr.mxu0 0.0
        %6135 = vmatpush1.msra.mxu0 0.0
        %6136 = vmatprep.subr.mxu0 0.0
        %6137 = vmatpush1.msra.mxu0 0.0
        %6138 = vmatprep.subr.mxu0 0.0
        %6139 = vmatpush1.msra.mxu0 0.0
        %6140 = vmatprep.subr.mxu0 0.0
        %6141 = vmatpush1.msra.mxu0 0.0
        %6142 = vmatprep.subr.mxu0 0.0
        %6143 = vmatpush1.msra.mxu0 0.0
        %6144 = vmatprep.subr.mxu0 0.0
        %6145 = vmatpush1.msra.mxu0 0.0
        %6146 = vmatprep.subr.mxu0 0.0
        %6147 = vmatpush1.msra.mxu0 0.0
        %6148 = vmatprep.subr.mxu0 0.0
        %6149 = vmatpush1.msra.mxu0 0.0
        %6150 = vmatprep.subr.mxu0 0.0
        %6151 = vmatpush1.msra.mxu0 0.0
        %6152 = vmatprep.subr.mxu0 0.0
        %6153 = vmatpush1.msra.mxu0 0.0
        %6154 = vmatprep.subr.mxu0 0.0
        %6155 = vmatpush1.msra.mxu0 0.0
        %6156 = vmatprep.subr.mxu0 0.0
        %6157 = vmatpush1.msra.mxu0 0.0
        %6158 = vmatprep.subr.mxu0 0.0
        %6159 = vmatpush1.msra.mxu0 0.0
        %6160 = vmatprep.subr.mxu0 0.0
        %6161 = vmatpush1.msra.mxu0 0.0
        %6162 = vmatprep.subr.mxu0 0.0
        %6163 = vmatpush1.msra.mxu0 0.0
        %6164 = vmatprep.subr.mxu0 0.0
        %6165 = vmatpush1.msra.mxu0 0.0
        %6166 = vmatprep.subr.mxu0 0.0
        %6167 = vmatpush1.msra.mxu0 0.0
        %6168 = vmatprep.subr.mxu0 0.0
        %6169 = vmatpush1.msra.mxu0 0.0
        %6170 = vmatprep.subr.mxu0 0.0
        %6171 = vmatpush1.msra.mxu0 0.0
        %6172 = vmatprep.subr.mxu0 0.0
        %6173 = vmatpush1.msra.mxu0 0.0
        %6174 = vmatprep.subr.mxu0 0.0
        %6175 = vmatpush1.msra.mxu0 0.0
        %6176 = vmatprep.mubr.f32.mxu0 0.0
        %6177 = vmatmul.mubr.f32.gmra.mrb[0].mxu0 %v6089
        %v6178 = vpop.f32.mrb[0].mxu0
        %v6179 = vadd.f32 0.0, %v6178
        %v6180 = vpop.f32.mrb[0].mxu0
        %6181 = vmatprep.mubr.f32.mxu0 0.0
        %6182 = vmatmul.mubr.f32.gmra.mrb[0].mxu0 %v6092
        %v6183 = vpop.f32.mrb[0].mxu0
        %v6184 = vadd.f32 0.0, %v6183
        %v6185 = vpop.f32.mrb[0].mxu0
        %6186 = vmatprep.mubr.f32.mxu0 0.0
        %6187 = vmatmul.mubr.f32.gmra.mrb[0].mxu0 %v6095
        %v6188 = vpop.f32.mrb[0].mxu0
        %v6189 = vadd.f32 0.0, %v6188
        %v6190 = vpop.f32.mrb[0].mxu0
        %6191 = vmatprep.mubr.f32.mxu0 0.0
        %6192 = vmatmul.mubr.f32.gmra.mrb[0].mxu0 %v6098
        %v6193 = vpop.f32.mrb[0].mxu0
        %v6194 = vadd.f32 0.0, %v6193
        %v6195 = vpop.f32.mrb[0].mxu0
        %6196 = vmatprep.mubr.f32.mxu0 0.0
        %6197 = vmatmul.mubr.f32.gmra.mrb[0].mxu0 %v6101
        %v6198 = vpop.f32.mrb[0].mxu0
        %v6199 = vadd.f32 0.0, %v6198
        %v6200 = vpop.f32.mrb[0].mxu0
        %6201 = vmatprep.mubr.f32.mxu0 0.0
        %6202 = vmatmul.mubr.f32.gmra.mrb[0].mxu0 %v6104
        %v6203 = vpop.f32.mrb[0].mxu0
        %v6204 = vadd.f32 0.0, %v6203
        %v6205 = vpop.f32.mrb[0].mxu0
        %6206 = vmatprep.mubr.f32.mxu0 0.0
        %6207 = vmatmul.mubr.f32.gmra.mrb[0].mxu0 %v6107
        %v6208 = vpop.f32.mrb[0].mxu0
        %v6209 = vadd.f32 0.0, %v6208
        %v6210 = vpop.f32.mrb[0].mxu0
        %6211 = vmatprep.mubr.f32.mxu0 0.0
        %6212 = vmatmul.mubr.f32.gmra.mrb[0].mxu0 %v6110
        %v6213 = vpop.f32.mrb[0].mxu0
        %v6214 = vadd.f32 0.0, %v6213
        %v6215 = vpop.f32.mrb[0].mxu0
        %6216 = vdwg.mxu0
        %6217 = vmatprep.subr.mxu0 0.0
        %6218 = vmatpush1.msra.mxu0 %v6046
        %6219 = vmatprep.subr.mxu0 0.0
        %6220 = vmatpush1.msra.mxu0 %v6047
        %6221 = vmatprep.subr.mxu0 0.0
        %6222 = vmatpush1.msra.mxu0 %v6048
        %6223 = vmatprep.subr.mxu0 0.0
        %6224 = vmatpush1.msra.mxu0 %v6049
        %6225 = vmatprep.subr.mxu0 0.0
        %6226 = vmatpush1.msra.mxu0 %v6050
        %6227 = vmatprep.subr.mxu0 0.0
        %6228 = vmatpush1.msra.mxu0 %v6051
        %6229 = vmatprep.subr.mxu0 0.0
        %6230 = vmatpush1.msra.mxu0 %v6052
        %6231 = vmatprep.subr.mxu0 0.0
        %6232 = vmatpush1.msra.mxu0 %v6053
        %6233 = vmatprep.subr.mxu0 0.0
        %6234 = vmatpush1.msra.mxu0 0.0
        %6235 = vmatprep.subr.mxu0 0.0
        %6236 = vmatpush1.msra.mxu0 0.0
        %6237 = vmatprep.subr.mxu0 0.0
        %6238 = vmatpush1.msra.mxu0 0.0
        %6239 = vmatprep.subr.mxu0 0.0
        %6240 = vmatpush1.msra.mxu0 0.0
        %6241 = vmatprep.subr.mxu0 0.0
        %6242 = vmatpush1.msra.mxu0 0.0
        %6243 = vmatprep.subr.mxu0 0.0
        %6244 = vmatpush1.msra.mxu0 0.0
        %6245 = vmatprep.subr.mxu0 0.0
        %6246 = vmatpush1.msra.mxu0 0.0
        %6247 = vmatprep.subr.mxu0 0.0
        %6248 = vmatpush1.msra.mxu0 0.0
        %6249 = vmatprep.subr.mxu0 0.0
        %6250 = vmatpush1.msra.mxu0 0.0
        %6251 = vmatprep.subr.mxu0 0.0
        %6252 = vmatpush1.msra.mxu0 0.0
        %6253 = vmatprep.subr.mxu0 0.0
        %6254 = vmatpush1.msra.mxu0 0.0
        %6255 = vmatprep.subr.mxu0 0.0
        %6256 = vmatpush1.msra.mxu0 0.0
        %6257 = vmatprep.subr.mxu0 0.0
        %6258 = vmatpush1.msra.mxu0 0.0
        %6259 = vmatprep.subr.mxu0 0.0
        %6260 = vmatpush1.msra.mxu0 0.0
        %6261 = vmatprep.subr.mxu0 0.0
        %6262 = vmatpush1.msra.mxu0 0.0
        %6263 = vmatprep.subr.mxu0 0.0
        %6264 = vmatpush1.msra.mxu0 0.0
        %6265 = vmatprep.subr.mxu0 0.0
        %6266 = vmatpush1.msra.mxu0 0.0
        %6267 = vmatprep.subr.mxu0 0.0
        %6268 = vmatpush1.msra.mxu0 0.0
        %6269 = vmatprep.subr.mxu0 0.0
        %6270 = vmatpush1.msra.mxu0 0.0
        %6271 = vmatprep.subr.mxu0 0.0
        %6272 = vmatpush1.msra.mxu0 0.0
        %6273 = vmatprep.subr.mxu0 0.0
        %6274 = vmatpush1.msra.mxu0 0.0
        %6275 = vmatprep.subr.mxu0 0.0
        %6276 = vmatpush1.msra.mxu0 0.0
        %6277 = vmatprep.subr.mxu0 0.0
        %6278 = vmatpush1.msra.mxu0 0.0
        %6279 = vmatprep.subr.mxu0 0.0
        %6280 = vmatpush1.msra.mxu0 0.0
        %6281 = vmatprep.mubr.f32.mxu0 0.0
        %6282 = vmatmul.mubr.f32.gmra.mrb[0].mxu0 %v2802
        %v6283 = vpop.f32.mrb[0].mxu0
        %v6284 = vadd.f32 0.0, %v6283
        %v6285 = vpop.f32.mrb[0].mxu0
        %6286 = vmatprep.mubr.f32.mxu0 0.0
        %6287 = vmatmul.mubr.f32.gmra.mrb[0].mxu0 %v2805
        %v6288 = vpop.f32.mrb[0].mxu0
        %v6289 = vadd.f32 0.0, %v6288
        %v6290 = vpop.f32.mrb[0].mxu0
        %6291 = vmatprep.mubr.f32.mxu0 0.0
        %6292 = vmatmul.mubr.f32.gmra.mrb[0].mxu0 %v2808
        %v6293 = vpop.f32.mrb[0].mxu0
        %v6294 = vadd.f32 0.0, %v6293
        %v6295 = vpop.f32.mrb[0].mxu0
        %6296 = vmatprep.mubr.f32.mxu0 0.0
        %6297 = vmatmul.mubr.f32.gmra.mrb[0].mxu0 %v2811
        %v6298 = vpop.f32.mrb[0].mxu0
        %v6299 = vadd.f32 0.0, %v6298
        %v6300 = vpop.f32.mrb[0].mxu0
        %6301 = vmatprep.mubr.f32.mxu0 0.0
        %6302 = vmatmul.mubr.f32.gmra.mrb[0].mxu0 %v2814
        %v6303 = vpop.f32.mrb[0].mxu0
        %v6304 = vadd.f32 0.0, %v6303
        %v6305 = vpop.f32.mrb[0].mxu0
        %6306 = vmatprep.mubr.f32.mxu0 0.0
        %6307 = vmatmul.mubr.f32.gmra.mrb[0].mxu0 %v2817
        %v6308 = vpop.f32.mrb[0].mxu0
        %v6309 = vadd.f32 0.0, %v6308
        %v6310 = vpop.f32.mrb[0].mxu0
        %6311 = vmatprep.mubr.f32.mxu0 0.0
        %6312 = vmatmul.mubr.f32.gmra.mrb[0].mxu0 %v2820
        %v6313 = vpop.f32.mrb[0].mxu0
        %v6314 = vadd.f32 0.0, %v6313
        %v6315 = vpop.f32.mrb[0].mxu0
        %6316 = vmatprep.mubr.f32.mxu0 0.0
        %6317 = vmatmul.mubr.f32.gmra.mrb[0].mxu0 %v2823
        %v6318 = vpop.f32.mrb[0].mxu0
        %v6319 = vadd.f32 0.0, %v6318
        %v6320 = vpop.f32.mrb[0].mxu0
        %6321 = vdwg.mxu0
        %v6323 = vsel %vm1977, %v6179, 0
        %v6326 = vsel %vm1977, %v6184, 0
        %v6329 = vsel %vm1977, %v6189, 0
        %v6332 = vsel %vm1977, %v6194, 0
        %v6335 = vsel %vm1977, %v6199, 0
        %v6338 = vsel %vm1977, %v6204, 0
        %v6341 = vsel %vm1977, %v6209, 0
        %v6344 = vsel %vm1977, %v6214, 0
        %v6347 = vsel %vm1977, %v6284, 0
        %v6350 = vsel %vm1977, %v6289, 0
        %v6353 = vsel %vm1977, %v6294, 0
        %v6356 = vsel %vm1977, %v6299, 0
        %v6359 = vsel %vm1977, %v6304, 0
        %v6362 = vsel %vm1977, %v6309, 0
        %v6365 = vsel %vm1977, %v6314, 0
        %v6368 = vsel %vm1977, %v6319, 0
        %6370 = vmatprep.subr.mxu0 0.0
        %6371 = vmatpush1.xpose.msra.mxu0 %v6347
        %6372 = vmatprep.subr.mxu0 0.0
        %6373 = vmatpush1.xpose.msra.mxu0 %v6350
        %6374 = vmatprep.subr.mxu0 0.0
        %6375 = vmatpush1.xpose.msra.mxu0 %v6353
        %6376 = vmatprep.subr.mxu0 0.0
        %6377 = vmatpush1.xpose.msra.mxu0 %v6356
        %6378 = vmatprep.subr.mxu0 0.0
        %6379 = vmatpush1.xpose.msra.mxu0 %v6359
        %6380 = vmatprep.subr.mxu0 0.0
        %6381 = vmatpush1.xpose.msra.mxu0 %v6362
        %6382 = vmatprep.subr.mxu0 0.0
        %6383 = vmatpush1.xpose.msra.mxu0 %v6365
        %6384 = vmatprep.subr.mxu0 0.0
        %6385 = vmatpush1.xpose.msra.mxu0 %v6368
        %6386 = vmatprep.subr.mxu0 0.0
        %6387 = vmatpush1.xpose.msra.mxu0 0.0
        %6388 = vmatprep.subr.mxu0 0.0
        %6389 = vmatpush1.xpose.msra.mxu0 0.0
        %6390 = vmatprep.subr.mxu0 0.0
        %6391 = vmatpush1.xpose.msra.mxu0 0.0
        %6392 = vmatprep.subr.mxu0 0.0
        %6393 = vmatpush1.xpose.msra.mxu0 0.0
        %6394 = vmatprep.subr.mxu0 0.0
        %6395 = vmatpush1.xpose.msra.mxu0 0.0
        %6396 = vmatprep.subr.mxu0 0.0
        %6397 = vmatpush1.xpose.msra.mxu0 0.0
        %6398 = vmatprep.subr.mxu0 0.0
        %6399 = vmatpush1.xpose.msra.mxu0 0.0
        %6400 = vmatprep.subr.mxu0 0.0
        %6401 = vmatpush1.xpose.msra.mxu0 0.0
        %6402 = vmatprep.subr.mxu0 0.0
        %6403 = vmatpush1.xpose.msra.mxu0 0.0
        %6404 = vmatprep.subr.mxu0 0.0
        %6405 = vmatpush1.xpose.msra.mxu0 0.0
        %6406 = vmatprep.subr.mxu0 0.0
        %6407 = vmatpush1.xpose.msra.mxu0 0.0
        %6408 = vmatprep.subr.mxu0 0.0
        %6409 = vmatpush1.xpose.msra.mxu0 0.0
        %6410 = vmatprep.subr.mxu0 0.0
        %6411 = vmatpush1.xpose.msra.mxu0 0.0
        %6412 = vmatprep.subr.mxu0 0.0
        %6413 = vmatpush1.xpose.msra.mxu0 0.0
        %6414 = vmatprep.subr.mxu0 0.0
        %6415 = vmatpush1.xpose.msra.mxu0 0.0
        %6416 = vmatprep.subr.mxu0 0.0
        %6417 = vmatpush1.xpose.msra.mxu0 0.0
        %6418 = vmatprep.subr.mxu0 0.0
        %6419 = vmatpush1.xpose.msra.mxu0 0.0
        %6420 = vmatprep.subr.mxu0 0.0
        %6421 = vmatpush1.xpose.msra.mxu0 0.0
        %6422 = vmatprep.subr.mxu0 0.0
        %6423 = vmatpush1.xpose.msra.mxu0 0.0
        %6424 = vmatprep.subr.mxu0 0.0
        %6425 = vmatpush1.xpose.msra.mxu0 0.0
        %6426 = vmatprep.subr.mxu0 0.0
        %6427 = vmatpush1.xpose.msra.mxu0 0.0
        %6428 = vmatprep.subr.mxu0 0.0
        %6429 = vmatpush1.xpose.msra.mxu0 0.0
        %6430 = vmatprep.subr.mxu0 0.0
        %6431 = vmatpush1.xpose.msra.mxu0 0.0
        %6432 = vmatprep.subr.mxu0 0.0
        %6433 = vmatpush1.xpose.msra.mxu0 0.0
        %6434 = vmatprep.mubr.f32.mxu0 0.0
        %6435 = vmatmul.mubr.f32.gmra.mrb[0].mxu0 %v6323
        %v6436 = vpop.f32.mrb[0].mxu0
        %v6437 = vadd.f32 0.0, %v6436
        %v6438 = vpop.f32.mrb[0].mxu0
        %6439 = vmatprep.mubr.f32.mxu0 0.0
        %6440 = vmatmul.mubr.f32.gmra.mrb[0].mxu0 %v6326
        %v6441 = vpop.f32.mrb[0].mxu0
        %v6442 = vadd.f32 0.0, %v6441
        %v6443 = vpop.f32.mrb[0].mxu0
        %6444 = vmatprep.mubr.f32.mxu0 0.0
        %6445 = vmatmul.mubr.f32.gmra.mrb[0].mxu0 %v6329
        %v6446 = vpop.f32.mrb[0].mxu0
        %v6447 = vadd.f32 0.0, %v6446
        %v6448 = vpop.f32.mrb[0].mxu0
        %6449 = vmatprep.mubr.f32.mxu0 0.0
        %6450 = vmatmul.mubr.f32.gmra.mrb[0].mxu0 %v6332
        %v6451 = vpop.f32.mrb[0].mxu0
        %v6452 = vadd.f32 0.0, %v6451
        %v6453 = vpop.f32.mrb[0].mxu0
        %6454 = vmatprep.mubr.f32.mxu0 0.0
        %6455 = vmatmul.mubr.f32.gmra.mrb[0].mxu0 %v6335
        %v6456 = vpop.f32.mrb[0].mxu0
        %v6457 = vadd.f32 0.0, %v6456
        %v6458 = vpop.f32.mrb[0].mxu0
        %6459 = vmatprep.mubr.f32.mxu0 0.0
        %6460 = vmatmul.mubr.f32.gmra.mrb[0].mxu0 %v6338
        %v6461 = vpop.f32.mrb[0].mxu0
        %v6462 = vadd.f32 0.0, %v6461
        %v6463 = vpop.f32.mrb[0].mxu0
        %6464 = vmatprep.mubr.f32.mxu0 0.0
        %6465 = vmatmul.mubr.f32.gmra.mrb[0].mxu0 %v6341
        %v6466 = vpop.f32.mrb[0].mxu0
        %v6467 = vadd.f32 0.0, %v6466
        %v6468 = vpop.f32.mrb[0].mxu0
        %6469 = vmatprep.mubr.f32.mxu0 0.0
        %6470 = vmatmul.mubr.f32.gmra.mrb[0].mxu0 %v6344
        %v6471 = vpop.f32.mrb[0].mxu0
        %v6472 = vadd.f32 0.0, %v6471
        %v6473 = vpop.f32.mrb[0].mxu0
        %6474 = vdwg.mxu0
        %v6475 = vmul.f32 %v6437, 0.125
        %v6476 = vmul.f32 %v6442, 0.125
        %v6477 = vmul.f32 %v6447, 0.125
        %v6478 = vmul.f32 %v6452, 0.125
        %v6479 = vmul.f32 %v6457, 0.125
        %v6480 = vmul.f32 %v6462, 0.125
        %v6481 = vmul.f32 %v6467, 0.125
        %v6482 = vmul.f32 %v6472, 0.125
        %v6483 = vsel %vm1977, %v6475, -inf
        %6484 = vmax.xlane.f32.xlu0 %v6483
        %v6485 = vpop.xlane.xlu0 %6484
        %v6486 = vsel %vm1977, %v6476, -inf
        %6487 = vmax.xlane.f32.xlu0 %v6486
        %v6488 = vpop.xlane.xlu0 %6487
        %v6489 = vsel %vm1977, %v6477, -inf
        %6490 = vmax.xlane.f32.xlu0 %v6489
        %v6491 = vpop.xlane.xlu0 %6490
        %v6492 = vsel %vm1977, %v6478, -inf
        %6493 = vmax.xlane.f32.xlu0 %v6492
        %v6494 = vpop.xlane.xlu0 %6493
        %v6495 = vsel %vm1977, %v6479, -inf
        %6496 = vmax.xlane.f32.xlu0 %v6495
        %v6497 = vpop.xlane.xlu0 %6496
        %v6498 = vsel %vm1977, %v6480, -inf
        %6499 = vmax.xlane.f32.xlu0 %v6498
        %v6500 = vpop.xlane.xlu0 %6499
        %v6501 = vsel %vm1977, %v6481, -inf
        %6502 = vmax.xlane.f32.xlu0 %v6501
        %v6503 = vpop.xlane.xlu0 %6502
        %v6504 = vsel %vm1977, %v6482, -inf
        %6505 = vmax.xlane.f32.xlu0 %v6504
        %v6506 = vpop.xlane.xlu0 %6505
        %v6507 = vsub.f32 %v6475, %v6485
        %v6508 = vsub.f32 %v6476, %v6488
        %v6509 = vsub.f32 %v6477, %v6491
        %v6510 = vsub.f32 %v6478, %v6494
        %v6511 = vsub.f32 %v6479, %v6497
        %v6512 = vsub.f32 %v6480, %v6500
        %v6513 = vsub.f32 %v6481, %v6503
        %v6514 = vsub.f32 %v6482, %v6506
        %v6515 = vmul.f32 %v6507, 1.442695
        %v6516 = vpow.pop %v6515
        %v6517 = vmul.f32 %v6508, 1.442695
        %v6518 = vpow.pop %v6517
        %v6519 = vmul.f32 %v6509, 1.442695
        %v6520 = vpow.pop %v6519
        %v6521 = vmul.f32 %v6510, 1.442695
        %v6522 = vpow.pop %v6521
        %v6523 = vmul.f32 %v6511, 1.442695
        %v6524 = vpow.pop %v6523
        %v6525 = vmul.f32 %v6512, 1.442695
        %v6526 = vpow.pop %v6525
        %v6527 = vmul.f32 %v6513, 1.442695
        %v6528 = vpow.pop %v6527
        %v6529 = vmul.f32 %v6514, 1.442695
        %v6530 = vpow.pop %v6529
        %v6531 = vsel %vm1977, %v6516, 0.0
        %6532 = vadd.xlane.f32.xlu0 %v6531
        %v6533 = vpop.xlane.xlu0 %6532
        %v6534 = vsel %vm1977, %v6518, 0.0
        %6535 = vadd.xlane.f32.xlu0 %v6534
        %v6536 = vpop.xlane.xlu0 %6535
        %v6537 = vsel %vm1977, %v6520, 0.0
        %6538 = vadd.xlane.f32.xlu0 %v6537
        %v6539 = vpop.xlane.xlu0 %6538
        %v6540 = vsel %vm1977, %v6522, 0.0
        %6541 = vadd.xlane.f32.xlu0 %v6540
        %v6542 = vpop.xlane.xlu0 %6541
        %v6543 = vsel %vm1977, %v6524, 0.0
        %6544 = vadd.xlane.f32.xlu0 %v6543
        %v6545 = vpop.xlane.xlu0 %6544
        %v6546 = vsel %vm1977, %v6526, 0.0
        %6547 = vadd.xlane.f32.xlu0 %v6546
        %v6548 = vpop.xlane.xlu0 %6547
        %v6549 = vsel %vm1977, %v6528, 0.0
        %6550 = vadd.xlane.f32.xlu0 %v6549
        %v6551 = vpop.xlane.xlu0 %6550
        %v6552 = vsel %vm1977, %v6530, 0.0
        %6553 = vadd.xlane.f32.xlu0 %v6552
        %v6554 = vpop.xlane.xlu0 %6553
        %v6555 = vrcp.pop %v6533
        %v6556 = vrcp.pop %v6536
        %v6557 = vrcp.pop %v6539
        %v6558 = vrcp.pop %v6542
        %v6559 = vrcp.pop %v6545
        %v6560 = vrcp.pop %v6548
        %v6561 = vrcp.pop %v6551
        %v6562 = vrcp.pop %v6554
        %v6563 = vmul.f32 %v6516, %v6555
        %v6564 = vmul.f32 %v6518, %v6556
        %v6565 = vmul.f32 %v6520, %v6557
        %v6566 = vmul.f32 %v6522, %v6558
        %v6567 = vmul.f32 %v6524, %v6559
        %v6568 = vmul.f32 %v6526, %v6560
        %v6569 = vmul.f32 %v6528, %v6561
        %v6570 = vmul.f32 %v6530, %v6562
        %6571 = vrot.lane.b32.xlu0 %v6284, 64
        %v6572 = vpop.permute.xlu0 %6571
        %6573 = vrot.lane.b32.xlu0 %v6289, 64
        %v6574 = vpop.permute.xlu0 %6573
        %6575 = vrot.lane.b32.xlu0 %v6294, 64
        %v6576 = vpop.permute.xlu0 %6575
        %6577 = vrot.lane.b32.xlu0 %v6299, 64
        %v6578 = vpop.permute.xlu0 %6577
        %6579 = vrot.lane.b32.xlu0 %v6304, 64
        %v6580 = vpop.permute.xlu0 %6579
        %6581 = vrot.lane.b32.xlu0 %v6309, 64
        %v6582 = vpop.permute.xlu0 %6581
        %6583 = vrot.lane.b32.xlu0 %v6314, 64
        %v6584 = vpop.permute.xlu0 %6583
        %6585 = vrot.lane.b32.xlu0 %v6319, 64
        %v6586 = vpop.permute.xlu0 %6585
        %v6596 = vsel %vm1977, %v6563, 0
        %v6599 = vsel %vm1977, %v6564, 0
        %v6602 = vsel %vm1977, %v6565, 0
        %v6605 = vsel %vm1977, %v6566, 0
        %v6608 = vsel %vm1977, %v6567, 0
        %v6611 = vsel %vm1977, %v6568, 0
        %v6614 = vsel %vm1977, %v6569, 0
        %v6617 = vsel %vm1977, %v6570, 0
        %6619 = vmatprep.subr.mxu0 0.0
        %6620 = vmatpush1.msra.mxu0 %v6572
        %6621 = vmatprep.subr.mxu0 0.0
        %6622 = vmatpush1.msra.mxu0 %v6574
        %6623 = vmatprep.subr.mxu0 0.0
        %6624 = vmatpush1.msra.mxu0 %v6576
        %6625 = vmatprep.subr.mxu0 0.0
        %6626 = vmatpush1.msra.mxu0 %v6578
        %6627 = vmatprep.subr.mxu0 0.0
        %6628 = vmatpush1.msra.mxu0 %v6580
        %6629 = vmatprep.subr.mxu0 0.0
        %6630 = vmatpush1.msra.mxu0 %v6582
        %6631 = vmatprep.subr.mxu0 0.0
        %6632 = vmatpush1.msra.mxu0 %v6584
        %6633 = vmatprep.subr.mxu0 0.0
        %6634 = vmatpush1.msra.mxu0 %v6586
        %6635 = vmatprep.subr.mxu0 0.0
        %6636 = vmatpush1.msra.mxu0 0.0
        %6637 = vmatprep.subr.mxu0 0.0
        %6638 = vmatpush1.msra.mxu0 0.0
        %6639 = vmatprep.subr.mxu0 0.0
        %6640 = vmatpush1.msra.mxu0 0.0
        %6641 = vmatprep.subr.mxu0 0.0
        %6642 = vmatpush1.msra.mxu0 0.0
        %6643 = vmatprep.subr.mxu0 0.0
        %6644 = vmatpush1.msra.mxu0 0.0
        %6645 = vmatprep.subr.mxu0 0.0
        %6646 = vmatpush1.msra.mxu0 0.0
        %6647 = vmatprep.subr.mxu0 0.0
        %6648 = vmatpush1.msra.mxu0 0.0
        %6649 = vmatprep.subr.mxu0 0.0
        %6650 = vmatpush1.msra.mxu0 0.0
        %6651 = vmatprep.subr.mxu0 0.0
        %6652 = vmatpush1.msra.mxu0 0.0
        %6653 = vmatprep.subr.mxu0 0.0
        %6654 = vmatpush1.msra.mxu0 0.0
        %6655 = vmatprep.subr.mxu0 0.0
        %6656 = vmatpush1.msra.mxu0 0.0
        %6657 = vmatprep.subr.mxu0 0.0
        %6658 = vmatpush1.msra.mxu0 0.0
        %6659 = vmatprep.subr.mxu0 0.0
        %6660 = vmatpush1.msra.mxu0 0.0
        %6661 = vmatprep.subr.mxu0 0.0
        %6662 = vmatpush1.msra.mxu0 0.0
        %6663 = vmatprep.subr.mxu0 0.0
        %6664 = vmatpush1.msra.mxu0 0.0
        %6665 = vmatprep.subr.mxu0 0.0
        %6666 = vmatpush1.msra.mxu0 0.0
        %6667 = vmatprep.subr.mxu0 0.0
        %6668 = vmatpush1.msra.mxu0 0.0
        %6669 = vmatprep.subr.mxu0 0.0
        %6670 = vmatpush1.msra.mxu0 0.0
        %6671 = vmatprep.subr.mxu0 0.0
        %6672 = vmatpush1.msra.mxu0 0.0
        %6673 = vmatprep.subr.mxu0 0.0
        %6674 = vmatpush1.msra.mxu0 0.0
        %6675 = vmatprep.subr.mxu0 0.0
        %6676 = vmatpush1.msra.mxu0 0.0
        %6677 = vmatprep.subr.mxu0 0.0
        %6678 = vmatpush1.msra.mxu0 0.0
        %6679 = vmatprep.subr.mxu0 0.0
        %6680 = vmatpush1.msra.mxu0 0.0
        %6681 = vmatprep.subr.mxu0 0.0
        %6682 = vmatpush1.msra.mxu0 0.0
        %6683 = vmatprep.mubr.f32.mxu0 0.0
        %6684 = vmatmul.mubr.f32.gmra.mrb[0].mxu0 %v6596
        %v6685 = vpop.f32.mrb[0].mxu0
        %v6686 = vadd.f32 0.0, %v6685
        %v6687 = vpop.f32.mrb[0].mxu0
        %6688 = vmatprep.mubr.f32.mxu0 0.0
        %6689 = vmatmul.mubr.f32.gmra.mrb[0].mxu0 %v6599
        %v6690 = vpop.f32.mrb[0].mxu0
        %v6691 = vadd.f32 0.0, %v6690
        %v6692 = vpop.f32.mrb[0].mxu0
        %6693 = vmatprep.mubr.f32.mxu0 0.0
        %6694 = vmatmul.mubr.f32.gmra.mrb[0].mxu0 %v6602
        %v6695 = vpop.f32.mrb[0].mxu0
        %v6696 = vadd.f32 0.0, %v6695
        %v6697 = vpop.f32.mrb[0].mxu0
        %6698 = vmatprep.mubr.f32.mxu0 0.0
        %6699 = vmatmul.mubr.f32.gmra.mrb[0].mxu0 %v6605
        %v6700 = vpop.f32.mrb[0].mxu0
        %v6701 = vadd.f32 0.0, %v6700
        %v6702 = vpop.f32.mrb[0].mxu0
        %6703 = vmatprep.mubr.f32.mxu0 0.0
        %6704 = vmatmul.mubr.f32.gmra.mrb[0].mxu0 %v6608
        %v6705 = vpop.f32.mrb[0].mxu0
        %v6706 = vadd.f32 0.0, %v6705
        %v6707 = vpop.f32.mrb[0].mxu0
        %6708 = vmatprep.mubr.f32.mxu0 0.0
        %6709 = vmatmul.mubr.f32.gmra.mrb[0].mxu0 %v6611
        %v6710 = vpop.f32.mrb[0].mxu0
        %v6711 = vadd.f32 0.0, %v6710
        %v6712 = vpop.f32.mrb[0].mxu0
        %6713 = vmatprep.mubr.f32.mxu0 0.0
        %6714 = vmatmul.mubr.f32.gmra.mrb[0].mxu0 %v6614
        %v6715 = vpop.f32.mrb[0].mxu0
        %v6716 = vadd.f32 0.0, %v6715
        %v6717 = vpop.f32.mrb[0].mxu0
        %6718 = vmatprep.mubr.f32.mxu0 0.0
        %6719 = vmatmul.mubr.f32.gmra.mrb[0].mxu0 %v6617
        %v6720 = vpop.f32.mrb[0].mxu0
        %v6721 = vadd.f32 0.0, %v6720
        %v6722 = vpop.f32.mrb[0].mxu0
        %6723 = vdwg.mxu0
        %v6725 = vsel %vm1977, %v6686, 0
        %v6728 = vsel %vm1977, %v6691, 0
        %v6731 = vsel %vm1977, %v6696, 0
        %v6734 = vsel %vm1977, %v6701, 0
        %v6737 = vsel %vm1977, %v6706, 0
        %v6740 = vsel %vm1977, %v6711, 0
        %v6743 = vsel %vm1977, %v6716, 0
        %v6746 = vsel %vm1977, %v6721, 0
        %6748 = vmatprep.subr.mxu0 0.0
        %6749 = vmatpush1.msra.mxu0 %v6054
        %6750 = vmatprep.subr.mxu0 0.0
        %6751 = vmatpush1.msra.mxu0 %v6055
        %6752 = vmatprep.subr.mxu0 0.0
        %6753 = vmatpush1.msra.mxu0 %v6056
        %6754 = vmatprep.subr.mxu0 0.0
        %6755 = vmatpush1.msra.mxu0 %v6057
        %6756 = vmatprep.subr.mxu0 0.0
        %6757 = vmatpush1.msra.mxu0 %v6058
        %6758 = vmatprep.subr.mxu0 0.0
        %6759 = vmatpush1.msra.mxu0 %v6059
        %6760 = vmatprep.subr.mxu0 0.0
        %6761 = vmatpush1.msra.mxu0 %v6060
        %6762 = vmatprep.subr.mxu0 0.0
        %6763 = vmatpush1.msra.mxu0 %v6061
        %6764 = vmatprep.subr.mxu0 0.0
        %6765 = vmatpush1.msra.mxu0 0.0
        %6766 = vmatprep.subr.mxu0 0.0
        %6767 = vmatpush1.msra.mxu0 0.0
        %6768 = vmatprep.subr.mxu0 0.0
        %6769 = vmatpush1.msra.mxu0 0.0
        %6770 = vmatprep.subr.mxu0 0.0
        %6771 = vmatpush1.msra.mxu0 0.0
        %6772 = vmatprep.subr.mxu0 0.0
        %6773 = vmatpush1.msra.mxu0 0.0
        %6774 = vmatprep.subr.mxu0 0.0
        %6775 = vmatpush1.msra.mxu0 0.0
        %6776 = vmatprep.subr.mxu0 0.0
        %6777 = vmatpush1.msra.mxu0 0.0
        %6778 = vmatprep.subr.mxu0 0.0
        %6779 = vmatpush1.msra.mxu0 0.0
        %6780 = vmatprep.subr.mxu0 0.0
        %6781 = vmatpush1.msra.mxu0 0.0
        %6782 = vmatprep.subr.mxu0 0.0
        %6783 = vmatpush1.msra.mxu0 0.0
        %6784 = vmatprep.subr.mxu0 0.0
        %6785 = vmatpush1.msra.mxu0 0.0
        %6786 = vmatprep.subr.mxu0 0.0
        %6787 = vmatpush1.msra.mxu0 0.0
        %6788 = vmatprep.subr.mxu0 0.0
        %6789 = vmatpush1.msra.mxu0 0.0
        %6790 = vmatprep.subr.mxu0 0.0
        %6791 = vmatpush1.msra.mxu0 0.0
        %6792 = vmatprep.subr.mxu0 0.0
        %6793 = vmatpush1.msra.mxu0 0.0
        %6794 = vmatprep.subr.mxu0 0.0
        %6795 = vmatpush1.msra.mxu0 0.0
        %6796 = vmatprep.subr.mxu0 0.0
        %6797 = vmatpush1.msra.mxu0 0.0
        %6798 = vmatprep.subr.mxu0 0.0
        %6799 = vmatpush1.msra.mxu0 0.0
        %6800 = vmatprep.subr.mxu0 0.0
        %6801 = vmatpush1.msra.mxu0 0.0
        %6802 = vmatprep.subr.mxu0 0.0
        %6803 = vmatpush1.msra.mxu0 0.0
        %6804 = vmatprep.subr.mxu0 0.0
        %6805 = vmatpush1.msra.mxu0 0.0
        %6806 = vmatprep.subr.mxu0 0.0
        %6807 = vmatpush1.msra.mxu0 0.0
        %6808 = vmatprep.subr.mxu0 0.0
        %6809 = vmatpush1.msra.mxu0 0.0
        %6810 = vmatprep.subr.mxu0 0.0
        %6811 = vmatpush1.msra.mxu0 0.0
        %6812 = vmatprep.mubr.f32.mxu0 0.0
        %6813 = vmatmul.mubr.f32.gmra.mrb[0].mxu0 %v6725
        %v6814 = vpop.f32.mrb[0].mxu0
        %v6815 = vadd.f32 0.0, %v6814
        %v6816 = vpop.f32.mrb[0].mxu0
        %6817 = vmatprep.mubr.f32.mxu0 0.0
        %6818 = vmatmul.mubr.f32.gmra.mrb[0].mxu0 %v6728
        %v6819 = vpop.f32.mrb[0].mxu0
        %v6820 = vadd.f32 0.0, %v6819
        %v6821 = vpop.f32.mrb[0].mxu0
        %6822 = vmatprep.mubr.f32.mxu0 0.0
        %6823 = vmatmul.mubr.f32.gmra.mrb[0].mxu0 %v6731
        %v6824 = vpop.f32.mrb[0].mxu0
        %v6825 = vadd.f32 0.0, %v6824
        %v6826 = vpop.f32.mrb[0].mxu0
        %6827 = vmatprep.mubr.f32.mxu0 0.0
        %6828 = vmatmul.mubr.f32.gmra.mrb[0].mxu0 %v6734
        %v6829 = vpop.f32.mrb[0].mxu0
        %v6830 = vadd.f32 0.0, %v6829
        %v6831 = vpop.f32.mrb[0].mxu0
        %6832 = vmatprep.mubr.f32.mxu0 0.0
        %6833 = vmatmul.mubr.f32.gmra.mrb[0].mxu0 %v6737
        %v6834 = vpop.f32.mrb[0].mxu0
        %v6835 = vadd.f32 0.0, %v6834
        %v6836 = vpop.f32.mrb[0].mxu0
        %6837 = vmatprep.mubr.f32.mxu0 0.0
        %6838 = vmatmul.mubr.f32.gmra.mrb[0].mxu0 %v6740
        %v6839 = vpop.f32.mrb[0].mxu0
        %v6840 = vadd.f32 0.0, %v6839
        %v6841 = vpop.f32.mrb[0].mxu0
        %6842 = vmatprep.mubr.f32.mxu0 0.0
        %6843 = vmatmul.mubr.f32.gmra.mrb[0].mxu0 %v6743
        %v6844 = vpop.f32.mrb[0].mxu0
        %v6845 = vadd.f32 0.0, %v6844
        %v6846 = vpop.f32.mrb[0].mxu0
        %6847 = vmatprep.mubr.f32.mxu0 0.0
        %6848 = vmatmul.mubr.f32.gmra.mrb[0].mxu0 %v6746
        %v6849 = vpop.f32.mrb[0].mxu0
        %v6850 = vadd.f32 0.0, %v6849
        %v6851 = vpop.f32.mrb[0].mxu0
        %6852 = vdwg.mxu0
        %v6853 = vadd.f32 %v6030, %v6815
        %v6854 = vadd.f32 %v6031, %v6820
        %v6855 = vadd.f32 %v6032, %v6825
        %v6856 = vadd.f32 %v6033, %v6830
        %v6857 = vadd.f32 %v6034, %v6835
        %v6858 = vadd.f32 %v6035, %v6840
        %v6859 = vadd.f32 %v6036, %v6845
        %v6860 = vadd.f32 %v6037, %v6850
        %v6862 = vlaneseq
        %v6863 = vshrl.u32 %v6862, 7
        %v6864 = vsub.s32 0, %v6863
        %v6865 = vrot.slane %v6070, %v6864
        %v6868 = vsel %vm1977, %v6853, 0
        %v6871 = vsel %vm1977, %v6854, 0
        %v6874 = vsel %vm1977, %v6855, 0
        %v6877 = vsel %vm1977, %v6856, 0
        %v6880 = vsel %vm1977, %v6857, 0
        %v6883 = vsel %vm1977, %v6858, 0
        %v6886 = vsel %vm1977, %v6859, 0
        %v6889 = vsel %vm1977, %v6860, 0
        %6891 = vmatprep.subr.mxu0 0.0
        %6892 = vmatpush1.msra.mxu0 %v6062
        %6893 = vmatprep.subr.mxu0 0.0
        %6894 = vmatpush1.msra.mxu0 %v6063
        %6895 = vmatprep.subr.mxu0 0.0
        %6896 = vmatpush1.msra.mxu0 %v6064
        %6897 = vmatprep.subr.mxu0 0.0
        %6898 = vmatpush1.msra.mxu0 %v6065
        %6899 = vmatprep.subr.mxu0 0.0
        %6900 = vmatpush1.msra.mxu0 %v6066
        %6901 = vmatprep.subr.mxu0 0.0
        %6902 = vmatpush1.msra.mxu0 %v6067
        %6903 = vmatprep.subr.mxu0 0.0
        %6904 = vmatpush1.msra.mxu0 %v6068
        %6905 = vmatprep.subr.mxu0 0.0
        %6906 = vmatpush1.msra.mxu0 %v6069
        %6907 = vmatprep.subr.mxu0 0.0
        %6908 = vmatpush1.msra.mxu0 0.0
        %6909 = vmatprep.subr.mxu0 0.0
        %6910 = vmatpush1.msra.mxu0 0.0
        %6911 = vmatprep.subr.mxu0 0.0
        %6912 = vmatpush1.msra.mxu0 0.0
        %6913 = vmatprep.subr.mxu0 0.0
        %6914 = vmatpush1.msra.mxu0 0.0
        %6915 = vmatprep.subr.mxu0 0.0
        %6916 = vmatpush1.msra.mxu0 0.0
        %6917 = vmatprep.subr.mxu0 0.0
        %6918 = vmatpush1.msra.mxu0 0.0
        %6919 = vmatprep.subr.mxu0 0.0
        %6920 = vmatpush1.msra.mxu0 0.0
        %6921 = vmatprep.subr.mxu0 0.0
        %6922 = vmatpush1.msra.mxu0 0.0
        %6923 = vmatprep.subr.mxu0 0.0
        %6924 = vmatpush1.msra.mxu0 0.0
        %6925 = vmatprep.subr.mxu0 0.0
        %6926 = vmatpush1.msra.mxu0 0.0
        %6927 = vmatprep.subr.mxu0 0.0
        %6928 = vmatpush1.msra.mxu0 0.0
        %6929 = vmatprep.subr.mxu0 0.0
        %6930 = vmatpush1.msra.mxu0 0.0
        %6931 = vmatprep.subr.mxu0 0.0
        %6932 = vmatpush1.msra.mxu0 0.0
        %6933 = vmatprep.subr.mxu0 0.0
        %6934 = vmatpush1.msra.mxu0 0.0
        %6935 = vmatprep.subr.mxu0 0.0
        %6936 = vmatpush1.msra.mxu0 0.0
        %6937 = vmatprep.subr.mxu0 0.0
        %6938 = vmatpush1.msra.mxu0 0.0
        %6939 = vmatprep.subr.mxu0 0.0
        %6940 = vmatpush1.msra.mxu0 0.0
        %6941 = vmatprep.subr.mxu0 0.0
        %6942 = vmatpush1.msra.mxu0 0.0
        %6943 = vmatprep.subr.mxu0 0.0
        %6944 = vmatpush1.msra.mxu0 0.0
        %6945 = vmatprep.subr.mxu0 0.0
        %6946 = vmatpush1.msra.mxu0 0.0
        %6947 = vmatprep.subr.mxu0 0.0
        %6948 = vmatpush1.msra.mxu0 0.0
        %6949 = vmatprep.subr.mxu0 0.0
        %6950 = vmatpush1.msra.mxu0 0.0
        %6951 = vmatprep.subr.mxu0 0.0
        %6952 = vmatpush1.msra.mxu0 0.0
        %6953 = vmatprep.subr.mxu0 0.0
        %6954 = vmatpush1.msra.mxu0 0.0
        %6955 = vmatprep.mubr.f32.mxu0 0.0
        %6956 = vmatmul.mubr.f32.gmra.mrb[0].mxu0 %v6868
        %v6957 = vpop.f32.mrb[0].mxu0
        %v6958 = vadd.f32 %v6865, %v6957
        %v6959 = vpop.f32.mrb[0].mxu0
        %6960 = vmatprep.mubr.f32.mxu0 0.0
        %6961 = vmatmul.mubr.f32.gmra.mrb[0].mxu0 %v6871
        %v6962 = vpop.f32.mrb[0].mxu0
        %v6963 = vadd.f32 %v6865, %v6962
        %v6964 = vpop.f32.mrb[0].mxu0
        %6965 = vmatprep.mubr.f32.mxu0 0.0
        %6966 = vmatmul.mubr.f32.gmra.mrb[0].mxu0 %v6874
        %v6967 = vpop.f32.mrb[0].mxu0
        %v6968 = vadd.f32 %v6865, %v6967
        %v6969 = vpop.f32.mrb[0].mxu0
        %6970 = vmatprep.mubr.f32.mxu0 0.0
        %6971 = vmatmul.mubr.f32.gmra.mrb[0].mxu0 %v6877
        %v6972 = vpop.f32.mrb[0].mxu0
        %v6973 = vadd.f32 %v6865, %v6972
        %v6974 = vpop.f32.mrb[0].mxu0
        %6975 = vmatprep.mubr.f32.mxu0 0.0
        %6976 = vmatmul.mubr.f32.gmra.mrb[0].mxu0 %v6880
        %v6977 = vpop.f32.mrb[0].mxu0
        %v6978 = vadd.f32 %v6865, %v6977
        %v6979 = vpop.f32.mrb[0].mxu0
        %6980 = vmatprep.mubr.f32.mxu0 0.0
        %6981 = vmatmul.mubr.f32.gmra.mrb[0].mxu0 %v6883
        %v6982 = vpop.f32.mrb[0].mxu0
        %v6983 = vadd.f32 %v6865, %v6982
        %v6984 = vpop.f32.mrb[0].mxu0
        %6985 = vmatprep.mubr.f32.mxu0 0.0
        %6986 = vmatmul.mubr.f32.gmra.mrb[0].mxu0 %v6886
        %v6987 = vpop.f32.mrb[0].mxu0
        %v6988 = vadd.f32 %v6865, %v6987
        %v6989 = vpop.f32.mrb[0].mxu0
        %6990 = vmatprep.mubr.f32.mxu0 0.0
        %6991 = vmatmul.mubr.f32.gmra.mrb[0].mxu0 %v6889
        %v6992 = vpop.f32.mrb[0].mxu0
        %v6993 = vadd.f32 %v6865, %v6992
        %v6994 = vpop.f32.mrb[0].mxu0
        %6995 = vdwg.mxu0
        %v6996 = vmax.f32 %v6958, 0.0
        %v6997 = vmax.f32 %v6963, 0.0
        %v6998 = vmax.f32 %v6968, 0.0
        %v6999 = vmax.f32 %v6973, 0.0
        %v7000 = vmax.f32 %v6978, 0.0
        %v7001 = vmax.f32 %v6983, 0.0
        %v7002 = vmax.f32 %v6988, 0.0
        %v7003 = vmax.f32 %v6993, 0.0
        %7004 = vmatprep.subr.mxu0 0.0
        %7005 = vmatpush1.msra.mxu0 %v6071
        %7006 = vmatprep.subr.mxu0 0.0
        %7007 = vmatpush1.msra.mxu0 %v6072
        %7008 = vmatprep.subr.mxu0 0.0
        %7009 = vmatpush1.msra.mxu0 %v6073
        %7010 = vmatprep.subr.mxu0 0.0
        %7011 = vmatpush1.msra.mxu0 %v6074
        %7012 = vmatprep.subr.mxu0 0.0
        %7013 = vmatpush1.msra.mxu0 %v6075
        %7014 = vmatprep.subr.mxu0 0.0
        %7015 = vmatpush1.msra.mxu0 %v6076
        %7016 = vmatprep.subr.mxu0 0.0
        %7017 = vmatpush1.msra.mxu0 %v6077
        %7018 = vmatprep.subr.mxu0 0.0
        %7019 = vmatpush1.msra.mxu0 %v6078
        %7020 = vmatprep.subr.mxu0 0.0
        %7021 = vmatpush1.msra.mxu0 %v6079
        %7022 = vmatprep.subr.mxu0 0.0
        %7023 = vmatpush1.msra.mxu0 %v6080
        %7024 = vmatprep.subr.mxu0 0.0
        %7025 = vmatpush1.msra.mxu0 %v6081
        %7026 = vmatprep.subr.mxu0 0.0
        %7027 = vmatpush1.msra.mxu0 %v6082
        %7028 = vmatprep.subr.mxu0 0.0
        %7029 = vmatpush1.msra.mxu0 %v6083
        %7030 = vmatprep.subr.mxu0 0.0
        %7031 = vmatpush1.msra.mxu0 %v6084
        %7032 = vmatprep.subr.mxu0 0.0
        %7033 = vmatpush1.msra.mxu0 %v6085
        %7034 = vmatprep.subr.mxu0 0.0
        %7035 = vmatpush1.msra.mxu0 %v6086
        %7036 = vmatprep.subr.mxu0 0.0
        %7037 = vmatpush1.msra.mxu0 0.0
        %7038 = vmatprep.subr.mxu0 0.0
        %7039 = vmatpush1.msra.mxu0 0.0
        %7040 = vmatprep.subr.mxu0 0.0
        %7041 = vmatpush1.msra.mxu0 0.0
        %7042 = vmatprep.subr.mxu0 0.0
        %7043 = vmatpush1.msra.mxu0 0.0
        %7044 = vmatprep.subr.mxu0 0.0
        %7045 = vmatpush1.msra.mxu0 0.0
        %7046 = vmatprep.subr.mxu0 0.0
        %7047 = vmatpush1.msra.mxu0 0.0
        %7048 = vmatprep.subr.mxu0 0.0
        %7049 = vmatpush1.msra.mxu0 0.0
        %7050 = vmatprep.subr.mxu0 0.0
        %7051 = vmatpush1.msra.mxu0 0.0
        %7052 = vmatprep.subr.mxu0 0.0
        %7053 = vmatpush1.msra.mxu0 0.0
        %7054 = vmatprep.subr.mxu0 0.0
        %7055 = vmatpush1.msra.mxu0 0.0
        %7056 = vmatprep.subr.mxu0 0.0
        %7057 = vmatpush1.msra.mxu0 0.0
        %7058 = vmatprep.subr.mxu0 0.0
        %7059 = vmatpush1.msra.mxu0 0.0
        %7060 = vmatprep.subr.mxu0 0.0
        %7061 = vmatpush1.msra.mxu0 0.0
        %7062 = vmatprep.subr.mxu0 0.0
        %7063 = vmatpush1.msra.mxu0 0.0
        %7064 = vmatprep.subr.mxu0 0.0
        %7065 = vmatpush1.msra.mxu0 0.0
        %7066 = vmatprep.subr.mxu0 0.0
        %7067 = vmatpush1.msra.mxu0 0.0
        %7068 = vmatprep.mubr.f32.mxu0 0.0
        %7069 = vmatmul.mubr.f32.gmra.mrb[0].mxu0 %v6996
        %v7070 = vpop.f32.mrb[0].mxu0
        %v7071 = vadd.f32 0.0, %v7070
        %v7072 = vpop.f32.mrb[0].mxu0
        %7073 = vmatprep.mubr.f32.mxu0 0.0
        %7074 = vmatmul.mubr.f32.gmra.mrb[0].mxu0 %v6997
        %v7075 = vpop.f32.mrb[0].mxu0
        %v7076 = vadd.f32 0.0, %v7075
        %v7077 = vpop.f32.mrb[0].mxu0
        %7078 = vmatprep.mubr.f32.mxu0 0.0
        %7079 = vmatmul.mubr.f32.gmra.mrb[0].mxu0 %v6998
        %v7080 = vpop.f32.mrb[0].mxu0
        %v7081 = vadd.f32 0.0, %v7080
        %v7082 = vpop.f32.mrb[0].mxu0
        %7083 = vmatprep.mubr.f32.mxu0 0.0
        %7084 = vmatmul.mubr.f32.gmra.mrb[0].mxu0 %v6999
        %v7085 = vpop.f32.mrb[0].mxu0
        %v7086 = vadd.f32 0.0, %v7085
        %v7087 = vpop.f32.mrb[0].mxu0
        %7088 = vmatprep.mubr.f32.mxu0 0.0
        %7089 = vmatmul.mubr.f32.gmra.mrb[0].mxu0 %v7000
        %v7090 = vpop.f32.mrb[0].mxu0
        %v7091 = vadd.f32 0.0, %v7090
        %v7092 = vpop.f32.mrb[0].mxu0
        %7093 = vmatprep.mubr.f32.mxu0 0.0
        %7094 = vmatmul.mubr.f32.gmra.mrb[0].mxu0 %v7001
        %v7095 = vpop.f32.mrb[0].mxu0
        %v7096 = vadd.f32 0.0, %v7095
        %v7097 = vpop.f32.mrb[0].mxu0
        %7098 = vmatprep.mubr.f32.mxu0 0.0
        %7099 = vmatmul.mubr.f32.gmra.mrb[0].mxu0 %v7002
        %v7100 = vpop.f32.mrb[0].mxu0
        %v7101 = vadd.f32 0.0, %v7100
        %v7102 = vpop.f32.mrb[0].mxu0
        %7103 = vmatprep.mubr.f32.mxu0 0.0
        %7104 = vmatmul.mubr.f32.gmra.mrb[0].mxu0 %v7003
        %v7105 = vpop.f32.mrb[0].mxu0
        %v7106 = vadd.f32 0.0, %v7105
        %v7107 = vpop.f32.mrb[0].mxu0
        %7108 = vdwg.mxu0
        %v7109 = vadd.f32 %v6853, %v7071
        %v7110 = vadd.f32 %v6854, %v7076
        %v7111 = vadd.f32 %v6855, %v7081
        %v7112 = vadd.f32 %v6856, %v7086
        %v7113 = vadd.f32 %v6857, %v7091
        %v7114 = vadd.f32 %v6858, %v7096
        %v7115 = vadd.f32 %v6859, %v7101
        %v7116 = vadd.f32 %v6860, %v7106
        %v7118 = vlaneseq
        %v7119 = vshrl.u32 %v7118, 7
        %v7120 = vsub.s32 0, %v7119
        %v7121 = vrot.slane %v6087, %v7120
        %v7123 = vadd.f32 %v7109, %v7121
        %v7124 = vadd.f32 %v7110, %v7121
        %v7125 = vadd.f32 %v7111, %v7121
        %v7126 = vadd.f32 %v7112, %v7121
        %v7127 = vadd.f32 %v7113, %v7121
        %v7128 = vadd.f32 %v7114, %v7121
        %v7129 = vadd.f32 %v7115, %v7121
        %v7130 = vadd.f32 %v7116, %v7121
        %v7131 = vadd.f32 %v2743, %v7123
        %v7132 = vadd.f32 %v2744, %v7124
        %v7133 = vadd.f32 %v2745, %v7125
        %v7134 = vadd.f32 %v2746, %v7126
        %v7135 = vadd.f32 %v2747, %v7127
        %v7136 = vadd.f32 %v2748, %v7128
        %v7137 = vadd.f32 %v2749, %v7129
        %v7138 = vadd.f32 %v2750, %v7130
        %v7139 = vld [vmem:[#allocation18] sm:$0xff]
        %v7140 = vld [vmem:[#allocation18 + $0x8] sm:$0xff]
        %v7141 = vld [vmem:[#allocation18 + $0x10] sm:$0xff]
        %v7142 = vld [vmem:[#allocation18 + $0x18] sm:$0xff]
        %v7143 = vld [vmem:[#allocation18 + $0x20] sm:$0xff]
        %v7144 = vld [vmem:[#allocation18 + $0x28] sm:$0xff]
        %v7145 = vld [vmem:[#allocation18 + $0x30] sm:$0xff]
        %v7146 = vld [vmem:[#allocation18 + $0x38] sm:$0xff]
        %v7147 = vld [vmem:[#allocation20] sm:$0xff]
        %v7148 = vld [vmem:[#allocation20 + $0x8] sm:$0xff]
        %v7149 = vld [vmem:[#allocation20 + $0x10] sm:$0xff]
        %v7150 = vld [vmem:[#allocation20 + $0x18] sm:$0xff]
        %v7151 = vld [vmem:[#allocation20 + $0x20] sm:$0xff]
        %v7152 = vld [vmem:[#allocation20 + $0x28] sm:$0xff]
        %v7153 = vld [vmem:[#allocation20 + $0x30] sm:$0xff]
        %v7154 = vld [vmem:[#allocation20 + $0x38] sm:$0xff]
        %v7155 = vld [vmem:[#allocation21] sm:$0x1]
        %v7156 = vld [vmem:[#allocation23] sm:$0xff]
        %v7157 = vld [vmem:[#allocation23 + $0x8] sm:$0xff]
        %v7158 = vld [vmem:[#allocation23 + $0x10] sm:$0xff]
        %v7159 = vld [vmem:[#allocation23 + $0x18] sm:$0xff]
        %v7160 = vld [vmem:[#allocation23 + $0x20] sm:$0xff]
        %v7161 = vld [vmem:[#allocation23 + $0x28] sm:$0xff]
        %v7162 = vld [vmem:[#allocation23 + $0x30] sm:$0xff]
        %v7163 = vld [vmem:[#allocation23 + $0x38] sm:$0xff]
        %v7164 = vld [vmem:[#allocation24] sm:$0x1]
        %v7165 = vld [vmem:[#allocation26] sm:$0x1]
        %v7166 = vld [vmem:[#allocation3] sm:$0x1]
        %v7168 = vsel %vm1977, %v4961, 0
        %v7171 = vsel %vm1977, %v4962, 0
        %v7174 = vsel %vm1977, %v4963, 0
        %v7177 = vsel %vm1977, %v4964, 0
        %v7180 = vsel %vm1977, %v4965, 0
        %v7183 = vsel %vm1977, %v4966, 0
        %v7186 = vsel %vm1977, %v4967, 0
        %v7189 = vsel %vm1977, %v4968, 0
        %7191 = vmatprep.subr.mxu0 0.0
        %7192 = vmatpush1.msra.mxu0 %v7139
        %7193 = vmatprep.subr.mxu0 0.0
        %7194 = vmatpush1.msra.mxu0 %v7140
        %7195 = vmatprep.subr.mxu0 0.0
        %7196 = vmatpush1.msra.mxu0 %v7141
        %7197 = vmatprep.subr.mxu0 0.0
        %7198 = vmatpush1.msra.mxu0 %v7142
        %7199 = vmatprep.subr.mxu0 0.0
        %7200 = vmatpush1.msra.mxu0 %v7143
        %7201 = vmatprep.subr.mxu0 0.0
        %7202 = vmatpush1.msra.mxu0 %v7144
        %7203 = vmatprep.subr.mxu0 0.0
        %7204 = vmatpush1.msra.mxu0 %v7145
        %7205 = vmatprep.subr.mxu0 0.0
        %7206 = vmatpush1.msra.mxu0 %v7146
        %7207 = vmatprep.subr.mxu0 0.0
        %7208 = vmatpush1.msra.mxu0 0.0
        %7209 = vmatprep.subr.mxu0 0.0
        %7210 = vmatpush1.msra.mxu0 0.0
        %7211 = vmatprep.subr.mxu0 0.0
        %7212 = vmatpush1.msra.mxu0 0.0
        %7213 = vmatprep.subr.mxu0 0.0
        %7214 = vmatpush1.msra.mxu0 0.0
        %7215 = vmatprep.subr.mxu0 0.0
        %7216 = vmatpush1.msra.mxu0 0.0
        %7217 = vmatprep.subr.mxu0 0.0
        %7218 = vmatpush1.msra.mxu0 0.0
        %7219 = vmatprep.subr.mxu0 0.0
        %7220 = vmatpush1.msra.mxu0 0.0
        %7221 = vmatprep.subr.mxu0 0.0
        %7222 = vmatpush1.msra.mxu0 0.0
        %7223 = vmatprep.subr.mxu0 0.0
        %7224 = vmatpush1.msra.mxu0 0.0
        %7225 = vmatprep.subr.mxu0 0.0
        %7226 = vmatpush1.msra.mxu0 0.0
        %7227 = vmatprep.subr.mxu0 0.0
        %7228 = vmatpush1.msra.mxu0 0.0
        %7229 = vmatprep.subr.mxu0 0.0
        %7230 = vmatpush1.msra.mxu0 0.0
        %7231 = vmatprep.subr.mxu0 0.0
        %7232 = vmatpush1.msra.mxu0 0.0
        %7233 = vmatprep.subr.mxu0 0.0
        %7234 = vmatpush1.msra.mxu0 0.0
        %7235 = vmatprep.subr.mxu0 0.0
        %7236 = vmatpush1.msra.mxu0 0.0
        %7237 = vmatprep.subr.mxu0 0.0
        %7238 = vmatpush1.msra.mxu0 0.0
        %7239 = vmatprep.subr.mxu0 0.0
        %7240 = vmatpush1.msra.mxu0 0.0
        %7241 = vmatprep.subr.mxu0 0.0
        %7242 = vmatpush1.msra.mxu0 0.0
        %7243 = vmatprep.subr.mxu0 0.0
        %7244 = vmatpush1.msra.mxu0 0.0
        %7245 = vmatprep.subr.mxu0 0.0
        %7246 = vmatpush1.msra.mxu0 0.0
        %7247 = vmatprep.subr.mxu0 0.0
        %7248 = vmatpush1.msra.mxu0 0.0
        %7249 = vmatprep.subr.mxu0 0.0
        %7250 = vmatpush1.msra.mxu0 0.0
        %7251 = vmatprep.subr.mxu0 0.0
        %7252 = vmatpush1.msra.mxu0 0.0
        %7253 = vmatprep.subr.mxu0 0.0
        %7254 = vmatpush1.msra.mxu0 0.0
        %7255 = vmatprep.mubr.f32.mxu0 0.0
        %7256 = vmatmul.mubr.f32.gmra.mrb[0].mxu0 %v7168
        %v7257 = vpop.f32.mrb[0].mxu0
        %v7258 = vadd.f32 0.0, %v7257
        %v7259 = vpop.f32.mrb[0].mxu0
        %7260 = vmatprep.mubr.f32.mxu0 0.0
        %7261 = vmatmul.mubr.f32.gmra.mrb[0].mxu0 %v7171
        %v7262 = vpop.f32.mrb[0].mxu0
        %v7263 = vadd.f32 0.0, %v7262
        %v7264 = vpop.f32.mrb[0].mxu0
        %7265 = vmatprep.mubr.f32.mxu0 0.0
        %7266 = vmatmul.mubr.f32.gmra.mrb[0].mxu0 %v7174
        %v7267 = vpop.f32.mrb[0].mxu0
        %v7268 = vadd.f32 0.0, %v7267
        %v7269 = vpop.f32.mrb[0].mxu0
        %7270 = vmatprep.mubr.f32.mxu0 0.0
        %7271 = vmatmul.mubr.f32.gmra.mrb[0].mxu0 %v7177
        %v7272 = vpop.f32.mrb[0].mxu0
        %v7273 = vadd.f32 0.0, %v7272
        %v7274 = vpop.f32.mrb[0].mxu0
        %7275 = vmatprep.mubr.f32.mxu0 0.0
        %7276 = vmatmul.mubr.f32.gmra.mrb[0].mxu0 %v7180
        %v7277 = vpop.f32.mrb[0].mxu0
        %v7278 = vadd.f32 0.0, %v7277
        %v7279 = vpop.f32.mrb[0].mxu0
        %7280 = vmatprep.mubr.f32.mxu0 0.0
        %7281 = vmatmul.mubr.f32.gmra.mrb[0].mxu0 %v7183
        %v7282 = vpop.f32.mrb[0].mxu0
        %v7283 = vadd.f32 0.0, %v7282
        %v7284 = vpop.f32.mrb[0].mxu0
        %7285 = vmatprep.mubr.f32.mxu0 0.0
        %7286 = vmatmul.mubr.f32.gmra.mrb[0].mxu0 %v7186
        %v7287 = vpop.f32.mrb[0].mxu0
        %v7288 = vadd.f32 0.0, %v7287
        %v7289 = vpop.f32.mrb[0].mxu0
        %7290 = vmatprep.mubr.f32.mxu0 0.0
        %7291 = vmatmul.mubr.f32.gmra.mrb[0].mxu0 %v7189
        %v7292 = vpop.f32.mrb[0].mxu0
        %v7293 = vadd.f32 0.0, %v7292
        %v7294 = vpop.f32.mrb[0].mxu0
        %7295 = vdwg.mxu0
        %7296 = vst.msk [vmem:[#allocation2] sm:$0xff] %vm1977, %v7258
        %7297 = vst.msk [vmem:[#allocation2 + $0x8] sm:$0xff] %vm1977, %v7263
        %7298 = vst.msk [vmem:[#allocation2 + $0x10] sm:$0xff] %vm1977, %v7268
        %7299 = vst.msk [vmem:[#allocation2 + $0x18] sm:$0xff] %vm1977, %v7273
        %7300 = vst.msk [vmem:[#allocation2 + $0x20] sm:$0xff] %vm1977, %v7278
        %7301 = vst.msk [vmem:[#allocation2 + $0x28] sm:$0xff] %vm1977, %v7283
        %7302 = vst.msk [vmem:[#allocation2 + $0x30] sm:$0xff] %vm1977, %v7288
        %7303 = vst.msk [vmem:[#allocation2 + $0x38] sm:$0xff] %vm1977, %v7293
        %v7305 = vlaneseq
        %v7306 = vshrl.u32 %v7305, 7
        %v7307 = vsub.s32 0, %v7306
        %v7308 = vrot.slane %v7155, %v7307
        %v7311 = vsel %vm1977, %v7131, 0
        %v7314 = vsel %vm1977, %v7132, 0
        %v7317 = vsel %vm1977, %v7133, 0
        %v7320 = vsel %vm1977, %v7134, 0
        %v7323 = vsel %vm1977, %v7135, 0
        %v7326 = vsel %vm1977, %v7136, 0
        %v7329 = vsel %vm1977, %v7137, 0
        %v7332 = vsel %vm1977, %v7138, 0
        %7334 = vmatprep.subr.mxu0 0.0
        %7335 = vmatpush1.msra.mxu0 %v7147
        %7336 = vmatprep.subr.mxu0 0.0
        %7337 = vmatpush1.msra.mxu0 %v7148
        %7338 = vmatprep.subr.mxu0 0.0
        %7339 = vmatpush1.msra.mxu0 %v7149
        %7340 = vmatprep.subr.mxu0 0.0
        %7341 = vmatpush1.msra.mxu0 %v7150
        %7342 = vmatprep.subr.mxu0 0.0
        %7343 = vmatpush1.msra.mxu0 %v7151
        %7344 = vmatprep.subr.mxu0 0.0
        %7345 = vmatpush1.msra.mxu0 %v7152
        %7346 = vmatprep.subr.mxu0 0.0
        %7347 = vmatpush1.msra.mxu0 %v7153
        %7348 = vmatprep.subr.mxu0 0.0
        %7349 = vmatpush1.msra.mxu0 %v7154
        %7350 = vmatprep.subr.mxu0 0.0
        %7351 = vmatpush1.msra.mxu0 0.0
        %7352 = vmatprep.subr.mxu0 0.0
        %7353 = vmatpush1.msra.mxu0 0.0
        %7354 = vmatprep.subr.mxu0 0.0
        %7355 = vmatpush1.msra.mxu0 0.0
        %7356 = vmatprep.subr.mxu0 0.0
        %7357 = vmatpush1.msra.mxu0 0.0
        %7358 = vmatprep.subr.mxu0 0.0
        %7359 = vmatpush1.msra.mxu0 0.0
        %7360 = vmatprep.subr.mxu0 0.0
        %7361 = vmatpush1.msra.mxu0 0.0
        %7362 = vmatprep.subr.mxu0 0.0
        %7363 = vmatpush1.msra.mxu0 0.0
        %7364 = vmatprep.subr.mxu0 0.0
        %7365 = vmatpush1.msra.mxu0 0.0
        %7366 = vmatprep.subr.mxu0 0.0
        %7367 = vmatpush1.msra.mxu0 0.0
        %7368 = vmatprep.subr.mxu0 0.0
        %7369 = vmatpush1.msra.mxu0 0.0
        %7370 = vmatprep.subr.mxu0 0.0
        %7371 = vmatpush1.msra.mxu0 0.0
        %7372 = vmatprep.subr.mxu0 0.0
        %7373 = vmatpush1.msra.mxu0 0.0
        %7374 = vmatprep.subr.mxu0 0.0
        %7375 = vmatpush1.msra.mxu0 0.0
        %7376 = vmatprep.subr.mxu0 0.0
        %7377 = vmatpush1.msra.mxu0 0.0
        %7378 = vmatprep.subr.mxu0 0.0
        %7379 = vmatpush1.msra.mxu0 0.0
        %7380 = vmatprep.subr.mxu0 0.0
        %7381 = vmatpush1.msra.mxu0 0.0
        %7382 = vmatprep.subr.mxu0 0.0
        %7383 = vmatpush1.msra.mxu0 0.0
        %7384 = vmatprep.subr.mxu0 0.0
        %7385 = vmatpush1.msra.mxu0 0.0
        %7386 = vmatprep.subr.mxu0 0.0
        %7387 = vmatpush1.msra.mxu0 0.0
        %7388 = vmatprep.subr.mxu0 0.0
        %7389 = vmatpush1.msra.mxu0 0.0
        %7390 = vmatprep.subr.mxu0 0.0
        %7391 = vmatpush1.msra.mxu0 0.0
        %7392 = vmatprep.subr.mxu0 0.0
        %7393 = vmatpush1.msra.mxu0 0.0
        %7394 = vmatprep.subr.mxu0 0.0
        %7395 = vmatpush1.msra.mxu0 0.0
        %7396 = vmatprep.subr.mxu0 0.0
        %7397 = vmatpush1.msra.mxu0 0.0
        %7398 = vmatprep.mubr.f32.mxu0 0.0
        %7399 = vmatmul.mubr.f32.gmra.mrb[0].mxu0 %v7311
        %v7400 = vpop.f32.mrb[0].mxu0
        %v7401 = vadd.f32 %v7308, %v7400
        %v7402 = vpop.f32.mrb[0].mxu0
        %7403 = vmatprep.mubr.f32.mxu0 0.0
        %7404 = vmatmul.mubr.f32.gmra.mrb[0].mxu0 %v7314
        %v7405 = vpop.f32.mrb[0].mxu0
        %v7406 = vadd.f32 %v7308, %v7405
        %v7407 = vpop.f32.mrb[0].mxu0
        %7408 = vmatprep.mubr.f32.mxu0 0.0
        %7409 = vmatmul.mubr.f32.gmra.mrb[0].mxu0 %v7317
        %v7410 = vpop.f32.mrb[0].mxu0
        %v7411 = vadd.f32 %v7308, %v7410
        %v7412 = vpop.f32.mrb[0].mxu0
        %7413 = vmatprep.mubr.f32.mxu0 0.0
        %7414 = vmatmul.mubr.f32.gmra.mrb[0].mxu0 %v7320
        %v7415 = vpop.f32.mrb[0].mxu0
        %v7416 = vadd.f32 %v7308, %v7415
        %v7417 = vpop.f32.mrb[0].mxu0
        %7418 = vmatprep.mubr.f32.mxu0 0.0
        %7419 = vmatmul.mubr.f32.gmra.mrb[0].mxu0 %v7323
        %v7420 = vpop.f32.mrb[0].mxu0
        %v7421 = vadd.f32 %v7308, %v7420
        %v7422 = vpop.f32.mrb[0].mxu0
        %7423 = vmatprep.mubr.f32.mxu0 0.0
        %7424 = vmatmul.mubr.f32.gmra.mrb[0].mxu0 %v7326
        %v7425 = vpop.f32.mrb[0].mxu0
        %v7426 = vadd.f32 %v7308, %v7425
        %v7427 = vpop.f32.mrb[0].mxu0
        %7428 = vmatprep.mubr.f32.mxu0 0.0
        %7429 = vmatmul.mubr.f32.gmra.mrb[0].mxu0 %v7329
        %v7430 = vpop.f32.mrb[0].mxu0
        %v7431 = vadd.f32 %v7308, %v7430
        %v7432 = vpop.f32.mrb[0].mxu0
        %7433 = vmatprep.mubr.f32.mxu0 0.0
        %7434 = vmatmul.mubr.f32.gmra.mrb[0].mxu0 %v7332
        %v7435 = vpop.f32.mrb[0].mxu0
        %v7436 = vadd.f32 %v7308, %v7435
        %v7437 = vpop.f32.mrb[0].mxu0
        %7438 = vdwg.mxu0
        %v7439 = vpack.c.bf16 %v7157, %v7156
        %v7440 = vpack.c.bf16 %v7159, %v7158
        %v7441 = vpack.c.bf16 %v7161, %v7160
        %v7442 = vpack.c.bf16 %v7163, %v7162
        loop: start=0, step=1, limit=8
        $region281: #{forward.1} parent=219 // loop_pre_header
          _
        $region282: #{forward.1} parent=219 // loop_header
          %s7444 = sphi 0, %s7448
          %p7445 = scmp.ge.s32.totalorder %s7444, 8
        $region283: #{forward.1} parent=219 // loop_header_branch
          %7447 = sbr.rel (%p7445) target = $region287
        $region284: #{forward.1} parent=219 // loop_body
          %s7449 = smul.u32 %s7444, 8
          %s7450 = scalar_lea.vmem [#allocation2], %s7449
          %v7451 = vld [vmem:[%s7450] sm:$0xff]
          %v7453 = vcombine.high %v7451, %v7451
          %v7455 = vunpack.c.l.s4 1966171168
          %v7456 = vunpack.c.0.s8 %v7455
          %v7457 = vlaneseq
          %v7458 = vshrl.u32 %v7457, 7
          %v7459 = vsub.s32 %v7456, %v7458
          %v7460 = vrot.slane %v7451, %v7459
          %v7462 = vunpack.c.l.s4 1966171168
          %v7463 = vunpack.c.0.s8 %v7462
          %v7464 = vlaneseq
          %v7465 = vshrl.u32 %v7464, 7
          %v7466 = vsub.s32 %v7463, %v7465
          %v7467 = vrot.slane %v7453, %v7466
          %v7468 = vcombine.high %v7460, %v7460
          %v7469 = vcombine.high %v7467, %v7467
          %v7471 = vunpack.c.l.s4 1966171168
          %v7472 = vunpack.c.0.s8 %v7471
          %v7473 = vlaneseq
          %v7474 = vshrl.u32 %v7473, 7
          %v7475 = vsub.s32 %v7472, %v7474
          %v7476 = vrot.slane %v7460, %v7475
          %v7478 = vunpack.c.l.s4 1966171168
          %v7479 = vunpack.c.0.s8 %v7478
          %v7480 = vlaneseq
          %v7481 = vshrl.u32 %v7480, 7
          %v7482 = vsub.s32 %v7479, %v7481
          %v7483 = vrot.slane %v7467, %v7482
          %v7485 = vunpack.c.l.s4 1966171168
          %v7486 = vunpack.c.0.s8 %v7485
          %v7487 = vlaneseq
          %v7488 = vshrl.u32 %v7487, 7
          %v7489 = vsub.s32 %v7486, %v7488
          %v7490 = vrot.slane %v7468, %v7489
          %v7492 = vunpack.c.l.s4 1966171168
          %v7493 = vunpack.c.0.s8 %v7492
          %v7494 = vlaneseq
          %v7495 = vshrl.u32 %v7494, 7
          %v7496 = vsub.s32 %v7493, %v7495
          %v7497 = vrot.slane %v7469, %v7496
          %v7498 = vcombine.high %v7476, %v7476
          %v7499 = vcombine.high %v7483, %v7483
          %v7500 = vcombine.high %v7490, %v7490
          %v7501 = vcombine.high %v7497, %v7497
          %v7502 = vlaneseq
          %v7503 = vshrl.u32 %v7502, 7
          %v7504 = vsub.s32 0, %v7503
          %v7505 = vrot.slane %v7476, %v7504
          %v7506 = vlaneseq
          %v7507 = vshrl.u32 %v7506, 7
          %v7508 = vsub.s32 0, %v7507
          %v7509 = vrot.slane %v7490, %v7508
          %v7510 = vlaneseq
          %v7511 = vshrl.u32 %v7510, 7
          %v7512 = vsub.s32 0, %v7511
          %v7513 = vrot.slane %v7498, %v7512
          %v7514 = vlaneseq
          %v7515 = vshrl.u32 %v7514, 7
          %v7516 = vsub.s32 0, %v7515
          %v7517 = vrot.slane %v7500, %v7516
          %v7518 = vlaneseq
          %v7519 = vshrl.u32 %v7518, 7
          %v7520 = vsub.s32 0, %v7519
          %v7521 = vrot.slane %v7483, %v7520
          %v7522 = vlaneseq
          %v7523 = vshrl.u32 %v7522, 7
          %v7524 = vsub.s32 0, %v7523
          %v7525 = vrot.slane %v7497, %v7524
          %v7526 = vlaneseq
          %v7527 = vshrl.u32 %v7526, 7
          %v7528 = vsub.s32 0, %v7527
          %v7529 = vrot.slane %v7499, %v7528
          %v7530 = vlaneseq
          %v7531 = vshrl.u32 %v7530, 7
          %v7532 = vsub.s32 0, %v7531
          %v7533 = vrot.slane %v7501, %v7532
          %v7542 = vadd.f32 %v7505, %v7401
          %v7543 = vadd.f32 %v7505, %v7406
          %v7544 = vadd.f32 %v7505, %v7411
          %v7545 = vadd.f32 %v7505, %v7416
          %v7546 = vadd.f32 %v7505, %v7421
          %v7547 = vadd.f32 %v7505, %v7426
          %v7548 = vadd.f32 %v7505, %v7431
          %v7549 = vadd.f32 %v7505, %v7436
          %v7550 = vadd.f32 %v7509, %v7401
          %v7551 = vadd.f32 %v7509, %v7406
          %v7552 = vadd.f32 %v7509, %v7411
          %v7553 = vadd.f32 %v7509, %v7416
          %v7554 = vadd.f32 %v7509, %v7421
          %v7555 = vadd.f32 %v7509, %v7426
          %v7556 = vadd.f32 %v7509, %v7431
          %v7557 = vadd.f32 %v7509, %v7436
          %v7558 = vadd.f32 %v7513, %v7401
          %v7559 = vadd.f32 %v7513, %v7406
          %v7560 = vadd.f32 %v7513, %v7411
          %v7561 = vadd.f32 %v7513, %v7416
          %v7562 = vadd.f32 %v7513, %v7421
          %v7563 = vadd.f32 %v7513, %v7426
          %v7564 = vadd.f32 %v7513, %v7431
          %v7565 = vadd.f32 %v7513, %v7436
          %v7566 = vadd.f32 %v7517, %v7401
          %v7567 = vadd.f32 %v7517, %v7406
          %v7568 = vadd.f32 %v7517, %v7411
          %v7569 = vadd.f32 %v7517, %v7416
          %v7570 = vadd.f32 %v7517, %v7421
          %v7571 = vadd.f32 %v7517, %v7426
          %v7572 = vadd.f32 %v7517, %v7431
          %v7573 = vadd.f32 %v7517, %v7436
          %v7574 = vadd.f32 %v7521, %v7401
          %v7575 = vadd.f32 %v7521, %v7406
          %v7576 = vadd.f32 %v7521, %v7411
          %v7577 = vadd.f32 %v7521, %v7416
          %v7578 = vadd.f32 %v7521, %v7421
          %v7579 = vadd.f32 %v7521, %v7426
          %v7580 = vadd.f32 %v7521, %v7431
          %v7581 = vadd.f32 %v7521, %v7436
          %v7582 = vadd.f32 %v7525, %v7401
          %v7583 = vadd.f32 %v7525, %v7406
          %v7584 = vadd.f32 %v7525, %v7411
          %v7585 = vadd.f32 %v7525, %v7416
          %v7586 = vadd.f32 %v7525, %v7421
          %v7587 = vadd.f32 %v7525, %v7426
          %v7588 = vadd.f32 %v7525, %v7431
          %v7589 = vadd.f32 %v7525, %v7436
          %v7590 = vadd.f32 %v7529, %v7401
          %v7591 = vadd.f32 %v7529, %v7406
          %v7592 = vadd.f32 %v7529, %v7411
          %v7593 = vadd.f32 %v7529, %v7416
          %v7594 = vadd.f32 %v7529, %v7421
          %v7595 = vadd.f32 %v7529, %v7426
          %v7596 = vadd.f32 %v7529, %v7431
          %v7597 = vadd.f32 %v7529, %v7436
          %v7598 = vadd.f32 %v7533, %v7401
          %v7599 = vadd.f32 %v7533, %v7406
          %v7600 = vadd.f32 %v7533, %v7411
          %v7601 = vadd.f32 %v7533, %v7416
          %v7602 = vadd.f32 %v7533, %v7421
          %v7603 = vadd.f32 %v7533, %v7426
          %v7604 = vadd.f32 %v7533, %v7431
          %v7605 = vadd.f32 %v7533, %v7436
          %v7606 = vmax.f32 %v7542, 0.0
          %v7607 = vmax.f32 %v7543, 0.0
          %v7608 = vmax.f32 %v7544, 0.0
          %v7609 = vmax.f32 %v7545, 0.0
          %v7610 = vmax.f32 %v7546, 0.0
          %v7611 = vmax.f32 %v7547, 0.0
          %v7612 = vmax.f32 %v7548, 0.0
          %v7613 = vmax.f32 %v7549, 0.0
          %v7614 = vmax.f32 %v7550, 0.0
          %v7615 = vmax.f32 %v7551, 0.0
          %v7616 = vmax.f32 %v7552, 0.0
          %v7617 = vmax.f32 %v7553, 0.0
          %v7618 = vmax.f32 %v7554, 0.0
          %v7619 = vmax.f32 %v7555, 0.0
          %v7620 = vmax.f32 %v7556, 0.0
          %v7621 = vmax.f32 %v7557, 0.0
          %v7622 = vmax.f32 %v7558, 0.0
          %v7623 = vmax.f32 %v7559, 0.0
          %v7624 = vmax.f32 %v7560, 0.0
          %v7625 = vmax.f32 %v7561, 0.0
          %v7626 = vmax.f32 %v7562, 0.0
          %v7627 = vmax.f32 %v7563, 0.0
          %v7628 = vmax.f32 %v7564, 0.0
          %v7629 = vmax.f32 %v7565, 0.0
          %v7630 = vmax.f32 %v7566, 0.0
          %v7631 = vmax.f32 %v7567, 0.0
          %v7632 = vmax.f32 %v7568, 0.0
          %v7633 = vmax.f32 %v7569, 0.0
          %v7634 = vmax.f32 %v7570, 0.0
          %v7635 = vmax.f32 %v7571, 0.0
          %v7636 = vmax.f32 %v7572, 0.0
          %v7637 = vmax.f32 %v7573, 0.0
          %v7638 = vmax.f32 %v7574, 0.0
          %v7639 = vmax.f32 %v7575, 0.0
          %v7640 = vmax.f32 %v7576, 0.0
          %v7641 = vmax.f32 %v7577, 0.0
          %v7642 = vmax.f32 %v7578, 0.0
          %v7643 = vmax.f32 %v7579, 0.0
          %v7644 = vmax.f32 %v7580, 0.0
          %v7645 = vmax.f32 %v7581, 0.0
          %v7646 = vmax.f32 %v7582, 0.0
          %v7647 = vmax.f32 %v7583, 0.0
          %v7648 = vmax.f32 %v7584, 0.0
          %v7649 = vmax.f32 %v7585, 0.0
          %v7650 = vmax.f32 %v7586, 0.0
          %v7651 = vmax.f32 %v7587, 0.0
          %v7652 = vmax.f32 %v7588, 0.0
          %v7653 = vmax.f32 %v7589, 0.0
          %v7654 = vmax.f32 %v7590, 0.0
          %v7655 = vmax.f32 %v7591, 0.0
          %v7656 = vmax.f32 %v7592, 0.0
          %v7657 = vmax.f32 %v7593, 0.0
          %v7658 = vmax.f32 %v7594, 0.0
          %v7659 = vmax.f32 %v7595, 0.0
          %v7660 = vmax.f32 %v7596, 0.0
          %v7661 = vmax.f32 %v7597, 0.0
          %v7662 = vmax.f32 %v7598, 0.0
          %v7663 = vmax.f32 %v7599, 0.0
          %v7664 = vmax.f32 %v7600, 0.0
          %v7665 = vmax.f32 %v7601, 0.0
          %v7666 = vmax.f32 %v7602, 0.0
          %v7667 = vmax.f32 %v7603, 0.0
          %v7668 = vmax.f32 %v7604, 0.0
          %v7669 = vmax.f32 %v7605, 0.0
          %v7670 = vpack.c.bf16 %v7607, %v7606
          %v7671 = vpack.c.bf16 %v7609, %v7608
          %v7672 = vpack.c.bf16 %v7611, %v7610
          %v7673 = vpack.c.bf16 %v7613, %v7612
          %v7674 = vpack.c.bf16 %v7615, %v7614
          %v7675 = vpack.c.bf16 %v7617, %v7616
          %v7676 = vpack.c.bf16 %v7619, %v7618
          %v7677 = vpack.c.bf16 %v7621, %v7620
          %v7678 = vpack.c.bf16 %v7623, %v7622
          %v7679 = vpack.c.bf16 %v7625, %v7624
          %v7680 = vpack.c.bf16 %v7627, %v7626
          %v7681 = vpack.c.bf16 %v7629, %v7628
          %v7682 = vpack.c.bf16 %v7631, %v7630
          %v7683 = vpack.c.bf16 %v7633, %v7632
          %v7684 = vpack.c.bf16 %v7635, %v7634
          %v7685 = vpack.c.bf16 %v7637, %v7636
          %v7686 = vpack.c.bf16 %v7639, %v7638
          %v7687 = vpack.c.bf16 %v7641, %v7640
          %v7688 = vpack.c.bf16 %v7643, %v7642
          %v7689 = vpack.c.bf16 %v7645, %v7644
          %v7690 = vpack.c.bf16 %v7647, %v7646
          %v7691 = vpack.c.bf16 %v7649, %v7648
          %v7692 = vpack.c.bf16 %v7651, %v7650
          %v7693 = vpack.c.bf16 %v7653, %v7652
          %v7694 = vpack.c.bf16 %v7655, %v7654
          %v7695 = vpack.c.bf16 %v7657, %v7656
          %v7696 = vpack.c.bf16 %v7659, %v7658
          %v7697 = vpack.c.bf16 %v7661, %v7660
          %v7698 = vpack.c.bf16 %v7663, %v7662
          %v7699 = vpack.c.bf16 %v7665, %v7664
          %v7700 = vpack.c.bf16 %v7667, %v7666
          %v7701 = vpack.c.bf16 %v7669, %v7668
          %v7703 = vlaneseq
          %v7704 = vshrl.u32 %v7703, 7
          %v7705 = vsub.s32 0, %v7704
          %v7706 = vrot.slane %v7164, %v7705
          %v7709 = vsel %vm1977, %v7670, 0
          %v7712 = vsel %vm1977, %v7671, 0
          %v7715 = vsel %vm1977, %v7672, 0
          %v7718 = vsel %vm1977, %v7673, 0
          %v7721 = vsel %vm1977, %v7674, 0
          %v7724 = vsel %vm1977, %v7675, 0
          %v7727 = vsel %vm1977, %v7676, 0
          %v7730 = vsel %vm1977, %v7677, 0
          %v7733 = vsel %vm1977, %v7678, 0
          %v7736 = vsel %vm1977, %v7679, 0
          %v7739 = vsel %vm1977, %v7680, 0
          %v7742 = vsel %vm1977, %v7681, 0
          %v7745 = vsel %vm1977, %v7682, 0
          %v7748 = vsel %vm1977, %v7683, 0
          %v7751 = vsel %vm1977, %v7684, 0
          %v7754 = vsel %vm1977, %v7685, 0
          %v7757 = vsel %vm1977, %v7686, 0
          %v7760 = vsel %vm1977, %v7687, 0
          %v7763 = vsel %vm1977, %v7688, 0
          %v7766 = vsel %vm1977, %v7689, 0
          %v7769 = vsel %vm1977, %v7690, 0
          %v7772 = vsel %vm1977, %v7691, 0
          %v7775 = vsel %vm1977, %v7692, 0
          %v7778 = vsel %vm1977, %v7693, 0
          %v7781 = vsel %vm1977, %v7694, 0
          %v7784 = vsel %vm1977, %v7695, 0
          %v7787 = vsel %vm1977, %v7696, 0
          %v7790 = vsel %vm1977, %v7697, 0
          %v7793 = vsel %vm1977, %v7698, 0
          %v7796 = vsel %vm1977, %v7699, 0
          %v7799 = vsel %vm1977, %v7700, 0
          %v7802 = vsel %vm1977, %v7701, 0
          %7804 = vmatprep.subr.bf16.mxu0 0
          %7805 = vmatpush1.bf16.msra.mxu0 %v7439
          %7806 = vmatprep.subr.bf16.mxu0 0
          %7807 = vmatpush1.bf16.msra.mxu0 %v7440
          %7808 = vmatprep.subr.bf16.mxu0 0
          %7809 = vmatpush1.bf16.msra.mxu0 %v7441
          %7810 = vmatprep.subr.bf16.mxu0 0
          %7811 = vmatpush1.bf16.msra.mxu0 %v7442
          %7812 = vmatprep.subr.bf16.mxu0 0
          %7813 = vmatpush1.bf16.msra.mxu0 0
          %7814 = vmatprep.subr.bf16.mxu0 0
          %7815 = vmatpush1.bf16.msra.mxu0 0
          %7816 = vmatprep.subr.bf16.mxu0 0
          %7817 = vmatpush1.bf16.msra.mxu0 0
          %7818 = vmatprep.subr.bf16.mxu0 0
          %7819 = vmatpush1.bf16.msra.mxu0 0
          %7820 = vmatprep.subr.bf16.mxu0 0
          %7821 = vmatpush1.bf16.msra.mxu0 0
          %7822 = vmatprep.subr.bf16.mxu0 0
          %7823 = vmatpush1.bf16.msra.mxu0 0
          %7824 = vmatprep.subr.bf16.mxu0 0
          %7825 = vmatpush1.bf16.msra.mxu0 0
          %7826 = vmatprep.subr.bf16.mxu0 0
          %7827 = vmatpush1.bf16.msra.mxu0 0
          %7828 = vmatprep.subr.bf16.mxu0 0
          %7829 = vmatpush1.bf16.msra.mxu0 0
          %7830 = vmatprep.subr.bf16.mxu0 0
          %7831 = vmatpush1.bf16.msra.mxu0 0
          %7832 = vmatprep.subr.bf16.mxu0 0
          %7833 = vmatpush1.bf16.msra.mxu0 0
          %7834 = vmatprep.subr.bf16.mxu0 0
          %7835 = vmatpush1.bf16.msra.mxu0 0
          %7836 = vmatprep.mubr.bf16.mxu0 0
          %7837 = vmatmul.mubr.bf16.gmra.mrb[0].mxu0 %v7709
          %v7838 = vpop.f32.mrb[0].mxu0
          %v7839 = vadd.f32 %v7706, %v7838
          %v7840 = vpop.f32.mrb[0].mxu0
          %v7841 = vpop.f32.mrb[0].mxu0
          %v7842 = vadd.f32 %v7706, %v7841
          %v7843 = vpop.f32.mrb[0].mxu0
          %7844 = vmatprep.mubr.bf16.mxu0 0
          %7845 = vmatmul.mubr.bf16.gmra.mrb[0].mxu0 %v7712
          %v7846 = vpop.f32.mrb[0].mxu0
          %v7847 = vadd.f32 %v7706, %v7846
          %v7848 = vpop.f32.mrb[0].mxu0
          %v7849 = vpop.f32.mrb[0].mxu0
          %v7850 = vadd.f32 %v7706, %v7849
          %v7851 = vpop.f32.mrb[0].mxu0
          %7852 = vmatprep.mubr.bf16.mxu0 0
          %7853 = vmatmul.mubr.bf16.gmra.mrb[0].mxu0 %v7715
          %v7854 = vpop.f32.mrb[0].mxu0
          %v7855 = vadd.f32 %v7706, %v7854
          %v7856 = vpop.f32.mrb[0].mxu0
          %v7857 = vpop.f32.mrb[0].mxu0
          %v7858 = vadd.f32 %v7706, %v7857
          %v7859 = vpop.f32.mrb[0].mxu0
          %7860 = vmatprep.mubr.bf16.mxu0 0
          %7861 = vmatmul.mubr.bf16.gmra.mrb[0].mxu0 %v7718
          %v7862 = vpop.f32.mrb[0].mxu0
          %v7863 = vadd.f32 %v7706, %v7862
          %v7864 = vpop.f32.mrb[0].mxu0
          %v7865 = vpop.f32.mrb[0].mxu0
          %v7866 = vadd.f32 %v7706, %v7865
          %v7867 = vpop.f32.mrb[0].mxu0
          %7868 = vmatprep.mubr.bf16.mxu0 0
          %7869 = vmatmul.mubr.bf16.gmra.mrb[0].mxu0 %v7721
          %v7870 = vpop.f32.mrb[0].mxu0
          %v7871 = vadd.f32 %v7706, %v7870
          %v7872 = vpop.f32.mrb[0].mxu0
          %v7873 = vpop.f32.mrb[0].mxu0
          %v7874 = vadd.f32 %v7706, %v7873
          %v7875 = vpop.f32.mrb[0].mxu0
          %7876 = vmatprep.mubr.bf16.mxu0 0
          %7877 = vmatmul.mubr.bf16.gmra.mrb[0].mxu0 %v7724
          %v7878 = vpop.f32.mrb[0].mxu0
          %v7879 = vadd.f32 %v7706, %v7878
          %v7880 = vpop.f32.mrb[0].mxu0
          %v7881 = vpop.f32.mrb[0].mxu0
          %v7882 = vadd.f32 %v7706, %v7881
          %v7883 = vpop.f32.mrb[0].mxu0
          %7884 = vmatprep.mubr.bf16.mxu0 0
          %7885 = vmatmul.mubr.bf16.gmra.mrb[0].mxu0 %v7727
          %v7886 = vpop.f32.mrb[0].mxu0
          %v7887 = vadd.f32 %v7706, %v7886
          %v7888 = vpop.f32.mrb[0].mxu0
          %v7889 = vpop.f32.mrb[0].mxu0
          %v7890 = vadd.f32 %v7706, %v7889
          %v7891 = vpop.f32.mrb[0].mxu0
          %7892 = vmatprep.mubr.bf16.mxu0 0
          %7893 = vmatmul.mubr.bf16.gmra.mrb[0].mxu0 %v7730
          %v7894 = vpop.f32.mrb[0].mxu0
          %v7895 = vadd.f32 %v7706, %v7894
          %v7896 = vpop.f32.mrb[0].mxu0
          %v7897 = vpop.f32.mrb[0].mxu0
          %v7898 = vadd.f32 %v7706, %v7897
          %v7899 = vpop.f32.mrb[0].mxu0
          %7900 = vmatprep.mubr.bf16.mxu0 0
          %7901 = vmatmul.mubr.bf16.gmra.mrb[0].mxu0 %v7733
          %v7902 = vpop.f32.mrb[0].mxu0
          %v7903 = vadd.f32 %v7706, %v7902
          %v7904 = vpop.f32.mrb[0].mxu0
          %v7905 = vpop.f32.mrb[0].mxu0
          %v7906 = vadd.f32 %v7706, %v7905
          %v7907 = vpop.f32.mrb[0].mxu0
          %7908 = vmatprep.mubr.bf16.mxu0 0
          %7909 = vmatmul.mubr.bf16.gmra.mrb[0].mxu0 %v7736
          %v7910 = vpop.f32.mrb[0].mxu0
          %v7911 = vadd.f32 %v7706, %v7910
          %v7912 = vpop.f32.mrb[0].mxu0
          %v7913 = vpop.f32.mrb[0].mxu0
          %v7914 = vadd.f32 %v7706, %v7913
          %v7915 = vpop.f32.mrb[0].mxu0
          %7916 = vmatprep.mubr.bf16.mxu0 0
          %7917 = vmatmul.mubr.bf16.gmra.mrb[0].mxu0 %v7739
          %v7918 = vpop.f32.mrb[0].mxu0
          %v7919 = vadd.f32 %v7706, %v7918
          %v7920 = vpop.f32.mrb[0].mxu0
          %v7921 = vpop.f32.mrb[0].mxu0
          %v7922 = vadd.f32 %v7706, %v7921
          %v7923 = vpop.f32.mrb[0].mxu0
          %7924 = vmatprep.mubr.bf16.mxu0 0
          %7925 = vmatmul.mubr.bf16.gmra.mrb[0].mxu0 %v7742
          %v7926 = vpop.f32.mrb[0].mxu0
          %v7927 = vadd.f32 %v7706, %v7926
          %v7928 = vpop.f32.mrb[0].mxu0
          %v7929 = vpop.f32.mrb[0].mxu0
          %v7930 = vadd.f32 %v7706, %v7929
          %v7931 = vpop.f32.mrb[0].mxu0
          %7932 = vmatprep.mubr.bf16.mxu0 0
          %7933 = vmatmul.mubr.bf16.gmra.mrb[0].mxu0 %v7745
          %v7934 = vpop.f32.mrb[0].mxu0
          %v7935 = vadd.f32 %v7706, %v7934
          %v7936 = vpop.f32.mrb[0].mxu0
          %v7937 = vpop.f32.mrb[0].mxu0
          %v7938 = vadd.f32 %v7706, %v7937
          %v7939 = vpop.f32.mrb[0].mxu0
          %7940 = vmatprep.mubr.bf16.mxu0 0
          %7941 = vmatmul.mubr.bf16.gmra.mrb[0].mxu0 %v7748
          %v7942 = vpop.f32.mrb[0].mxu0
          %v7943 = vadd.f32 %v7706, %v7942
          %v7944 = vpop.f32.mrb[0].mxu0
          %v7945 = vpop.f32.mrb[0].mxu0
          %v7946 = vadd.f32 %v7706, %v7945
          %v7947 = vpop.f32.mrb[0].mxu0
          %7948 = vmatprep.mubr.bf16.mxu0 0
          %7949 = vmatmul.mubr.bf16.gmra.mrb[0].mxu0 %v7751
          %v7950 = vpop.f32.mrb[0].mxu0
          %v7951 = vadd.f32 %v7706, %v7950
          %v7952 = vpop.f32.mrb[0].mxu0
          %v7953 = vpop.f32.mrb[0].mxu0
          %v7954 = vadd.f32 %v7706, %v7953
          %v7955 = vpop.f32.mrb[0].mxu0
          %7956 = vmatprep.mubr.bf16.mxu0 0
          %7957 = vmatmul.mubr.bf16.gmra.mrb[0].mxu0 %v7754
          %v7958 = vpop.f32.mrb[0].mxu0
          %v7959 = vadd.f32 %v7706, %v7958
          %v7960 = vpop.f32.mrb[0].mxu0
          %v7961 = vpop.f32.mrb[0].mxu0
          %v7962 = vadd.f32 %v7706, %v7961
          %v7963 = vpop.f32.mrb[0].mxu0
          %7964 = vmatprep.mubr.bf16.mxu0 0
          %7965 = vmatmul.mubr.bf16.gmra.mrb[0].mxu0 %v7757
          %v7966 = vpop.f32.mrb[0].mxu0
          %v7967 = vadd.f32 %v7706, %v7966
          %v7968 = vpop.f32.mrb[0].mxu0
          %v7969 = vpop.f32.mrb[0].mxu0
          %v7970 = vadd.f32 %v7706, %v7969
          %v7971 = vpop.f32.mrb[0].mxu0
          %7972 = vmatprep.mubr.bf16.mxu0 0
          %7973 = vmatmul.mubr.bf16.gmra.mrb[0].mxu0 %v7760
          %v7974 = vpop.f32.mrb[0].mxu0
          %v7975 = vadd.f32 %v7706, %v7974
          %v7976 = vpop.f32.mrb[0].mxu0
          %v7977 = vpop.f32.mrb[0].mxu0
          %v7978 = vadd.f32 %v7706, %v7977
          %v7979 = vpop.f32.mrb[0].mxu0
          %7980 = vmatprep.mubr.bf16.mxu0 0
          %7981 = vmatmul.mubr.bf16.gmra.mrb[0].mxu0 %v7763
          %v7982 = vpop.f32.mrb[0].mxu0
          %v7983 = vadd.f32 %v7706, %v7982
          %v7984 = vpop.f32.mrb[0].mxu0
          %v7985 = vpop.f32.mrb[0].mxu0
          %v7986 = vadd.f32 %v7706, %v7985
          %v7987 = vpop.f32.mrb[0].mxu0
          %7988 = vmatprep.mubr.bf16.mxu0 0
          %7989 = vmatmul.mubr.bf16.gmra.mrb[0].mxu0 %v7766
          %v7990 = vpop.f32.mrb[0].mxu0
          %v7991 = vadd.f32 %v7706, %v7990
          %v7992 = vpop.f32.mrb[0].mxu0
          %v7993 = vpop.f32.mrb[0].mxu0
          %v7994 = vadd.f32 %v7706, %v7993
          %v7995 = vpop.f32.mrb[0].mxu0
          %7996 = vmatprep.mubr.bf16.mxu0 0
          %7997 = vmatmul.mubr.bf16.gmra.mrb[0].mxu0 %v7769
          %v7998 = vpop.f32.mrb[0].mxu0
          %v7999 = vadd.f32 %v7706, %v7998
          %v8000 = vpop.f32.mrb[0].mxu0
          %v8001 = vpop.f32.mrb[0].mxu0
          %v8002 = vadd.f32 %v7706, %v8001
          %v8003 = vpop.f32.mrb[0].mxu0
          %8004 = vmatprep.mubr.bf16.mxu0 0
          %8005 = vmatmul.mubr.bf16.gmra.mrb[0].mxu0 %v7772
          %v8006 = vpop.f32.mrb[0].mxu0
          %v8007 = vadd.f32 %v7706, %v8006
          %v8008 = vpop.f32.mrb[0].mxu0
          %v8009 = vpop.f32.mrb[0].mxu0
          %v8010 = vadd.f32 %v7706, %v8009
          %v8011 = vpop.f32.mrb[0].mxu0
          %8012 = vmatprep.mubr.bf16.mxu0 0
          %8013 = vmatmul.mubr.bf16.gmra.mrb[0].mxu0 %v7775
          %v8014 = vpop.f32.mrb[0].mxu0
          %v8015 = vadd.f32 %v7706, %v8014
          %v8016 = vpop.f32.mrb[0].mxu0
          %v8017 = vpop.f32.mrb[0].mxu0
          %v8018 = vadd.f32 %v7706, %v8017
          %v8019 = vpop.f32.mrb[0].mxu0
          %8020 = vmatprep.mubr.bf16.mxu0 0
          %8021 = vmatmul.mubr.bf16.gmra.mrb[0].mxu0 %v7778
          %v8022 = vpop.f32.mrb[0].mxu0
          %v8023 = vadd.f32 %v7706, %v8022
          %v8024 = vpop.f32.mrb[0].mxu0
          %v8025 = vpop.f32.mrb[0].mxu0
          %v8026 = vadd.f32 %v7706, %v8025
          %v8027 = vpop.f32.mrb[0].mxu0
          %8028 = vmatprep.mubr.bf16.mxu0 0
          %8029 = vmatmul.mubr.bf16.gmra.mrb[0].mxu0 %v7781
          %v8030 = vpop.f32.mrb[0].mxu0
          %v8031 = vadd.f32 %v7706, %v8030
          %v8032 = vpop.f32.mrb[0].mxu0
          %v8033 = vpop.f32.mrb[0].mxu0
          %v8034 = vadd.f32 %v7706, %v8033
          %v8035 = vpop.f32.mrb[0].mxu0
          %8036 = vmatprep.mubr.bf16.mxu0 0
          %8037 = vmatmul.mubr.bf16.gmra.mrb[0].mxu0 %v7784
          %v8038 = vpop.f32.mrb[0].mxu0
          %v8039 = vadd.f32 %v7706, %v8038
          %v8040 = vpop.f32.mrb[0].mxu0
          %v8041 = vpop.f32.mrb[0].mxu0
          %v8042 = vadd.f32 %v7706, %v8041
          %v8043 = vpop.f32.mrb[0].mxu0
          %8044 = vmatprep.mubr.bf16.mxu0 0
          %8045 = vmatmul.mubr.bf16.gmra.mrb[0].mxu0 %v7787
          %v8046 = vpop.f32.mrb[0].mxu0
          %v8047 = vadd.f32 %v7706, %v8046
          %v8048 = vpop.f32.mrb[0].mxu0
          %v8049 = vpop.f32.mrb[0].mxu0
          %v8050 = vadd.f32 %v7706, %v8049
          %v8051 = vpop.f32.mrb[0].mxu0
          %8052 = vmatprep.mubr.bf16.mxu0 0
          %8053 = vmatmul.mubr.bf16.gmra.mrb[0].mxu0 %v7790
          %v8054 = vpop.f32.mrb[0].mxu0
          %v8055 = vadd.f32 %v7706, %v8054
          %v8056 = vpop.f32.mrb[0].mxu0
          %v8057 = vpop.f32.mrb[0].mxu0
          %v8058 = vadd.f32 %v7706, %v8057
          %v8059 = vpop.f32.mrb[0].mxu0
          %8060 = vmatprep.mubr.bf16.mxu0 0
          %8061 = vmatmul.mubr.bf16.gmra.mrb[0].mxu0 %v7793
          %v8062 = vpop.f32.mrb[0].mxu0
          %v8063 = vadd.f32 %v7706, %v8062
          %v8064 = vpop.f32.mrb[0].mxu0
          %v8065 = vpop.f32.mrb[0].mxu0
          %v8066 = vadd.f32 %v7706, %v8065
          %v8067 = vpop.f32.mrb[0].mxu0
          %8068 = vmatprep.mubr.bf16.mxu0 0
          %8069 = vmatmul.mubr.bf16.gmra.mrb[0].mxu0 %v7796
          %v8070 = vpop.f32.mrb[0].mxu0
          %v8071 = vadd.f32 %v7706, %v8070
          %v8072 = vpop.f32.mrb[0].mxu0
          %v8073 = vpop.f32.mrb[0].mxu0
          %v8074 = vadd.f32 %v7706, %v8073
          %v8075 = vpop.f32.mrb[0].mxu0
          %8076 = vmatprep.mubr.bf16.mxu0 0
          %8077 = vmatmul.mubr.bf16.gmra.mrb[0].mxu0 %v7799
          %v8078 = vpop.f32.mrb[0].mxu0
          %v8079 = vadd.f32 %v7706, %v8078
          %v8080 = vpop.f32.mrb[0].mxu0
          %v8081 = vpop.f32.mrb[0].mxu0
          %v8082 = vadd.f32 %v7706, %v8081
          %v8083 = vpop.f32.mrb[0].mxu0
          %8084 = vmatprep.mubr.bf16.mxu0 0
          %8085 = vmatmul.mubr.bf16.gmra.mrb[0].mxu0 %v7802
          %v8086 = vpop.f32.mrb[0].mxu0
          %v8087 = vadd.f32 %v7706, %v8086
          %v8088 = vpop.f32.mrb[0].mxu0
          %v8089 = vpop.f32.mrb[0].mxu0
          %v8090 = vadd.f32 %v7706, %v8089
          %v8091 = vpop.f32.mrb[0].mxu0
          %8092 = vdwg.mxu0
          %v8093 = vmax.f32 %v7839, 0.0
          %v8094 = vmax.f32 %v7842, 0.0
          %v8095 = vmax.f32 %v7847, 0.0
          %v8096 = vmax.f32 %v7850, 0.0
          %v8097 = vmax.f32 %v7855, 0.0
          %v8098 = vmax.f32 %v7858, 0.0
          %v8099 = vmax.f32 %v7863, 0.0
          %v8100 = vmax.f32 %v7866, 0.0
          %v8101 = vmax.f32 %v7871, 0.0
          %v8102 = vmax.f32 %v7874, 0.0
          %v8103 = vmax.f32 %v7879, 0.0
          %v8104 = vmax.f32 %v7882, 0.0
          %v8105 = vmax.f32 %v7887, 0.0
          %v8106 = vmax.f32 %v7890, 0.0
          %v8107 = vmax.f32 %v7895, 0.0
          %v8108 = vmax.f32 %v7898, 0.0
          %v8109 = vmax.f32 %v7903, 0.0
          %v8110 = vmax.f32 %v7906, 0.0
          %v8111 = vmax.f32 %v7911, 0.0
          %v8112 = vmax.f32 %v7914, 0.0
          %v8113 = vmax.f32 %v7919, 0.0
          %v8114 = vmax.f32 %v7922, 0.0
          %v8115 = vmax.f32 %v7927, 0.0
          %v8116 = vmax.f32 %v7930, 0.0
          %v8117 = vmax.f32 %v7935, 0.0
          %v8118 = vmax.f32 %v7938, 0.0
          %v8119 = vmax.f32 %v7943, 0.0
          %v8120 = vmax.f32 %v7946, 0.0
          %v8121 = vmax.f32 %v7951, 0.0
          %v8122 = vmax.f32 %v7954, 0.0
          %v8123 = vmax.f32 %v7959, 0.0
          %v8124 = vmax.f32 %v7962, 0.0
          %v8125 = vmax.f32 %v7967, 0.0
          %v8126 = vmax.f32 %v7970, 0.0
          %v8127 = vmax.f32 %v7975, 0.0
          %v8128 = vmax.f32 %v7978, 0.0
          %v8129 = vmax.f32 %v7983, 0.0
          %v8130 = vmax.f32 %v7986, 0.0
          %v8131 = vmax.f32 %v7991, 0.0
          %v8132 = vmax.f32 %v7994, 0.0
          %v8133 = vmax.f32 %v7999, 0.0
          %v8134 = vmax.f32 %v8002, 0.0
          %v8135 = vmax.f32 %v8007, 0.0
          %v8136 = vmax.f32 %v8010, 0.0
          %v8137 = vmax.f32 %v8015, 0.0
          %v8138 = vmax.f32 %v8018, 0.0
          %v8139 = vmax.f32 %v8023, 0.0
          %v8140 = vmax.f32 %v8026, 0.0
          %v8141 = vmax.f32 %v8031, 0.0
          %v8142 = vmax.f32 %v8034, 0.0
          %v8143 = vmax.f32 %v8039, 0.0
          %v8144 = vmax.f32 %v8042, 0.0
          %v8145 = vmax.f32 %v8047, 0.0
          %v8146 = vmax.f32 %v8050, 0.0
          %v8147 = vmax.f32 %v8055, 0.0
          %v8148 = vmax.f32 %v8058, 0.0
          %v8149 = vmax.f32 %v8063, 0.0
          %v8150 = vmax.f32 %v8066, 0.0
          %v8151 = vmax.f32 %v8071, 0.0
          %v8152 = vmax.f32 %v8074, 0.0
          %v8153 = vmax.f32 %v8079, 0.0
          %v8154 = vmax.f32 %v8082, 0.0
          %v8155 = vmax.f32 %v8087, 0.0
          %v8156 = vmax.f32 %v8090, 0.0
          %8158 = vset.pattern.permute.xlu0 0
          %8159 = vperm.xlu0 %8158, %v7166
          %v8160 = vpop.permute.xlu0 %8159
          %v8162 = vlaneseq
          %v8163 = vshrl.u32 %v8162, 7
          %v8164 = vsub.s32 0, %v8163
          %v8165 = vrot.slane %v8160, %v8164
          %v8167 = vsel %vm1977, %v7165, 0
          %v8170 = vsel %vm1977, %v8093, 0
          %v8173 = vsel %vm1977, %v8094, 0
          %v8176 = vsel %vm1977, %v8095, 0
          %v8179 = vsel %vm1977, %v8096, 0
          %v8182 = vsel %vm1977, %v8097, 0
          %v8185 = vsel %vm1977, %v8098, 0
          %v8188 = vsel %vm1977, %v8099, 0
          %v8191 = vsel %vm1977, %v8100, 0
          %v8194 = vsel %vm1977, %v8101, 0
          %v8197 = vsel %vm1977, %v8102, 0
          %v8200 = vsel %vm1977, %v8103, 0
          %v8203 = vsel %vm1977, %v8104, 0
          %v8206 = vsel %vm1977, %v8105, 0
          %v8209 = vsel %vm1977, %v8106, 0
          %v8212 = vsel %vm1977, %v8107, 0
          %v8215 = vsel %vm1977, %v8108, 0
          %v8218 = vsel %vm1977, %v8109, 0
          %v8221 = vsel %vm1977, %v8110, 0
          %v8224 = vsel %vm1977, %v8111, 0
          %v8227 = vsel %vm1977, %v8112, 0
          %v8230 = vsel %vm1977, %v8113, 0
          %v8233 = vsel %vm1977, %v8114, 0
          %v8236 = vsel %vm1977, %v8115, 0
          %v8239 = vsel %vm1977, %v8116, 0
          %v8242 = vsel %vm1977, %v8117, 0
          %v8245 = vsel %vm1977, %v8118, 0
          %v8248 = vsel %vm1977, %v8119, 0
          %v8251 = vsel %vm1977, %v8120, 0
          %v8254 = vsel %vm1977, %v8121, 0
          %v8257 = vsel %vm1977, %v8122, 0
          %v8260 = vsel %vm1977, %v8123, 0
          %v8263 = vsel %vm1977, %v8124, 0
          %v8266 = vsel %vm1977, %v8125, 0
          %v8269 = vsel %vm1977, %v8126, 0
          %v8272 = vsel %vm1977, %v8127, 0
          %v8275 = vsel %vm1977, %v8128, 0
          %v8278 = vsel %vm1977, %v8129, 0
          %v8281 = vsel %vm1977, %v8130, 0
          %v8284 = vsel %vm1977, %v8131, 0
          %v8287 = vsel %vm1977, %v8132, 0
          %v8290 = vsel %vm1977, %v8133, 0
          %v8293 = vsel %vm1977, %v8134, 0
          %v8296 = vsel %vm1977, %v8135, 0
          %v8299 = vsel %vm1977, %v8136, 0
          %v8302 = vsel %vm1977, %v8137, 0
          %v8305 = vsel %vm1977, %v8138, 0
          %v8308 = vsel %vm1977, %v8139, 0
          %v8311 = vsel %vm1977, %v8140, 0
          %v8314 = vsel %vm1977, %v8141, 0
          %v8317 = vsel %vm1977, %v8142, 0
          %v8320 = vsel %vm1977, %v8143, 0
          %v8323 = vsel %vm1977, %v8144, 0
          %v8326 = vsel %vm1977, %v8145, 0
          %v8329 = vsel %vm1977, %v8146, 0
          %v8332 = vsel %vm1977, %v8147, 0
          %v8335 = vsel %vm1977, %v8148, 0
          %v8338 = vsel %vm1977, %v8149, 0
          %v8341 = vsel %vm1977, %v8150, 0
          %v8344 = vsel %vm1977, %v8151, 0
          %v8347 = vsel %vm1977, %v8152, 0
          %v8350 = vsel %vm1977, %v8153, 0
          %v8353 = vsel %vm1977, %v8154, 0
          %v8356 = vsel %vm1977, %v8155, 0
          %v8359 = vsel %vm1977, %v8156, 0
          %8361 = vmatprep.subr.mxu0 0.0
          %8362 = vmatpush1.xpose.msra.mxu0 %v8170
          %8363 = vmatprep.subr.mxu0 0.0
          %8364 = vmatpush1.xpose.msra.mxu0 %v8173
          %8365 = vmatprep.subr.mxu0 0.0
          %8366 = vmatpush1.xpose.msra.mxu0 %v8176
          %8367 = vmatprep.subr.mxu0 0.0
          %8368 = vmatpush1.xpose.msra.mxu0 %v8179
          %8369 = vmatprep.subr.mxu0 0.0
          %8370 = vmatpush1.xpose.msra.mxu0 %v8182
          %8371 = vmatprep.subr.mxu0 0.0
          %8372 = vmatpush1.xpose.msra.mxu0 %v8185
          %8373 = vmatprep.subr.mxu0 0.0
          %8374 = vmatpush1.xpose.msra.mxu0 %v8188
          %8375 = vmatprep.subr.mxu0 0.0
          %8376 = vmatpush1.xpose.msra.mxu0 %v8191
          %8377 = vmatprep.subr.mxu0 0.0
          %8378 = vmatpush1.xpose.msra.mxu0 %v8194
          %8379 = vmatprep.subr.mxu0 0.0
          %8380 = vmatpush1.xpose.msra.mxu0 %v8197
          %8381 = vmatprep.subr.mxu0 0.0
          %8382 = vmatpush1.xpose.msra.mxu0 %v8200
          %8383 = vmatprep.subr.mxu0 0.0
          %8384 = vmatpush1.xpose.msra.mxu0 %v8203
          %8385 = vmatprep.subr.mxu0 0.0
          %8386 = vmatpush1.xpose.msra.mxu0 %v8206
          %8387 = vmatprep.subr.mxu0 0.0
          %8388 = vmatpush1.xpose.msra.mxu0 %v8209
          %8389 = vmatprep.subr.mxu0 0.0
          %8390 = vmatpush1.xpose.msra.mxu0 %v8212
          %8391 = vmatprep.subr.mxu0 0.0
          %8392 = vmatpush1.xpose.msra.mxu0 %v8215
          %8393 = vmatprep.subr.mxu0 0.0
          %8394 = vmatpush1.xpose.msra.mxu0 %v8218
          %8395 = vmatprep.subr.mxu0 0.0
          %8396 = vmatpush1.xpose.msra.mxu0 %v8221
          %8397 = vmatprep.subr.mxu0 0.0
          %8398 = vmatpush1.xpose.msra.mxu0 %v8224
          %8399 = vmatprep.subr.mxu0 0.0
          %8400 = vmatpush1.xpose.msra.mxu0 %v8227
          %8401 = vmatprep.subr.mxu0 0.0
          %8402 = vmatpush1.xpose.msra.mxu0 %v8230
          %8403 = vmatprep.subr.mxu0 0.0
          %8404 = vmatpush1.xpose.msra.mxu0 %v8233
          %8405 = vmatprep.subr.mxu0 0.0
          %8406 = vmatpush1.xpose.msra.mxu0 %v8236
          %8407 = vmatprep.subr.mxu0 0.0
          %8408 = vmatpush1.xpose.msra.mxu0 %v8239
          %8409 = vmatprep.subr.mxu0 0.0
          %8410 = vmatpush1.xpose.msra.mxu0 %v8242
          %8411 = vmatprep.subr.mxu0 0.0
          %8412 = vmatpush1.xpose.msra.mxu0 %v8245
          %8413 = vmatprep.subr.mxu0 0.0
          %8414 = vmatpush1.xpose.msra.mxu0 %v8248
          %8415 = vmatprep.subr.mxu0 0.0
          %8416 = vmatpush1.xpose.msra.mxu0 %v8251
          %8417 = vmatprep.subr.mxu0 0.0
          %8418 = vmatpush1.xpose.msra.mxu0 %v8254
          %8419 = vmatprep.subr.mxu0 0.0
          %8420 = vmatpush1.xpose.msra.mxu0 %v8257
          %8421 = vmatprep.subr.mxu0 0.0
          %8422 = vmatpush1.xpose.msra.mxu0 %v8260
          %8423 = vmatprep.subr.mxu0 0.0
          %8424 = vmatpush1.xpose.msra.mxu0 %v8263
          %8425 = vmatprep.mubr.f32.mxu0 0.0
          %8426 = vmatmul.mubr.f32.gmra.mrb[0].mxu0 %v8167
          %v8427 = vpop.f32.mrb[0].mxu0
          %v8428 = vadd.f32 %v8165, %v8427
          %v8429 = vpop.f32.mrb[0].mxu0
          %v8430 = vadd.f32 %v8165, %v8429
          %8431 = vdwg.mxu0
          %8432 = vmatprep.subr.mxu0 0.0
          %8433 = vmatpush1.xpose.msra.mxu0 %v8266
          %8434 = vmatprep.subr.mxu0 0.0
          %8435 = vmatpush1.xpose.msra.mxu0 %v8269
          %8436 = vmatprep.subr.mxu0 0.0
          %8437 = vmatpush1.xpose.msra.mxu0 %v8272
          %8438 = vmatprep.subr.mxu0 0.0
          %8439 = vmatpush1.xpose.msra.mxu0 %v8275
          %8440 = vmatprep.subr.mxu0 0.0
          %8441 = vmatpush1.xpose.msra.mxu0 %v8278
          %8442 = vmatprep.subr.mxu0 0.0
          %8443 = vmatpush1.xpose.msra.mxu0 %v8281
          %8444 = vmatprep.subr.mxu0 0.0
          %8445 = vmatpush1.xpose.msra.mxu0 %v8284
          %8446 = vmatprep.subr.mxu0 0.0
          %8447 = vmatpush1.xpose.msra.mxu0 %v8287
          %8448 = vmatprep.subr.mxu0 0.0
          %8449 = vmatpush1.xpose.msra.mxu0 %v8290
          %8450 = vmatprep.subr.mxu0 0.0
          %8451 = vmatpush1.xpose.msra.mxu0 %v8293
          %8452 = vmatprep.subr.mxu0 0.0
          %8453 = vmatpush1.xpose.msra.mxu0 %v8296
          %8454 = vmatprep.subr.mxu0 0.0
          %8455 = vmatpush1.xpose.msra.mxu0 %v8299
          %8456 = vmatprep.subr.mxu0 0.0
          %8457 = vmatpush1.xpose.msra.mxu0 %v8302
          %8458 = vmatprep.subr.mxu0 0.0
          %8459 = vmatpush1.xpose.msra.mxu0 %v8305
          %8460 = vmatprep.subr.mxu0 0.0
          %8461 = vmatpush1.xpose.msra.mxu0 %v8308
          %8462 = vmatprep.subr.mxu0 0.0
          %8463 = vmatpush1.xpose.msra.mxu0 %v8311
          %8464 = vmatprep.subr.mxu0 0.0
          %8465 = vmatpush1.xpose.msra.mxu0 %v8314
          %8466 = vmatprep.subr.mxu0 0.0
          %8467 = vmatpush1.xpose.msra.mxu0 %v8317
          %8468 = vmatprep.subr.mxu0 0.0
          %8469 = vmatpush1.xpose.msra.mxu0 %v8320
          %8470 = vmatprep.subr.mxu0 0.0
          %8471 = vmatpush1.xpose.msra.mxu0 %v8323
          %8472 = vmatprep.subr.mxu0 0.0
          %8473 = vmatpush1.xpose.msra.mxu0 %v8326
          %8474 = vmatprep.subr.mxu0 0.0
          %8475 = vmatpush1.xpose.msra.mxu0 %v8329
          %8476 = vmatprep.subr.mxu0 0.0
          %8477 = vmatpush1.xpose.msra.mxu0 %v8332
          %8478 = vmatprep.subr.mxu0 0.0
          %8479 = vmatpush1.xpose.msra.mxu0 %v8335
          %8480 = vmatprep.subr.mxu0 0.0
          %8481 = vmatpush1.xpose.msra.mxu0 %v8338
          %8482 = vmatprep.subr.mxu0 0.0
          %8483 = vmatpush1.xpose.msra.mxu0 %v8341
          %8484 = vmatprep.subr.mxu0 0.0
          %8485 = vmatpush1.xpose.msra.mxu0 %v8344
          %8486 = vmatprep.subr.mxu0 0.0
          %8487 = vmatpush1.xpose.msra.mxu0 %v8347
          %8488 = vmatprep.subr.mxu0 0.0
          %8489 = vmatpush1.xpose.msra.mxu0 %v8350
          %8490 = vmatprep.subr.mxu0 0.0
          %8491 = vmatpush1.xpose.msra.mxu0 %v8353
          %8492 = vmatprep.subr.mxu0 0.0
          %8493 = vmatpush1.xpose.msra.mxu0 %v8356
          %8494 = vmatprep.subr.mxu0 0.0
          %8495 = vmatpush1.xpose.msra.mxu0 %v8359
          %8496 = vmatprep.mubr.f32.mxu0 0.0
          %8497 = vmatmul.mubr.f32.gmra.mrb[0].mxu0 %v8167
          %v8498 = vpop.f32.mrb[0].mxu0
          %v8499 = vadd.f32 %v8165, %v8498
          %v8500 = vpop.f32.mrb[0].mxu0
          %v8501 = vadd.f32 %v8165, %v8500
          %8502 = vdwg.mxu0
          %s8503 = smul.u32 %s7444, 512
          %v8508 = vcombine.low %v8428, %v8430
          %v8509 = vcombine.low %v8499, %v8501
          %v8511 = vunpack.c.l.s4 1966171168
          %v8512 = vunpack.c.0.s8 %v8511
          %v8513 = vlaneseq
          %v8514 = vshrl.u32 %v8513, 7
          %v8515 = vsub.s32 %v8512, %v8514
          %v8516 = vrot.slane %v8508, %v8515
          %v8518 = vunpack.c.l.s4 1966171168
          %v8519 = vunpack.c.0.s8 %v8518
          %v8520 = vlaneseq
          %v8521 = vshrl.u32 %v8520, 7
          %v8522 = vsub.s32 %v8519, %v8521
          %v8523 = vrot.slane %v8509, %v8522
          %v8524 = vcombine.low %v8516, %v8523
          %v8526 = vunpack.c.l.s4 1966171168
          %v8527 = vunpack.c.0.s8 %v8526
          %v8528 = vlaneseq
          %v8529 = vshrl.u32 %v8528, 7
          %v8530 = vsub.s32 %v8527, %v8529
          %v8531 = vrot.slane %v8524, %v8530
          %s8533 = sshra.s32 %s8503, 7
          %s8534 = sand.u32 %s8503, 127
          %s8535 = scalar_lea.vmem %s1722, %s8533
          %v8536 = vlaneseq
          %vm8537 = vcmp.ge.s32.totalorder %v8536, 0
          %vm8538 = vcmp.lt.s32.totalorder %v8536, 512
          %vm8539 = vmand %vm8537, %vm8538
          %8540 = vst.msk [vmem:[%s8535] sm:$0xf] %vm8539, %v8531
        $region285: #{forward.1} parent=219 // loop_footer
          %s7448 = sadd.s32 1, %s7444
        $region286: #{forward.1} parent=219 // loop_footer_branch
          %7443 = sbr.rel target = $region282
        $region287: #{forward.1} parent=219 // loop_exit
          _
        %p8541 = scmp.lt.s32.totalorder %s122, 1
        %s8542 = scalar_select %p8541, %s122, 1
        %s8543 = smul.addr %s8542, 32
        %s8544 = scalar_lea.vmem %s101, %s8543
        // Predicated region
        $region288: #{forward.1} parent=219 // pred_check
          %p8545 = pneg %p1205
        $region289: #{forward.1} parent=219 // pred_check_branch
          %8547 = sbr.rel (%p8545) target = $region291
        $region290: #{forward.1} parent=219 // pred_region
          _
        $region291: #{forward.1} parent=219 // pred_fallthru
          _
      $region220: #{forward.1} parent=5 // pred_fallthru
        _
      %p8548 = scmp.le.s32.totalorder 2, %s117
      // Predicated region
      $region292: #{forward.1} parent=5 // pred_check
        %p8549 = pneg %p8548
      $region293: #{forward.1} parent=5 // pred_check_branch
        %8551 = sbr.rel (%p8549) target = $region295
      $region294: #{forward.1} parent=5 // pred_region
        %s8552 = ssub.s32 %s117, 2
        // Predicated region
        $region296: #{forward.1} parent=294 // pred_check
          %p8553 = pneg %p1211
        $region297: #{forward.1} parent=294 // pred_check_branch
          %8555 = sbr.rel (%p8553) target = $region299
        $region298: #{forward.1} parent=294 // pred_region
          %p8556 = scmp.lt.s32.totalorder %s123, 1
          %s8557 = scalar_select %p8556, %s123, 1
          %s8558 = smul.addr %s8557, 32
          %s8559 = scalar_lea.vmem %s101, %s8558
        $region299: #{forward.1} parent=294 // pred_fallthru
          _
      $region295: #{forward.1} parent=5 // pred_fallthru
        _
    $region6: #{forward.1} parent=1 // loop_footer
      %s121 = sadd.s32 1, %s117
    $region7: #{forward.1} parent=1 // loop_footer_branch
      %116 = sbr.rel target = $region3
    $region8: #{forward.1} parent=1 // loop_exit
      _
    %8560 = vsyncpa [#allocation5], 1
    %s8561 = scalar_lea.sflag [#allocation5], 1
    %8562 = vsyncpa %s8561, 1
    %8563 = vsyncpa [#allocation7], 1
    %8564 = vsyncpa [#allocation10], 1
    %8565 = vsyncpa [#allocation13], 1
    %8566 = vsyncpa [#allocation16], 1
    %8567 = vsyncpa [#allocation19], 1
    %8568 = vsyncpa [#allocation22], 1
    %8569 = vsyncpa [#allocation25], 1

</llo_original>
